<compile_context>
chip_gen: v7x
topology: tpu7x:2x2x1
jax: 0.10.0
libtpu: 0.0.40
codegen_flags: <defaults>
</compile_context>

<pallas_src>
import functools
from collections import namedtuple

import numpy as np
import jax
import jax.numpy as jnp
from jax.experimental import pallas as pl
from jax.experimental.pallas import tpu as pltpu


# ----------------------------------------------------------------------------- utils
def _round_up(x, m):
    return (x + m - 1) // m * m


# ----------------------------------------------------------------------------- Pallas kernels
def _mm_kernel(*args, relu_in, relu_out, has_res):
    """A(bf16) @ W(bf16) -> f32, fused scale/shift (+residual) (+ReLU on in/out)."""
    if has_res:
        a_ref, w_ref, scsh_ref, r_ref, o_ref = args
    else:
        a_ref, w_ref, scsh_ref, o_ref = args
        r_ref = None
    a = a_ref[...]
    if relu_in:
        a = jnp.maximum(a, 0)
    out = jnp.dot(a, w_ref[...], preferred_element_type=jnp.float32)
    out = out * scsh_ref[0] + scsh_ref[1]          # (1,tn) broadcasts over (tm,tn)
    if has_res:
        out = out + r_ref[...]
    if relu_out:
        out = jnp.maximum(out, 0.0)
    o_ref[...] = out


def _reduce_add_kernel(*args, kinds):
    """Sum of per-operand reductions; every ref is lane-dense (…, tr, 128)."""
    o_ref = args[-1]
    refs = args[:-1]
    idx = 0
    acc = None
    for kind in kinds:
        if kind == "max":
            v = jnp.max(refs[idx][...], axis=0)
            idx += 1
        elif kind == "avg":
            v = jnp.sum(refs[idx][...], axis=0) * refs[idx + 1][...]  # * 1/count
            idx += 2
        else:  # identity
            v = refs[idx][...]
            idx += 1
        acc = v if acc is None else acc + v
    o_ref[...] = acc


def _gap_kernel(x_ref, o_ref):
    o_ref[...] = jnp.mean(x_ref[...], axis=0, keepdims=True)


# ----------------------------------------------------------------------------- packed matmul (conv/fc core)
def pack_matmul_params(w2d, scale, shift):
    """Pad weight to (Kp, Np) bf16 and merge scale/shift into one (2,1,Np) f32 slab (done once)."""
    K, N = w2d.shape
    Kp, Np = _round_up(K, 128), _round_up(N, 128)
    w_p = jnp.pad(w2d, ((0, Kp - K), (0, Np - N))).astype(jnp.bfloat16)
    scsh = jnp.stack([jnp.pad(scale, (0, Np - N)),
                      jnp.pad(shift, (0, Np - N))], axis=0).reshape(2, 1, Np).astype(jnp.float32)
    return {"w": w_p, "scsh": scsh, "k": K, "n": N}


def matmul_fused(a, pw, relu_in=False, relu_out=False, residual=None):
    """(M,K) @ packed weight, fused BN scale/shift (+residual) (+ReLU)."""
    M, K = a.shape
    Kp, Np = pw["w"].shape
    assert K == pw["k"]
    N = pw["n"]
    tn = 128
    tm = min(512, _round_up(max(M, 1), 16))
    Mp = _round_up(M, tm)

    a_p = jnp.pad(a.astype(jnp.bfloat16), ((0, Mp - M), (0, Kp - K)))
    args = [a_p, pw["w"], pw["scsh"]]
    in_specs = [
        pl.BlockSpec((tm, Kp), lambda i, j: (i, 0)),
        pl.BlockSpec((Kp, tn), lambda i, j: (0, j)),
        pl.BlockSpec((2, 1, tn), lambda i, j: (0, 0, j)),
    ]
    has_res = residual is not None
    if has_res:
        r_p = jnp.pad(residual.astype(jnp.float32), ((0, Mp - M), (0, Np - N)))
        args.append(r_p)
        in_specs.append(pl.BlockSpec((tm, tn), lambda i, j: (i, j)))

    kern = functools.partial(_mm_kernel, relu_in=relu_in, relu_out=relu_out, has_res=has_res)
    out = pl.pallas_call(
        kern,
        out_shape=jax.ShapeDtypeStruct((Mp, Np), jnp.float32),
        grid=(Mp // tm, Np // tn),
        in_specs=in_specs,
        out_specs=pl.BlockSpec((tm, tn), lambda i, j: (i, j)),
        compiler_params=pltpu.CompilerParams(
            dimension_semantics=("parallel", "parallel")),
    )(*args)
    return out[:M, :N]


# ----------------------------------------------------------------------------- fused pooling / DARTS node
def _window_stack(x, kh, kw, stride, pad, pad_value):
    """x: (N,H,W,C) -> (kh*kw, N, Ho, Wo, C) shifted windows."""
    N, H, W, C = x.shape
    xp = jnp.pad(x, ((0, 0), (pad, pad), (pad, pad), (0, 0)), constant_values=pad_value)
    Ho = (H + 2 * pad - kh) // stride + 1
    Wo = (W + 2 * pad - kw) // stride + 1
    slabs = [xp[:, i:i + stride * Ho:stride, j:j + stride * Wo:stride, :]
             for i in range(kh) for j in range(kw)]
    return jnp.stack(slabs, axis=0), Ho, Wo


def _avg_pool_rcount(H, W, k, stride, pad):
    """Static reciprocal window counts (count_include_pad=False)."""
    ones = np.zeros((H + 2 * pad, W + 2 * pad), np.float32)
    ones[pad:pad + H, pad:pad + W] = 1.0
    Ho = (H + 2 * pad - k) // stride + 1
    Wo = (W + 2 * pad - k) // stride + 1
    cnt = np.zeros((Ho, Wo), np.float32)
    for i in range(k):
        for j in range(k):
            cnt += ones[i:i + stride * Ho:stride, j:j + stride * Wo:stride]
    return (1.0 / np.maximum(cnt, 1.0)).astype(np.float32)


def fused_reduce_add(operands):
    """operands: list of (kind, x NHWC, stride) with kind in {max, avg, id}; outputs summed.

    A single lane-dense pallas_call covers one whole DARTS-cell node (op1 + op2) or one pooling op.
    """
    pieces = []
    out_shape = None
    for kind, x, stride in operands:
        N, H, W, C = x.shape
        if kind == "id":
            Ho, Wo = H, W
            arrs = [x.reshape(-1)]
        else:
            pad_val = float("-inf") if kind == "max" else 0.0
            win, Ho, Wo = _window_stack(x, 3, 3, stride, 1, pad_val)
            arrs = [win.reshape(9, -1)]
            if kind == "avg":
                rc = _avg_pool_rcount(H, W, 3, stride, 1)
                rc = jnp.broadcast_to(jnp.asarray(rc)[None, :, :, None],
                                      (N, Ho, Wo, C)).reshape(-1)
                arrs.append(rc)
        shape_i = (N, Ho, Wo, C)
        if out_shape is None:
            out_shape = shape_i
        else:
            assert out_shape == shape_i, (out_shape, shape_i)
        pieces.append((kind, arrs))

    L = out_shape[0] * out_shape[1] * out_shape[2] * out_shape[3]
    R0 = (L + 127) // 128
    tr = min(256, _round_up(R0, 8))          # bounded row tile -> bounded VMEM, parallel grid
    R = _round_up(R0, tr)
    Lp = R * 128

    map_2d = lambda r: (r, 0)
    map_3d = lambda r: (0, r, 0)
    inputs, specs, kinds = [], [], []
    for kind, arrs in pieces:
        kinds.append(kind)
        for arr in arrs:
            if arr.ndim == 1:
                inputs.append(jnp.pad(arr, (0, Lp - L)).reshape(R, 128))
                specs.append(pl.BlockSpec((tr, 128), map_2d))
            else:
                inputs.append(jnp.pad(arr, ((0, 0), (0, Lp - L))).reshape(arr.shape[0], R, 128))
                specs.append(pl.BlockSpec((arr.shape[0], tr, 128), map_3d))

    kern = functools.partial(_reduce_add_kernel, kinds=tuple(kinds))
    out = pl.pallas_call(
        kern,
        out_shape=jax.ShapeDtypeStruct((R, 128), jnp.float32),
        grid=(R // tr,),
        in_specs=specs,
        out_specs=pl.BlockSpec((tr, 128), map_2d),
        compiler_params=pltpu.CompilerParams(dimension_semantics=("parallel",)),
    )(*inputs)
    return out.reshape(-1)[:L].reshape(out_shape)


def max_pool_3x3(x, stride):
    return fused_reduce_add([("max", x, stride)])


def global_avg_pool(x):
    N, H, W, C = x.shape
    HW, NC = H * W, N * C
    NCp = _round_up(NC, 128)
    xr = jnp.transpose(x.reshape(N, HW, C), (1, 0, 2)).reshape(HW, NC)
    xr = jnp.pad(xr, ((0, 0), (0, NCp - NC)))
    out = pl.pallas_call(
        _gap_kernel,
        out_shape=jax.ShapeDtypeStruct((1, NCp), jnp.float32),
        in_specs=[pl.BlockSpec(memory_space=pltpu.MemorySpace.VMEM)],
        out_specs=pl.BlockSpec(memory_space=pltpu.MemorySpace.VMEM),
    )(xr)
    return out.reshape(NCp)[:NC].reshape(N, C)


# ----------------------------------------------------------------------------- conv wrapper (im2col glue)
def _conv_patches(x, kh, kw, stride, pad):
    N, H, W, C = x.shape
    xp = jnp.pad(x, ((0, 0), (pad, pad), (pad, pad), (0, 0)))
    Ho = (H + 2 * pad - kh) // stride + 1
    Wo = (W + 2 * pad - kw) // stride + 1
    slabs = [xp[:, i:i + stride * Ho:stride, j:j + stride * Wo:stride, :]
             for i in range(kh) for j in range(kw)]
    patches = jnp.stack(slabs, axis=3)                       # (N,Ho,Wo,KW,C)
    return patches.reshape(N * Ho * Wo, kh * kw * C), Ho, Wo


def conv2d(x, pw, kh, kw, stride, pad, relu_in=False, relu_out=False, residual=None):
    N, H, W, C = x.shape
    if kh == 1 and kw == 1 and pad == 0:
        xs = x if stride == 1 else x[:, ::stride, ::stride, :]
        Ho, Wo = xs.shape[1], xs.shape[2]
        a = xs.reshape(N * Ho * Wo, C)
    else:
        a, Ho, Wo = _conv_patches(x, kh, kw, stride, pad)
    r = residual.reshape(N * Ho * Wo, -1) if residual is not None else None
    out = matmul_fused(a, pw, relu_in=relu_in, relu_out=relu_out, residual=r)
    return out.reshape(N, Ho, Wo, pw["n"])


# ----------------------------------------------------------------------------- parameters
class KeyGen:
    def __init__(self, key):
        self.key = key

    def __call__(self):
        self.key, sub = jax.random.split(self.key)
        return sub


def _init_bn(kg, c, eps=1e-5):
    gamma = 1.0 + 0.1 * jax.random.normal(kg(), (c,), jnp.float32)
    beta = 0.05 * jax.random.normal(kg(), (c,), jnp.float32)
    mean = 0.05 * jax.random.normal(kg(), (c,), jnp.float32)
    var = 1.0 + 0.1 * jnp.abs(jax.random.normal(kg(), (c,), jnp.float32))
    scale = gamma / jnp.sqrt(var + eps)
    shift = beta - mean * scale
    return scale, shift


def init_conv_bn(kg, cin, cout, kh, kw):
    fan = kh * kw * cin
    w = jax.random.normal(kg(), (kh, kw, cin, cout), jnp.float32) / jnp.sqrt(float(fan))
    scale, shift = _init_bn(kg, cout)
    return pack_matmul_params(w.reshape(fan, cout), scale, shift)


def init_factorized_reduce(kg, cin, cout):
    half = cout // 2
    w1 = jax.random.normal(kg(), (cin, half), jnp.float32) / jnp.sqrt(float(cin))
    w2 = jax.random.normal(kg(), (cin, half), jnp.float32) / jnp.sqrt(float(cin))
    scale, shift = _init_bn(kg, cout)
    return {"p1": pack_matmul_params(w1, scale[:half], shift[:half]),
            "p2": pack_matmul_params(w2, scale[half:], shift[half:])}


def apply_factorized_reduce(p, x):
    x1 = x[:, ::2, ::2, :]           # conv_1: 1x1 stride-2 on relu(x)
    x2 = x[:, 1::2, 1::2, :]         # conv_2: 1x1 stride-2 on relu(x)[:, :, 1:, 1:]
    N, Ho, Wo, C = x1.shape
    o1 = matmul_fused(x1.reshape(N * Ho * Wo, C), p["p1"], relu_in=True)
    o2 = matmul_fused(x2.reshape(N * Ho * Wo, C), p["p2"], relu_in=True)
    return jnp.concatenate([o1, o2], axis=-1).reshape(N, Ho, Wo, -1)


# ----------------------------------------------------------------------------- DARTS cell
Genotype = namedtuple("Genotype", "normal normal_concat reduce reduce_concat")
GENOTYPE = Genotype(
    normal=[("max_pool_3x3", 0), ("skip_connect", 1), ("max_pool_3x3", 0), ("avg_pool_3x3", 1),
            ("skip_connect", 2), ("max_pool_3x3", 1), ("avg_pool_3x3", 0), ("skip_connect", 2)],
    normal_concat=[2, 3, 4, 5],
    reduce=[("max_pool_3x3", 0), ("max_pool_3x3", 1), ("skip_connect", 2), ("max_pool_3x3", 1),
            ("max_pool_3x3", 0), ("skip_connect", 2), ("skip_connect", 2), ("avg_pool_3x3", 1)],
    reduce_concat=[2, 3, 4, 5])


def init_op(kg, name, C, stride):
    if name in ("max_pool_3x3", "avg_pool_3x3"):
        return {"name": name, "stride": stride, "params": None}
    if name == "skip_connect":
        params = None if stride == 1 else init_factorized_reduce(kg, C, C)
        return {"name": name, "stride": stride, "params": params}
    raise NotImplementedError(name)


def init_cell(kg, genotype, Cpp, Cp, C, reduction, reduction_prev):
    p = {}
    if reduction_prev:
        p["pre0"] = ("fr", init_factorized_reduce(kg, Cpp, C))
    else:
        p["pre0"] = ("rcb", init_conv_bn(kg, Cpp, C, 1, 1))
    p["pre1"] = ("rcb", init_conv_bn(kg, Cp, C, 1, 1))
    ops_geno = genotype.reduce if reduction else genotype.normal
    concat = genotype.reduce_concat if reduction else genotype.normal_concat
    ops = []
    for name, index in ops_geno:
        stride = 2 if reduction and index < 2 else 1
        ops.append(init_op(kg, name, C, stride))
    p["ops"] = ops
    p["indices"] = [idx for _, idx in ops_geno]
    p["concat"] = list(concat)
    p["multiplier"] = len(concat)
    return p


def apply_pre(tagged, x):
    tag, params = tagged
    if tag == "fr":
        return apply_factorized_reduce(params, x)
    return conv2d(x, params, 1, 1, 1, 0, relu_in=True)       # ReLU-Conv1x1-BN


def apply_node(op1, x1, op2, x2):
    """One DARTS node: op1(x1) + op2(x2), fused into a single lane-dense pallas_call."""
    operands = []
    for op, x in ((op1, x1), (op2, x2)):
        name, stride = op["name"], op["stride"]
        if name == "max_pool_3x3":
            operands.append(("max", x, stride))
        elif name == "avg_pool_3x3":
            operands.append(("avg", x, stride))
        elif name == "skip_connect":
            y = x if stride == 1 else apply_factorized_reduce(op["params"], x)
            operands.append(("id", y, 1))
        else:
            raise NotImplementedError(name)
    return fused_reduce_add(operands)


def apply_cell(p, s0, s1):
    s0 = apply_pre(p["pre0"], s0)
    s1 = apply_pre(p["pre1"], s1)
    states = [s0, s1]
    idx = p["indices"]
    for i in range(len(p["ops"]) // 2):
        states.append(apply_node(p["ops"][2 * i], states[idx[2 * i]],
                                 p["ops"][2 * i + 1], states[idx[2 * i + 1]]))
    return jnp.concatenate([states[i] for i in p["concat"]], axis=-1)


# ----------------------------------------------------------------------------- lidar encoder (ResNet-18 style)
def init_basic_block(kg, cin, cout, stride):
    p = {"conv1": init_conv_bn(kg, cin, cout, 3, 3),
         "conv2": init_conv_bn(kg, cout, cout, 3, 3),
         "down": None, "stride": stride}
    if stride != 1 or cin != cout:
        p["down"] = init_conv_bn(kg, cin, cout, 1, 1)
    return p


def apply_basic_block(p, x):
    out = conv2d(x, p["conv1"], 3, 3, p["stride"], 1, relu_out=True)
    identity = x if p["down"] is None else conv2d(x, p["down"], 1, 1, p["stride"], 0)
    # conv2 + BN + residual add + ReLU fused in one matmul epilogue
    return conv2d(out, p["conv2"], 3, 3, 1, 1, relu_out=True, residual=identity)


def init_lidar_encoder(kg, in_channels=1, base=8):
    p = {"conv1": init_conv_bn(kg, in_channels, base, 7, 7)}
    layers = []
    cin = base
    for li, c in enumerate([base, base * 2, base * 4, base * 8]):
        stride = 1 if li == 0 else 2
        layers.append([init_basic_block(kg, cin, c, stride), init_basic_block(kg, c, c, 1)])
        cin = c
    p["layers"] = layers
    p["out_dim"] = cin
    return p


def apply_lidar_encoder(p, x):
    x = conv2d(x, p["conv1"], 7, 7, 2, 3, relu_out=True)
    x = max_pool_3x3(x, 2)
    for blocks in p["layers"]:
        for b in blocks:
            x = apply_basic_block(b, x)
    return global_avg_pool(x)                                 # (N, out_dim)


# ----------------------------------------------------------------------------- NetworkImageCNN
def init_network(key, C_image=16, out_channels=64, layers=3, genotype=GENOTYPE, lidar_base=8):
    kg = KeyGen(key)
    p = {"lidar": init_lidar_encoder(kg, 1, lidar_base)}
    assert p["lidar"]["out_dim"] == out_channels              # fusion (cat+sum) needs matching dims
    p["stem"] = init_conv_bn(kg, 3, C_image, 7, 7)
    Cpp, Cp, Cc = C_image, C_image, C_image
    cells = []
    reduction_prev = False
    for i in range(layers):
        if i in [layers // 3, 2 * layers // 3]:
            Cc *= 2
            reduction = True
        else:
            reduction = False
        cell = init_cell(kg, genotype, Cpp, Cp, Cc, reduction, reduction_prev)
        reduction_prev = reduction
        cells.append(cell)
        Cpp, Cp = Cp, cell["multiplier"] * Cc
    p["cells"] = cells
    fc_w = jax.random.normal(kg(), (Cp, out_channels), jnp.float32) / jnp.sqrt(float(Cp))
    fc_b = 0.05 * jax.random.normal(kg(), (out_channels,), jnp.float32)
    p["fc"] = pack_matmul_params(fc_w, jnp.ones((out_channels,), jnp.float32), fc_b)
    return p


def network_forward(p, image_list, lidar_list, n_views=1, seq_len=1):
    # image_list: (length, 3, H, W) NCHW ; lidar_list: (1, bz, 1, H, W) NCHW (as in PyTorch)
    lidar = lidar_list[0]                                     # .squeeze(0)
    bz, lidar_channel, h, w = lidar.shape
    img_channel = image_list.shape[1]
    image_tensor = image_list.reshape(bz * n_views * seq_len, img_channel, h, w)
    lidar_tensor = lidar.reshape(bz * seq_len, lidar_channel, h, w)
    img = jnp.transpose(image_tensor, (0, 2, 3, 1))           # NCHW -> NHWC
    lid = jnp.transpose(lidar_tensor, (0, 2, 3, 1))

    # lidar branch
    lidar_features = apply_lidar_encoder(p["lidar"], lid)     # (bz, D)

    # image stem: conv7x7 s2 + BN + ReLU + maxpool3x3 s2
    x = conv2d(img, p["stem"], 7, 7, 2, 3, relu_out=True)
    x = max_pool_3x3(x, 2)
    s0 = s1 = x
    for cell in p["cells"]:
        s0, s1 = s1, apply_cell(cell, s0, s1)

    img_feat = global_avg_pool(s1)                            # (bz, C_prev)
    # Linear(image_fc) then cat([img, lidar], dim=1).sum(dim=1) == fc(img) + lidar (n_views=seq_len=1),
    # fused into the matmul epilogue as a residual add.
    fused = matmul_fused(img_feat, p["fc"], residual=lidar_features)   # (bz, D)
    return jnp.transpose(fused, (1, 0))[None, ...]            # permute(1,0).unsqueeze(0)


# ----------------------------------------------------------------------------- main
if __name__ == "__main__":
    key = jax.random.PRNGKey(0)
    k_img, k_lid, k_param = jax.random.split(key, 3)

    bz, H, W = 2, 32, 32
    out_channels = 64
    image_list = jax.random.normal(k_img, (bz, 3, H, W), jnp.float32)
    lidar_list = jax.random.normal(k_lid, (1, bz, 1, H, W), jnp.float32)

    params = init_network(k_param, C_image=16, out_channels=out_channels, layers=3)

    fwd = jax.jit(lambda img, lid: network_forward(params, img, lid))
    out = fwd(image_list, lidar_list)
    out = jax.block_until_ready(out)

    assert out.shape == (1, out_channels, bz), out.shape
    assert bool(jnp.all(jnp.isfinite(out)))
    print("KERNEL_OK")
</pallas_src>

<mosaic_0001>
module attributes {stable_mosaic.version = 11 : i64} {
  func.func @_mm_kernel(%arg0: i32, %arg1: i32, %arg2: memref<512x256xbf16, #tpu.memory_space<vmem>>, %arg3: memref<256x128xbf16, #tpu.memory_space<vmem>>, %arg4: memref<2x1x128xf32, #tpu.memory_space<vmem>>, %arg5: memref<512x128xf32, #tpu.memory_space<vmem>>) attributes {dimension_semantics = [#tpu.dimension_semantics<parallel>, #tpu.dimension_semantics<parallel>], iteration_bounds = array<i64: 1, 1>, scalar_prefetch = 0 : i64, scratch_operands = 0 : i64, tpu.core_type = #tpu.core_type<tc>, window_params = [{transform_indices = @transform_0, window_bounds = array<i64: 512, 256>}, {transform_indices = @transform_1, window_bounds = array<i64: 256, 128>}, {transform_indices = @transform_2, window_bounds = array<i64: 2, 1, 128>}, {transform_indices = @transform_3, window_bounds = array<i64: 512, 128>}]} {
    %c0 = arith.constant 0 : index
    %c0_0 = arith.constant 0 : index
    %0 = vector.load %arg2[%c0, %c0_0] : memref<512x256xbf16, #tpu.memory_space<vmem>>, vector<512x256xbf16>
    %c0_1 = arith.constant 0 : index
    %c0_2 = arith.constant 0 : index
    %1 = vector.load %arg3[%c0_1, %c0_2] : memref<256x128xbf16, #tpu.memory_space<vmem>>, vector<256x128xbf16>
    %cst = arith.constant dense<0.000000e+00> : vector<512x128xf32>
    %2 = tpu.matmul %0, %1, %cst {dimension_numbers = #tpu.dot_dimension_numbers<[1], [0], [0], [1], [0, 0, 1, 1], [], []>} : vector<512x256xbf16>, vector<256x128xbf16>, vector<512x128xf32> -> vector<512x128xf32>
    %c0_3 = arith.constant 0 : index
    %c0_4 = arith.constant 0 : index
    %c0_5 = arith.constant 0 : index
    %3 = vector.load %arg4[%c0_3, %c0_4, %c0_5] : memref<2x1x128xf32, #tpu.memory_space<vmem>>, vector<1x1x128xf32>
    %4 = vector.shape_cast %3 : vector<1x1x128xf32> to vector<1x128xf32>
    %5 = vector.broadcast %4 : vector<1x128xf32> to vector<512x128xf32>
    %6 = arith.mulf %2, %5 : vector<512x128xf32>
    %c1 = arith.constant 1 : index
    %c0_6 = arith.constant 0 : index
    %c0_7 = arith.constant 0 : index
    %7 = vector.load %arg4[%c1, %c0_6, %c0_7] : memref<2x1x128xf32, #tpu.memory_space<vmem>>, vector<1x1x128xf32>
    %8 = vector.shape_cast %7 : vector<1x1x128xf32> to vector<1x128xf32>
    %9 = vector.broadcast %8 : vector<1x128xf32> to vector<512x128xf32>
    %10 = arith.addf %6, %9 : vector<512x128xf32>
    %cst_8 = arith.constant 0.000000e+00 : f32
    %11 = vector.broadcast %cst_8 : f32 to vector<512x128xf32>
    %12 = arith.maximumf %10, %11 : vector<512x128xf32>
    %c0_9 = arith.constant 0 : index
    %c0_10 = arith.constant 0 : index
    %13 = vector.load %arg5[%c0_9, %c0_10] : memref<512x128xf32, #tpu.memory_space<vmem>>, vector<512x128xf32>
    tpu.vector_store %arg5[%c0_9, %c0_10], %12 {strides = array<i32>} : memref<512x128xf32, #tpu.memory_space<vmem>>, vector<512x128xf32>,
    return
  }
  func.func @transform_0(%arg0: i32, %arg1: i32) -> (i32, i32) {
    %c0_i32 = arith.constant 0 : i32
    %c0_i32_0 = arith.constant 0 : i32
    return %arg0, %c0_i32 : i32, i32
  }
  func.func @transform_1(%arg0: i32, %arg1: i32) -> (i32, i32) {
    %c0_i32 = arith.constant 0 : i32
    %c0_i32_0 = arith.constant 0 : i32
    return %c0_i32, %arg1 : i32, i32
  }
  func.func @transform_2(%arg0: i32, %arg1: i32) -> (i32, i32, i32) {
    %c0_i32 = arith.constant 0 : i32
    %c0_i32_0 = arith.constant 0 : i32
    %c0_i32_1 = arith.constant 0 : i32
    return %c0_i32, %c0_i32_0, %arg1 : i32, i32, i32
  }
  func.func @transform_3(%arg0: i32, %arg1: i32) -> (i32, i32) {
    %c0_i32 = arith.constant 0 : i32
    return %arg0, %arg1 : i32, i32
  }
}

module attributes {stable_mosaic.version = 11 : i64} {
  func.func @_reduce_add_kernel(%arg0: i32, %arg1: memref<9x16x128xf32, #tpu.memory_space<vmem>>, %arg2: memref<16x128xf32, #tpu.memory_space<vmem>>) attributes {dimension_semantics = [#tpu.dimension_semantics<parallel>], iteration_bounds = array<i64: 1>, scalar_prefetch = 0 : i64, scratch_operands = 0 : i64, tpu.core_type = #tpu.core_type<tc>, window_params = [{transform_indices = @transform_0, window_bounds = array<i64: 9, 16, 128>}, {transform_indices = @transform_1, window_bounds = array<i64: 16, 128>}]} {
    %c0 = arith.constant 0 : index
    %c0_0 = arith.constant 0 : index
    %c0_1 = arith.constant 0 : index
    %0 = vector.load %arg1[%c0, %c0_0, %c0_1] : memref<9x16x128xf32, #tpu.memory_space<vmem>>, vector<9x16x128xf32>
    %cst = arith.constant dense<0xFF800000> : vector<16x128xf32>
    %1 = vector.multi_reduction <maximumf>, %0, %cst [0] : vector<9x16x128xf32> to vector<16x128xf32>
    %c0_2 = arith.constant 0 : index
    %c0_3 = arith.constant 0 : index
    %2 = vector.load %arg2[%c0_2, %c0_3] : memref<16x128xf32, #tpu.memory_space<vmem>>, vector<16x128xf32>
    tpu.vector_store %arg2[%c0_2, %c0_3], %1 {strides = array<i32>} : memref<16x128xf32, #tpu.memory_space<vmem>>, vector<16x128xf32>,
    return
  }
  func.func @transform_0(%arg0: i32) -> (i32, i32, i32) {
    %c0_i32 = arith.constant 0 : i32
    %c0_i32_0 = arith.constant 0 : i32
    %c0_i32_1 = arith.constant 0 : i32
    return %c0_i32, %arg0, %c0_i32_0 : i32, i32, i32
  }
  func.func @transform_1(%arg0: i32) -> (i32, i32) {
    %c0_i32 = arith.constant 0 : i32
    %c0_i32_0 = arith.constant 0 : i32
    return %arg0, %c0_i32 : i32, i32
  }
}

module attributes {stable_mosaic.version = 11 : i64} {
  func.func @_mm_kernel(%arg0: i32, %arg1: i32, %arg2: memref<128x128xbf16, #tpu.memory_space<vmem>>, %arg3: memref<128x128xbf16, #tpu.memory_space<vmem>>, %arg4: memref<2x1x128xf32, #tpu.memory_space<vmem>>, %arg5: memref<128x128xf32, #tpu.memory_space<vmem>>) attributes {dimension_semantics = [#tpu.dimension_semantics<parallel>, #tpu.dimension_semantics<parallel>], iteration_bounds = array<i64: 1, 1>, scalar_prefetch = 0 : i64, scratch_operands = 0 : i64, tpu.core_type = #tpu.core_type<tc>, window_params = [{transform_indices = @transform_0, window_bounds = array<i64: 128, 128>}, {transform_indices = @transform_1, window_bounds = array<i64: 128, 128>}, {transform_indices = @transform_2, window_bounds = array<i64: 2, 1, 128>}, {transform_indices = @transform_3, window_bounds = array<i64: 128, 128>}]} {
    %c0 = arith.constant 0 : index
    %c0_0 = arith.constant 0 : index
    %0 = vector.load %arg2[%c0, %c0_0] : memref<128x128xbf16, #tpu.memory_space<vmem>>, vector<128x128xbf16>
    %cst = arith.constant 0.000000e+00 : bf16
    %1 = vector.broadcast %cst : bf16 to vector<128x128xbf16>
    %2 = arith.maximumf %0, %1 : vector<128x128xbf16>
    %c0_1 = arith.constant 0 : index
    %c0_2 = arith.constant 0 : index
    %3 = vector.load %arg3[%c0_1, %c0_2] : memref<128x128xbf16, #tpu.memory_space<vmem>>, vector<128x128xbf16>
    %cst_3 = arith.constant dense<0.000000e+00> : vector<128x128xf32>
    %4 = tpu.matmul %2, %3, %cst_3 {dimension_numbers = #tpu.dot_dimension_numbers<[1], [0], [0], [1], [0, 0, 1, 1], [], []>} : vector<128x128xbf16>, vector<128x128xbf16>, vector<128x128xf32> -> vector<128x128xf32>
    %c0_4 = arith.constant 0 : index
    %c0_5 = arith.constant 0 : index
    %c0_6 = arith.constant 0 : index
    %5 = vector.load %arg4[%c0_4, %c0_5, %c0_6] : memref<2x1x128xf32, #tpu.memory_space<vmem>>, vector<1x1x128xf32>
    %6 = vector.shape_cast %5 : vector<1x1x128xf32> to vector<1x128xf32>
    %7 = vector.broadcast %6 : vector<1x128xf32> to vector<128x128xf32>
    %8 = arith.mulf %4, %7 : vector<128x128xf32>
    %c1 = arith.constant 1 : index
    %c0_7 = arith.constant 0 : index
    %c0_8 = arith.constant 0 : index
    %9 = vector.load %arg4[%c1, %c0_7, %c0_8] : memref<2x1x128xf32, #tpu.memory_space<vmem>>, vector<1x1x128xf32>
    %10 = vector.shape_cast %9 : vector<1x1x128xf32> to vector<1x128xf32>
    %11 = vector.broadcast %10 : vector<1x128xf32> to vector<128x128xf32>
    %12 = arith.addf %8, %11 : vector<128x128xf32>
    %c0_9 = arith.constant 0 : index
    %c0_10 = arith.constant 0 : index
    %13 = vector.load %arg5[%c0_9, %c0_10] : memref<128x128xf32, #tpu.memory_space<vmem>>, vector<128x128xf32>
    tpu.vector_store %arg5[%c0_9, %c0_10], %12 {strides = array<i32>} : memref<128x128xf32, #tpu.memory_space<vmem>>, vector<128x128xf32>,
    return
  }
  func.func @transform_0(%arg0: i32, %arg1: i32) -> (i32, i32) {
    %c0_i32 = arith.constant 0 : i32
    %c0_i32_0 = arith.constant 0 : i32
    return %arg0, %c0_i32 : i32, i32
  }
  func.func @transform_1(%arg0: i32, %arg1: i32) -> (i32, i32) {
    %c0_i32 = arith.constant 0 : i32
    %c0_i32_0 = arith.constant 0 : i32
    return %c0_i32, %arg1 : i32, i32
  }
  func.func @transform_2(%arg0: i32, %arg1: i32) -> (i32, i32, i32) {
    %c0_i32 = arith.constant 0 : i32
    %c0_i32_0 = arith.constant 0 : i32
    %c0_i32_1 = arith.constant 0 : i32
    return %c0_i32, %c0_i32_0, %arg1 : i32, i32, i32
  }
  func.func @transform_3(%arg0: i32, %arg1: i32) -> (i32, i32) {
    %c0_i32 = arith.constant 0 : i32
    return %arg0, %arg1 : i32, i32
  }
}

module attributes {stable_mosaic.version = 11 : i64} {
  func.func @_reduce_add_kernel(%arg0: i32, %arg1: memref<9x16x128xf32, #tpu.memory_space<vmem>>, %arg2: memref<16x128xf32, #tpu.memory_space<vmem>>, %arg3: memref<16x128xf32, #tpu.memory_space<vmem>>, %arg4: memref<16x128xf32, #tpu.memory_space<vmem>>) attributes {dimension_semantics = [#tpu.dimension_semantics<parallel>], iteration_bounds = array<i64: 1>, scalar_prefetch = 0 : i64, scratch_operands = 0 : i64, tpu.core_type = #tpu.core_type<tc>, window_params = [{transform_indices = @transform_0, window_bounds = array<i64: 9, 16, 128>}, {transform_indices = @transform_1, window_bounds = array<i64: 16, 128>}, {transform_indices = @transform_2, window_bounds = array<i64: 16, 128>}, {transform_indices = @transform_3, window_bounds = array<i64: 16, 128>}]} {
    %c0 = arith.constant 0 : index
    %c0_0 = arith.constant 0 : index
    %c0_1 = arith.constant 0 : index
    %0 = vector.load %arg1[%c0, %c0_0, %c0_1] : memref<9x16x128xf32, #tpu.memory_space<vmem>>, vector<9x16x128xf32>
    %cst = arith.constant dense<0.000000e+00> : vector<16x128xf32>
    %1 = vector.multi_reduction <add>, %0, %cst [0] : vector<9x16x128xf32> to vector<16x128xf32>
    %c0_2 = arith.constant 0 : index
    %c0_3 = arith.constant 0 : index
    %2 = vector.load %arg2[%c0_2, %c0_3] : memref<16x128xf32, #tpu.memory_space<vmem>>, vector<16x128xf32>
    %3 = arith.mulf %1, %2 : vector<16x128xf32>
    %c0_4 = arith.constant 0 : index
    %c0_5 = arith.constant 0 : index
    %4 = vector.load %arg3[%c0_4, %c0_5] : memref<16x128xf32, #tpu.memory_space<vmem>>, vector<16x128xf32>
    %5 = arith.addf %3, %4 : vector<16x128xf32>
    %c0_6 = arith.constant 0 : index
    %c0_7 = arith.constant 0 : index
    %6 = vector.load %arg4[%c0_6, %c0_7] : memref<16x128xf32, #tpu.memory_space<vmem>>, vector<16x128xf32>
    tpu.vector_store %arg4[%c0_6, %c0_7], %5 {strides = array<i32>} : memref<16x128xf32, #tpu.memory_space<vmem>>, vector<16x128xf32>,
    return
  }
  func.func @transform_0(%arg0: i32) -> (i32, i32, i32) {
    %c0_i32 = arith.constant 0 : i32
    %c0_i32_0 = arith.constant 0 : i32
    %c0_i32_1 = arith.constant 0 : i32
    return %c0_i32, %arg0, %c0_i32_0 : i32, i32, i32
  }
  func.func @transform_1(%arg0: i32) -> (i32, i32) {
    %c0_i32 = arith.constant 0 : i32
    %c0_i32_0 = arith.constant 0 : i32
    return %arg0, %c0_i32 : i32, i32
  }
  func.func @transform_2(%arg0: i32) -> (i32, i32) {
    %c0_i32 = arith.constant 0 : i32
    %c0_i32_0 = arith.constant 0 : i32
    return %arg0, %c0_i32 : i32, i32
  }
  func.func @transform_3(%arg0: i32) -> (i32, i32) {
    %c0_i32 = arith.constant 0 : i32
    %c0_i32_0 = arith.constant 0 : i32
    return %arg0, %c0_i32 : i32, i32
  }
}

module attributes {stable_mosaic.version = 11 : i64} {
  func.func @_reduce_add_kernel(%arg0: i32, %arg1: memref<9x16x128xf32, #tpu.memory_space<vmem>>, %arg2: memref<16x128xf32, #tpu.memory_space<vmem>>, %arg3: memref<16x128xf32, #tpu.memory_space<vmem>>) attributes {dimension_semantics = [#tpu.dimension_semantics<parallel>], iteration_bounds = array<i64: 1>, scalar_prefetch = 0 : i64, scratch_operands = 0 : i64, tpu.core_type = #tpu.core_type<tc>, window_params = [{transform_indices = @transform_0, window_bounds = array<i64: 9, 16, 128>}, {transform_indices = @transform_1, window_bounds = array<i64: 16, 128>}, {transform_indices = @transform_2, window_bounds = array<i64: 16, 128>}]} {
    %c0 = arith.constant 0 : index
    %c0_0 = arith.constant 0 : index
    %c0_1 = arith.constant 0 : index
    %0 = vector.load %arg1[%c0, %c0_0, %c0_1] : memref<9x16x128xf32, #tpu.memory_space<vmem>>, vector<9x16x128xf32>
    %cst = arith.constant dense<0xFF800000> : vector<16x128xf32>
    %1 = vector.multi_reduction <maximumf>, %0, %cst [0] : vector<9x16x128xf32> to vector<16x128xf32>
    %c0_2 = arith.constant 0 : index
    %c0_3 = arith.constant 0 : index
    %2 = vector.load %arg2[%c0_2, %c0_3] : memref<16x128xf32, #tpu.memory_space<vmem>>, vector<16x128xf32>
    %3 = arith.addf %1, %2 : vector<16x128xf32>
    %c0_4 = arith.constant 0 : index
    %c0_5 = arith.constant 0 : index
    %4 = vector.load %arg3[%c0_4, %c0_5] : memref<16x128xf32, #tpu.memory_space<vmem>>, vector<16x128xf32>
    tpu.vector_store %arg3[%c0_4, %c0_5], %3 {strides = array<i32>} : memref<16x128xf32, #tpu.memory_space<vmem>>, vector<16x128xf32>,
    return
  }
  func.func @transform_0(%arg0: i32) -> (i32, i32, i32) {
    %c0_i32 = arith.constant 0 : i32
    %c0_i32_0 = arith.constant 0 : i32
    %c0_i32_1 = arith.constant 0 : i32
    return %c0_i32, %arg0, %c0_i32_0 : i32, i32, i32
  }
  func.func @transform_1(%arg0: i32) -> (i32, i32) {
    %c0_i32 = arith.constant 0 : i32
    %c0_i32_0 = arith.constant 0 : i32
    return %arg0, %c0_i32 : i32, i32
  }
  func.func @transform_2(%arg0: i32) -> (i32, i32) {
    %c0_i32 = arith.constant 0 : i32
    %c0_i32_0 = arith.constant 0 : i32
    return %arg0, %c0_i32 : i32, i32
  }
}

module attributes {stable_mosaic.version = 11 : i64} {
  func.func @_reduce_add_kernel(%arg0: i32, %arg1: memref<16x128xf32, #tpu.memory_space<vmem>>, %arg2: memref<9x16x128xf32, #tpu.memory_space<vmem>>, %arg3: memref<16x128xf32, #tpu.memory_space<vmem>>) attributes {dimension_semantics = [#tpu.dimension_semantics<parallel>], iteration_bounds = array<i64: 1>, scalar_prefetch = 0 : i64, scratch_operands = 0 : i64, tpu.core_type = #tpu.core_type<tc>, window_params = [{transform_indices = @transform_0, window_bounds = array<i64: 16, 128>}, {transform_indices = @transform_1, window_bounds = array<i64: 9, 16, 128>}, {transform_indices = @transform_2, window_bounds = array<i64: 16, 128>}]} {
    %c0 = arith.constant 0 : index
    %c0_0 = arith.constant 0 : index
    %0 = vector.load %arg1[%c0, %c0_0] : memref<16x128xf32, #tpu.memory_space<vmem>>, vector<16x128xf32>
    %c0_1 = arith.constant 0 : index
    %c0_2 = arith.constant 0 : index
    %c0_3 = arith.constant 0 : index
    %1 = vector.load %arg2[%c0_1, %c0_2, %c0_3] : memref<9x16x128xf32, #tpu.memory_space<vmem>>, vector<9x16x128xf32>
    %cst = arith.constant dense<0xFF800000> : vector<16x128xf32>
    %2 = vector.multi_reduction <maximumf>, %1, %cst [0] : vector<9x16x128xf32> to vector<16x128xf32>
    %3 = arith.addf %0, %2 : vector<16x128xf32>
    %c0_4 = arith.constant 0 : index
    %c0_5 = arith.constant 0 : index
    %4 = vector.load %arg3[%c0_4, %c0_5] : memref<16x128xf32, #tpu.memory_space<vmem>>, vector<16x128xf32>
    tpu.vector_store %arg3[%c0_4, %c0_5], %3 {strides = array<i32>} : memref<16x128xf32, #tpu.memory_space<vmem>>, vector<16x128xf32>,
    return
  }
  func.func @transform_0(%arg0: i32) -> (i32, i32) {
    %c0_i32 = arith.constant 0 : i32
    %c0_i32_0 = arith.constant 0 : i32
    return %arg0, %c0_i32 : i32, i32
  }
  func.func @transform_1(%arg0: i32) -> (i32, i32, i32) {
    %c0_i32 = arith.constant 0 : i32
    %c0_i32_0 = arith.constant 0 : i32
    %c0_i32_1 = arith.constant 0 : i32
    return %c0_i32, %arg0, %c0_i32_0 : i32, i32, i32
  }
  func.func @transform_2(%arg0: i32) -> (i32, i32) {
    %c0_i32 = arith.constant 0 : i32
    %c0_i32_0 = arith.constant 0 : i32
    return %arg0, %c0_i32 : i32, i32
  }
}

module attributes {stable_mosaic.version = 11 : i64} {
  func.func @_reduce_add_kernel(%arg0: i32, %arg1: memref<9x16x128xf32, #tpu.memory_space<vmem>>, %arg2: memref<9x16x128xf32, #tpu.memory_space<vmem>>, %arg3: memref<16x128xf32, #tpu.memory_space<vmem>>, %arg4: memref<16x128xf32, #tpu.memory_space<vmem>>) attributes {dimension_semantics = [#tpu.dimension_semantics<parallel>], iteration_bounds = array<i64: 1>, scalar_prefetch = 0 : i64, scratch_operands = 0 : i64, tpu.core_type = #tpu.core_type<tc>, window_params = [{transform_indices = @transform_0, window_bounds = array<i64: 9, 16, 128>}, {transform_indices = @transform_1, window_bounds = array<i64: 9, 16, 128>}, {transform_indices = @transform_2, window_bounds = array<i64: 16, 128>}, {transform_indices = @transform_3, window_bounds = array<i64: 16, 128>}]} {
    %c0 = arith.constant 0 : index
    %c0_0 = arith.constant 0 : index
    %c0_1 = arith.constant 0 : index
    %0 = vector.load %arg1[%c0, %c0_0, %c0_1] : memref<9x16x128xf32, #tpu.memory_space<vmem>>, vector<9x16x128xf32>
    %cst = arith.constant dense<0xFF800000> : vector<16x128xf32>
    %1 = vector.multi_reduction <maximumf>, %0, %cst [0] : vector<9x16x128xf32> to vector<16x128xf32>
    %c0_2 = arith.constant 0 : index
    %c0_3 = arith.constant 0 : index
    %c0_4 = arith.constant 0 : index
    %2 = vector.load %arg2[%c0_2, %c0_3, %c0_4] : memref<9x16x128xf32, #tpu.memory_space<vmem>>, vector<9x16x128xf32>
    %cst_5 = arith.constant dense<0.000000e+00> : vector<16x128xf32>
    %3 = vector.multi_reduction <add>, %2, %cst_5 [0] : vector<9x16x128xf32> to vector<16x128xf32>
    %c0_6 = arith.constant 0 : index
    %c0_7 = arith.constant 0 : index
    %4 = vector.load %arg3[%c0_6, %c0_7] : memref<16x128xf32, #tpu.memory_space<vmem>>, vector<16x128xf32>
    %5 = arith.mulf %3, %4 : vector<16x128xf32>
    %6 = arith.addf %1, %5 : vector<16x128xf32>
    %c0_8 = arith.constant 0 : index
    %c0_9 = arith.constant 0 : index
    %7 = vector.load %arg4[%c0_8, %c0_9] : memref<16x128xf32, #tpu.memory_space<vmem>>, vector<16x128xf32>
    tpu.vector_store %arg4[%c0_8, %c0_9], %6 {strides = array<i32>} : memref<16x128xf32, #tpu.memory_space<vmem>>, vector<16x128xf32>,
    return
  }
  func.func @transform_0(%arg0: i32) -> (i32, i32, i32) {
    %c0_i32 = arith.constant 0 : i32
    %c0_i32_0 = arith.constant 0 : i32
    %c0_i32_1 = arith.constant 0 : i32
    return %c0_i32, %arg0, %c0_i32_0 : i32, i32, i32
  }
  func.func @transform_1(%arg0: i32) -> (i32, i32, i32) {
    %c0_i32 = arith.constant 0 : i32
    %c0_i32_0 = arith.constant 0 : i32
    %c0_i32_1 = arith.constant 0 : i32
    return %c0_i32, %arg0, %c0_i32_0 : i32, i32, i32
  }
  func.func @transform_2(%arg0: i32) -> (i32, i32) {
    %c0_i32 = arith.constant 0 : i32
    %c0_i32_0 = arith.constant 0 : i32
    return %arg0, %c0_i32 : i32, i32
  }
  func.func @transform_3(%arg0: i32) -> (i32, i32) {
    %c0_i32 = arith.constant 0 : i32
    %c0_i32_0 = arith.constant 0 : i32
    return %arg0, %c0_i32 : i32, i32
  }
}

module attributes {stable_mosaic.version = 11 : i64} {
  func.func @_mm_kernel(%arg0: i32, %arg1: i32, %arg2: memref<32x128xbf16, #tpu.memory_space<vmem>>, %arg3: memref<128x128xbf16, #tpu.memory_space<vmem>>, %arg4: memref<2x1x128xf32, #tpu.memory_space<vmem>>, %arg5: memref<32x128xf32, #tpu.memory_space<vmem>>) attributes {dimension_semantics = [#tpu.dimension_semantics<parallel>, #tpu.dimension_semantics<parallel>], iteration_bounds = array<i64: 1, 1>, scalar_prefetch = 0 : i64, scratch_operands = 0 : i64, tpu.core_type = #tpu.core_type<tc>, window_params = [{transform_indices = @transform_0, window_bounds = array<i64: 32, 128>}, {transform_indices = @transform_1, window_bounds = array<i64: 128, 128>}, {transform_indices = @transform_2, window_bounds = array<i64: 2, 1, 128>}, {transform_indices = @transform_3, window_bounds = array<i64: 32, 128>}]} {
    %c0 = arith.constant 0 : index
    %c0_0 = arith.constant 0 : index
    %0 = vector.load %arg2[%c0, %c0_0] : memref<32x128xbf16, #tpu.memory_space<vmem>>, vector<32x128xbf16>
    %cst = arith.constant 0.000000e+00 : bf16
    %1 = vector.broadcast %cst : bf16 to vector<32x128xbf16>
    %2 = arith.maximumf %0, %1 : vector<32x128xbf16>
    %c0_1 = arith.constant 0 : index
    %c0_2 = arith.constant 0 : index
    %3 = vector.load %arg3[%c0_1, %c0_2] : memref<128x128xbf16, #tpu.memory_space<vmem>>, vector<128x128xbf16>
    %cst_3 = arith.constant dense<0.000000e+00> : vector<32x128xf32>
    %4 = tpu.matmul %2, %3, %cst_3 {dimension_numbers = #tpu.dot_dimension_numbers<[1], [0], [0], [1], [0, 0, 1, 1], [], []>} : vector<32x128xbf16>, vector<128x128xbf16>, vector<32x128xf32> -> vector<32x128xf32>
    %c0_4 = arith.constant 0 : index
    %c0_5 = arith.constant 0 : index
    %c0_6 = arith.constant 0 : index
    %5 = vector.load %arg4[%c0_4, %c0_5, %c0_6] : memref<2x1x128xf32, #tpu.memory_space<vmem>>, vector<1x1x128xf32>
    %6 = vector.shape_cast %5 : vector<1x1x128xf32> to vector<1x128xf32>
    %7 = vector.broadcast %6 : vector<1x128xf32> to vector<32x128xf32>
    %8 = arith.mulf %4, %7 : vector<32x128xf32>
    %c1 = arith.constant 1 : index
    %c0_7 = arith.constant 0 : index
    %c0_8 = arith.constant 0 : index
    %9 = vector.load %arg4[%c1, %c0_7, %c0_8] : memref<2x1x128xf32, #tpu.memory_space<vmem>>, vector<1x1x128xf32>
    %10 = vector.shape_cast %9 : vector<1x1x128xf32> to vector<1x128xf32>
    %11 = vector.broadcast %10 : vector<1x128xf32> to vector<32x128xf32>
    %12 = arith.addf %8, %11 : vector<32x128xf32>
    %c0_9 = arith.constant 0 : index
    %c0_10 = arith.constant 0 : index
    %13 = vector.load %arg5[%c0_9, %c0_10] : memref<32x128xf32, #tpu.memory_space<vmem>>, vector<32x128xf32>
    tpu.vector_store %arg5[%c0_9, %c0_10], %12 {strides = array<i32>} : memref<32x128xf32, #tpu.memory_space<vmem>>, vector<32x128xf32>,
    return
  }
  func.func @transform_0(%arg0: i32, %arg1: i32) -> (i32, i32) {
    %c0_i32 = arith.constant 0 : i32
    %c0_i32_0 = arith.constant 0 : i32
    return %arg0, %c0_i32 : i32, i32
  }
  func.func @transform_1(%arg0: i32, %arg1: i32) -> (i32, i32) {
    %c0_i32 = arith.constant 0 : i32
    %c0_i32_0 = arith.constant 0 : i32
    return %c0_i32, %arg1 : i32, i32
  }
  func.func @transform_2(%arg0: i32, %arg1: i32) -> (i32, i32, i32) {
    %c0_i32 = arith.constant 0 : i32
    %c0_i32_0 = arith.constant 0 : i32
    %c0_i32_1 = arith.constant 0 : i32
    return %c0_i32, %c0_i32_0, %arg1 : i32, i32, i32
  }
  func.func @transform_3(%arg0: i32, %arg1: i32) -> (i32, i32) {
    %c0_i32 = arith.constant 0 : i32
    return %arg0, %arg1 : i32, i32
  }
}

module attributes {stable_mosaic.version = 11 : i64} {
  func.func @_reduce_add_kernel(%arg0: i32, %arg1: memref<9x8x128xf32, #tpu.memory_space<vmem>>, %arg2: memref<9x8x128xf32, #tpu.memory_space<vmem>>, %arg3: memref<8x128xf32, #tpu.memory_space<vmem>>) attributes {dimension_semantics = [#tpu.dimension_semantics<parallel>], iteration_bounds = array<i64: 1>, scalar_prefetch = 0 : i64, scratch_operands = 0 : i64, tpu.core_type = #tpu.core_type<tc>, window_params = [{transform_indices = @transform_0, window_bounds = array<i64: 9, 8, 128>}, {transform_indices = @transform_1, window_bounds = array<i64: 9, 8, 128>}, {transform_indices = @transform_2, window_bounds = array<i64: 8, 128>}]} {
    %c0 = arith.constant 0 : index
    %c0_0 = arith.constant 0 : index
    %c0_1 = arith.constant 0 : index
    %0 = vector.load %arg1[%c0, %c0_0, %c0_1] : memref<9x8x128xf32, #tpu.memory_space<vmem>>, vector<9x8x128xf32>
    %cst = arith.constant dense<0xFF800000> : vector<8x128xf32>
    %1 = vector.multi_reduction <maximumf>, %0, %cst [0] : vector<9x8x128xf32> to vector<8x128xf32>
    %c0_2 = arith.constant 0 : index
    %c0_3 = arith.constant 0 : index
    %c0_4 = arith.constant 0 : index
    %2 = vector.load %arg2[%c0_2, %c0_3, %c0_4] : memref<9x8x128xf32, #tpu.memory_space<vmem>>, vector<9x8x128xf32>
    %cst_5 = arith.constant dense<0xFF800000> : vector<8x128xf32>
    %3 = vector.multi_reduction <maximumf>, %2, %cst_5 [0] : vector<9x8x128xf32> to vector<8x128xf32>
    %4 = arith.addf %1, %3 : vector<8x128xf32>
    %c0_6 = arith.constant 0 : index
    %c0_7 = arith.constant 0 : index
    %5 = vector.load %arg3[%c0_6, %c0_7] : memref<8x128xf32, #tpu.memory_space<vmem>>, vector<8x128xf32>
    tpu.vector_store %arg3[%c0_6, %c0_7], %4 {strides = array<i32>} : memref<8x128xf32, #tpu.memory_space<vmem>>, vector<8x128xf32>,
    return
  }
  func.func @transform_0(%arg0: i32) -> (i32, i32, i32) {
    %c0_i32 = arith.constant 0 : i32
    %c0_i32_0 = arith.constant 0 : i32
    %c0_i32_1 = arith.constant 0 : i32
    return %c0_i32, %arg0, %c0_i32_0 : i32, i32, i32
  }
  func.func @transform_1(%arg0: i32) -> (i32, i32, i32) {
    %c0_i32 = arith.constant 0 : i32
    %c0_i32_0 = arith.constant 0 : i32
    %c0_i32_1 = arith.constant 0 : i32
    return %c0_i32, %arg0, %c0_i32_0 : i32, i32, i32
  }
  func.func @transform_2(%arg0: i32) -> (i32, i32) {
    %c0_i32 = arith.constant 0 : i32
    %c0_i32_0 = arith.constant 0 : i32
    return %arg0, %c0_i32 : i32, i32
  }
}

module attributes {stable_mosaic.version = 11 : i64} {
  func.func @_reduce_add_kernel(%arg0: i32, %arg1: memref<8x128xf32, #tpu.memory_space<vmem>>, %arg2: memref<9x8x128xf32, #tpu.memory_space<vmem>>, %arg3: memref<8x128xf32, #tpu.memory_space<vmem>>, %arg4: memref<8x128xf32, #tpu.memory_space<vmem>>) attributes {dimension_semantics = [#tpu.dimension_semantics<parallel>], iteration_bounds = array<i64: 1>, scalar_prefetch = 0 : i64, scratch_operands = 0 : i64, tpu.core_type = #tpu.core_type<tc>, window_params = [{transform_indices = @transform_0, window_bounds = array<i64: 8, 128>}, {transform_indices = @transform_1, window_bounds = array<i64: 9, 8, 128>}, {transform_indices = @transform_2, window_bounds = array<i64: 8, 128>}, {transform_indices = @transform_3, window_bounds = array<i64: 8, 128>}]} {
    %c0 = arith.constant 0 : index
    %c0_0 = arith.constant 0 : index
    %0 = vector.load %arg1[%c0, %c0_0] : memref<8x128xf32, #tpu.memory_space<vmem>>, vector<8x128xf32>
    %c0_1 = arith.constant 0 : index
    %c0_2 = arith.constant 0 : index
    %c0_3 = arith.constant 0 : index
    %1 = vector.load %arg2[%c0_1, %c0_2, %c0_3] : memref<9x8x128xf32, #tpu.memory_space<vmem>>, vector<9x8x128xf32>
    %cst = arith.constant dense<0.000000e+00> : vector<8x128xf32>
    %2 = vector.multi_reduction <add>, %1, %cst [0] : vector<9x8x128xf32> to vector<8x128xf32>
    %c0_4 = arith.constant 0 : index
    %c0_5 = arith.constant 0 : index
    %3 = vector.load %arg3[%c0_4, %c0_5] : memref<8x128xf32, #tpu.memory_space<vmem>>, vector<8x128xf32>
    %4 = arith.mulf %2, %3 : vector<8x128xf32>
    %5 = arith.addf %0, %4 : vector<8x128xf32>
    %c0_6 = arith.constant 0 : index
    %c0_7 = arith.constant 0 : index
    %6 = vector.load %arg4[%c0_6, %c0_7] : memref<8x128xf32, #tpu.memory_space<vmem>>, vector<8x128xf32>
    tpu.vector_store %arg4[%c0_6, %c0_7], %5 {strides = array<i32>} : memref<8x128xf32, #tpu.memory_space<vmem>>, vector<8x128xf32>,
    return
  }
  func.func @transform_0(%arg0: i32) -> (i32, i32) {
    %c0_i32 = arith.constant 0 : i32
    %c0_i32_0 = arith.constant 0 : i32
    return %arg0, %c0_i32 : i32, i32
  }
  func.func @transform_1(%arg0: i32) -> (i32, i32, i32) {
    %c0_i32 = arith.constant 0 : i32
    %c0_i32_0 = arith.constant 0 : i32
    %c0_i32_1 = arith.constant 0 : i32
    return %c0_i32, %arg0, %c0_i32_0 : i32, i32, i32
  }
  func.func @transform_2(%arg0: i32) -> (i32, i32) {
    %c0_i32 = arith.constant 0 : i32
    %c0_i32_0 = arith.constant 0 : i32
    return %arg0, %c0_i32 : i32, i32
  }
  func.func @transform_3(%arg0: i32) -> (i32, i32) {
    %c0_i32 = arith.constant 0 : i32
    %c0_i32_0 = arith.constant 0 : i32
    return %arg0, %c0_i32 : i32, i32
  }
}

module attributes {stable_mosaic.version = 11 : i64} {
  func.func @_reduce_add_kernel(%arg0: i32, %arg1: memref<9x8x128xf32, #tpu.memory_space<vmem>>, %arg2: memref<8x128xf32, #tpu.memory_space<vmem>>, %arg3: memref<8x128xf32, #tpu.memory_space<vmem>>) attributes {dimension_semantics = [#tpu.dimension_semantics<parallel>], iteration_bounds = array<i64: 1>, scalar_prefetch = 0 : i64, scratch_operands = 0 : i64, tpu.core_type = #tpu.core_type<tc>, window_params = [{transform_indices = @transform_0, window_bounds = array<i64: 9, 8, 128>}, {transform_indices = @transform_1, window_bounds = array<i64: 8, 128>}, {transform_indices = @transform_2, window_bounds = array<i64: 8, 128>}]} {
    %c0 = arith.constant 0 : index
    %c0_0 = arith.constant 0 : index
    %c0_1 = arith.constant 0 : index
    %0 = vector.load %arg1[%c0, %c0_0, %c0_1] : memref<9x8x128xf32, #tpu.memory_space<vmem>>, vector<9x8x128xf32>
    %cst = arith.constant dense<0xFF800000> : vector<8x128xf32>
    %1 = vector.multi_reduction <maximumf>, %0, %cst [0] : vector<9x8x128xf32> to vector<8x128xf32>
    %c0_2 = arith.constant 0 : index
    %c0_3 = arith.constant 0 : index
    %2 = vector.load %arg2[%c0_2, %c0_3] : memref<8x128xf32, #tpu.memory_space<vmem>>, vector<8x128xf32>
    %3 = arith.addf %1, %2 : vector<8x128xf32>
    %c0_4 = arith.constant 0 : index
    %c0_5 = arith.constant 0 : index
    %4 = vector.load %arg3[%c0_4, %c0_5] : memref<8x128xf32, #tpu.memory_space<vmem>>, vector<8x128xf32>
    tpu.vector_store %arg3[%c0_4, %c0_5], %3 {strides = array<i32>} : memref<8x128xf32, #tpu.memory_space<vmem>>, vector<8x128xf32>,
    return
  }
  func.func @transform_0(%arg0: i32) -> (i32, i32, i32) {
    %c0_i32 = arith.constant 0 : i32
    %c0_i32_0 = arith.constant 0 : i32
    %c0_i32_1 = arith.constant 0 : i32
    return %c0_i32, %arg0, %c0_i32_0 : i32, i32, i32
  }
  func.func @transform_1(%arg0: i32) -> (i32, i32) {
    %c0_i32 = arith.constant 0 : i32
    %c0_i32_0 = arith.constant 0 : i32
    return %arg0, %c0_i32 : i32, i32
  }
  func.func @transform_2(%arg0: i32) -> (i32, i32) {
    %c0_i32 = arith.constant 0 : i32
    %c0_i32_0 = arith.constant 0 : i32
    return %arg0, %c0_i32 : i32, i32
  }
}

module attributes {stable_mosaic.version = 11 : i64} {
  func.func @_reduce_add_kernel(%arg0: i32, %arg1: memref<8x128xf32, #tpu.memory_space<vmem>>, %arg2: memref<9x8x128xf32, #tpu.memory_space<vmem>>, %arg3: memref<8x128xf32, #tpu.memory_space<vmem>>) attributes {dimension_semantics = [#tpu.dimension_semantics<parallel>], iteration_bounds = array<i64: 1>, scalar_prefetch = 0 : i64, scratch_operands = 0 : i64, tpu.core_type = #tpu.core_type<tc>, window_params = [{transform_indices = @transform_0, window_bounds = array<i64: 8, 128>}, {transform_indices = @transform_1, window_bounds = array<i64: 9, 8, 128>}, {transform_indices = @transform_2, window_bounds = array<i64: 8, 128>}]} {
    %c0 = arith.constant 0 : index
    %c0_0 = arith.constant 0 : index
    %0 = vector.load %arg1[%c0, %c0_0] : memref<8x128xf32, #tpu.memory_space<vmem>>, vector<8x128xf32>
    %c0_1 = arith.constant 0 : index
    %c0_2 = arith.constant 0 : index
    %c0_3 = arith.constant 0 : index
    %1 = vector.load %arg2[%c0_1, %c0_2, %c0_3] : memref<9x8x128xf32, #tpu.memory_space<vmem>>, vector<9x8x128xf32>
    %cst = arith.constant dense<0xFF800000> : vector<8x128xf32>
    %2 = vector.multi_reduction <maximumf>, %1, %cst [0] : vector<9x8x128xf32> to vector<8x128xf32>
    %3 = arith.addf %0, %2 : vector<8x128xf32>
    %c0_4 = arith.constant 0 : index
    %c0_5 = arith.constant 0 : index
    %4 = vector.load %arg3[%c0_4, %c0_5] : memref<8x128xf32, #tpu.memory_space<vmem>>, vector<8x128xf32>
    tpu.vector_store %arg3[%c0_4, %c0_5], %3 {strides = array<i32>} : memref<8x128xf32, #tpu.memory_space<vmem>>, vector<8x128xf32>,
    return
  }
  func.func @transform_0(%arg0: i32) -> (i32, i32) {
    %c0_i32 = arith.constant 0 : i32
    %c0_i32_0 = arith.constant 0 : i32
    return %arg0, %c0_i32 : i32, i32
  }
  func.func @transform_1(%arg0: i32) -> (i32, i32, i32) {
    %c0_i32 = arith.constant 0 : i32
    %c0_i32_0 = arith.constant 0 : i32
    %c0_i32_1 = arith.constant 0 : i32
    return %c0_i32, %arg0, %c0_i32_0 : i32, i32, i32
  }
  func.func @transform_2(%arg0: i32) -> (i32, i32) {
    %c0_i32 = arith.constant 0 : i32
    %c0_i32_0 = arith.constant 0 : i32
    return %arg0, %c0_i32 : i32, i32
  }
}

module attributes {stable_mosaic.version = 11 : i64} {
  func.func @_gap_kernel(%arg0: memref<4x512xf32, #tpu.memory_space<vmem>>, %arg1: memref<1x512xf32, #tpu.memory_space<vmem>>) attributes {dimension_semantics = [], scalar_prefetch = 0 : i64, scratch_operands = 0 : i64, tpu.core_type = #tpu.core_type<tc>} {
    %c0 = arith.constant 0 : index
    %c0_0 = arith.constant 0 : index
    %0 = vector.load %arg0[%c0, %c0_0] : memref<4x512xf32, #tpu.memory_space<vmem>>, vector<4x512xf32>
    %cst = arith.constant dense<0.000000e+00> : vector<512xf32>
    %1 = vector.multi_reduction <add>, %0, %cst [0] : vector<4x512xf32> to vector<512xf32>
    %2 = vector.shape_cast %1 : vector<512xf32> to vector<1x512xf32>
    %cst_1 = arith.constant 4.000000e+00 : f32
    %3 = vector.broadcast %cst_1 : f32 to vector<1x512xf32>
    %4 = arith.divf %2, %3 : vector<1x512xf32>
    %c0_2 = arith.constant 0 : index
    %c0_3 = arith.constant 0 : index
    %5 = vector.load %arg1[%c0_2, %c0_3] : memref<1x512xf32, #tpu.memory_space<vmem>>, vector<1x512xf32>
    tpu.vector_store %arg1[%c0_2, %c0_3], %4 {strides = array<i32>} : memref<1x512xf32, #tpu.memory_space<vmem>>, vector<1x512xf32>,
    return
  }
}

module attributes {stable_mosaic.version = 11 : i64} {
  func.func @_mm_kernel(%arg0: i32, %arg1: i32, %arg2: memref<512x128xbf16, #tpu.memory_space<vmem>>, %arg3: memref<128x128xbf16, #tpu.memory_space<vmem>>, %arg4: memref<2x1x128xf32, #tpu.memory_space<vmem>>, %arg5: memref<512x128xf32, #tpu.memory_space<vmem>>) attributes {dimension_semantics = [#tpu.dimension_semantics<parallel>, #tpu.dimension_semantics<parallel>], iteration_bounds = array<i64: 1, 1>, scalar_prefetch = 0 : i64, scratch_operands = 0 : i64, tpu.core_type = #tpu.core_type<tc>, window_params = [{transform_indices = @transform_0, window_bounds = array<i64: 512, 128>}, {transform_indices = @transform_1, window_bounds = array<i64: 128, 128>}, {transform_indices = @transform_2, window_bounds = array<i64: 2, 1, 128>}, {transform_indices = @transform_3, window_bounds = array<i64: 512, 128>}]} {
    %c0 = arith.constant 0 : index
    %c0_0 = arith.constant 0 : index
    %0 = vector.load %arg2[%c0, %c0_0] : memref<512x128xbf16, #tpu.memory_space<vmem>>, vector<512x128xbf16>
    %c0_1 = arith.constant 0 : index
    %c0_2 = arith.constant 0 : index
    %1 = vector.load %arg3[%c0_1, %c0_2] : memref<128x128xbf16, #tpu.memory_space<vmem>>, vector<128x128xbf16>
    %cst = arith.constant dense<0.000000e+00> : vector<512x128xf32>
    %2 = tpu.matmul %0, %1, %cst {dimension_numbers = #tpu.dot_dimension_numbers<[1], [0], [0], [1], [0, 0, 1, 1], [], []>} : vector<512x128xbf16>, vector<128x128xbf16>, vector<512x128xf32> -> vector<512x128xf32>
    %c0_3 = arith.constant 0 : index
    %c0_4 = arith.constant 0 : index
    %c0_5 = arith.constant 0 : index
    %3 = vector.load %arg4[%c0_3, %c0_4, %c0_5] : memref<2x1x128xf32, #tpu.memory_space<vmem>>, vector<1x1x128xf32>
    %4 = vector.shape_cast %3 : vector<1x1x128xf32> to vector<1x128xf32>
    %5 = vector.broadcast %4 : vector<1x128xf32> to vector<512x128xf32>
    %6 = arith.mulf %2, %5 : vector<512x128xf32>
    %c1 = arith.constant 1 : index
    %c0_6 = arith.constant 0 : index
    %c0_7 = arith.constant 0 : index
    %7 = vector.load %arg4[%c1, %c0_6, %c0_7] : memref<2x1x128xf32, #tpu.memory_space<vmem>>, vector<1x1x128xf32>
    %8 = vector.shape_cast %7 : vector<1x1x128xf32> to vector<1x128xf32>
    %9 = vector.broadcast %8 : vector<1x128xf32> to vector<512x128xf32>
    %10 = arith.addf %6, %9 : vector<512x128xf32>
    %cst_8 = arith.constant 0.000000e+00 : f32
    %11 = vector.broadcast %cst_8 : f32 to vector<512x128xf32>
    %12 = arith.maximumf %10, %11 : vector<512x128xf32>
    %c0_9 = arith.constant 0 : index
    %c0_10 = arith.constant 0 : index
    %13 = vector.load %arg5[%c0_9, %c0_10] : memref<512x128xf32, #tpu.memory_space<vmem>>, vector<512x128xf32>
    tpu.vector_store %arg5[%c0_9, %c0_10], %12 {strides = array<i32>} : memref<512x128xf32, #tpu.memory_space<vmem>>, vector<512x128xf32>,
    return
  }
  func.func @transform_0(%arg0: i32, %arg1: i32) -> (i32, i32) {
    %c0_i32 = arith.constant 0 : i32
    %c0_i32_0 = arith.constant 0 : i32
    return %arg0, %c0_i32 : i32, i32
  }
  func.func @transform_1(%arg0: i32, %arg1: i32) -> (i32, i32) {
    %c0_i32 = arith.constant 0 : i32
    %c0_i32_0 = arith.constant 0 : i32
    return %c0_i32, %arg1 : i32, i32
  }
  func.func @transform_2(%arg0: i32, %arg1: i32) -> (i32, i32, i32) {
    %c0_i32 = arith.constant 0 : i32
    %c0_i32_0 = arith.constant 0 : i32
    %c0_i32_1 = arith.constant 0 : i32
    return %c0_i32, %c0_i32_0, %arg1 : i32, i32, i32
  }
  func.func @transform_3(%arg0: i32, %arg1: i32) -> (i32, i32) {
    %c0_i32 = arith.constant 0 : i32
    return %arg0, %arg1 : i32, i32
  }
}

module attributes {stable_mosaic.version = 11 : i64} {
  func.func @_reduce_add_kernel(%arg0: i32, %arg1: memref<9x8x128xf32, #tpu.memory_space<vmem>>, %arg2: memref<8x128xf32, #tpu.memory_space<vmem>>) attributes {dimension_semantics = [#tpu.dimension_semantics<parallel>], iteration_bounds = array<i64: 1>, scalar_prefetch = 0 : i64, scratch_operands = 0 : i64, tpu.core_type = #tpu.core_type<tc>, window_params = [{transform_indices = @transform_0, window_bounds = array<i64: 9, 8, 128>}, {transform_indices = @transform_1, window_bounds = array<i64: 8, 128>}]} {
    %c0 = arith.constant 0 : index
    %c0_0 = arith.constant 0 : index
    %c0_1 = arith.constant 0 : index
    %0 = vector.load %arg1[%c0, %c0_0, %c0_1] : memref<9x8x128xf32, #tpu.memory_space<vmem>>, vector<9x8x128xf32>
    %cst = arith.constant dense<0xFF800000> : vector<8x128xf32>
    %1 = vector.multi_reduction <maximumf>, %0, %cst [0] : vector<9x8x128xf32> to vector<8x128xf32>
    %c0_2 = arith.constant 0 : index
    %c0_3 = arith.constant 0 : index
    %2 = vector.load %arg2[%c0_2, %c0_3] : memref<8x128xf32, #tpu.memory_space<vmem>>, vector<8x128xf32>
    tpu.vector_store %arg2[%c0_2, %c0_3], %1 {strides = array<i32>} : memref<8x128xf32, #tpu.memory_space<vmem>>, vector<8x128xf32>,
    return
  }
  func.func @transform_0(%arg0: i32) -> (i32, i32, i32) {
    %c0_i32 = arith.constant 0 : i32
    %c0_i32_0 = arith.constant 0 : i32
    %c0_i32_1 = arith.constant 0 : i32
    return %c0_i32, %arg0, %c0_i32_0 : i32, i32, i32
  }
  func.func @transform_1(%arg0: i32) -> (i32, i32) {
    %c0_i32 = arith.constant 0 : i32
    %c0_i32_0 = arith.constant 0 : i32
    return %arg0, %c0_i32 : i32, i32
  }
}

module attributes {stable_mosaic.version = 11 : i64} {
  func.func @_mm_kernel(%arg0: i32, %arg1: i32, %arg2: memref<128x128xbf16, #tpu.memory_space<vmem>>, %arg3: memref<128x128xbf16, #tpu.memory_space<vmem>>, %arg4: memref<2x1x128xf32, #tpu.memory_space<vmem>>, %arg5: memref<128x128xf32, #tpu.memory_space<vmem>>) attributes {dimension_semantics = [#tpu.dimension_semantics<parallel>, #tpu.dimension_semantics<parallel>], iteration_bounds = array<i64: 1, 1>, scalar_prefetch = 0 : i64, scratch_operands = 0 : i64, tpu.core_type = #tpu.core_type<tc>, window_params = [{transform_indices = @transform_0, window_bounds = array<i64: 128, 128>}, {transform_indices = @transform_1, window_bounds = array<i64: 128, 128>}, {transform_indices = @transform_2, window_bounds = array<i64: 2, 1, 128>}, {transform_indices = @transform_3, window_bounds = array<i64: 128, 128>}]} {
    %c0 = arith.constant 0 : index
    %c0_0 = arith.constant 0 : index
    %0 = vector.load %arg2[%c0, %c0_0] : memref<128x128xbf16, #tpu.memory_space<vmem>>, vector<128x128xbf16>
    %c0_1 = arith.constant 0 : index
    %c0_2 = arith.constant 0 : index
    %1 = vector.load %arg3[%c0_1, %c0_2] : memref<128x128xbf16, #tpu.memory_space<vmem>>, vector<128x128xbf16>
    %cst = arith.constant dense<0.000000e+00> : vector<128x128xf32>
    %2 = tpu.matmul %0, %1, %cst {dimension_numbers = #tpu.dot_dimension_numbers<[1], [0], [0], [1], [0, 0, 1, 1], [], []>} : vector<128x128xbf16>, vector<128x128xbf16>, vector<128x128xf32> -> vector<128x128xf32>
    %c0_3 = arith.constant 0 : index
    %c0_4 = arith.constant 0 : index
    %c0_5 = arith.constant 0 : index
    %3 = vector.load %arg4[%c0_3, %c0_4, %c0_5] : memref<2x1x128xf32, #tpu.memory_space<vmem>>, vector<1x1x128xf32>
    %4 = vector.shape_cast %3 : vector<1x1x128xf32> to vector<1x128xf32>
    %5 = vector.broadcast %4 : vector<1x128xf32> to vector<128x128xf32>
    %6 = arith.mulf %2, %5 : vector<128x128xf32>
    %c1 = arith.constant 1 : index
    %c0_6 = arith.constant 0 : index
    %c0_7 = arith.constant 0 : index
    %7 = vector.load %arg4[%c1, %c0_6, %c0_7] : memref<2x1x128xf32, #tpu.memory_space<vmem>>, vector<1x1x128xf32>
    %8 = vector.shape_cast %7 : vector<1x1x128xf32> to vector<1x128xf32>
    %9 = vector.broadcast %8 : vector<1x128xf32> to vector<128x128xf32>
    %10 = arith.addf %6, %9 : vector<128x128xf32>
    %cst_8 = arith.constant 0.000000e+00 : f32
    %11 = vector.broadcast %cst_8 : f32 to vector<128x128xf32>
    %12 = arith.maximumf %10, %11 : vector<128x128xf32>
    %c0_9 = arith.constant 0 : index
    %c0_10 = arith.constant 0 : index
    %13 = vector.load %arg5[%c0_9, %c0_10] : memref<128x128xf32, #tpu.memory_space<vmem>>, vector<128x128xf32>
    tpu.vector_store %arg5[%c0_9, %c0_10], %12 {strides = array<i32>} : memref<128x128xf32, #tpu.memory_space<vmem>>, vector<128x128xf32>,
    return
  }
  func.func @transform_0(%arg0: i32, %arg1: i32) -> (i32, i32) {
    %c0_i32 = arith.constant 0 : i32
    %c0_i32_0 = arith.constant 0 : i32
    return %arg0, %c0_i32 : i32, i32
  }
  func.func @transform_1(%arg0: i32, %arg1: i32) -> (i32, i32) {
    %c0_i32 = arith.constant 0 : i32
    %c0_i32_0 = arith.constant 0 : i32
    return %c0_i32, %arg1 : i32, i32
  }
  func.func @transform_2(%arg0: i32, %arg1: i32) -> (i32, i32, i32) {
    %c0_i32 = arith.constant 0 : i32
    %c0_i32_0 = arith.constant 0 : i32
    %c0_i32_1 = arith.constant 0 : i32
    return %c0_i32, %c0_i32_0, %arg1 : i32, i32, i32
  }
  func.func @transform_3(%arg0: i32, %arg1: i32) -> (i32, i32) {
    %c0_i32 = arith.constant 0 : i32
    return %arg0, %arg1 : i32, i32
  }
}

module attributes {stable_mosaic.version = 11 : i64} {
  func.func @_mm_kernel(%arg0: i32, %arg1: i32, %arg2: memref<128x128xbf16, #tpu.memory_space<vmem>>, %arg3: memref<128x128xbf16, #tpu.memory_space<vmem>>, %arg4: memref<2x1x128xf32, #tpu.memory_space<vmem>>, %arg5: memref<128x128xf32, #tpu.memory_space<vmem>>, %arg6: memref<128x128xf32, #tpu.memory_space<vmem>>) attributes {dimension_semantics = [#tpu.dimension_semantics<parallel>, #tpu.dimension_semantics<parallel>], iteration_bounds = array<i64: 1, 1>, scalar_prefetch = 0 : i64, scratch_operands = 0 : i64, tpu.core_type = #tpu.core_type<tc>, window_params = [{transform_indices = @transform_0, window_bounds = array<i64: 128, 128>}, {transform_indices = @transform_1, window_bounds = array<i64: 128, 128>}, {transform_indices = @transform_2, window_bounds = array<i64: 2, 1, 128>}, {transform_indices = @transform_3, window_bounds = array<i64: 128, 128>}, {transform_indices = @transform_4, window_bounds = array<i64: 128, 128>}]} {
    %c0 = arith.constant 0 : index
    %c0_0 = arith.constant 0 : index
    %0 = vector.load %arg2[%c0, %c0_0] : memref<128x128xbf16, #tpu.memory_space<vmem>>, vector<128x128xbf16>
    %c0_1 = arith.constant 0 : index
    %c0_2 = arith.constant 0 : index
    %1 = vector.load %arg3[%c0_1, %c0_2] : memref<128x128xbf16, #tpu.memory_space<vmem>>, vector<128x128xbf16>
    %cst = arith.constant dense<0.000000e+00> : vector<128x128xf32>
    %2 = tpu.matmul %0, %1, %cst {dimension_numbers = #tpu.dot_dimension_numbers<[1], [0], [0], [1], [0, 0, 1, 1], [], []>} : vector<128x128xbf16>, vector<128x128xbf16>, vector<128x128xf32> -> vector<128x128xf32>
    %c0_3 = arith.constant 0 : index
    %c0_4 = arith.constant 0 : index
    %c0_5 = arith.constant 0 : index
    %3 = vector.load %arg4[%c0_3, %c0_4, %c0_5] : memref<2x1x128xf32, #tpu.memory_space<vmem>>, vector<1x1x128xf32>
    %4 = vector.shape_cast %3 : vector<1x1x128xf32> to vector<1x128xf32>
    %5 = vector.broadcast %4 : vector<1x128xf32> to vector<128x128xf32>
    %6 = arith.mulf %2, %5 : vector<128x128xf32>
    %c1 = arith.constant 1 : index
    %c0_6 = arith.constant 0 : index
    %c0_7 = arith.constant 0 : index
    %7 = vector.load %arg4[%c1, %c0_6, %c0_7] : memref<2x1x128xf32, #tpu.memory_space<vmem>>, vector<1x1x128xf32>
    %8 = vector.shape_cast %7 : vector<1x1x128xf32> to vector<1x128xf32>
    %9 = vector.broadcast %8 : vector<1x128xf32> to vector<128x128xf32>
    %10 = arith.addf %6, %9 : vector<128x128xf32>
    %c0_8 = arith.constant 0 : index
    %c0_9 = arith.constant 0 : index
    %11 = vector.load %arg5[%c0_8, %c0_9] : memref<128x128xf32, #tpu.memory_space<vmem>>, vector<128x128xf32>
    %12 = arith.addf %10, %11 : vector<128x128xf32>
    %cst_10 = arith.constant 0.000000e+00 : f32
    %13 = vector.broadcast %cst_10 : f32 to vector<128x128xf32>
    %14 = arith.maximumf %12, %13 : vector<128x128xf32>
    %c0_11 = arith.constant 0 : index
    %c0_12 = arith.constant 0 : index
    %15 = vector.load %arg6[%c0_11, %c0_12] : memref<128x128xf32, #tpu.memory_space<vmem>>, vector<128x128xf32>
    tpu.vector_store %arg6[%c0_11, %c0_12], %14 {strides = array<i32>} : memref<128x128xf32, #tpu.memory_space<vmem>>, vector<128x128xf32>,
    return
  }
  func.func @transform_0(%arg0: i32, %arg1: i32) -> (i32, i32) {
    %c0_i32 = arith.constant 0 : i32
    %c0_i32_0 = arith.constant 0 : i32
    return %arg0, %c0_i32 : i32, i32
  }
  func.func @transform_1(%arg0: i32, %arg1: i32) -> (i32, i32) {
    %c0_i32 = arith.constant 0 : i32
    %c0_i32_0 = arith.constant 0 : i32
    return %c0_i32, %arg1 : i32, i32
  }
  func.func @transform_2(%arg0: i32, %arg1: i32) -> (i32, i32, i32) {
    %c0_i32 = arith.constant 0 : i32
    %c0_i32_0 = arith.constant 0 : i32
    %c0_i32_1 = arith.constant 0 : i32
    return %c0_i32, %c0_i32_0, %arg1 : i32, i32, i32
  }
  func.func @transform_3(%arg0: i32, %arg1: i32) -> (i32, i32) {
    %c0_i32 = arith.constant 0 : i32
    return %arg0, %arg1 : i32, i32
  }
  func.func @transform_4(%arg0: i32, %arg1: i32) -> (i32, i32) {
    %c0_i32 = arith.constant 0 : i32
    return %arg0, %arg1 : i32, i32
  }
}

module attributes {stable_mosaic.version = 11 : i64} {
  func.func @_mm_kernel(%arg0: i32, %arg1: i32, %arg2: memref<32x128xbf16, #tpu.memory_space<vmem>>, %arg3: memref<128x128xbf16, #tpu.memory_space<vmem>>, %arg4: memref<2x1x128xf32, #tpu.memory_space<vmem>>, %arg5: memref<32x128xf32, #tpu.memory_space<vmem>>) attributes {dimension_semantics = [#tpu.dimension_semantics<parallel>, #tpu.dimension_semantics<parallel>], iteration_bounds = array<i64: 1, 1>, scalar_prefetch = 0 : i64, scratch_operands = 0 : i64, tpu.core_type = #tpu.core_type<tc>, window_params = [{transform_indices = @transform_0, window_bounds = array<i64: 32, 128>}, {transform_indices = @transform_1, window_bounds = array<i64: 128, 128>}, {transform_indices = @transform_2, window_bounds = array<i64: 2, 1, 128>}, {transform_indices = @transform_3, window_bounds = array<i64: 32, 128>}]} {
    %c0 = arith.constant 0 : index
    %c0_0 = arith.constant 0 : index
    %0 = vector.load %arg2[%c0, %c0_0] : memref<32x128xbf16, #tpu.memory_space<vmem>>, vector<32x128xbf16>
    %c0_1 = arith.constant 0 : index
    %c0_2 = arith.constant 0 : index
    %1 = vector.load %arg3[%c0_1, %c0_2] : memref<128x128xbf16, #tpu.memory_space<vmem>>, vector<128x128xbf16>
    %cst = arith.constant dense<0.000000e+00> : vector<32x128xf32>
    %2 = tpu.matmul %0, %1, %cst {dimension_numbers = #tpu.dot_dimension_numbers<[1], [0], [0], [1], [0, 0, 1, 1], [], []>} : vector<32x128xbf16>, vector<128x128xbf16>, vector<32x128xf32> -> vector<32x128xf32>
    %c0_3 = arith.constant 0 : index
    %c0_4 = arith.constant 0 : index
    %c0_5 = arith.constant 0 : index
    %3 = vector.load %arg4[%c0_3, %c0_4, %c0_5] : memref<2x1x128xf32, #tpu.memory_space<vmem>>, vector<1x1x128xf32>
    %4 = vector.shape_cast %3 : vector<1x1x128xf32> to vector<1x128xf32>
    %5 = vector.broadcast %4 : vector<1x128xf32> to vector<32x128xf32>
    %6 = arith.mulf %2, %5 : vector<32x128xf32>
    %c1 = arith.constant 1 : index
    %c0_6 = arith.constant 0 : index
    %c0_7 = arith.constant 0 : index
    %7 = vector.load %arg4[%c1, %c0_6, %c0_7] : memref<2x1x128xf32, #tpu.memory_space<vmem>>, vector<1x1x128xf32>
    %8 = vector.shape_cast %7 : vector<1x1x128xf32> to vector<1x128xf32>
    %9 = vector.broadcast %8 : vector<1x128xf32> to vector<32x128xf32>
    %10 = arith.addf %6, %9 : vector<32x128xf32>
    %cst_8 = arith.constant 0.000000e+00 : f32
    %11 = vector.broadcast %cst_8 : f32 to vector<32x128xf32>
    %12 = arith.maximumf %10, %11 : vector<32x128xf32>
    %c0_9 = arith.constant 0 : index
    %c0_10 = arith.constant 0 : index
    %13 = vector.load %arg5[%c0_9, %c0_10] : memref<32x128xf32, #tpu.memory_space<vmem>>, vector<32x128xf32>
    tpu.vector_store %arg5[%c0_9, %c0_10], %12 {strides = array<i32>} : memref<32x128xf32, #tpu.memory_space<vmem>>, vector<32x128xf32>,
    return
  }
  func.func @transform_0(%arg0: i32, %arg1: i32) -> (i32, i32) {
    %c0_i32 = arith.constant 0 : i32
    %c0_i32_0 = arith.constant 0 : i32
    return %arg0, %c0_i32 : i32, i32
  }
  func.func @transform_1(%arg0: i32, %arg1: i32) -> (i32, i32) {
    %c0_i32 = arith.constant 0 : i32
    %c0_i32_0 = arith.constant 0 : i32
    return %c0_i32, %arg1 : i32, i32
  }
  func.func @transform_2(%arg0: i32, %arg1: i32) -> (i32, i32, i32) {
    %c0_i32 = arith.constant 0 : i32
    %c0_i32_0 = arith.constant 0 : i32
    %c0_i32_1 = arith.constant 0 : i32
    return %c0_i32, %c0_i32_0, %arg1 : i32, i32, i32
  }
  func.func @transform_3(%arg0: i32, %arg1: i32) -> (i32, i32) {
    %c0_i32 = arith.constant 0 : i32
    return %arg0, %arg1 : i32, i32
  }
}

module attributes {stable_mosaic.version = 11 : i64} {
  func.func @_mm_kernel(%arg0: i32, %arg1: i32, %arg2: memref<32x256xbf16, #tpu.memory_space<vmem>>, %arg3: memref<256x128xbf16, #tpu.memory_space<vmem>>, %arg4: memref<2x1x128xf32, #tpu.memory_space<vmem>>, %arg5: memref<32x128xf32, #tpu.memory_space<vmem>>, %arg6: memref<32x128xf32, #tpu.memory_space<vmem>>) attributes {dimension_semantics = [#tpu.dimension_semantics<parallel>, #tpu.dimension_semantics<parallel>], iteration_bounds = array<i64: 1, 1>, scalar_prefetch = 0 : i64, scratch_operands = 0 : i64, tpu.core_type = #tpu.core_type<tc>, window_params = [{transform_indices = @transform_0, window_bounds = array<i64: 32, 256>}, {transform_indices = @transform_1, window_bounds = array<i64: 256, 128>}, {transform_indices = @transform_2, window_bounds = array<i64: 2, 1, 128>}, {transform_indices = @transform_3, window_bounds = array<i64: 32, 128>}, {transform_indices = @transform_4, window_bounds = array<i64: 32, 128>}]} {
    %c0 = arith.constant 0 : index
    %c0_0 = arith.constant 0 : index
    %0 = vector.load %arg2[%c0, %c0_0] : memref<32x256xbf16, #tpu.memory_space<vmem>>, vector<32x256xbf16>
    %c0_1 = arith.constant 0 : index
    %c0_2 = arith.constant 0 : index
    %1 = vector.load %arg3[%c0_1, %c0_2] : memref<256x128xbf16, #tpu.memory_space<vmem>>, vector<256x128xbf16>
    %cst = arith.constant dense<0.000000e+00> : vector<32x128xf32>
    %2 = tpu.matmul %0, %1, %cst {dimension_numbers = #tpu.dot_dimension_numbers<[1], [0], [0], [1], [0, 0, 1, 1], [], []>} : vector<32x256xbf16>, vector<256x128xbf16>, vector<32x128xf32> -> vector<32x128xf32>
    %c0_3 = arith.constant 0 : index
    %c0_4 = arith.constant 0 : index
    %c0_5 = arith.constant 0 : index
    %3 = vector.load %arg4[%c0_3, %c0_4, %c0_5] : memref<2x1x128xf32, #tpu.memory_space<vmem>>, vector<1x1x128xf32>
    %4 = vector.shape_cast %3 : vector<1x1x128xf32> to vector<1x128xf32>
    %5 = vector.broadcast %4 : vector<1x128xf32> to vector<32x128xf32>
    %6 = arith.mulf %2, %5 : vector<32x128xf32>
    %c1 = arith.constant 1 : index
    %c0_6 = arith.constant 0 : index
    %c0_7 = arith.constant 0 : index
    %7 = vector.load %arg4[%c1, %c0_6, %c0_7] : memref<2x1x128xf32, #tpu.memory_space<vmem>>, vector<1x1x128xf32>
    %8 = vector.shape_cast %7 : vector<1x1x128xf32> to vector<1x128xf32>
    %9 = vector.broadcast %8 : vector<1x128xf32> to vector<32x128xf32>
    %10 = arith.addf %6, %9 : vector<32x128xf32>
    %c0_8 = arith.constant 0 : index
    %c0_9 = arith.constant 0 : index
    %11 = vector.load %arg5[%c0_8, %c0_9] : memref<32x128xf32, #tpu.memory_space<vmem>>, vector<32x128xf32>
    %12 = arith.addf %10, %11 : vector<32x128xf32>
    %cst_10 = arith.constant 0.000000e+00 : f32
    %13 = vector.broadcast %cst_10 : f32 to vector<32x128xf32>
    %14 = arith.maximumf %12, %13 : vector<32x128xf32>
    %c0_11 = arith.constant 0 : index
    %c0_12 = arith.constant 0 : index
    %15 = vector.load %arg6[%c0_11, %c0_12] : memref<32x128xf32, #tpu.memory_space<vmem>>, vector<32x128xf32>
    tpu.vector_store %arg6[%c0_11, %c0_12], %14 {strides = array<i32>} : memref<32x128xf32, #tpu.memory_space<vmem>>, vector<32x128xf32>,
    return
  }
  func.func @transform_0(%arg0: i32, %arg1: i32) -> (i32, i32) {
    %c0_i32 = arith.constant 0 : i32
    %c0_i32_0 = arith.constant 0 : i32
    return %arg0, %c0_i32 : i32, i32
  }
  func.func @transform_1(%arg0: i32, %arg1: i32) -> (i32, i32) {
    %c0_i32 = arith.constant 0 : i32
    %c0_i32_0 = arith.constant 0 : i32
    return %c0_i32, %arg1 : i32, i32
  }
  func.func @transform_2(%arg0: i32, %arg1: i32) -> (i32, i32, i32) {
    %c0_i32 = arith.constant 0 : i32
    %c0_i32_0 = arith.constant 0 : i32
    %c0_i32_1 = arith.constant 0 : i32
    return %c0_i32, %c0_i32_0, %arg1 : i32, i32, i32
  }
  func.func @transform_3(%arg0: i32, %arg1: i32) -> (i32, i32) {
    %c0_i32 = arith.constant 0 : i32
    return %arg0, %arg1 : i32, i32
  }
  func.func @transform_4(%arg0: i32, %arg1: i32) -> (i32, i32) {
    %c0_i32 = arith.constant 0 : i32
    return %arg0, %arg1 : i32, i32
  }
}

module attributes {stable_mosaic.version = 11 : i64} {
  func.func @_mm_kernel(%arg0: i32, %arg1: i32, %arg2: memref<32x256xbf16, #tpu.memory_space<vmem>>, %arg3: memref<256x128xbf16, #tpu.memory_space<vmem>>, %arg4: memref<2x1x128xf32, #tpu.memory_space<vmem>>, %arg5: memref<32x128xf32, #tpu.memory_space<vmem>>) attributes {dimension_semantics = [#tpu.dimension_semantics<parallel>, #tpu.dimension_semantics<parallel>], iteration_bounds = array<i64: 1, 1>, scalar_prefetch = 0 : i64, scratch_operands = 0 : i64, tpu.core_type = #tpu.core_type<tc>, window_params = [{transform_indices = @transform_0, window_bounds = array<i64: 32, 256>}, {transform_indices = @transform_1, window_bounds = array<i64: 256, 128>}, {transform_indices = @transform_2, window_bounds = array<i64: 2, 1, 128>}, {transform_indices = @transform_3, window_bounds = array<i64: 32, 128>}]} {
    %c0 = arith.constant 0 : index
    %c0_0 = arith.constant 0 : index
    %0 = vector.load %arg2[%c0, %c0_0] : memref<32x256xbf16, #tpu.memory_space<vmem>>, vector<32x256xbf16>
    %c0_1 = arith.constant 0 : index
    %c0_2 = arith.constant 0 : index
    %1 = vector.load %arg3[%c0_1, %c0_2] : memref<256x128xbf16, #tpu.memory_space<vmem>>, vector<256x128xbf16>
    %cst = arith.constant dense<0.000000e+00> : vector<32x128xf32>
    %2 = tpu.matmul %0, %1, %cst {dimension_numbers = #tpu.dot_dimension_numbers<[1], [0], [0], [1], [0, 0, 1, 1], [], []>} : vector<32x256xbf16>, vector<256x128xbf16>, vector<32x128xf32> -> vector<32x128xf32>
    %c0_3 = arith.constant 0 : index
    %c0_4 = arith.constant 0 : index
    %c0_5 = arith.constant 0 : index
    %3 = vector.load %arg4[%c0_3, %c0_4, %c0_5] : memref<2x1x128xf32, #tpu.memory_space<vmem>>, vector<1x1x128xf32>
    %4 = vector.shape_cast %3 : vector<1x1x128xf32> to vector<1x128xf32>
    %5 = vector.broadcast %4 : vector<1x128xf32> to vector<32x128xf32>
    %6 = arith.mulf %2, %5 : vector<32x128xf32>
    %c1 = arith.constant 1 : index
    %c0_6 = arith.constant 0 : index
    %c0_7 = arith.constant 0 : index
    %7 = vector.load %arg4[%c1, %c0_6, %c0_7] : memref<2x1x128xf32, #tpu.memory_space<vmem>>, vector<1x1x128xf32>
    %8 = vector.shape_cast %7 : vector<1x1x128xf32> to vector<1x128xf32>
    %9 = vector.broadcast %8 : vector<1x128xf32> to vector<32x128xf32>
    %10 = arith.addf %6, %9 : vector<32x128xf32>
    %cst_8 = arith.constant 0.000000e+00 : f32
    %11 = vector.broadcast %cst_8 : f32 to vector<32x128xf32>
    %12 = arith.maximumf %10, %11 : vector<32x128xf32>
    %c0_9 = arith.constant 0 : index
    %c0_10 = arith.constant 0 : index
    %13 = vector.load %arg5[%c0_9, %c0_10] : memref<32x128xf32, #tpu.memory_space<vmem>>, vector<32x128xf32>
    tpu.vector_store %arg5[%c0_9, %c0_10], %12 {strides = array<i32>} : memref<32x128xf32, #tpu.memory_space<vmem>>, vector<32x128xf32>,
    return
  }
  func.func @transform_0(%arg0: i32, %arg1: i32) -> (i32, i32) {
    %c0_i32 = arith.constant 0 : i32
    %c0_i32_0 = arith.constant 0 : i32
    return %arg0, %c0_i32 : i32, i32
  }
  func.func @transform_1(%arg0: i32, %arg1: i32) -> (i32, i32) {
    %c0_i32 = arith.constant 0 : i32
    %c0_i32_0 = arith.constant 0 : i32
    return %c0_i32, %arg1 : i32, i32
  }
  func.func @transform_2(%arg0: i32, %arg1: i32) -> (i32, i32, i32) {
    %c0_i32 = arith.constant 0 : i32
    %c0_i32_0 = arith.constant 0 : i32
    %c0_i32_1 = arith.constant 0 : i32
    return %c0_i32, %c0_i32_0, %arg1 : i32, i32, i32
  }
  func.func @transform_3(%arg0: i32, %arg1: i32) -> (i32, i32) {
    %c0_i32 = arith.constant 0 : i32
    return %arg0, %arg1 : i32, i32
  }
}

module attributes {stable_mosaic.version = 11 : i64} {
  func.func @_mm_kernel(%arg0: i32, %arg1: i32, %arg2: memref<32x128xbf16, #tpu.memory_space<vmem>>, %arg3: memref<128x128xbf16, #tpu.memory_space<vmem>>, %arg4: memref<2x1x128xf32, #tpu.memory_space<vmem>>, %arg5: memref<32x128xf32, #tpu.memory_space<vmem>>) attributes {dimension_semantics = [#tpu.dimension_semantics<parallel>, #tpu.dimension_semantics<parallel>], iteration_bounds = array<i64: 1, 1>, scalar_prefetch = 0 : i64, scratch_operands = 0 : i64, tpu.core_type = #tpu.core_type<tc>, window_params = [{transform_indices = @transform_0, window_bounds = array<i64: 32, 128>}, {transform_indices = @transform_1, window_bounds = array<i64: 128, 128>}, {transform_indices = @transform_2, window_bounds = array<i64: 2, 1, 128>}, {transform_indices = @transform_3, window_bounds = array<i64: 32, 128>}]} {
    %c0 = arith.constant 0 : index
    %c0_0 = arith.constant 0 : index
    %0 = vector.load %arg2[%c0, %c0_0] : memref<32x128xbf16, #tpu.memory_space<vmem>>, vector<32x128xbf16>
    %c0_1 = arith.constant 0 : index
    %c0_2 = arith.constant 0 : index
    %1 = vector.load %arg3[%c0_1, %c0_2] : memref<128x128xbf16, #tpu.memory_space<vmem>>, vector<128x128xbf16>
    %cst = arith.constant dense<0.000000e+00> : vector<32x128xf32>
    %2 = tpu.matmul %0, %1, %cst {dimension_numbers = #tpu.dot_dimension_numbers<[1], [0], [0], [1], [0, 0, 1, 1], [], []>} : vector<32x128xbf16>, vector<128x128xbf16>, vector<32x128xf32> -> vector<32x128xf32>
    %c0_3 = arith.constant 0 : index
    %c0_4 = arith.constant 0 : index
    %c0_5 = arith.constant 0 : index
    %3 = vector.load %arg4[%c0_3, %c0_4, %c0_5] : memref<2x1x128xf32, #tpu.memory_space<vmem>>, vector<1x1x128xf32>
    %4 = vector.shape_cast %3 : vector<1x1x128xf32> to vector<1x128xf32>
    %5 = vector.broadcast %4 : vector<1x128xf32> to vector<32x128xf32>
    %6 = arith.mulf %2, %5 : vector<32x128xf32>
    %c1 = arith.constant 1 : index
    %c0_6 = arith.constant 0 : index
    %c0_7 = arith.constant 0 : index
    %7 = vector.load %arg4[%c1, %c0_6, %c0_7] : memref<2x1x128xf32, #tpu.memory_space<vmem>>, vector<1x1x128xf32>
    %8 = vector.shape_cast %7 : vector<1x1x128xf32> to vector<1x128xf32>
    %9 = vector.broadcast %8 : vector<1x128xf32> to vector<32x128xf32>
    %10 = arith.addf %6, %9 : vector<32x128xf32>
    %c0_8 = arith.constant 0 : index
    %c0_9 = arith.constant 0 : index
    %11 = vector.load %arg5[%c0_8, %c0_9] : memref<32x128xf32, #tpu.memory_space<vmem>>, vector<32x128xf32>
    tpu.vector_store %arg5[%c0_8, %c0_9], %10 {strides = array<i32>} : memref<32x128xf32, #tpu.memory_space<vmem>>, vector<32x128xf32>,
    return
  }
  func.func @transform_0(%arg0: i32, %arg1: i32) -> (i32, i32) {
    %c0_i32 = arith.constant 0 : i32
    %c0_i32_0 = arith.constant 0 : i32
    return %arg0, %c0_i32 : i32, i32
  }
  func.func @transform_1(%arg0: i32, %arg1: i32) -> (i32, i32) {
    %c0_i32 = arith.constant 0 : i32
    %c0_i32_0 = arith.constant 0 : i32
    return %c0_i32, %arg1 : i32, i32
  }
  func.func @transform_2(%arg0: i32, %arg1: i32) -> (i32, i32, i32) {
    %c0_i32 = arith.constant 0 : i32
    %c0_i32_0 = arith.constant 0 : i32
    %c0_i32_1 = arith.constant 0 : i32
    return %c0_i32, %c0_i32_0, %arg1 : i32, i32, i32
  }
  func.func @transform_3(%arg0: i32, %arg1: i32) -> (i32, i32) {
    %c0_i32 = arith.constant 0 : i32
    return %arg0, %arg1 : i32, i32
  }
}

module attributes {stable_mosaic.version = 11 : i64} {
  func.func @_mm_kernel(%arg0: i32, %arg1: i32, %arg2: memref<16x256xbf16, #tpu.memory_space<vmem>>, %arg3: memref<256x128xbf16, #tpu.memory_space<vmem>>, %arg4: memref<2x1x128xf32, #tpu.memory_space<vmem>>, %arg5: memref<16x128xf32, #tpu.memory_space<vmem>>) attributes {dimension_semantics = [#tpu.dimension_semantics<parallel>, #tpu.dimension_semantics<parallel>], iteration_bounds = array<i64: 1, 1>, scalar_prefetch = 0 : i64, scratch_operands = 0 : i64, tpu.core_type = #tpu.core_type<tc>, window_params = [{transform_indices = @transform_0, window_bounds = array<i64: 16, 256>}, {transform_indices = @transform_1, window_bounds = array<i64: 256, 128>}, {transform_indices = @transform_2, window_bounds = array<i64: 2, 1, 128>}, {transform_indices = @transform_3, window_bounds = array<i64: 16, 128>}]} {
    %c0 = arith.constant 0 : index
    %c0_0 = arith.constant 0 : index
    %0 = vector.load %arg2[%c0, %c0_0] : memref<16x256xbf16, #tpu.memory_space<vmem>>, vector<16x256xbf16>
    %c0_1 = arith.constant 0 : index
    %c0_2 = arith.constant 0 : index
    %1 = vector.load %arg3[%c0_1, %c0_2] : memref<256x128xbf16, #tpu.memory_space<vmem>>, vector<256x128xbf16>
    %cst = arith.constant dense<0.000000e+00> : vector<16x128xf32>
    %2 = tpu.matmul %0, %1, %cst {dimension_numbers = #tpu.dot_dimension_numbers<[1], [0], [0], [1], [0, 0, 1, 1], [], []>} : vector<16x256xbf16>, vector<256x128xbf16>, vector<16x128xf32> -> vector<16x128xf32>
    %c0_3 = arith.constant 0 : index
    %c0_4 = arith.constant 0 : index
    %c0_5 = arith.constant 0 : index
    %3 = vector.load %arg4[%c0_3, %c0_4, %c0_5] : memref<2x1x128xf32, #tpu.memory_space<vmem>>, vector<1x1x128xf32>
    %4 = vector.shape_cast %3 : vector<1x1x128xf32> to vector<1x128xf32>
    %5 = vector.broadcast %4 : vector<1x128xf32> to vector<16x128xf32>
    %6 = arith.mulf %2, %5 : vector<16x128xf32>
    %c1 = arith.constant 1 : index
    %c0_6 = arith.constant 0 : index
    %c0_7 = arith.constant 0 : index
    %7 = vector.load %arg4[%c1, %c0_6, %c0_7] : memref<2x1x128xf32, #tpu.memory_space<vmem>>, vector<1x1x128xf32>
    %8 = vector.shape_cast %7 : vector<1x1x128xf32> to vector<1x128xf32>
    %9 = vector.broadcast %8 : vector<1x128xf32> to vector<16x128xf32>
    %10 = arith.addf %6, %9 : vector<16x128xf32>
    %cst_8 = arith.constant 0.000000e+00 : f32
    %11 = vector.broadcast %cst_8 : f32 to vector<16x128xf32>
    %12 = arith.maximumf %10, %11 : vector<16x128xf32>
    %c0_9 = arith.constant 0 : index
    %c0_10 = arith.constant 0 : index
    %13 = vector.load %arg5[%c0_9, %c0_10] : memref<16x128xf32, #tpu.memory_space<vmem>>, vector<16x128xf32>
    tpu.vector_store %arg5[%c0_9, %c0_10], %12 {strides = array<i32>} : memref<16x128xf32, #tpu.memory_space<vmem>>, vector<16x128xf32>,
    return
  }
  func.func @transform_0(%arg0: i32, %arg1: i32) -> (i32, i32) {
    %c0_i32 = arith.constant 0 : i32
    %c0_i32_0 = arith.constant 0 : i32
    return %arg0, %c0_i32 : i32, i32
  }
  func.func @transform_1(%arg0: i32, %arg1: i32) -> (i32, i32) {
    %c0_i32 = arith.constant 0 : i32
    %c0_i32_0 = arith.constant 0 : i32
    return %c0_i32, %arg1 : i32, i32
  }
  func.func @transform_2(%arg0: i32, %arg1: i32) -> (i32, i32, i32) {
    %c0_i32 = arith.constant 0 : i32
    %c0_i32_0 = arith.constant 0 : i32
    %c0_i32_1 = arith.constant 0 : i32
    return %c0_i32, %c0_i32_0, %arg1 : i32, i32, i32
  }
  func.func @transform_3(%arg0: i32, %arg1: i32) -> (i32, i32) {
    %c0_i32 = arith.constant 0 : i32
    return %arg0, %arg1 : i32, i32
  }
}

module attributes {stable_mosaic.version = 11 : i64} {
  func.func @_mm_kernel(%arg0: i32, %arg1: i32, %arg2: memref<16x128xbf16, #tpu.memory_space<vmem>>, %arg3: memref<128x128xbf16, #tpu.memory_space<vmem>>, %arg4: memref<2x1x128xf32, #tpu.memory_space<vmem>>, %arg5: memref<16x128xf32, #tpu.memory_space<vmem>>) attributes {dimension_semantics = [#tpu.dimension_semantics<parallel>, #tpu.dimension_semantics<parallel>], iteration_bounds = array<i64: 1, 1>, scalar_prefetch = 0 : i64, scratch_operands = 0 : i64, tpu.core_type = #tpu.core_type<tc>, window_params = [{transform_indices = @transform_0, window_bounds = array<i64: 16, 128>}, {transform_indices = @transform_1, window_bounds = array<i64: 128, 128>}, {transform_indices = @transform_2, window_bounds = array<i64: 2, 1, 128>}, {transform_indices = @transform_3, window_bounds = array<i64: 16, 128>}]} {
    %c0 = arith.constant 0 : index
    %c0_0 = arith.constant 0 : index
    %0 = vector.load %arg2[%c0, %c0_0] : memref<16x128xbf16, #tpu.memory_space<vmem>>, vector<16x128xbf16>
    %c0_1 = arith.constant 0 : index
    %c0_2 = arith.constant 0 : index
    %1 = vector.load %arg3[%c0_1, %c0_2] : memref<128x128xbf16, #tpu.memory_space<vmem>>, vector<128x128xbf16>
    %cst = arith.constant dense<0.000000e+00> : vector<16x128xf32>
    %2 = tpu.matmul %0, %1, %cst {dimension_numbers = #tpu.dot_dimension_numbers<[1], [0], [0], [1], [0, 0, 1, 1], [], []>} : vector<16x128xbf16>, vector<128x128xbf16>, vector<16x128xf32> -> vector<16x128xf32>
    %c0_3 = arith.constant 0 : index
    %c0_4 = arith.constant 0 : index
    %c0_5 = arith.constant 0 : index
    %3 = vector.load %arg4[%c0_3, %c0_4, %c0_5] : memref<2x1x128xf32, #tpu.memory_space<vmem>>, vector<1x1x128xf32>
    %4 = vector.shape_cast %3 : vector<1x1x128xf32> to vector<1x128xf32>
    %5 = vector.broadcast %4 : vector<1x128xf32> to vector<16x128xf32>
    %6 = arith.mulf %2, %5 : vector<16x128xf32>
    %c1 = arith.constant 1 : index
    %c0_6 = arith.constant 0 : index
    %c0_7 = arith.constant 0 : index
    %7 = vector.load %arg4[%c1, %c0_6, %c0_7] : memref<2x1x128xf32, #tpu.memory_space<vmem>>, vector<1x1x128xf32>
    %8 = vector.shape_cast %7 : vector<1x1x128xf32> to vector<1x128xf32>
    %9 = vector.broadcast %8 : vector<1x128xf32> to vector<16x128xf32>
    %10 = arith.addf %6, %9 : vector<16x128xf32>
    %c0_8 = arith.constant 0 : index
    %c0_9 = arith.constant 0 : index
    %11 = vector.load %arg5[%c0_8, %c0_9] : memref<16x128xf32, #tpu.memory_space<vmem>>, vector<16x128xf32>
    tpu.vector_store %arg5[%c0_8, %c0_9], %10 {strides = array<i32>} : memref<16x128xf32, #tpu.memory_space<vmem>>, vector<16x128xf32>,
    return
  }
  func.func @transform_0(%arg0: i32, %arg1: i32) -> (i32, i32) {
    %c0_i32 = arith.constant 0 : i32
    %c0_i32_0 = arith.constant 0 : i32
    return %arg0, %c0_i32 : i32, i32
  }
  func.func @transform_1(%arg0: i32, %arg1: i32) -> (i32, i32) {
    %c0_i32 = arith.constant 0 : i32
    %c0_i32_0 = arith.constant 0 : i32
    return %c0_i32, %arg1 : i32, i32
  }
  func.func @transform_2(%arg0: i32, %arg1: i32) -> (i32, i32, i32) {
    %c0_i32 = arith.constant 0 : i32
    %c0_i32_0 = arith.constant 0 : i32
    %c0_i32_1 = arith.constant 0 : i32
    return %c0_i32, %c0_i32_0, %arg1 : i32, i32, i32
  }
  func.func @transform_3(%arg0: i32, %arg1: i32) -> (i32, i32) {
    %c0_i32 = arith.constant 0 : i32
    return %arg0, %arg1 : i32, i32
  }
}

module attributes {stable_mosaic.version = 11 : i64} {
  func.func @_mm_kernel(%arg0: i32, %arg1: i32, %arg2: memref<16x384xbf16, #tpu.memory_space<vmem>>, %arg3: memref<384x128xbf16, #tpu.memory_space<vmem>>, %arg4: memref<2x1x128xf32, #tpu.memory_space<vmem>>, %arg5: memref<16x128xf32, #tpu.memory_space<vmem>>, %arg6: memref<16x128xf32, #tpu.memory_space<vmem>>) attributes {dimension_semantics = [#tpu.dimension_semantics<parallel>, #tpu.dimension_semantics<parallel>], iteration_bounds = array<i64: 1, 1>, scalar_prefetch = 0 : i64, scratch_operands = 0 : i64, tpu.core_type = #tpu.core_type<tc>, window_params = [{transform_indices = @transform_0, window_bounds = array<i64: 16, 384>}, {transform_indices = @transform_1, window_bounds = array<i64: 384, 128>}, {transform_indices = @transform_2, window_bounds = array<i64: 2, 1, 128>}, {transform_indices = @transform_3, window_bounds = array<i64: 16, 128>}, {transform_indices = @transform_4, window_bounds = array<i64: 16, 128>}]} {
    %c0 = arith.constant 0 : index
    %c0_0 = arith.constant 0 : index
    %0 = vector.load %arg2[%c0, %c0_0] : memref<16x384xbf16, #tpu.memory_space<vmem>>, vector<16x384xbf16>
    %c0_1 = arith.constant 0 : index
    %c0_2 = arith.constant 0 : index
    %1 = vector.load %arg3[%c0_1, %c0_2] : memref<384x128xbf16, #tpu.memory_space<vmem>>, vector<384x128xbf16>
    %cst = arith.constant dense<0.000000e+00> : vector<16x128xf32>
    %2 = tpu.matmul %0, %1, %cst {dimension_numbers = #tpu.dot_dimension_numbers<[1], [0], [0], [1], [0, 0, 1, 1], [], []>} : vector<16x384xbf16>, vector<384x128xbf16>, vector<16x128xf32> -> vector<16x128xf32>
    %c0_3 = arith.constant 0 : index
    %c0_4 = arith.constant 0 : index
    %c0_5 = arith.constant 0 : index
    %3 = vector.load %arg4[%c0_3, %c0_4, %c0_5] : memref<2x1x128xf32, #tpu.memory_space<vmem>>, vector<1x1x128xf32>
    %4 = vector.shape_cast %3 : vector<1x1x128xf32> to vector<1x128xf32>
    %5 = vector.broadcast %4 : vector<1x128xf32> to vector<16x128xf32>
    %6 = arith.mulf %2, %5 : vector<16x128xf32>
    %c1 = arith.constant 1 : index
    %c0_6 = arith.constant 0 : index
    %c0_7 = arith.constant 0 : index
    %7 = vector.load %arg4[%c1, %c0_6, %c0_7] : memref<2x1x128xf32, #tpu.memory_space<vmem>>, vector<1x1x128xf32>
    %8 = vector.shape_cast %7 : vector<1x1x128xf32> to vector<1x128xf32>
    %9 = vector.broadcast %8 : vector<1x128xf32> to vector<16x128xf32>
    %10 = arith.addf %6, %9 : vector<16x128xf32>
    %c0_8 = arith.constant 0 : index
    %c0_9 = arith.constant 0 : index
    %11 = vector.load %arg5[%c0_8, %c0_9] : memref<16x128xf32, #tpu.memory_space<vmem>>, vector<16x128xf32>
    %12 = arith.addf %10, %11 : vector<16x128xf32>
    %cst_10 = arith.constant 0.000000e+00 : f32
    %13 = vector.broadcast %cst_10 : f32 to vector<16x128xf32>
    %14 = arith.maximumf %12, %13 : vector<16x128xf32>
    %c0_11 = arith.constant 0 : index
    %c0_12 = arith.constant 0 : index
    %15 = vector.load %arg6[%c0_11, %c0_12] : memref<16x128xf32, #tpu.memory_space<vmem>>, vector<16x128xf32>
    tpu.vector_store %arg6[%c0_11, %c0_12], %14 {strides = array<i32>} : memref<16x128xf32, #tpu.memory_space<vmem>>, vector<16x128xf32>,
    return
  }
  func.func @transform_0(%arg0: i32, %arg1: i32) -> (i32, i32) {
    %c0_i32 = arith.constant 0 : i32
    %c0_i32_0 = arith.constant 0 : i32
    return %arg0, %c0_i32 : i32, i32
  }
  func.func @transform_1(%arg0: i32, %arg1: i32) -> (i32, i32) {
    %c0_i32 = arith.constant 0 : i32
    %c0_i32_0 = arith.constant 0 : i32
    return %c0_i32, %arg1 : i32, i32
  }
  func.func @transform_2(%arg0: i32, %arg1: i32) -> (i32, i32, i32) {
    %c0_i32 = arith.constant 0 : i32
    %c0_i32_0 = arith.constant 0 : i32
    %c0_i32_1 = arith.constant 0 : i32
    return %c0_i32, %c0_i32_0, %arg1 : i32, i32, i32
  }
  func.func @transform_3(%arg0: i32, %arg1: i32) -> (i32, i32) {
    %c0_i32 = arith.constant 0 : i32
    return %arg0, %arg1 : i32, i32
  }
  func.func @transform_4(%arg0: i32, %arg1: i32) -> (i32, i32) {
    %c0_i32 = arith.constant 0 : i32
    return %arg0, %arg1 : i32, i32
  }
}

module attributes {stable_mosaic.version = 11 : i64} {
  func.func @_mm_kernel(%arg0: i32, %arg1: i32, %arg2: memref<16x384xbf16, #tpu.memory_space<vmem>>, %arg3: memref<384x128xbf16, #tpu.memory_space<vmem>>, %arg4: memref<2x1x128xf32, #tpu.memory_space<vmem>>, %arg5: memref<16x128xf32, #tpu.memory_space<vmem>>) attributes {dimension_semantics = [#tpu.dimension_semantics<parallel>, #tpu.dimension_semantics<parallel>], iteration_bounds = array<i64: 1, 1>, scalar_prefetch = 0 : i64, scratch_operands = 0 : i64, tpu.core_type = #tpu.core_type<tc>, window_params = [{transform_indices = @transform_0, window_bounds = array<i64: 16, 384>}, {transform_indices = @transform_1, window_bounds = array<i64: 384, 128>}, {transform_indices = @transform_2, window_bounds = array<i64: 2, 1, 128>}, {transform_indices = @transform_3, window_bounds = array<i64: 16, 128>}]} {
    %c0 = arith.constant 0 : index
    %c0_0 = arith.constant 0 : index
    %0 = vector.load %arg2[%c0, %c0_0] : memref<16x384xbf16, #tpu.memory_space<vmem>>, vector<16x384xbf16>
    %c0_1 = arith.constant 0 : index
    %c0_2 = arith.constant 0 : index
    %1 = vector.load %arg3[%c0_1, %c0_2] : memref<384x128xbf16, #tpu.memory_space<vmem>>, vector<384x128xbf16>
    %cst = arith.constant dense<0.000000e+00> : vector<16x128xf32>
    %2 = tpu.matmul %0, %1, %cst {dimension_numbers = #tpu.dot_dimension_numbers<[1], [0], [0], [1], [0, 0, 1, 1], [], []>} : vector<16x384xbf16>, vector<384x128xbf16>, vector<16x128xf32> -> vector<16x128xf32>
    %c0_3 = arith.constant 0 : index
    %c0_4 = arith.constant 0 : index
    %c0_5 = arith.constant 0 : index
    %3 = vector.load %arg4[%c0_3, %c0_4, %c0_5] : memref<2x1x128xf32, #tpu.memory_space<vmem>>, vector<1x1x128xf32>
    %4 = vector.shape_cast %3 : vector<1x1x128xf32> to vector<1x128xf32>
    %5 = vector.broadcast %4 : vector<1x128xf32> to vector<16x128xf32>
    %6 = arith.mulf %2, %5 : vector<16x128xf32>
    %c1 = arith.constant 1 : index
    %c0_6 = arith.constant 0 : index
    %c0_7 = arith.constant 0 : index
    %7 = vector.load %arg4[%c1, %c0_6, %c0_7] : memref<2x1x128xf32, #tpu.memory_space<vmem>>, vector<1x1x128xf32>
    %8 = vector.shape_cast %7 : vector<1x1x128xf32> to vector<1x128xf32>
    %9 = vector.broadcast %8 : vector<1x128xf32> to vector<16x128xf32>
    %10 = arith.addf %6, %9 : vector<16x128xf32>
    %cst_8 = arith.constant 0.000000e+00 : f32
    %11 = vector.broadcast %cst_8 : f32 to vector<16x128xf32>
    %12 = arith.maximumf %10, %11 : vector<16x128xf32>
    %c0_9 = arith.constant 0 : index
    %c0_10 = arith.constant 0 : index
    %13 = vector.load %arg5[%c0_9, %c0_10] : memref<16x128xf32, #tpu.memory_space<vmem>>, vector<16x128xf32>
    tpu.vector_store %arg5[%c0_9, %c0_10], %12 {strides = array<i32>} : memref<16x128xf32, #tpu.memory_space<vmem>>, vector<16x128xf32>,
    return
  }
  func.func @transform_0(%arg0: i32, %arg1: i32) -> (i32, i32) {
    %c0_i32 = arith.constant 0 : i32
    %c0_i32_0 = arith.constant 0 : i32
    return %arg0, %c0_i32 : i32, i32
  }
  func.func @transform_1(%arg0: i32, %arg1: i32) -> (i32, i32) {
    %c0_i32 = arith.constant 0 : i32
    %c0_i32_0 = arith.constant 0 : i32
    return %c0_i32, %arg1 : i32, i32
  }
  func.func @transform_2(%arg0: i32, %arg1: i32) -> (i32, i32, i32) {
    %c0_i32 = arith.constant 0 : i32
    %c0_i32_0 = arith.constant 0 : i32
    %c0_i32_1 = arith.constant 0 : i32
    return %c0_i32, %c0_i32_0, %arg1 : i32, i32, i32
  }
  func.func @transform_3(%arg0: i32, %arg1: i32) -> (i32, i32) {
    %c0_i32 = arith.constant 0 : i32
    return %arg0, %arg1 : i32, i32
  }
}

module attributes {stable_mosaic.version = 11 : i64} {
  func.func @_mm_kernel(%arg0: i32, %arg1: i32, %arg2: memref<16x640xbf16, #tpu.memory_space<vmem>>, %arg3: memref<640x128xbf16, #tpu.memory_space<vmem>>, %arg4: memref<2x1x128xf32, #tpu.memory_space<vmem>>, %arg5: memref<16x128xf32, #tpu.memory_space<vmem>>, %arg6: memref<16x128xf32, #tpu.memory_space<vmem>>) attributes {dimension_semantics = [#tpu.dimension_semantics<parallel>, #tpu.dimension_semantics<parallel>], iteration_bounds = array<i64: 1, 1>, scalar_prefetch = 0 : i64, scratch_operands = 0 : i64, tpu.core_type = #tpu.core_type<tc>, window_params = [{transform_indices = @transform_0, window_bounds = array<i64: 16, 640>}, {transform_indices = @transform_1, window_bounds = array<i64: 640, 128>}, {transform_indices = @transform_2, window_bounds = array<i64: 2, 1, 128>}, {transform_indices = @transform_3, window_bounds = array<i64: 16, 128>}, {transform_indices = @transform_4, window_bounds = array<i64: 16, 128>}]} {
    %c0 = arith.constant 0 : index
    %c0_0 = arith.constant 0 : index
    %0 = vector.load %arg2[%c0, %c0_0] : memref<16x640xbf16, #tpu.memory_space<vmem>>, vector<16x640xbf16>
    %c0_1 = arith.constant 0 : index
    %c0_2 = arith.constant 0 : index
    %1 = vector.load %arg3[%c0_1, %c0_2] : memref<640x128xbf16, #tpu.memory_space<vmem>>, vector<640x128xbf16>
    %cst = arith.constant dense<0.000000e+00> : vector<16x128xf32>
    %2 = tpu.matmul %0, %1, %cst {dimension_numbers = #tpu.dot_dimension_numbers<[1], [0], [0], [1], [0, 0, 1, 1], [], []>} : vector<16x640xbf16>, vector<640x128xbf16>, vector<16x128xf32> -> vector<16x128xf32>
    %c0_3 = arith.constant 0 : index
    %c0_4 = arith.constant 0 : index
    %c0_5 = arith.constant 0 : index
    %3 = vector.load %arg4[%c0_3, %c0_4, %c0_5] : memref<2x1x128xf32, #tpu.memory_space<vmem>>, vector<1x1x128xf32>
    %4 = vector.shape_cast %3 : vector<1x1x128xf32> to vector<1x128xf32>
    %5 = vector.broadcast %4 : vector<1x128xf32> to vector<16x128xf32>
    %6 = arith.mulf %2, %5 : vector<16x128xf32>
    %c1 = arith.constant 1 : index
    %c0_6 = arith.constant 0 : index
    %c0_7 = arith.constant 0 : index
    %7 = vector.load %arg4[%c1, %c0_6, %c0_7] : memref<2x1x128xf32, #tpu.memory_space<vmem>>, vector<1x1x128xf32>
    %8 = vector.shape_cast %7 : vector<1x1x128xf32> to vector<1x128xf32>
    %9 = vector.broadcast %8 : vector<1x128xf32> to vector<16x128xf32>
    %10 = arith.addf %6, %9 : vector<16x128xf32>
    %c0_8 = arith.constant 0 : index
    %c0_9 = arith.constant 0 : index
    %11 = vector.load %arg5[%c0_8, %c0_9] : memref<16x128xf32, #tpu.memory_space<vmem>>, vector<16x128xf32>
    %12 = arith.addf %10, %11 : vector<16x128xf32>
    %cst_10 = arith.constant 0.000000e+00 : f32
    %13 = vector.broadcast %cst_10 : f32 to vector<16x128xf32>
    %14 = arith.maximumf %12, %13 : vector<16x128xf32>
    %c0_11 = arith.constant 0 : index
    %c0_12 = arith.constant 0 : index
    %15 = vector.load %arg6[%c0_11, %c0_12] : memref<16x128xf32, #tpu.memory_space<vmem>>, vector<16x128xf32>
    tpu.vector_store %arg6[%c0_11, %c0_12], %14 {strides = array<i32>} : memref<16x128xf32, #tpu.memory_space<vmem>>, vector<16x128xf32>,
    return
  }
  func.func @transform_0(%arg0: i32, %arg1: i32) -> (i32, i32) {
    %c0_i32 = arith.constant 0 : i32
    %c0_i32_0 = arith.constant 0 : i32
    return %arg0, %c0_i32 : i32, i32
  }
  func.func @transform_1(%arg0: i32, %arg1: i32) -> (i32, i32) {
    %c0_i32 = arith.constant 0 : i32
    %c0_i32_0 = arith.constant 0 : i32
    return %c0_i32, %arg1 : i32, i32
  }
  func.func @transform_2(%arg0: i32, %arg1: i32) -> (i32, i32, i32) {
    %c0_i32 = arith.constant 0 : i32
    %c0_i32_0 = arith.constant 0 : i32
    %c0_i32_1 = arith.constant 0 : i32
    return %c0_i32, %c0_i32_0, %arg1 : i32, i32, i32
  }
  func.func @transform_3(%arg0: i32, %arg1: i32) -> (i32, i32) {
    %c0_i32 = arith.constant 0 : i32
    return %arg0, %arg1 : i32, i32
  }
  func.func @transform_4(%arg0: i32, %arg1: i32) -> (i32, i32) {
    %c0_i32 = arith.constant 0 : i32
    return %arg0, %arg1 : i32, i32
  }
}

module attributes {stable_mosaic.version = 11 : i64} {
  func.func @_gap_kernel(%arg0: memref<1x128xf32, #tpu.memory_space<vmem>>, %arg1: memref<1x128xf32, #tpu.memory_space<vmem>>) attributes {dimension_semantics = [], scalar_prefetch = 0 : i64, scratch_operands = 0 : i64, tpu.core_type = #tpu.core_type<tc>} {
    %c0 = arith.constant 0 : index
    %c0_0 = arith.constant 0 : index
    %0 = vector.load %arg0[%c0, %c0_0] : memref<1x128xf32, #tpu.memory_space<vmem>>, vector<1x128xf32>
    %cst = arith.constant dense<0.000000e+00> : vector<128xf32>
    %1 = vector.multi_reduction <add>, %0, %cst [0] : vector<1x128xf32> to vector<128xf32>
    %2 = vector.shape_cast %1 : vector<128xf32> to vector<1x128xf32>
    %cst_1 = arith.constant 1.000000e+00 : f32
    %3 = vector.broadcast %cst_1 : f32 to vector<1x128xf32>
    %4 = arith.divf %2, %3 : vector<1x128xf32>
    %c0_2 = arith.constant 0 : index
    %c0_3 = arith.constant 0 : index
    %5 = vector.load %arg1[%c0_2, %c0_3] : memref<1x128xf32, #tpu.memory_space<vmem>>, vector<1x128xf32>
    tpu.vector_store %arg1[%c0_2, %c0_3], %4 {strides = array<i32>} : memref<1x128xf32, #tpu.memory_space<vmem>>, vector<1x128xf32>,
    return
  }
}

module attributes {stable_mosaic.version = 11 : i64} {
  func.func @_mm_kernel(%arg0: i32, %arg1: i32, %arg2: memref<16x640xbf16, #tpu.memory_space<vmem>>, %arg3: memref<640x128xbf16, #tpu.memory_space<vmem>>, %arg4: memref<2x1x128xf32, #tpu.memory_space<vmem>>, %arg5: memref<16x128xf32, #tpu.memory_space<vmem>>) attributes {dimension_semantics = [#tpu.dimension_semantics<parallel>, #tpu.dimension_semantics<parallel>], iteration_bounds = array<i64: 1, 1>, scalar_prefetch = 0 : i64, scratch_operands = 0 : i64, tpu.core_type = #tpu.core_type<tc>, window_params = [{transform_indices = @transform_0, window_bounds = array<i64: 16, 640>}, {transform_indices = @transform_1, window_bounds = array<i64: 640, 128>}, {transform_indices = @transform_2, window_bounds = array<i64: 2, 1, 128>}, {transform_indices = @transform_3, window_bounds = array<i64: 16, 128>}]} {
    %c0 = arith.constant 0 : index
    %c0_0 = arith.constant 0 : index
    %0 = vector.load %arg2[%c0, %c0_0] : memref<16x640xbf16, #tpu.memory_space<vmem>>, vector<16x640xbf16>
    %c0_1 = arith.constant 0 : index
    %c0_2 = arith.constant 0 : index
    %1 = vector.load %arg3[%c0_1, %c0_2] : memref<640x128xbf16, #tpu.memory_space<vmem>>, vector<640x128xbf16>
    %cst = arith.constant dense<0.000000e+00> : vector<16x128xf32>
    %2 = tpu.matmul %0, %1, %cst {dimension_numbers = #tpu.dot_dimension_numbers<[1], [0], [0], [1], [0, 0, 1, 1], [], []>} : vector<16x640xbf16>, vector<640x128xbf16>, vector<16x128xf32> -> vector<16x128xf32>
    %c0_3 = arith.constant 0 : index
    %c0_4 = arith.constant 0 : index
    %c0_5 = arith.constant 0 : index
    %3 = vector.load %arg4[%c0_3, %c0_4, %c0_5] : memref<2x1x128xf32, #tpu.memory_space<vmem>>, vector<1x1x128xf32>
    %4 = vector.shape_cast %3 : vector<1x1x128xf32> to vector<1x128xf32>
    %5 = vector.broadcast %4 : vector<1x128xf32> to vector<16x128xf32>
    %6 = arith.mulf %2, %5 : vector<16x128xf32>
    %c1 = arith.constant 1 : index
    %c0_6 = arith.constant 0 : index
    %c0_7 = arith.constant 0 : index
    %7 = vector.load %arg4[%c1, %c0_6, %c0_7] : memref<2x1x128xf32, #tpu.memory_space<vmem>>, vector<1x1x128xf32>
    %8 = vector.shape_cast %7 : vector<1x1x128xf32> to vector<1x128xf32>
    %9 = vector.broadcast %8 : vector<1x128xf32> to vector<16x128xf32>
    %10 = arith.addf %6, %9 : vector<16x128xf32>
    %cst_8 = arith.constant 0.000000e+00 : f32
    %11 = vector.broadcast %cst_8 : f32 to vector<16x128xf32>
    %12 = arith.maximumf %10, %11 : vector<16x128xf32>
    %c0_9 = arith.constant 0 : index
    %c0_10 = arith.constant 0 : index
    %13 = vector.load %arg5[%c0_9, %c0_10] : memref<16x128xf32, #tpu.memory_space<vmem>>, vector<16x128xf32>
    tpu.vector_store %arg5[%c0_9, %c0_10], %12 {strides = array<i32>} : memref<16x128xf32, #tpu.memory_space<vmem>>, vector<16x128xf32>,
    return
  }
  func.func @transform_0(%arg0: i32, %arg1: i32) -> (i32, i32) {
    %c0_i32 = arith.constant 0 : i32
    %c0_i32_0 = arith.constant 0 : i32
    return %arg0, %c0_i32 : i32, i32
  }
  func.func @transform_1(%arg0: i32, %arg1: i32) -> (i32, i32) {
    %c0_i32 = arith.constant 0 : i32
    %c0_i32_0 = arith.constant 0 : i32
    return %c0_i32, %arg1 : i32, i32
  }
  func.func @transform_2(%arg0: i32, %arg1: i32) -> (i32, i32, i32) {
    %c0_i32 = arith.constant 0 : i32
    %c0_i32_0 = arith.constant 0 : i32
    %c0_i32_1 = arith.constant 0 : i32
    return %c0_i32, %c0_i32_0, %arg1 : i32, i32, i32
  }
  func.func @transform_3(%arg0: i32, %arg1: i32) -> (i32, i32) {
    %c0_i32 = arith.constant 0 : i32
    return %arg0, %arg1 : i32, i32
  }
}

module attributes {stable_mosaic.version = 11 : i64} {
  func.func @_mm_kernel(%arg0: i32, %arg1: i32, %arg2: memref<16x256xbf16, #tpu.memory_space<vmem>>, %arg3: memref<256x128xbf16, #tpu.memory_space<vmem>>, %arg4: memref<2x1x128xf32, #tpu.memory_space<vmem>>, %arg5: memref<16x128xf32, #tpu.memory_space<vmem>>, %arg6: memref<16x128xf32, #tpu.memory_space<vmem>>) attributes {dimension_semantics = [#tpu.dimension_semantics<parallel>, #tpu.dimension_semantics<parallel>], iteration_bounds = array<i64: 1, 1>, scalar_prefetch = 0 : i64, scratch_operands = 0 : i64, tpu.core_type = #tpu.core_type<tc>, window_params = [{transform_indices = @transform_0, window_bounds = array<i64: 16, 256>}, {transform_indices = @transform_1, window_bounds = array<i64: 256, 128>}, {transform_indices = @transform_2, window_bounds = array<i64: 2, 1, 128>}, {transform_indices = @transform_3, window_bounds = array<i64: 16, 128>}, {transform_indices = @transform_4, window_bounds = array<i64: 16, 128>}]} {
    %c0 = arith.constant 0 : index
    %c0_0 = arith.constant 0 : index
    %0 = vector.load %arg2[%c0, %c0_0] : memref<16x256xbf16, #tpu.memory_space<vmem>>, vector<16x256xbf16>
    %c0_1 = arith.constant 0 : index
    %c0_2 = arith.constant 0 : index
    %1 = vector.load %arg3[%c0_1, %c0_2] : memref<256x128xbf16, #tpu.memory_space<vmem>>, vector<256x128xbf16>
    %cst = arith.constant dense<0.000000e+00> : vector<16x128xf32>
    %2 = tpu.matmul %0, %1, %cst {dimension_numbers = #tpu.dot_dimension_numbers<[1], [0], [0], [1], [0, 0, 1, 1], [], []>} : vector<16x256xbf16>, vector<256x128xbf16>, vector<16x128xf32> -> vector<16x128xf32>
    %c0_3 = arith.constant 0 : index
    %c0_4 = arith.constant 0 : index
    %c0_5 = arith.constant 0 : index
    %3 = vector.load %arg4[%c0_3, %c0_4, %c0_5] : memref<2x1x128xf32, #tpu.memory_space<vmem>>, vector<1x1x128xf32>
    %4 = vector.shape_cast %3 : vector<1x1x128xf32> to vector<1x128xf32>
    %5 = vector.broadcast %4 : vector<1x128xf32> to vector<16x128xf32>
    %6 = arith.mulf %2, %5 : vector<16x128xf32>
    %c1 = arith.constant 1 : index
    %c0_6 = arith.constant 0 : index
    %c0_7 = arith.constant 0 : index
    %7 = vector.load %arg4[%c1, %c0_6, %c0_7] : memref<2x1x128xf32, #tpu.memory_space<vmem>>, vector<1x1x128xf32>
    %8 = vector.shape_cast %7 : vector<1x1x128xf32> to vector<1x128xf32>
    %9 = vector.broadcast %8 : vector<1x128xf32> to vector<16x128xf32>
    %10 = arith.addf %6, %9 : vector<16x128xf32>
    %c0_8 = arith.constant 0 : index
    %c0_9 = arith.constant 0 : index
    %11 = vector.load %arg5[%c0_8, %c0_9] : memref<16x128xf32, #tpu.memory_space<vmem>>, vector<16x128xf32>
    %12 = arith.addf %10, %11 : vector<16x128xf32>
    %c0_10 = arith.constant 0 : index
    %c0_11 = arith.constant 0 : index
    %13 = vector.load %arg6[%c0_10, %c0_11] : memref<16x128xf32, #tpu.memory_space<vmem>>, vector<16x128xf32>
    tpu.vector_store %arg6[%c0_10, %c0_11], %12 {strides = array<i32>} : memref<16x128xf32, #tpu.memory_space<vmem>>, vector<16x128xf32>,
    return
  }
  func.func @transform_0(%arg0: i32, %arg1: i32) -> (i32, i32) {
    %c0_i32 = arith.constant 0 : i32
    %c0_i32_0 = arith.constant 0 : i32
    return %arg0, %c0_i32 : i32, i32
  }
  func.func @transform_1(%arg0: i32, %arg1: i32) -> (i32, i32) {
    %c0_i32 = arith.constant 0 : i32
    %c0_i32_0 = arith.constant 0 : i32
    return %c0_i32, %arg1 : i32, i32
  }
  func.func @transform_2(%arg0: i32, %arg1: i32) -> (i32, i32, i32) {
    %c0_i32 = arith.constant 0 : i32
    %c0_i32_0 = arith.constant 0 : i32
    %c0_i32_1 = arith.constant 0 : i32
    return %c0_i32, %c0_i32_0, %arg1 : i32, i32, i32
  }
  func.func @transform_3(%arg0: i32, %arg1: i32) -> (i32, i32) {
    %c0_i32 = arith.constant 0 : i32
    return %arg0, %arg1 : i32, i32
  }
  func.func @transform_4(%arg0: i32, %arg1: i32) -> (i32, i32) {
    %c0_i32 = arith.constant 0 : i32
    return %arg0, %arg1 : i32, i32
  }
}

</mosaic_0001>

<llo_original>
// kernel: _lambda_.67
$region0: #{_lambda_.67}
  #allocation0 [shape = 'u32[]', space=smem, size = 0x4, offset = 0x4, fixed_abs, tag = 'smem constant byte address 0x4 - core index']
  #allocation1 [shape = 'u32[144,128]{1,0:T(1,128)}', space=vmem, size = 0x12000, scoped, tag = 'internal scratch']
  %s0 = inlined_call_operand.vmem [shape: bf16[512,256], index: 0, kind: input, shape index: {}]
  %s1 = inlined_call_operand.vmem [shape: bf16[256,128], index: 1, kind: input, shape index: {}]
  %s2 = inlined_call_operand.vmem [shape: f32[2,1,128], index: 2, kind: input, shape index: {}]
  %s3 = inlined_call_operand.vmem [shape: f32[512,128], index: 3, kind: output, shape index: {}]
  %s4 = sld [smem:[#allocation0]]
  $region22: #{_lambda_.67} parent=0
    _
  %s6 = ssub.s32 1, %s4
  %s7 = scalar_select 0, %s6, %s4
  // Predicated region
  $region2: #{_lambda_.67} parent=0 // pred_check
    _
  $region3: #{_lambda_.67} parent=0 // pred_check_branch
    %9 = sbr.rel (0) target = $region5
  $region4: #{_lambda_.67} parent=0 // pred_region
    _
  $region5: #{_lambda_.67} parent=0 // pred_fallthru
    _
  // Predicated region
  $region6: #{_lambda_.67} parent=0 // pred_check
    _
  $region7: #{_lambda_.67} parent=0 // pred_check_branch
    %11 = sbr.rel (0) target = $region9
  $region8: #{_lambda_.67} parent=0 // pred_region
    _
  $region9: #{_lambda_.67} parent=0 // pred_fallthru
    _
  // Predicated region
  $region10: #{_lambda_.67} parent=0 // pred_check
    _
  $region11: #{_lambda_.67} parent=0 // pred_check_branch
    %13 = sbr.rel (0) target = $region13
  $region12: #{_lambda_.67} parent=0 // pred_region
    _
  $region13: #{_lambda_.67} parent=0 // pred_fallthru
    _
  %v15 = vld [vmem:[%s0] sm:$0xff]
  %v16 = vld [vmem:[%s0 + $0x8] sm:$0xff]
  %v17 = vld [vmem:[%s0 + $0x10] sm:$0xff]
  %v18 = vld [vmem:[%s0 + $0x18] sm:$0xff]
  %v19 = vld [vmem:[%s0 + $0x20] sm:$0xff]
  %v20 = vld [vmem:[%s0 + $0x28] sm:$0xff]
  %v21 = vld [vmem:[%s0 + $0x30] sm:$0xff]
  %v22 = vld [vmem:[%s0 + $0x38] sm:$0xff]
  %v23 = vld [vmem:[%s0 + $0x40] sm:$0xff]
  %v24 = vld [vmem:[%s0 + $0x48] sm:$0xff]
  %v25 = vld [vmem:[%s0 + $0x50] sm:$0xff]
  %v26 = vld [vmem:[%s0 + $0x58] sm:$0xff]
  %v27 = vld [vmem:[%s0 + $0x60] sm:$0xff]
  %v28 = vld [vmem:[%s0 + $0x68] sm:$0xff]
  %v29 = vld [vmem:[%s0 + $0x70] sm:$0xff]
  %v30 = vld [vmem:[%s0 + $0x78] sm:$0xff]
  %v31 = vld [vmem:[%s0 + $0x80] sm:$0xff]
  %v32 = vld [vmem:[%s0 + $0x88] sm:$0xff]
  %v33 = vld [vmem:[%s0 + $0x90] sm:$0xff]
  %v34 = vld [vmem:[%s0 + $0x98] sm:$0xff]
  %v35 = vld [vmem:[%s0 + $0xa0] sm:$0xff]
  %v36 = vld [vmem:[%s0 + $0xa8] sm:$0xff]
  %v37 = vld [vmem:[%s0 + $0xb0] sm:$0xff]
  %v38 = vld [vmem:[%s0 + $0xb8] sm:$0xff]
  %v39 = vld [vmem:[%s0 + $0xc0] sm:$0xff]
  %v40 = vld [vmem:[%s0 + $0xc8] sm:$0xff]
  %v41 = vld [vmem:[%s0 + $0xd0] sm:$0xff]
  %v42 = vld [vmem:[%s0 + $0xd8] sm:$0xff]
  %v43 = vld [vmem:[%s0 + $0xe0] sm:$0xff]
  %v44 = vld [vmem:[%s0 + $0xe8] sm:$0xff]
  %v45 = vld [vmem:[%s0 + $0xf0] sm:$0xff]
  %v46 = vld [vmem:[%s0 + $0xf8] sm:$0xff]
  %v47 = vld [vmem:[%s0 + $0x100] sm:$0xff]
  %v48 = vld [vmem:[%s0 + $0x108] sm:$0xff]
  %v49 = vld [vmem:[%s0 + $0x110] sm:$0xff]
  %v50 = vld [vmem:[%s0 + $0x118] sm:$0xff]
  %v51 = vld [vmem:[%s0 + $0x120] sm:$0xff]
  %v52 = vld [vmem:[%s0 + $0x128] sm:$0xff]
  %v53 = vld [vmem:[%s0 + $0x130] sm:$0xff]
  %v54 = vld [vmem:[%s0 + $0x138] sm:$0xff]
  %v55 = vld [vmem:[%s0 + $0x140] sm:$0xff]
  %v56 = vld [vmem:[%s0 + $0x148] sm:$0xff]
  %v57 = vld [vmem:[%s0 + $0x150] sm:$0xff]
  %v58 = vld [vmem:[%s0 + $0x158] sm:$0xff]
  %v59 = vld [vmem:[%s0 + $0x160] sm:$0xff]
  %v60 = vld [vmem:[%s0 + $0x168] sm:$0xff]
  %v61 = vld [vmem:[%s0 + $0x170] sm:$0xff]
  %v62 = vld [vmem:[%s0 + $0x178] sm:$0xff]
  %v63 = vld [vmem:[%s0 + $0x180] sm:$0xff]
  %v64 = vld [vmem:[%s0 + $0x188] sm:$0xff]
  %v65 = vld [vmem:[%s0 + $0x190] sm:$0xff]
  %v66 = vld [vmem:[%s0 + $0x198] sm:$0xff]
  %v67 = vld [vmem:[%s0 + $0x1a0] sm:$0xff]
  %v68 = vld [vmem:[%s0 + $0x1a8] sm:$0xff]
  %v69 = vld [vmem:[%s0 + $0x1b0] sm:$0xff]
  %v70 = vld [vmem:[%s0 + $0x1b8] sm:$0xff]
  %v71 = vld [vmem:[%s0 + $0x1c0] sm:$0xff]
  %v72 = vld [vmem:[%s0 + $0x1c8] sm:$0xff]
  %v73 = vld [vmem:[%s0 + $0x1d0] sm:$0xff]
  %v74 = vld [vmem:[%s0 + $0x1d8] sm:$0xff]
  %v75 = vld [vmem:[%s0 + $0x1e0] sm:$0xff]
  %v76 = vld [vmem:[%s0 + $0x1e8] sm:$0xff]
  %v77 = vld [vmem:[%s0 + $0x1f0] sm:$0xff]
  %v78 = vld [vmem:[%s0 + $0x1f8] sm:$0xff]
  %v79 = vld [vmem:[%s1] sm:$0xf]
  %v80 = vld [vmem:[%s1 + $0x4] sm:$0xf]
  %v81 = vld [vmem:[%s1 + $0x8] sm:$0xf]
  %v82 = vld [vmem:[%s1 + $0xc] sm:$0xf]
  %v83 = vld [vmem:[%s1 + $0x10] sm:$0xf]
  %v84 = vld [vmem:[%s1 + $0x14] sm:$0xf]
  %v85 = vld [vmem:[%s1 + $0x18] sm:$0xf]
  %v86 = vld [vmem:[%s1 + $0x1c] sm:$0xf]
  %v87 = vld [vmem:[%s1 + $0x20] sm:$0xf]
  %v88 = vld [vmem:[%s1 + $0x24] sm:$0xf]
  %v89 = vld [vmem:[%s1 + $0x28] sm:$0xf]
  %v90 = vld [vmem:[%s1 + $0x2c] sm:$0xf]
  %v91 = vld [vmem:[%s1 + $0x30] sm:$0xf]
  %v92 = vld [vmem:[%s1 + $0x34] sm:$0xf]
  %v93 = vld [vmem:[%s1 + $0x38] sm:$0xf]
  %v94 = vld [vmem:[%s1 + $0x3c] sm:$0xf]
  %v95 = vld [vmem:[%s1 + $0x40] sm:$0xf]
  %v96 = vld [vmem:[%s1 + $0x44] sm:$0xf]
  %v97 = vld [vmem:[%s1 + $0x48] sm:$0xf]
  %v98 = vld [vmem:[%s1 + $0x4c] sm:$0xf]
  %v99 = vld [vmem:[%s1 + $0x50] sm:$0xf]
  %v100 = vld [vmem:[%s1 + $0x54] sm:$0xf]
  %v101 = vld [vmem:[%s1 + $0x58] sm:$0xf]
  %v102 = vld [vmem:[%s1 + $0x5c] sm:$0xf]
  %v103 = vld [vmem:[%s1 + $0x60] sm:$0xf]
  %v104 = vld [vmem:[%s1 + $0x64] sm:$0xf]
  %v105 = vld [vmem:[%s1 + $0x68] sm:$0xf]
  %v106 = vld [vmem:[%s1 + $0x6c] sm:$0xf]
  %v107 = vld [vmem:[%s1 + $0x70] sm:$0xf]
  %v108 = vld [vmem:[%s1 + $0x74] sm:$0xf]
  %v109 = vld [vmem:[%s1 + $0x78] sm:$0xf]
  %v110 = vld [vmem:[%s1 + $0x7c] sm:$0xf]
  %v175 = vunpack.c.l.b16 %v15
  %v176 = vunpack.c.h.b16 %v15
  %v177 = vunpack.c.l.b16 %v16
  %v178 = vunpack.c.h.b16 %v16
  %v179 = vunpack.c.l.b16 %v17
  %v180 = vunpack.c.h.b16 %v17
  %v181 = vunpack.c.l.b16 %v18
  %v182 = vunpack.c.h.b16 %v18
  %v183 = vunpack.c.l.b16 %v19
  %v184 = vunpack.c.h.b16 %v19
  %v185 = vunpack.c.l.b16 %v20
  %v186 = vunpack.c.h.b16 %v20
  %v187 = vunpack.c.l.b16 %v21
  %v188 = vunpack.c.h.b16 %v21
  %v189 = vunpack.c.l.b16 %v22
  %v190 = vunpack.c.h.b16 %v22
  %v191 = vunpack.c.l.b16 %v23
  %v192 = vunpack.c.h.b16 %v23
  %v193 = vunpack.c.l.b16 %v24
  %v194 = vunpack.c.h.b16 %v24
  %v195 = vunpack.c.l.b16 %v25
  %v196 = vunpack.c.h.b16 %v25
  %v197 = vunpack.c.l.b16 %v26
  %v198 = vunpack.c.h.b16 %v26
  %v199 = vunpack.c.l.b16 %v27
  %v200 = vunpack.c.h.b16 %v27
  %v201 = vunpack.c.l.b16 %v28
  %v202 = vunpack.c.h.b16 %v28
  %v203 = vunpack.c.l.b16 %v29
  %v204 = vunpack.c.h.b16 %v29
  %v205 = vunpack.c.l.b16 %v30
  %v206 = vunpack.c.h.b16 %v30
  %v207 = vunpack.c.l.b16 %v31
  %v208 = vunpack.c.h.b16 %v31
  %v209 = vunpack.c.l.b16 %v32
  %v210 = vunpack.c.h.b16 %v32
  %v211 = vunpack.c.l.b16 %v33
  %v212 = vunpack.c.h.b16 %v33
  %v213 = vunpack.c.l.b16 %v34
  %v214 = vunpack.c.h.b16 %v34
  %v215 = vunpack.c.l.b16 %v35
  %v216 = vunpack.c.h.b16 %v35
  %v217 = vunpack.c.l.b16 %v36
  %v218 = vunpack.c.h.b16 %v36
  %v219 = vunpack.c.l.b16 %v37
  %v220 = vunpack.c.h.b16 %v37
  %v221 = vunpack.c.l.b16 %v38
  %v222 = vunpack.c.h.b16 %v38
  %v223 = vunpack.c.l.b16 %v39
  %v224 = vunpack.c.h.b16 %v39
  %v225 = vunpack.c.l.b16 %v40
  %v226 = vunpack.c.h.b16 %v40
  %v227 = vunpack.c.l.b16 %v41
  %v228 = vunpack.c.h.b16 %v41
  %v229 = vunpack.c.l.b16 %v42
  %v230 = vunpack.c.h.b16 %v42
  %v231 = vunpack.c.l.b16 %v43
  %v232 = vunpack.c.h.b16 %v43
  %v233 = vunpack.c.l.b16 %v44
  %v234 = vunpack.c.h.b16 %v44
  %v235 = vunpack.c.l.b16 %v45
  %v236 = vunpack.c.h.b16 %v45
  %v237 = vunpack.c.l.b16 %v46
  %v238 = vunpack.c.h.b16 %v46
  %v239 = vunpack.c.l.b16 %v47
  %v240 = vunpack.c.h.b16 %v47
  %v241 = vunpack.c.l.b16 %v48
  %v242 = vunpack.c.h.b16 %v48
  %v243 = vunpack.c.l.b16 %v49
  %v244 = vunpack.c.h.b16 %v49
  %v245 = vunpack.c.l.b16 %v50
  %v246 = vunpack.c.h.b16 %v50
  %v247 = vunpack.c.l.b16 %v51
  %v248 = vunpack.c.h.b16 %v51
  %v249 = vunpack.c.l.b16 %v52
  %v250 = vunpack.c.h.b16 %v52
  %v251 = vunpack.c.l.b16 %v53
  %v252 = vunpack.c.h.b16 %v53
  %v253 = vunpack.c.l.b16 %v54
  %v254 = vunpack.c.h.b16 %v54
  %v255 = vunpack.c.l.b16 %v55
  %v256 = vunpack.c.h.b16 %v55
  %v257 = vunpack.c.l.b16 %v56
  %v258 = vunpack.c.h.b16 %v56
  %v259 = vunpack.c.l.b16 %v57
  %v260 = vunpack.c.h.b16 %v57
  %v261 = vunpack.c.l.b16 %v58
  %v262 = vunpack.c.h.b16 %v58
  %v263 = vunpack.c.l.b16 %v59
  %v264 = vunpack.c.h.b16 %v59
  %v265 = vunpack.c.l.b16 %v60
  %v266 = vunpack.c.h.b16 %v60
  %v267 = vunpack.c.l.b16 %v61
  %v268 = vunpack.c.h.b16 %v61
  %v269 = vunpack.c.l.b16 %v62
  %v270 = vunpack.c.h.b16 %v62
  %v271 = vunpack.c.l.b16 %v63
  %v272 = vunpack.c.h.b16 %v63
  %v273 = vunpack.c.l.b16 %v64
  %v274 = vunpack.c.h.b16 %v64
  %v275 = vunpack.c.l.b16 %v65
  %v276 = vunpack.c.h.b16 %v65
  %v277 = vunpack.c.l.b16 %v66
  %v278 = vunpack.c.h.b16 %v66
  %v279 = vunpack.c.l.b16 %v67
  %v280 = vunpack.c.h.b16 %v67
  %v281 = vunpack.c.l.b16 %v68
  %v282 = vunpack.c.h.b16 %v68
  %v283 = vunpack.c.l.b16 %v69
  %v284 = vunpack.c.h.b16 %v69
  %v285 = vunpack.c.l.b16 %v70
  %v286 = vunpack.c.h.b16 %v70
  %v287 = vunpack.c.l.b16 %v71
  %v288 = vunpack.c.h.b16 %v71
  %v289 = vunpack.c.l.b16 %v72
  %v290 = vunpack.c.h.b16 %v72
  %v291 = vunpack.c.l.b16 %v73
  %v292 = vunpack.c.h.b16 %v73
  %v293 = vunpack.c.l.b16 %v74
  %v294 = vunpack.c.h.b16 %v74
  %v295 = vunpack.c.l.b16 %v75
  %v296 = vunpack.c.h.b16 %v75
  %v297 = vunpack.c.l.b16 %v76
  %v298 = vunpack.c.h.b16 %v76
  %v299 = vunpack.c.l.b16 %v77
  %v300 = vunpack.c.h.b16 %v77
  %v301 = vunpack.c.l.b16 %v78
  %v302 = vunpack.c.h.b16 %v78
  %v303 = vpack.c.b16 %v177, %v175
  %v304 = vpack.c.b16 %v178, %v176
  %v305 = vpack.c.b16 %v181, %v179
  %v306 = vpack.c.b16 %v182, %v180
  %v307 = vpack.c.b16 %v185, %v183
  %v308 = vpack.c.b16 %v186, %v184
  %v309 = vpack.c.b16 %v189, %v187
  %v310 = vpack.c.b16 %v190, %v188
  %v311 = vpack.c.b16 %v193, %v191
  %v312 = vpack.c.b16 %v194, %v192
  %v313 = vpack.c.b16 %v197, %v195
  %v314 = vpack.c.b16 %v198, %v196
  %v315 = vpack.c.b16 %v201, %v199
  %v316 = vpack.c.b16 %v202, %v200
  %v317 = vpack.c.b16 %v205, %v203
  %v318 = vpack.c.b16 %v206, %v204
  %v319 = vpack.c.b16 %v209, %v207
  %v320 = vpack.c.b16 %v210, %v208
  %v321 = vpack.c.b16 %v213, %v211
  %v322 = vpack.c.b16 %v214, %v212
  %v323 = vpack.c.b16 %v217, %v215
  %v324 = vpack.c.b16 %v218, %v216
  %v325 = vpack.c.b16 %v221, %v219
  %v326 = vpack.c.b16 %v222, %v220
  %v327 = vpack.c.b16 %v225, %v223
  %v328 = vpack.c.b16 %v226, %v224
  %v329 = vpack.c.b16 %v229, %v227
  %v330 = vpack.c.b16 %v230, %v228
  %v331 = vpack.c.b16 %v233, %v231
  %v332 = vpack.c.b16 %v234, %v232
  %v333 = vpack.c.b16 %v237, %v235
  %v334 = vpack.c.b16 %v238, %v236
  %v335 = vpack.c.b16 %v241, %v239
  %v336 = vpack.c.b16 %v242, %v240
  %v337 = vpack.c.b16 %v245, %v243
  %v338 = vpack.c.b16 %v246, %v244
  %v339 = vpack.c.b16 %v249, %v247
  %v340 = vpack.c.b16 %v250, %v248
  %v341 = vpack.c.b16 %v253, %v251
  %v342 = vpack.c.b16 %v254, %v252
  %v343 = vpack.c.b16 %v257, %v255
  %v344 = vpack.c.b16 %v258, %v256
  %v345 = vpack.c.b16 %v261, %v259
  %v346 = vpack.c.b16 %v262, %v260
  %v347 = vpack.c.b16 %v265, %v263
  %v348 = vpack.c.b16 %v266, %v264
  %v349 = vpack.c.b16 %v269, %v267
  %v350 = vpack.c.b16 %v270, %v268
  %v351 = vpack.c.b16 %v273, %v271
  %v352 = vpack.c.b16 %v274, %v272
  %v353 = vpack.c.b16 %v277, %v275
  %v354 = vpack.c.b16 %v278, %v276
  %v355 = vpack.c.b16 %v281, %v279
  %v356 = vpack.c.b16 %v282, %v280
  %v357 = vpack.c.b16 %v285, %v283
  %v358 = vpack.c.b16 %v286, %v284
  %v359 = vpack.c.b16 %v289, %v287
  %v360 = vpack.c.b16 %v290, %v288
  %v361 = vpack.c.b16 %v293, %v291
  %v362 = vpack.c.b16 %v294, %v292
  %v363 = vpack.c.b16 %v297, %v295
  %v364 = vpack.c.b16 %v298, %v296
  %v365 = vpack.c.b16 %v301, %v299
  %v366 = vpack.c.b16 %v302, %v300
  %v463 = vunpack.c.l.b16 %v79
  %v464 = vunpack.c.l.b16 %v80
  %v465 = vunpack.c.l.b16 %v81
  %v466 = vunpack.c.l.b16 %v82
  %v467 = vunpack.c.l.b16 %v83
  %v468 = vunpack.c.l.b16 %v84
  %v469 = vunpack.c.l.b16 %v85
  %v470 = vunpack.c.l.b16 %v86
  %v471 = vunpack.c.l.b16 %v87
  %v472 = vunpack.c.l.b16 %v88
  %v473 = vunpack.c.l.b16 %v89
  %v474 = vunpack.c.l.b16 %v90
  %v475 = vunpack.c.l.b16 %v91
  %v476 = vunpack.c.l.b16 %v92
  %v477 = vunpack.c.l.b16 %v93
  %v478 = vunpack.c.l.b16 %v94
  %v479 = vunpack.c.l.b16 %v95
  %v480 = vunpack.c.l.b16 %v96
  %v481 = vunpack.c.l.b16 %v97
  %v482 = vunpack.c.l.b16 %v98
  %v483 = vunpack.c.l.b16 %v99
  %v484 = vunpack.c.l.b16 %v100
  %v485 = vunpack.c.l.b16 %v101
  %v486 = vunpack.c.l.b16 %v102
  %v487 = vunpack.c.l.b16 %v103
  %v488 = vunpack.c.l.b16 %v104
  %v489 = vunpack.c.l.b16 %v105
  %v490 = vunpack.c.l.b16 %v106
  %v491 = vunpack.c.l.b16 %v107
  %v492 = vunpack.c.l.b16 %v108
  %v493 = vunpack.c.l.b16 %v109
  %v494 = vunpack.c.l.b16 %v110
  %v495 = vpack.c.b16 %v464, %v463
  %v496 = vpack.c.b16 %v466, %v465
  %v497 = vpack.c.b16 %v468, %v467
  %v498 = vpack.c.b16 %v470, %v469
  %v499 = vpack.c.b16 %v472, %v471
  %v500 = vpack.c.b16 %v474, %v473
  %v501 = vpack.c.b16 %v476, %v475
  %v502 = vpack.c.b16 %v478, %v477
  %v503 = vpack.c.b16 %v480, %v479
  %v504 = vpack.c.b16 %v482, %v481
  %v505 = vpack.c.b16 %v484, %v483
  %v506 = vpack.c.b16 %v486, %v485
  %v507 = vpack.c.b16 %v488, %v487
  %v508 = vpack.c.b16 %v490, %v489
  %v509 = vpack.c.b16 %v492, %v491
  %v510 = vpack.c.b16 %v494, %v493
  %527 = vmatprep.subr.bf16.mxu0 0
  %528 = vmatpush1.bf16.msra.mxu0 %v495
  %529 = vmatprep.subr.bf16.mxu0 0
  %530 = vmatpush1.bf16.msra.mxu0 %v496
  %531 = vmatprep.subr.bf16.mxu0 0
  %532 = vmatpush1.bf16.msra.mxu0 %v497
  %533 = vmatprep.subr.bf16.mxu0 0
  %534 = vmatpush1.bf16.msra.mxu0 %v498
  %535 = vmatprep.subr.bf16.mxu0 0
  %536 = vmatpush1.bf16.msra.mxu0 %v499
  %537 = vmatprep.subr.bf16.mxu0 0
  %538 = vmatpush1.bf16.msra.mxu0 %v500
  %539 = vmatprep.subr.bf16.mxu0 0
  %540 = vmatpush1.bf16.msra.mxu0 %v501
  %541 = vmatprep.subr.bf16.mxu0 0
  %542 = vmatpush1.bf16.msra.mxu0 %v502
  %543 = vmatprep.subr.bf16.mxu0 0
  %544 = vmatpush1.bf16.msra.mxu0 %v503
  %545 = vmatprep.subr.bf16.mxu0 0
  %546 = vmatpush1.bf16.msra.mxu0 %v504
  %547 = vmatprep.subr.bf16.mxu0 0
  %548 = vmatpush1.bf16.msra.mxu0 %v505
  %549 = vmatprep.subr.bf16.mxu0 0
  %550 = vmatpush1.bf16.msra.mxu0 %v506
  %551 = vmatprep.subr.bf16.mxu0 0
  %552 = vmatpush1.bf16.msra.mxu0 %v507
  %553 = vmatprep.subr.bf16.mxu0 0
  %554 = vmatpush1.bf16.msra.mxu0 %v508
  %555 = vmatprep.subr.bf16.mxu0 0
  %556 = vmatpush1.bf16.msra.mxu0 %v509
  %557 = vmatprep.subr.bf16.mxu0 0
  %558 = vmatpush1.bf16.msra.mxu0 %v510
  %559 = vmatprep.mubr.bf16.mxu0 %v304
  %560 = vmatmul.mubr.bf16.gmra.mrb[0].mxu0 %v303
  %v561 = vpop.f32.mrb[0].mxu0
  %v562 = vadd.f32 0.0, %v561
  %v563 = vpop.f32.mrb[0].mxu0
  %v564 = vpop.f32.mrb[0].mxu0
  %v565 = vadd.f32 0.0, %v564
  %v566 = vpop.f32.mrb[0].mxu0
  %567 = vmatprep.mubr.bf16.mxu0 %v306
  %568 = vmatmul.mubr.bf16.gmra.mrb[0].mxu0 %v305
  %v569 = vpop.f32.mrb[0].mxu0
  %v570 = vadd.f32 0.0, %v569
  %v571 = vpop.f32.mrb[0].mxu0
  %v572 = vpop.f32.mrb[0].mxu0
  %v573 = vadd.f32 0.0, %v572
  %v574 = vpop.f32.mrb[0].mxu0
  %575 = vmatprep.mubr.bf16.mxu0 %v308
  %576 = vmatmul.mubr.bf16.gmra.mrb[0].mxu0 %v307
  %v577 = vpop.f32.mrb[0].mxu0
  %v578 = vadd.f32 0.0, %v577
  %v579 = vpop.f32.mrb[0].mxu0
  %v580 = vpop.f32.mrb[0].mxu0
  %v581 = vadd.f32 0.0, %v580
  %v582 = vpop.f32.mrb[0].mxu0
  %583 = vmatprep.mubr.bf16.mxu0 %v310
  %584 = vmatmul.mubr.bf16.gmra.mrb[0].mxu0 %v309
  %v585 = vpop.f32.mrb[0].mxu0
  %v586 = vadd.f32 0.0, %v585
  %v587 = vpop.f32.mrb[0].mxu0
  %v588 = vpop.f32.mrb[0].mxu0
  %v589 = vadd.f32 0.0, %v588
  %v590 = vpop.f32.mrb[0].mxu0
  %591 = vmatprep.mubr.bf16.mxu0 %v312
  %592 = vmatmul.mubr.bf16.gmra.mrb[0].mxu0 %v311
  %v593 = vpop.f32.mrb[0].mxu0
  %v594 = vadd.f32 0.0, %v593
  %v595 = vpop.f32.mrb[0].mxu0
  %v596 = vpop.f32.mrb[0].mxu0
  %v597 = vadd.f32 0.0, %v596
  %v598 = vpop.f32.mrb[0].mxu0
  %599 = vmatprep.mubr.bf16.mxu0 %v314
  %600 = vmatmul.mubr.bf16.gmra.mrb[0].mxu0 %v313
  %v601 = vpop.f32.mrb[0].mxu0
  %v602 = vadd.f32 0.0, %v601
  %v603 = vpop.f32.mrb[0].mxu0
  %v604 = vpop.f32.mrb[0].mxu0
  %v605 = vadd.f32 0.0, %v604
  %v606 = vpop.f32.mrb[0].mxu0
  %607 = vmatprep.mubr.bf16.mxu0 %v316
  %608 = vmatmul.mubr.bf16.gmra.mrb[0].mxu0 %v315
  %v609 = vpop.f32.mrb[0].mxu0
  %v610 = vadd.f32 0.0, %v609
  %v611 = vpop.f32.mrb[0].mxu0
  %v612 = vpop.f32.mrb[0].mxu0
  %v613 = vadd.f32 0.0, %v612
  %v614 = vpop.f32.mrb[0].mxu0
  %615 = vmatprep.mubr.bf16.mxu0 %v318
  %616 = vmatmul.mubr.bf16.gmra.mrb[0].mxu0 %v317
  %v617 = vpop.f32.mrb[0].mxu0
  %v618 = vadd.f32 0.0, %v617
  %v619 = vpop.f32.mrb[0].mxu0
  %v620 = vpop.f32.mrb[0].mxu0
  %v621 = vadd.f32 0.0, %v620
  %v622 = vpop.f32.mrb[0].mxu0
  %623 = vmatprep.mubr.bf16.mxu0 %v320
  %624 = vmatmul.mubr.bf16.gmra.mrb[0].mxu0 %v319
  %v625 = vpop.f32.mrb[0].mxu0
  %v626 = vadd.f32 0.0, %v625
  %v627 = vpop.f32.mrb[0].mxu0
  %v628 = vpop.f32.mrb[0].mxu0
  %v629 = vadd.f32 0.0, %v628
  %v630 = vpop.f32.mrb[0].mxu0
  %631 = vmatprep.mubr.bf16.mxu0 %v322
  %632 = vmatmul.mubr.bf16.gmra.mrb[0].mxu0 %v321
  %v633 = vpop.f32.mrb[0].mxu0
  %v634 = vadd.f32 0.0, %v633
  %v635 = vpop.f32.mrb[0].mxu0
  %v636 = vpop.f32.mrb[0].mxu0
  %v637 = vadd.f32 0.0, %v636
  %v638 = vpop.f32.mrb[0].mxu0
  %639 = vmatprep.mubr.bf16.mxu0 %v324
  %640 = vmatmul.mubr.bf16.gmra.mrb[0].mxu0 %v323
  %v641 = vpop.f32.mrb[0].mxu0
  %v642 = vadd.f32 0.0, %v641
  %v643 = vpop.f32.mrb[0].mxu0
  %v644 = vpop.f32.mrb[0].mxu0
  %v645 = vadd.f32 0.0, %v644
  %v646 = vpop.f32.mrb[0].mxu0
  %647 = vmatprep.mubr.bf16.mxu0 %v326
  %648 = vmatmul.mubr.bf16.gmra.mrb[0].mxu0 %v325
  %v649 = vpop.f32.mrb[0].mxu0
  %v650 = vadd.f32 0.0, %v649
  %v651 = vpop.f32.mrb[0].mxu0
  %v652 = vpop.f32.mrb[0].mxu0
  %v653 = vadd.f32 0.0, %v652
  %v654 = vpop.f32.mrb[0].mxu0
  %655 = vmatprep.mubr.bf16.mxu0 %v328
  %656 = vmatmul.mubr.bf16.gmra.mrb[0].mxu0 %v327
  %v657 = vpop.f32.mrb[0].mxu0
  %v658 = vadd.f32 0.0, %v657
  %v659 = vpop.f32.mrb[0].mxu0
  %v660 = vpop.f32.mrb[0].mxu0
  %v661 = vadd.f32 0.0, %v660
  %v662 = vpop.f32.mrb[0].mxu0
  %663 = vmatprep.mubr.bf16.mxu0 %v330
  %664 = vmatmul.mubr.bf16.gmra.mrb[0].mxu0 %v329
  %v665 = vpop.f32.mrb[0].mxu0
  %v666 = vadd.f32 0.0, %v665
  %v667 = vpop.f32.mrb[0].mxu0
  %v668 = vpop.f32.mrb[0].mxu0
  %v669 = vadd.f32 0.0, %v668
  %v670 = vpop.f32.mrb[0].mxu0
  %671 = vmatprep.mubr.bf16.mxu0 %v332
  %672 = vmatmul.mubr.bf16.gmra.mrb[0].mxu0 %v331
  %v673 = vpop.f32.mrb[0].mxu0
  %v674 = vadd.f32 0.0, %v673
  %v675 = vpop.f32.mrb[0].mxu0
  %v676 = vpop.f32.mrb[0].mxu0
  %v677 = vadd.f32 0.0, %v676
  %v678 = vpop.f32.mrb[0].mxu0
  %679 = vmatprep.mubr.bf16.mxu0 %v334
  %680 = vmatmul.mubr.bf16.gmra.mrb[0].mxu0 %v333
  %v681 = vpop.f32.mrb[0].mxu0
  %v682 = vadd.f32 0.0, %v681
  %v683 = vpop.f32.mrb[0].mxu0
  %v684 = vpop.f32.mrb[0].mxu0
  %v685 = vadd.f32 0.0, %v684
  %v686 = vpop.f32.mrb[0].mxu0
  %687 = vmatprep.mubr.bf16.mxu0 %v336
  %688 = vmatmul.mubr.bf16.gmra.mrb[0].mxu0 %v335
  %v689 = vpop.f32.mrb[0].mxu0
  %v690 = vadd.f32 0.0, %v689
  %v691 = vpop.f32.mrb[0].mxu0
  %v692 = vpop.f32.mrb[0].mxu0
  %v693 = vadd.f32 0.0, %v692
  %v694 = vpop.f32.mrb[0].mxu0
  %695 = vmatprep.mubr.bf16.mxu0 %v338
  %696 = vmatmul.mubr.bf16.gmra.mrb[0].mxu0 %v337
  %v697 = vpop.f32.mrb[0].mxu0
  %v698 = vadd.f32 0.0, %v697
  %v699 = vpop.f32.mrb[0].mxu0
  %v700 = vpop.f32.mrb[0].mxu0
  %v701 = vadd.f32 0.0, %v700
  %v702 = vpop.f32.mrb[0].mxu0
  %703 = vmatprep.mubr.bf16.mxu0 %v340
  %704 = vmatmul.mubr.bf16.gmra.mrb[0].mxu0 %v339
  %v705 = vpop.f32.mrb[0].mxu0
  %v706 = vadd.f32 0.0, %v705
  %v707 = vpop.f32.mrb[0].mxu0
  %v708 = vpop.f32.mrb[0].mxu0
  %v709 = vadd.f32 0.0, %v708
  %v710 = vpop.f32.mrb[0].mxu0
  %711 = vmatprep.mubr.bf16.mxu0 %v342
  %712 = vmatmul.mubr.bf16.gmra.mrb[0].mxu0 %v341
  %v713 = vpop.f32.mrb[0].mxu0
  %v714 = vadd.f32 0.0, %v713
  %v715 = vpop.f32.mrb[0].mxu0
  %v716 = vpop.f32.mrb[0].mxu0
  %v717 = vadd.f32 0.0, %v716
  %v718 = vpop.f32.mrb[0].mxu0
  %719 = vmatprep.mubr.bf16.mxu0 %v344
  %720 = vmatmul.mubr.bf16.gmra.mrb[0].mxu0 %v343
  %v721 = vpop.f32.mrb[0].mxu0
  %v722 = vadd.f32 0.0, %v721
  %v723 = vpop.f32.mrb[0].mxu0
  %v724 = vpop.f32.mrb[0].mxu0
  %v725 = vadd.f32 0.0, %v724
  %v726 = vpop.f32.mrb[0].mxu0
  %727 = vmatprep.mubr.bf16.mxu0 %v346
  %728 = vmatmul.mubr.bf16.gmra.mrb[0].mxu0 %v345
  %v729 = vpop.f32.mrb[0].mxu0
  %v730 = vadd.f32 0.0, %v729
  %v731 = vpop.f32.mrb[0].mxu0
  %v732 = vpop.f32.mrb[0].mxu0
  %v733 = vadd.f32 0.0, %v732
  %v734 = vpop.f32.mrb[0].mxu0
  %735 = vmatprep.mubr.bf16.mxu0 %v348
  %736 = vmatmul.mubr.bf16.gmra.mrb[0].mxu0 %v347
  %v737 = vpop.f32.mrb[0].mxu0
  %v738 = vadd.f32 0.0, %v737
  %v739 = vpop.f32.mrb[0].mxu0
  %v740 = vpop.f32.mrb[0].mxu0
  %v741 = vadd.f32 0.0, %v740
  %v742 = vpop.f32.mrb[0].mxu0
  %743 = vmatprep.mubr.bf16.mxu0 %v350
  %744 = vmatmul.mubr.bf16.gmra.mrb[0].mxu0 %v349
  %v745 = vpop.f32.mrb[0].mxu0
  %v746 = vadd.f32 0.0, %v745
  %v747 = vpop.f32.mrb[0].mxu0
  %v748 = vpop.f32.mrb[0].mxu0
  %v749 = vadd.f32 0.0, %v748
  %v750 = vpop.f32.mrb[0].mxu0
  %751 = vmatprep.mubr.bf16.mxu0 %v352
  %752 = vmatmul.mubr.bf16.gmra.mrb[0].mxu0 %v351
  %v753 = vpop.f32.mrb[0].mxu0
  %v754 = vadd.f32 0.0, %v753
  %v755 = vpop.f32.mrb[0].mxu0
  %v756 = vpop.f32.mrb[0].mxu0
  %v757 = vadd.f32 0.0, %v756
  %v758 = vpop.f32.mrb[0].mxu0
  %759 = vmatprep.mubr.bf16.mxu0 %v354
  %760 = vmatmul.mubr.bf16.gmra.mrb[0].mxu0 %v353
  %v761 = vpop.f32.mrb[0].mxu0
  %v762 = vadd.f32 0.0, %v761
  %v763 = vpop.f32.mrb[0].mxu0
  %v764 = vpop.f32.mrb[0].mxu0
  %v765 = vadd.f32 0.0, %v764
  %v766 = vpop.f32.mrb[0].mxu0
  %767 = vmatprep.mubr.bf16.mxu0 %v356
  %768 = vmatmul.mubr.bf16.gmra.mrb[0].mxu0 %v355
  %v769 = vpop.f32.mrb[0].mxu0
  %v770 = vadd.f32 0.0, %v769
  %v771 = vpop.f32.mrb[0].mxu0
  %v772 = vpop.f32.mrb[0].mxu0
  %v773 = vadd.f32 0.0, %v772
  %v774 = vpop.f32.mrb[0].mxu0
  %775 = vmatprep.mubr.bf16.mxu0 %v358
  %776 = vmatmul.mubr.bf16.gmra.mrb[0].mxu0 %v357
  %v777 = vpop.f32.mrb[0].mxu0
  %v778 = vadd.f32 0.0, %v777
  %v779 = vpop.f32.mrb[0].mxu0
  %v780 = vpop.f32.mrb[0].mxu0
  %v781 = vadd.f32 0.0, %v780
  %v782 = vpop.f32.mrb[0].mxu0
  %783 = vmatprep.mubr.bf16.mxu0 %v360
  %784 = vmatmul.mubr.bf16.gmra.mrb[0].mxu0 %v359
  %v785 = vpop.f32.mrb[0].mxu0
  %v786 = vadd.f32 0.0, %v785
  %v787 = vpop.f32.mrb[0].mxu0
  %v788 = vpop.f32.mrb[0].mxu0
  %v789 = vadd.f32 0.0, %v788
  %v790 = vpop.f32.mrb[0].mxu0
  %791 = vmatprep.mubr.bf16.mxu0 %v362
  %792 = vmatmul.mubr.bf16.gmra.mrb[0].mxu0 %v361
  %v793 = vpop.f32.mrb[0].mxu0
  %v794 = vadd.f32 0.0, %v793
  %v795 = vpop.f32.mrb[0].mxu0
  %v796 = vpop.f32.mrb[0].mxu0
  %v797 = vadd.f32 0.0, %v796
  %v798 = vpop.f32.mrb[0].mxu0
  %799 = vmatprep.mubr.bf16.mxu0 %v364
  %800 = vmatmul.mubr.bf16.gmra.mrb[0].mxu0 %v363
  %v801 = vpop.f32.mrb[0].mxu0
  %v802 = vadd.f32 0.0, %v801
  %v803 = vpop.f32.mrb[0].mxu0
  %v804 = vpop.f32.mrb[0].mxu0
  %v805 = vadd.f32 0.0, %v804
  %v806 = vpop.f32.mrb[0].mxu0
  %807 = vmatprep.mubr.bf16.mxu0 %v366
  %808 = vmatmul.mubr.bf16.gmra.mrb[0].mxu0 %v365
  %v809 = vpop.f32.mrb[0].mxu0
  %v810 = vadd.f32 0.0, %v809
  %v811 = vpop.f32.mrb[0].mxu0
  %v812 = vpop.f32.mrb[0].mxu0
  %v813 = vadd.f32 0.0, %v812
  %v814 = vpop.f32.mrb[0].mxu0
  %815 = vdwg.mxu0
  %v816 = vld [vmem:[%s2] sm:$0x1]
  %v818 = vlaneseq
  %v819 = vshrl.u32 %v818, 7
  %v820 = vsub.s32 0, %v819
  %v821 = vrot.slane %v816, %v820
  %v823 = vmul.f32 %v562, %v821
  %v824 = vmul.f32 %v565, %v821
  %v825 = vmul.f32 %v570, %v821
  %v826 = vmul.f32 %v573, %v821
  %v827 = vmul.f32 %v578, %v821
  %v828 = vmul.f32 %v581, %v821
  %v829 = vmul.f32 %v586, %v821
  %v830 = vmul.f32 %v589, %v821
  %v831 = vmul.f32 %v594, %v821
  %v832 = vmul.f32 %v597, %v821
  %v833 = vmul.f32 %v602, %v821
  %v834 = vmul.f32 %v605, %v821
  %v835 = vmul.f32 %v610, %v821
  %v836 = vmul.f32 %v613, %v821
  %v837 = vmul.f32 %v618, %v821
  %v838 = vmul.f32 %v621, %v821
  %v839 = vmul.f32 %v626, %v821
  %v840 = vmul.f32 %v629, %v821
  %v841 = vmul.f32 %v634, %v821
  %v842 = vmul.f32 %v637, %v821
  %v843 = vmul.f32 %v642, %v821
  %v844 = vmul.f32 %v645, %v821
  %v845 = vmul.f32 %v650, %v821
  %v846 = vmul.f32 %v653, %v821
  %v847 = vmul.f32 %v658, %v821
  %v848 = vmul.f32 %v661, %v821
  %v849 = vmul.f32 %v666, %v821
  %v850 = vmul.f32 %v669, %v821
  %v851 = vmul.f32 %v674, %v821
  %v852 = vmul.f32 %v677, %v821
  %v853 = vmul.f32 %v682, %v821
  %v854 = vmul.f32 %v685, %v821
  %v855 = vmul.f32 %v690, %v821
  %v856 = vmul.f32 %v693, %v821
  %v857 = vmul.f32 %v698, %v821
  %v858 = vmul.f32 %v701, %v821
  %v859 = vmul.f32 %v706, %v821
  %v860 = vmul.f32 %v709, %v821
  %v861 = vmul.f32 %v714, %v821
  %v862 = vmul.f32 %v717, %v821
  %v863 = vmul.f32 %v722, %v821
  %v864 = vmul.f32 %v725, %v821
  %v865 = vmul.f32 %v730, %v821
  %v866 = vmul.f32 %v733, %v821
  %v867 = vmul.f32 %v738, %v821
  %v868 = vmul.f32 %v741, %v821
  %v869 = vmul.f32 %v746, %v821
  %v870 = vmul.f32 %v749, %v821
  %v871 = vmul.f32 %v754, %v821
  %v872 = vmul.f32 %v757, %v821
  %v873 = vmul.f32 %v762, %v821
  %v874 = vmul.f32 %v765, %v821
  %v875 = vmul.f32 %v770, %v821
  %v876 = vmul.f32 %v773, %v821
  %v877 = vmul.f32 %v778, %v821
  %v878 = vmul.f32 %v781, %v821
  %v879 = vmul.f32 %v786, %v821
  %v880 = vmul.f32 %v789, %v821
  %v881 = vmul.f32 %v794, %v821
  %v882 = vmul.f32 %v797, %v821
  %v883 = vmul.f32 %v802, %v821
  %v884 = vmul.f32 %v805, %v821
  %v885 = vmul.f32 %v810, %v821
  %v886 = vmul.f32 %v813, %v821
  %s887 = scalar_lea.vmem %s2, 1
  %v888 = vld [vmem:[%s887] sm:$0x1]
  %v890 = vlaneseq
  %v891 = vshrl.u32 %v890, 7
  %v892 = vsub.s32 0, %v891
  %v893 = vrot.slane %v888, %v892
  %v895 = vadd.f32 %v823, %v893
  %v896 = vadd.f32 %v824, %v893
  %v897 = vadd.f32 %v825, %v893
  %v898 = vadd.f32 %v826, %v893
  %v899 = vadd.f32 %v827, %v893
  %v900 = vadd.f32 %v828, %v893
  %v901 = vadd.f32 %v829, %v893
  %v902 = vadd.f32 %v830, %v893
  %v903 = vadd.f32 %v831, %v893
  %v904 = vadd.f32 %v832, %v893
  %v905 = vadd.f32 %v833, %v893
  %v906 = vadd.f32 %v834, %v893
  %v907 = vadd.f32 %v835, %v893
  %v908 = vadd.f32 %v836, %v893
  %v909 = vadd.f32 %v837, %v893
  %v910 = vadd.f32 %v838, %v893
  %v911 = vadd.f32 %v839, %v893
  %v912 = vadd.f32 %v840, %v893
  %v913 = vadd.f32 %v841, %v893
  %v914 = vadd.f32 %v842, %v893
  %v915 = vadd.f32 %v843, %v893
  %v916 = vadd.f32 %v844, %v893
  %v917 = vadd.f32 %v845, %v893
  %v918 = vadd.f32 %v846, %v893
  %v919 = vadd.f32 %v847, %v893
  %v920 = vadd.f32 %v848, %v893
  %v921 = vadd.f32 %v849, %v893
  %v922 = vadd.f32 %v850, %v893
  %v923 = vadd.f32 %v851, %v893
  %v924 = vadd.f32 %v852, %v893
  %v925 = vadd.f32 %v853, %v893
  %v926 = vadd.f32 %v854, %v893
  %v927 = vadd.f32 %v855, %v893
  %v928 = vadd.f32 %v856, %v893
  %v929 = vadd.f32 %v857, %v893
  %v930 = vadd.f32 %v858, %v893
  %v931 = vadd.f32 %v859, %v893
  %v932 = vadd.f32 %v860, %v893
  %v933 = vadd.f32 %v861, %v893
  %v934 = vadd.f32 %v862, %v893
  %v935 = vadd.f32 %v863, %v893
  %v936 = vadd.f32 %v864, %v893
  %v937 = vadd.f32 %v865, %v893
  %v938 = vadd.f32 %v866, %v893
  %v939 = vadd.f32 %v867, %v893
  %v940 = vadd.f32 %v868, %v893
  %v941 = vadd.f32 %v869, %v893
  %v942 = vadd.f32 %v870, %v893
  %v943 = vadd.f32 %v871, %v893
  %v944 = vadd.f32 %v872, %v893
  %v945 = vadd.f32 %v873, %v893
  %v946 = vadd.f32 %v874, %v893
  %v947 = vadd.f32 %v875, %v893
  %v948 = vadd.f32 %v876, %v893
  %v949 = vadd.f32 %v877, %v893
  %v950 = vadd.f32 %v878, %v893
  %v951 = vadd.f32 %v879, %v893
  %v952 = vadd.f32 %v880, %v893
  %v953 = vadd.f32 %v881, %v893
  %v954 = vadd.f32 %v882, %v893
  %v955 = vadd.f32 %v883, %v893
  %v956 = vadd.f32 %v884, %v893
  %v957 = vadd.f32 %v885, %v893
  %v958 = vadd.f32 %v886, %v893
  %v959 = vmax.f32 %v895, 0.0
  %v960 = vmax.f32 %v896, 0.0
  %v961 = vmax.f32 %v897, 0.0
  %v962 = vmax.f32 %v898, 0.0
  %v963 = vmax.f32 %v899, 0.0
  %v964 = vmax.f32 %v900, 0.0
  %v965 = vmax.f32 %v901, 0.0
  %v966 = vmax.f32 %v902, 0.0
  %v967 = vmax.f32 %v903, 0.0
  %v968 = vmax.f32 %v904, 0.0
  %v969 = vmax.f32 %v905, 0.0
  %v970 = vmax.f32 %v906, 0.0
  %v971 = vmax.f32 %v907, 0.0
  %v972 = vmax.f32 %v908, 0.0
  %v973 = vmax.f32 %v909, 0.0
  %v974 = vmax.f32 %v910, 0.0
  %v975 = vmax.f32 %v911, 0.0
  %v976 = vmax.f32 %v912, 0.0
  %v977 = vmax.f32 %v913, 0.0
  %v978 = vmax.f32 %v914, 0.0
  %v979 = vmax.f32 %v915, 0.0
  %v980 = vmax.f32 %v916, 0.0
  %v981 = vmax.f32 %v917, 0.0
  %v982 = vmax.f32 %v918, 0.0
  %v983 = vmax.f32 %v919, 0.0
  %v984 = vmax.f32 %v920, 0.0
  %v985 = vmax.f32 %v921, 0.0
  %v986 = vmax.f32 %v922, 0.0
  %v987 = vmax.f32 %v923, 0.0
  %v988 = vmax.f32 %v924, 0.0
  %v989 = vmax.f32 %v925, 0.0
  %v990 = vmax.f32 %v926, 0.0
  %v991 = vmax.f32 %v927, 0.0
  %v992 = vmax.f32 %v928, 0.0
  %v993 = vmax.f32 %v929, 0.0
  %v994 = vmax.f32 %v930, 0.0
  %v995 = vmax.f32 %v931, 0.0
  %v996 = vmax.f32 %v932, 0.0
  %v997 = vmax.f32 %v933, 0.0
  %v998 = vmax.f32 %v934, 0.0
  %v999 = vmax.f32 %v935, 0.0
  %v1000 = vmax.f32 %v936, 0.0
  %v1001 = vmax.f32 %v937, 0.0
  %v1002 = vmax.f32 %v938, 0.0
  %v1003 = vmax.f32 %v939, 0.0
  %v1004 = vmax.f32 %v940, 0.0
  %v1005 = vmax.f32 %v941, 0.0
  %v1006 = vmax.f32 %v942, 0.0
  %v1007 = vmax.f32 %v943, 0.0
  %v1008 = vmax.f32 %v944, 0.0
  %v1009 = vmax.f32 %v945, 0.0
  %v1010 = vmax.f32 %v946, 0.0
  %v1011 = vmax.f32 %v947, 0.0
  %v1012 = vmax.f32 %v948, 0.0
  %v1013 = vmax.f32 %v949, 0.0
  %v1014 = vmax.f32 %v950, 0.0
  %v1015 = vmax.f32 %v951, 0.0
  %v1016 = vmax.f32 %v952, 0.0
  %v1017 = vmax.f32 %v953, 0.0
  %v1018 = vmax.f32 %v954, 0.0
  %v1019 = vmax.f32 %v955, 0.0
  %v1020 = vmax.f32 %v956, 0.0
  %v1021 = vmax.f32 %v957, 0.0
  %v1022 = vmax.f32 %v958, 0.0
  %1023 = vst [vmem:[%s3] sm:$0xff] %v959
  %1024 = vst [vmem:[%s3 + $0x8] sm:$0xff] %v960
  %1025 = vst [vmem:[%s3 + $0x10] sm:$0xff] %v961
  %1026 = vst [vmem:[%s3 + $0x18] sm:$0xff] %v962
  %1027 = vst [vmem:[%s3 + $0x20] sm:$0xff] %v963
  %1028 = vst [vmem:[%s3 + $0x28] sm:$0xff] %v964
  %1029 = vst [vmem:[%s3 + $0x30] sm:$0xff] %v965
  %1030 = vst [vmem:[%s3 + $0x38] sm:$0xff] %v966
  %1031 = vst [vmem:[%s3 + $0x40] sm:$0xff] %v967
  %1032 = vst [vmem:[%s3 + $0x48] sm:$0xff] %v968
  %1033 = vst [vmem:[%s3 + $0x50] sm:$0xff] %v969
  %1034 = vst [vmem:[%s3 + $0x58] sm:$0xff] %v970
  %1035 = vst [vmem:[%s3 + $0x60] sm:$0xff] %v971
  %1036 = vst [vmem:[%s3 + $0x68] sm:$0xff] %v972
  %1037 = vst [vmem:[%s3 + $0x70] sm:$0xff] %v973
  %1038 = vst [vmem:[%s3 + $0x78] sm:$0xff] %v974
  %1039 = vst [vmem:[%s3 + $0x80] sm:$0xff] %v975
  %1040 = vst [vmem:[%s3 + $0x88] sm:$0xff] %v976
  %1041 = vst [vmem:[%s3 + $0x90] sm:$0xff] %v977
  %1042 = vst [vmem:[%s3 + $0x98] sm:$0xff] %v978
  %1043 = vst [vmem:[%s3 + $0xa0] sm:$0xff] %v979
  %1044 = vst [vmem:[%s3 + $0xa8] sm:$0xff] %v980
  %1045 = vst [vmem:[%s3 + $0xb0] sm:$0xff] %v981
  %1046 = vst [vmem:[%s3 + $0xb8] sm:$0xff] %v982
  %1047 = vst [vmem:[%s3 + $0xc0] sm:$0xff] %v983
  %1048 = vst [vmem:[%s3 + $0xc8] sm:$0xff] %v984
  %1049 = vst [vmem:[%s3 + $0xd0] sm:$0xff] %v985
  %1050 = vst [vmem:[%s3 + $0xd8] sm:$0xff] %v986
  %1051 = vst [vmem:[%s3 + $0xe0] sm:$0xff] %v987
  %1052 = vst [vmem:[%s3 + $0xe8] sm:$0xff] %v988
  %1053 = vst [vmem:[%s3 + $0xf0] sm:$0xff] %v989
  %1054 = vst [vmem:[%s3 + $0xf8] sm:$0xff] %v990
  %1055 = vst [vmem:[%s3 + $0x100] sm:$0xff] %v991
  %1056 = vst [vmem:[%s3 + $0x108] sm:$0xff] %v992
  %1057 = vst [vmem:[%s3 + $0x110] sm:$0xff] %v993
  %1058 = vst [vmem:[%s3 + $0x118] sm:$0xff] %v994
  %1059 = vst [vmem:[%s3 + $0x120] sm:$0xff] %v995
  %1060 = vst [vmem:[%s3 + $0x128] sm:$0xff] %v996
  %1061 = vst [vmem:[%s3 + $0x130] sm:$0xff] %v997
  %1062 = vst [vmem:[%s3 + $0x138] sm:$0xff] %v998
  %1063 = vst [vmem:[%s3 + $0x140] sm:$0xff] %v999
  %1064 = vst [vmem:[%s3 + $0x148] sm:$0xff] %v1000
  %1065 = vst [vmem:[%s3 + $0x150] sm:$0xff] %v1001
  %1066 = vst [vmem:[%s3 + $0x158] sm:$0xff] %v1002
  %1067 = vst [vmem:[%s3 + $0x160] sm:$0xff] %v1003
  %1068 = vst [vmem:[%s3 + $0x168] sm:$0xff] %v1004
  %1069 = vst [vmem:[%s3 + $0x170] sm:$0xff] %v1005
  %1070 = vst [vmem:[%s3 + $0x178] sm:$0xff] %v1006
  %1071 = vst [vmem:[%s3 + $0x180] sm:$0xff] %v1007
  %1072 = vst [vmem:[%s3 + $0x188] sm:$0xff] %v1008
  %1073 = vst [vmem:[%s3 + $0x190] sm:$0xff] %v1009
  %1074 = vst [vmem:[%s3 + $0x198] sm:$0xff] %v1010
  %1075 = vst [vmem:[%s3 + $0x1a0] sm:$0xff] %v1011
  %1076 = vst [vmem:[%s3 + $0x1a8] sm:$0xff] %v1012
  %1077 = vst [vmem:[%s3 + $0x1b0] sm:$0xff] %v1013
  %1078 = vst [vmem:[%s3 + $0x1b8] sm:$0xff] %v1014
  %1079 = vst [vmem:[%s3 + $0x1c0] sm:$0xff] %v1015
  %1080 = vst [vmem:[%s3 + $0x1c8] sm:$0xff] %v1016
  %1081 = vst [vmem:[%s3 + $0x1d0] sm:$0xff] %v1017
  %1082 = vst [vmem:[%s3 + $0x1d8] sm:$0xff] %v1018
  %1083 = vst [vmem:[%s3 + $0x1e0] sm:$0xff] %v1019
  %1084 = vst [vmem:[%s3 + $0x1e8] sm:$0xff] %v1020
  %1085 = vst [vmem:[%s3 + $0x1f0] sm:$0xff] %v1021
  %1086 = vst [vmem:[%s3 + $0x1f8] sm:$0xff] %v1022
  // Predicated region
  $region14: #{_lambda_.67} parent=0 // pred_check
    _
  $region15: #{_lambda_.67} parent=0 // pred_check_branch
    %1088 = sbr.rel (0) target = $region17
  $region16: #{_lambda_.67} parent=0 // pred_region
    _
  $region17: #{_lambda_.67} parent=0 // pred_fallthru
    _
  // Predicated region
  $region18: #{_lambda_.67} parent=0 // pred_check
    _
  $region19: #{_lambda_.67} parent=0 // pred_check_branch
    %1090 = sbr.rel (0) target = $region21
  $region20: #{_lambda_.67} parent=0 // pred_region
    _
  $region21: #{_lambda_.67} parent=0 // pred_fallthru
    _

// kernel: _lambda_.68
$region0: #{_lambda_.68}
  #allocation0 [shape = 'u32[]', space=smem, size = 0x4, offset = 0x4, fixed_abs, tag = 'smem constant byte address 0x4 - core index']
  #allocation1 [shape = 'u32[144,128]{1,0:T(1,128)}', space=vmem, size = 0x12000, scoped, tag = 'internal scratch']
  %s0 = inlined_call_operand.vmem [shape: f32[9,16,128], index: 0, kind: input, shape index: {}]
  %s1 = inlined_call_operand.vmem [shape: f32[16,128], index: 1, kind: output, shape index: {}]
  %s2 = sld [smem:[#allocation0]]
  $region14: #{_lambda_.68} parent=0
    _
  %s4 = ssub.s32 1, %s2
  %s5 = scalar_select 0, %s4, %s2
  // Predicated region
  $region2: #{_lambda_.68} parent=0 // pred_check
    _
  $region3: #{_lambda_.68} parent=0 // pred_check_branch
    %7 = sbr.rel (0) target = $region5
  $region4: #{_lambda_.68} parent=0 // pred_region
    _
  $region5: #{_lambda_.68} parent=0 // pred_fallthru
    _
  %v8 = vld [vmem:[%s0] sm:$0xff]
  %v9 = vld [vmem:[%s0 + $0x8] sm:$0xff]
  %v10 = vld [vmem:[%s0 + $0x10] sm:$0xff]
  %v11 = vld [vmem:[%s0 + $0x18] sm:$0xff]
  %v12 = vld [vmem:[%s0 + $0x20] sm:$0xff]
  %v13 = vld [vmem:[%s0 + $0x28] sm:$0xff]
  %v14 = vld [vmem:[%s0 + $0x30] sm:$0xff]
  %v15 = vld [vmem:[%s0 + $0x38] sm:$0xff]
  %v16 = vld [vmem:[%s0 + $0x40] sm:$0xff]
  %v17 = vld [vmem:[%s0 + $0x48] sm:$0xff]
  %v18 = vld [vmem:[%s0 + $0x50] sm:$0xff]
  %v19 = vld [vmem:[%s0 + $0x58] sm:$0xff]
  %v20 = vld [vmem:[%s0 + $0x60] sm:$0xff]
  %v21 = vld [vmem:[%s0 + $0x68] sm:$0xff]
  %v22 = vld [vmem:[%s0 + $0x70] sm:$0xff]
  %v23 = vld [vmem:[%s0 + $0x78] sm:$0xff]
  %v24 = vld [vmem:[%s0 + $0x80] sm:$0xff]
  %v25 = vld [vmem:[%s0 + $0x88] sm:$0xff]
  %v26 = vmax.f32 %v8, %v12
  %v27 = vmax.f32 %v10, %v14
  %v28 = vmax.f32 %v26, %v16
  %v29 = vmax.f32 %v27, %v18
  %v30 = vmax.f32 %v28, %v20
  %v31 = vmax.f32 %v29, %v22
  %v32 = vmax.f32 %v30, %v24
  %v33 = vmax.f32 %v32, %v31
  %v34 = vmax.f32 %v9, %v13
  %v35 = vmax.f32 %v11, %v15
  %v36 = vmax.f32 %v34, %v17
  %v37 = vmax.f32 %v35, %v19
  %v38 = vmax.f32 %v36, %v21
  %v39 = vmax.f32 %v37, %v23
  %v40 = vmax.f32 %v38, %v25
  %v41 = vmax.f32 %v40, %v39
  %42 = vst [vmem:[%s1] sm:$0xff] %v33
  %43 = vst [vmem:[%s1 + $0x8] sm:$0xff] %v41
  // Predicated region
  $region6: #{_lambda_.68} parent=0 // pred_check
    _
  $region7: #{_lambda_.68} parent=0 // pred_check_branch
    %45 = sbr.rel (0) target = $region9
  $region8: #{_lambda_.68} parent=0 // pred_region
    _
  $region9: #{_lambda_.68} parent=0 // pred_fallthru
    _
  // Predicated region
  $region10: #{_lambda_.68} parent=0 // pred_check
    _
  $region11: #{_lambda_.68} parent=0 // pred_check_branch
    %47 = sbr.rel (0) target = $region13
  $region12: #{_lambda_.68} parent=0 // pred_region
    _
  $region13: #{_lambda_.68} parent=0 // pred_fallthru
    _

// kernel: _lambda_.69
$region0: #{_lambda_.69}
  #allocation0 [shape = 'u32[]', space=smem, size = 0x4, offset = 0x4, fixed_abs, tag = 'smem constant byte address 0x4 - core index']
  #allocation1 [shape = 'u32[144,128]{1,0:T(1,128)}', space=vmem, size = 0x12000, scoped, tag = 'internal scratch']
  %s0 = inlined_call_operand.vmem [shape: bf16[128,128], index: 0, kind: input, shape index: {}]
  %s1 = inlined_call_operand.vmem [shape: bf16[128,128], index: 1, kind: input, shape index: {}]
  %s2 = inlined_call_operand.vmem [shape: f32[2,1,128], index: 2, kind: input, shape index: {}]
  %s3 = inlined_call_operand.vmem [shape: f32[128,128], index: 3, kind: output, shape index: {}]
  %s4 = sld [smem:[#allocation0]]
  $region22: #{_lambda_.69} parent=0
    _
  %s6 = ssub.s32 1, %s4
  %s7 = scalar_select 0, %s6, %s4
  // Predicated region
  $region2: #{_lambda_.69} parent=0 // pred_check
    _
  $region3: #{_lambda_.69} parent=0 // pred_check_branch
    %9 = sbr.rel (0) target = $region5
  $region4: #{_lambda_.69} parent=0 // pred_region
    _
  $region5: #{_lambda_.69} parent=0 // pred_fallthru
    _
  // Predicated region
  $region6: #{_lambda_.69} parent=0 // pred_check
    _
  $region7: #{_lambda_.69} parent=0 // pred_check_branch
    %11 = sbr.rel (0) target = $region9
  $region8: #{_lambda_.69} parent=0 // pred_region
    _
  $region9: #{_lambda_.69} parent=0 // pred_fallthru
    _
  // Predicated region
  $region10: #{_lambda_.69} parent=0 // pred_check
    _
  $region11: #{_lambda_.69} parent=0 // pred_check_branch
    %13 = sbr.rel (0) target = $region13
  $region12: #{_lambda_.69} parent=0 // pred_region
    _
  $region13: #{_lambda_.69} parent=0 // pred_fallthru
    _
  %v15 = vld [vmem:[%s0] sm:$0xf]
  %v16 = vld [vmem:[%s0 + $0x4] sm:$0xf]
  %v17 = vld [vmem:[%s0 + $0x8] sm:$0xf]
  %v18 = vld [vmem:[%s0 + $0xc] sm:$0xf]
  %v19 = vld [vmem:[%s0 + $0x10] sm:$0xf]
  %v20 = vld [vmem:[%s0 + $0x14] sm:$0xf]
  %v21 = vld [vmem:[%s0 + $0x18] sm:$0xf]
  %v22 = vld [vmem:[%s0 + $0x1c] sm:$0xf]
  %v23 = vld [vmem:[%s0 + $0x20] sm:$0xf]
  %v24 = vld [vmem:[%s0 + $0x24] sm:$0xf]
  %v25 = vld [vmem:[%s0 + $0x28] sm:$0xf]
  %v26 = vld [vmem:[%s0 + $0x2c] sm:$0xf]
  %v27 = vld [vmem:[%s0 + $0x30] sm:$0xf]
  %v28 = vld [vmem:[%s0 + $0x34] sm:$0xf]
  %v29 = vld [vmem:[%s0 + $0x38] sm:$0xf]
  %v30 = vld [vmem:[%s0 + $0x3c] sm:$0xf]
  %v31 = vmax.bf16 %v15, 0
  %v32 = vmax.bf16 %v16, 0
  %v33 = vmax.bf16 %v17, 0
  %v34 = vmax.bf16 %v18, 0
  %v35 = vmax.bf16 %v19, 0
  %v36 = vmax.bf16 %v20, 0
  %v37 = vmax.bf16 %v21, 0
  %v38 = vmax.bf16 %v22, 0
  %v39 = vmax.bf16 %v23, 0
  %v40 = vmax.bf16 %v24, 0
  %v41 = vmax.bf16 %v25, 0
  %v42 = vmax.bf16 %v26, 0
  %v43 = vmax.bf16 %v27, 0
  %v44 = vmax.bf16 %v28, 0
  %v45 = vmax.bf16 %v29, 0
  %v46 = vmax.bf16 %v30, 0
  %v47 = vld [vmem:[%s1] sm:$0xf]
  %v48 = vld [vmem:[%s1 + $0x4] sm:$0xf]
  %v49 = vld [vmem:[%s1 + $0x8] sm:$0xf]
  %v50 = vld [vmem:[%s1 + $0xc] sm:$0xf]
  %v51 = vld [vmem:[%s1 + $0x10] sm:$0xf]
  %v52 = vld [vmem:[%s1 + $0x14] sm:$0xf]
  %v53 = vld [vmem:[%s1 + $0x18] sm:$0xf]
  %v54 = vld [vmem:[%s1 + $0x1c] sm:$0xf]
  %v55 = vld [vmem:[%s1 + $0x20] sm:$0xf]
  %v56 = vld [vmem:[%s1 + $0x24] sm:$0xf]
  %v57 = vld [vmem:[%s1 + $0x28] sm:$0xf]
  %v58 = vld [vmem:[%s1 + $0x2c] sm:$0xf]
  %v59 = vld [vmem:[%s1 + $0x30] sm:$0xf]
  %v60 = vld [vmem:[%s1 + $0x34] sm:$0xf]
  %v61 = vld [vmem:[%s1 + $0x38] sm:$0xf]
  %v62 = vld [vmem:[%s1 + $0x3c] sm:$0xf]
  %v79 = vunpack.c.l.b16 %v31
  %v80 = vunpack.c.l.b16 %v32
  %v81 = vunpack.c.l.b16 %v33
  %v82 = vunpack.c.l.b16 %v34
  %v83 = vunpack.c.l.b16 %v35
  %v84 = vunpack.c.l.b16 %v36
  %v85 = vunpack.c.l.b16 %v37
  %v86 = vunpack.c.l.b16 %v38
  %v87 = vunpack.c.l.b16 %v39
  %v88 = vunpack.c.l.b16 %v40
  %v89 = vunpack.c.l.b16 %v41
  %v90 = vunpack.c.l.b16 %v42
  %v91 = vunpack.c.l.b16 %v43
  %v92 = vunpack.c.l.b16 %v44
  %v93 = vunpack.c.l.b16 %v45
  %v94 = vunpack.c.l.b16 %v46
  %v95 = vpack.c.b16 %v80, %v79
  %v96 = vpack.c.b16 %v82, %v81
  %v97 = vpack.c.b16 %v84, %v83
  %v98 = vpack.c.b16 %v86, %v85
  %v99 = vpack.c.b16 %v88, %v87
  %v100 = vpack.c.b16 %v90, %v89
  %v101 = vpack.c.b16 %v92, %v91
  %v102 = vpack.c.b16 %v94, %v93
  %v127 = vunpack.c.l.b16 %v47
  %v128 = vunpack.c.l.b16 %v48
  %v129 = vunpack.c.l.b16 %v49
  %v130 = vunpack.c.l.b16 %v50
  %v131 = vunpack.c.l.b16 %v51
  %v132 = vunpack.c.l.b16 %v52
  %v133 = vunpack.c.l.b16 %v53
  %v134 = vunpack.c.l.b16 %v54
  %v135 = vunpack.c.l.b16 %v55
  %v136 = vunpack.c.l.b16 %v56
  %v137 = vunpack.c.l.b16 %v57
  %v138 = vunpack.c.l.b16 %v58
  %v139 = vunpack.c.l.b16 %v59
  %v140 = vunpack.c.l.b16 %v60
  %v141 = vunpack.c.l.b16 %v61
  %v142 = vunpack.c.l.b16 %v62
  %v143 = vpack.c.b16 %v128, %v127
  %v144 = vpack.c.b16 %v130, %v129
  %v145 = vpack.c.b16 %v132, %v131
  %v146 = vpack.c.b16 %v134, %v133
  %v147 = vpack.c.b16 %v136, %v135
  %v148 = vpack.c.b16 %v138, %v137
  %v149 = vpack.c.b16 %v140, %v139
  %v150 = vpack.c.b16 %v142, %v141
  %159 = vmatprep.subr.bf16.mxu0 0
  %160 = vmatpush1.bf16.msra.mxu0 %v143
  %161 = vmatprep.subr.bf16.mxu0 0
  %162 = vmatpush1.bf16.msra.mxu0 %v144
  %163 = vmatprep.subr.bf16.mxu0 0
  %164 = vmatpush1.bf16.msra.mxu0 %v145
  %165 = vmatprep.subr.bf16.mxu0 0
  %166 = vmatpush1.bf16.msra.mxu0 %v146
  %167 = vmatprep.subr.bf16.mxu0 0
  %168 = vmatpush1.bf16.msra.mxu0 %v147
  %169 = vmatprep.subr.bf16.mxu0 0
  %170 = vmatpush1.bf16.msra.mxu0 %v148
  %171 = vmatprep.subr.bf16.mxu0 0
  %172 = vmatpush1.bf16.msra.mxu0 %v149
  %173 = vmatprep.subr.bf16.mxu0 0
  %174 = vmatpush1.bf16.msra.mxu0 %v150
  %175 = vmatprep.subr.bf16.mxu0 0
  %176 = vmatpush1.bf16.msra.mxu0 0
  %177 = vmatprep.subr.bf16.mxu0 0
  %178 = vmatpush1.bf16.msra.mxu0 0
  %179 = vmatprep.subr.bf16.mxu0 0
  %180 = vmatpush1.bf16.msra.mxu0 0
  %181 = vmatprep.subr.bf16.mxu0 0
  %182 = vmatpush1.bf16.msra.mxu0 0
  %183 = vmatprep.subr.bf16.mxu0 0
  %184 = vmatpush1.bf16.msra.mxu0 0
  %185 = vmatprep.subr.bf16.mxu0 0
  %186 = vmatpush1.bf16.msra.mxu0 0
  %187 = vmatprep.subr.bf16.mxu0 0
  %188 = vmatpush1.bf16.msra.mxu0 0
  %189 = vmatprep.subr.bf16.mxu0 0
  %190 = vmatpush1.bf16.msra.mxu0 0
  %191 = vmatprep.mubr.bf16.mxu0 0
  %192 = vmatmul.mubr.bf16.gmra.mrb[0].mxu0 %v95
  %v193 = vpop.f32.mrb[0].mxu0
  %v194 = vadd.f32 0.0, %v193
  %v195 = vpop.f32.mrb[0].mxu0
  %v196 = vpop.f32.mrb[0].mxu0
  %v197 = vadd.f32 0.0, %v196
  %v198 = vpop.f32.mrb[0].mxu0
  %199 = vmatprep.mubr.bf16.mxu0 0
  %200 = vmatmul.mubr.bf16.gmra.mrb[0].mxu0 %v96
  %v201 = vpop.f32.mrb[0].mxu0
  %v202 = vadd.f32 0.0, %v201
  %v203 = vpop.f32.mrb[0].mxu0
  %v204 = vpop.f32.mrb[0].mxu0
  %v205 = vadd.f32 0.0, %v204
  %v206 = vpop.f32.mrb[0].mxu0
  %207 = vmatprep.mubr.bf16.mxu0 0
  %208 = vmatmul.mubr.bf16.gmra.mrb[0].mxu0 %v97
  %v209 = vpop.f32.mrb[0].mxu0
  %v210 = vadd.f32 0.0, %v209
  %v211 = vpop.f32.mrb[0].mxu0
  %v212 = vpop.f32.mrb[0].mxu0
  %v213 = vadd.f32 0.0, %v212
  %v214 = vpop.f32.mrb[0].mxu0
  %215 = vmatprep.mubr.bf16.mxu0 0
  %216 = vmatmul.mubr.bf16.gmra.mrb[0].mxu0 %v98
  %v217 = vpop.f32.mrb[0].mxu0
  %v218 = vadd.f32 0.0, %v217
  %v219 = vpop.f32.mrb[0].mxu0
  %v220 = vpop.f32.mrb[0].mxu0
  %v221 = vadd.f32 0.0, %v220
  %v222 = vpop.f32.mrb[0].mxu0
  %223 = vmatprep.mubr.bf16.mxu0 0
  %224 = vmatmul.mubr.bf16.gmra.mrb[0].mxu0 %v99
  %v225 = vpop.f32.mrb[0].mxu0
  %v226 = vadd.f32 0.0, %v225
  %v227 = vpop.f32.mrb[0].mxu0
  %v228 = vpop.f32.mrb[0].mxu0
  %v229 = vadd.f32 0.0, %v228
  %v230 = vpop.f32.mrb[0].mxu0
  %231 = vmatprep.mubr.bf16.mxu0 0
  %232 = vmatmul.mubr.bf16.gmra.mrb[0].mxu0 %v100
  %v233 = vpop.f32.mrb[0].mxu0
  %v234 = vadd.f32 0.0, %v233
  %v235 = vpop.f32.mrb[0].mxu0
  %v236 = vpop.f32.mrb[0].mxu0
  %v237 = vadd.f32 0.0, %v236
  %v238 = vpop.f32.mrb[0].mxu0
  %239 = vmatprep.mubr.bf16.mxu0 0
  %240 = vmatmul.mubr.bf16.gmra.mrb[0].mxu0 %v101
  %v241 = vpop.f32.mrb[0].mxu0
  %v242 = vadd.f32 0.0, %v241
  %v243 = vpop.f32.mrb[0].mxu0
  %v244 = vpop.f32.mrb[0].mxu0
  %v245 = vadd.f32 0.0, %v244
  %v246 = vpop.f32.mrb[0].mxu0
  %247 = vmatprep.mubr.bf16.mxu0 0
  %248 = vmatmul.mubr.bf16.gmra.mrb[0].mxu0 %v102
  %v249 = vpop.f32.mrb[0].mxu0
  %v250 = vadd.f32 0.0, %v249
  %v251 = vpop.f32.mrb[0].mxu0
  %v252 = vpop.f32.mrb[0].mxu0
  %v253 = vadd.f32 0.0, %v252
  %v254 = vpop.f32.mrb[0].mxu0
  %255 = vdwg.mxu0
  %v256 = vld [vmem:[%s2] sm:$0x1]
  %v258 = vlaneseq
  %v259 = vshrl.u32 %v258, 7
  %v260 = vsub.s32 0, %v259
  %v261 = vrot.slane %v256, %v260
  %v263 = vmul.f32 %v194, %v261
  %v264 = vmul.f32 %v197, %v261
  %v265 = vmul.f32 %v202, %v261
  %v266 = vmul.f32 %v205, %v261
  %v267 = vmul.f32 %v210, %v261
  %v268 = vmul.f32 %v213, %v261
  %v269 = vmul.f32 %v218, %v261
  %v270 = vmul.f32 %v221, %v261
  %v271 = vmul.f32 %v226, %v261
  %v272 = vmul.f32 %v229, %v261
  %v273 = vmul.f32 %v234, %v261
  %v274 = vmul.f32 %v237, %v261
  %v275 = vmul.f32 %v242, %v261
  %v276 = vmul.f32 %v245, %v261
  %v277 = vmul.f32 %v250, %v261
  %v278 = vmul.f32 %v253, %v261
  %s279 = scalar_lea.vmem %s2, 1
  %v280 = vld [vmem:[%s279] sm:$0x1]
  %v282 = vlaneseq
  %v283 = vshrl.u32 %v282, 7
  %v284 = vsub.s32 0, %v283
  %v285 = vrot.slane %v280, %v284
  %v287 = vadd.f32 %v263, %v285
  %v288 = vadd.f32 %v264, %v285
  %v289 = vadd.f32 %v265, %v285
  %v290 = vadd.f32 %v266, %v285
  %v291 = vadd.f32 %v267, %v285
  %v292 = vadd.f32 %v268, %v285
  %v293 = vadd.f32 %v269, %v285
  %v294 = vadd.f32 %v270, %v285
  %v295 = vadd.f32 %v271, %v285
  %v296 = vadd.f32 %v272, %v285
  %v297 = vadd.f32 %v273, %v285
  %v298 = vadd.f32 %v274, %v285
  %v299 = vadd.f32 %v275, %v285
  %v300 = vadd.f32 %v276, %v285
  %v301 = vadd.f32 %v277, %v285
  %v302 = vadd.f32 %v278, %v285
  %303 = vst [vmem:[%s3] sm:$0xff] %v287
  %304 = vst [vmem:[%s3 + $0x8] sm:$0xff] %v288
  %305 = vst [vmem:[%s3 + $0x10] sm:$0xff] %v289
  %306 = vst [vmem:[%s3 + $0x18] sm:$0xff] %v290
  %307 = vst [vmem:[%s3 + $0x20] sm:$0xff] %v291
  %308 = vst [vmem:[%s3 + $0x28] sm:$0xff] %v292
  %309 = vst [vmem:[%s3 + $0x30] sm:$0xff] %v293
  %310 = vst [vmem:[%s3 + $0x38] sm:$0xff] %v294
  %311 = vst [vmem:[%s3 + $0x40] sm:$0xff] %v295
  %312 = vst [vmem:[%s3 + $0x48] sm:$0xff] %v296
  %313 = vst [vmem:[%s3 + $0x50] sm:$0xff] %v297
  %314 = vst [vmem:[%s3 + $0x58] sm:$0xff] %v298
  %315 = vst [vmem:[%s3 + $0x60] sm:$0xff] %v299
  %316 = vst [vmem:[%s3 + $0x68] sm:$0xff] %v300
  %317 = vst [vmem:[%s3 + $0x70] sm:$0xff] %v301
  %318 = vst [vmem:[%s3 + $0x78] sm:$0xff] %v302
  // Predicated region
  $region14: #{_lambda_.69} parent=0 // pred_check
    _
  $region15: #{_lambda_.69} parent=0 // pred_check_branch
    %320 = sbr.rel (0) target = $region17
  $region16: #{_lambda_.69} parent=0 // pred_region
    _
  $region17: #{_lambda_.69} parent=0 // pred_fallthru
    _
  // Predicated region
  $region18: #{_lambda_.69} parent=0 // pred_check
    _
  $region19: #{_lambda_.69} parent=0 // pred_check_branch
    %322 = sbr.rel (0) target = $region21
  $region20: #{_lambda_.69} parent=0 // pred_region
    _
  $region21: #{_lambda_.69} parent=0 // pred_fallthru
    _

// kernel: _lambda_.74
$region0: #{_lambda_.74}
  #allocation0 [shape = 'u32[]', space=smem, size = 0x4, offset = 0x4, fixed_abs, tag = 'smem constant byte address 0x4 - core index']
  #allocation1 [shape = 'u32[144,128]{1,0:T(1,128)}', space=vmem, size = 0x12000, scoped, tag = 'internal scratch']
  %s0 = inlined_call_operand.vmem [shape: f32[9,16,128], index: 0, kind: input, shape index: {}]
  %s1 = inlined_call_operand.vmem [shape: f32[16,128], index: 1, kind: input, shape index: {}]
  %s2 = inlined_call_operand.vmem [shape: f32[16,128], index: 2, kind: input, shape index: {}]
  %s3 = inlined_call_operand.vmem [shape: f32[16,128], index: 3, kind: output, shape index: {}]
  %s4 = sld [smem:[#allocation0]]
  $region22: #{_lambda_.74} parent=0
    _
  %s6 = ssub.s32 1, %s4
  %s7 = scalar_select 0, %s6, %s4
  // Predicated region
  $region2: #{_lambda_.74} parent=0 // pred_check
    _
  $region3: #{_lambda_.74} parent=0 // pred_check_branch
    %9 = sbr.rel (0) target = $region5
  $region4: #{_lambda_.74} parent=0 // pred_region
    _
  $region5: #{_lambda_.74} parent=0 // pred_fallthru
    _
  // Predicated region
  $region6: #{_lambda_.74} parent=0 // pred_check
    _
  $region7: #{_lambda_.74} parent=0 // pred_check_branch
    %11 = sbr.rel (0) target = $region9
  $region8: #{_lambda_.74} parent=0 // pred_region
    _
  $region9: #{_lambda_.74} parent=0 // pred_fallthru
    _
  // Predicated region
  $region10: #{_lambda_.74} parent=0 // pred_check
    _
  $region11: #{_lambda_.74} parent=0 // pred_check_branch
    %13 = sbr.rel (0) target = $region13
  $region12: #{_lambda_.74} parent=0 // pred_region
    _
  $region13: #{_lambda_.74} parent=0 // pred_fallthru
    _
  %v14 = vld [vmem:[%s0] sm:$0xff]
  %v15 = vld [vmem:[%s0 + $0x8] sm:$0xff]
  %v16 = vld [vmem:[%s0 + $0x10] sm:$0xff]
  %v17 = vld [vmem:[%s0 + $0x18] sm:$0xff]
  %v18 = vld [vmem:[%s0 + $0x20] sm:$0xff]
  %v19 = vld [vmem:[%s0 + $0x28] sm:$0xff]
  %v20 = vld [vmem:[%s0 + $0x30] sm:$0xff]
  %v21 = vld [vmem:[%s0 + $0x38] sm:$0xff]
  %v22 = vld [vmem:[%s0 + $0x40] sm:$0xff]
  %v23 = vld [vmem:[%s0 + $0x48] sm:$0xff]
  %v24 = vld [vmem:[%s0 + $0x50] sm:$0xff]
  %v25 = vld [vmem:[%s0 + $0x58] sm:$0xff]
  %v26 = vld [vmem:[%s0 + $0x60] sm:$0xff]
  %v27 = vld [vmem:[%s0 + $0x68] sm:$0xff]
  %v28 = vld [vmem:[%s0 + $0x70] sm:$0xff]
  %v29 = vld [vmem:[%s0 + $0x78] sm:$0xff]
  %v30 = vld [vmem:[%s0 + $0x80] sm:$0xff]
  %v31 = vld [vmem:[%s0 + $0x88] sm:$0xff]
  %v32 = vadd.f32 %v14, %v16
  %v33 = vadd.f32 %v32, %v18
  %v34 = vadd.f32 %v33, %v20
  %v35 = vadd.f32 %v34, %v22
  %v36 = vadd.f32 %v35, %v24
  %v37 = vadd.f32 %v36, %v26
  %v38 = vadd.f32 %v37, %v28
  %v39 = vadd.f32 %v38, %v30
  %v40 = vadd.f32 %v15, %v17
  %v41 = vadd.f32 %v40, %v19
  %v42 = vadd.f32 %v41, %v21
  %v43 = vadd.f32 %v42, %v23
  %v44 = vadd.f32 %v43, %v25
  %v45 = vadd.f32 %v44, %v27
  %v46 = vadd.f32 %v45, %v29
  %v47 = vadd.f32 %v46, %v31
  %v48 = vld [vmem:[%s1] sm:$0xff]
  %v49 = vld [vmem:[%s1 + $0x8] sm:$0xff]
  %v50 = vmul.f32 %v39, %v48
  %v51 = vmul.f32 %v47, %v49
  %v52 = vld [vmem:[%s2] sm:$0xff]
  %v53 = vld [vmem:[%s2 + $0x8] sm:$0xff]
  %v54 = vadd.f32 %v50, %v52
  %v55 = vadd.f32 %v51, %v53
  %56 = vst [vmem:[%s3] sm:$0xff] %v54
  %57 = vst [vmem:[%s3 + $0x8] sm:$0xff] %v55
  // Predicated region
  $region14: #{_lambda_.74} parent=0 // pred_check
    _
  $region15: #{_lambda_.74} parent=0 // pred_check_branch
    %59 = sbr.rel (0) target = $region17
  $region16: #{_lambda_.74} parent=0 // pred_region
    _
  $region17: #{_lambda_.74} parent=0 // pred_fallthru
    _
  // Predicated region
  $region18: #{_lambda_.74} parent=0 // pred_check
    _
  $region19: #{_lambda_.74} parent=0 // pred_check_branch
    %61 = sbr.rel (0) target = $region21
  $region20: #{_lambda_.74} parent=0 // pred_region
    _
  $region21: #{_lambda_.74} parent=0 // pred_fallthru
    _

// kernel: _lambda_.71
$region0: #{_lambda_.71}
  #allocation0 [shape = 'u32[]', space=smem, size = 0x4, offset = 0x4, fixed_abs, tag = 'smem constant byte address 0x4 - core index']
  #allocation1 [shape = 'u32[144,128]{1,0:T(1,128)}', space=vmem, size = 0x12000, scoped, tag = 'internal scratch']
  %s0 = inlined_call_operand.vmem [shape: f32[9,16,128], index: 0, kind: input, shape index: {}]
  %s1 = inlined_call_operand.vmem [shape: f32[16,128], index: 1, kind: input, shape index: {}]
  %s2 = inlined_call_operand.vmem [shape: f32[16,128], index: 2, kind: output, shape index: {}]
  %s3 = sld [smem:[#allocation0]]
  $region18: #{_lambda_.71} parent=0
    _
  %s5 = ssub.s32 1, %s3
  %s6 = scalar_select 0, %s5, %s3
  // Predicated region
  $region2: #{_lambda_.71} parent=0 // pred_check
    _
  $region3: #{_lambda_.71} parent=0 // pred_check_branch
    %8 = sbr.rel (0) target = $region5
  $region4: #{_lambda_.71} parent=0 // pred_region
    _
  $region5: #{_lambda_.71} parent=0 // pred_fallthru
    _
  // Predicated region
  $region6: #{_lambda_.71} parent=0 // pred_check
    _
  $region7: #{_lambda_.71} parent=0 // pred_check_branch
    %10 = sbr.rel (0) target = $region9
  $region8: #{_lambda_.71} parent=0 // pred_region
    _
  $region9: #{_lambda_.71} parent=0 // pred_fallthru
    _
  %v11 = vld [vmem:[%s0] sm:$0xff]
  %v12 = vld [vmem:[%s0 + $0x8] sm:$0xff]
  %v13 = vld [vmem:[%s0 + $0x10] sm:$0xff]
  %v14 = vld [vmem:[%s0 + $0x18] sm:$0xff]
  %v15 = vld [vmem:[%s0 + $0x20] sm:$0xff]
  %v16 = vld [vmem:[%s0 + $0x28] sm:$0xff]
  %v17 = vld [vmem:[%s0 + $0x30] sm:$0xff]
  %v18 = vld [vmem:[%s0 + $0x38] sm:$0xff]
  %v19 = vld [vmem:[%s0 + $0x40] sm:$0xff]
  %v20 = vld [vmem:[%s0 + $0x48] sm:$0xff]
  %v21 = vld [vmem:[%s0 + $0x50] sm:$0xff]
  %v22 = vld [vmem:[%s0 + $0x58] sm:$0xff]
  %v23 = vld [vmem:[%s0 + $0x60] sm:$0xff]
  %v24 = vld [vmem:[%s0 + $0x68] sm:$0xff]
  %v25 = vld [vmem:[%s0 + $0x70] sm:$0xff]
  %v26 = vld [vmem:[%s0 + $0x78] sm:$0xff]
  %v27 = vld [vmem:[%s0 + $0x80] sm:$0xff]
  %v28 = vld [vmem:[%s0 + $0x88] sm:$0xff]
  %v29 = vmax.f32 %v11, %v15
  %v30 = vmax.f32 %v13, %v17
  %v31 = vmax.f32 %v29, %v19
  %v32 = vmax.f32 %v30, %v21
  %v33 = vmax.f32 %v31, %v23
  %v34 = vmax.f32 %v32, %v25
  %v35 = vmax.f32 %v33, %v27
  %v36 = vmax.f32 %v35, %v34
  %v37 = vmax.f32 %v12, %v16
  %v38 = vmax.f32 %v14, %v18
  %v39 = vmax.f32 %v37, %v20
  %v40 = vmax.f32 %v38, %v22
  %v41 = vmax.f32 %v39, %v24
  %v42 = vmax.f32 %v40, %v26
  %v43 = vmax.f32 %v41, %v28
  %v44 = vmax.f32 %v43, %v42
  %v45 = vld [vmem:[%s1] sm:$0xff]
  %v46 = vld [vmem:[%s1 + $0x8] sm:$0xff]
  %v47 = vadd.f32 %v36, %v45
  %v48 = vadd.f32 %v44, %v46
  %49 = vst [vmem:[%s2] sm:$0xff] %v47
  %50 = vst [vmem:[%s2 + $0x8] sm:$0xff] %v48
  // Predicated region
  $region10: #{_lambda_.71} parent=0 // pred_check
    _
  $region11: #{_lambda_.71} parent=0 // pred_check_branch
    %52 = sbr.rel (0) target = $region13
  $region12: #{_lambda_.71} parent=0 // pred_region
    _
  $region13: #{_lambda_.71} parent=0 // pred_fallthru
    _
  // Predicated region
  $region14: #{_lambda_.71} parent=0 // pred_check
    _
  $region15: #{_lambda_.71} parent=0 // pred_check_branch
    %54 = sbr.rel (0) target = $region17
  $region16: #{_lambda_.71} parent=0 // pred_region
    _
  $region17: #{_lambda_.71} parent=0 // pred_fallthru
    _

// kernel: _lambda_.73
$region0: #{_lambda_.73}
  #allocation0 [shape = 'u32[]', space=smem, size = 0x4, offset = 0x4, fixed_abs, tag = 'smem constant byte address 0x4 - core index']
  #allocation1 [shape = 'u32[144,128]{1,0:T(1,128)}', space=vmem, size = 0x12000, scoped, tag = 'internal scratch']
  %s0 = inlined_call_operand.vmem [shape: f32[16,128], index: 0, kind: input, shape index: {}]
  %s1 = inlined_call_operand.vmem [shape: f32[9,16,128], index: 1, kind: input, shape index: {}]
  %s2 = inlined_call_operand.vmem [shape: f32[16,128], index: 2, kind: output, shape index: {}]
  %s3 = sld [smem:[#allocation0]]
  $region18: #{_lambda_.73} parent=0
    _
  %s5 = ssub.s32 1, %s3
  %s6 = scalar_select 0, %s5, %s3
  // Predicated region
  $region2: #{_lambda_.73} parent=0 // pred_check
    _
  $region3: #{_lambda_.73} parent=0 // pred_check_branch
    %8 = sbr.rel (0) target = $region5
  $region4: #{_lambda_.73} parent=0 // pred_region
    _
  $region5: #{_lambda_.73} parent=0 // pred_fallthru
    _
  // Predicated region
  $region6: #{_lambda_.73} parent=0 // pred_check
    _
  $region7: #{_lambda_.73} parent=0 // pred_check_branch
    %10 = sbr.rel (0) target = $region9
  $region8: #{_lambda_.73} parent=0 // pred_region
    _
  $region9: #{_lambda_.73} parent=0 // pred_fallthru
    _
  %v11 = vld [vmem:[%s0] sm:$0xff]
  %v12 = vld [vmem:[%s0 + $0x8] sm:$0xff]
  %v13 = vld [vmem:[%s1] sm:$0xff]
  %v14 = vld [vmem:[%s1 + $0x8] sm:$0xff]
  %v15 = vld [vmem:[%s1 + $0x10] sm:$0xff]
  %v16 = vld [vmem:[%s1 + $0x18] sm:$0xff]
  %v17 = vld [vmem:[%s1 + $0x20] sm:$0xff]
  %v18 = vld [vmem:[%s1 + $0x28] sm:$0xff]
  %v19 = vld [vmem:[%s1 + $0x30] sm:$0xff]
  %v20 = vld [vmem:[%s1 + $0x38] sm:$0xff]
  %v21 = vld [vmem:[%s1 + $0x40] sm:$0xff]
  %v22 = vld [vmem:[%s1 + $0x48] sm:$0xff]
  %v23 = vld [vmem:[%s1 + $0x50] sm:$0xff]
  %v24 = vld [vmem:[%s1 + $0x58] sm:$0xff]
  %v25 = vld [vmem:[%s1 + $0x60] sm:$0xff]
  %v26 = vld [vmem:[%s1 + $0x68] sm:$0xff]
  %v27 = vld [vmem:[%s1 + $0x70] sm:$0xff]
  %v28 = vld [vmem:[%s1 + $0x78] sm:$0xff]
  %v29 = vld [vmem:[%s1 + $0x80] sm:$0xff]
  %v30 = vld [vmem:[%s1 + $0x88] sm:$0xff]
  %v31 = vmax.f32 %v13, %v17
  %v32 = vmax.f32 %v15, %v19
  %v33 = vmax.f32 %v31, %v21
  %v34 = vmax.f32 %v32, %v23
  %v35 = vmax.f32 %v33, %v25
  %v36 = vmax.f32 %v34, %v27
  %v37 = vmax.f32 %v35, %v29
  %v38 = vmax.f32 %v37, %v36
  %v39 = vmax.f32 %v14, %v18
  %v40 = vmax.f32 %v16, %v20
  %v41 = vmax.f32 %v39, %v22
  %v42 = vmax.f32 %v40, %v24
  %v43 = vmax.f32 %v41, %v26
  %v44 = vmax.f32 %v42, %v28
  %v45 = vmax.f32 %v43, %v30
  %v46 = vmax.f32 %v45, %v44
  %v47 = vadd.f32 %v11, %v38
  %v48 = vadd.f32 %v12, %v46
  %49 = vst [vmem:[%s2] sm:$0xff] %v47
  %50 = vst [vmem:[%s2 + $0x8] sm:$0xff] %v48
  // Predicated region
  $region10: #{_lambda_.73} parent=0 // pred_check
    _
  $region11: #{_lambda_.73} parent=0 // pred_check_branch
    %52 = sbr.rel (0) target = $region13
  $region12: #{_lambda_.73} parent=0 // pred_region
    _
  $region13: #{_lambda_.73} parent=0 // pred_fallthru
    _
  // Predicated region
  $region14: #{_lambda_.73} parent=0 // pred_check
    _
  $region15: #{_lambda_.73} parent=0 // pred_check_branch
    %54 = sbr.rel (0) target = $region17
  $region16: #{_lambda_.73} parent=0 // pred_region
    _
  $region17: #{_lambda_.73} parent=0 // pred_fallthru
    _

// kernel: _lambda_.72
$region0: #{_lambda_.72}
  #allocation0 [shape = 'u32[]', space=smem, size = 0x4, offset = 0x4, fixed_abs, tag = 'smem constant byte address 0x4 - core index']
  #allocation1 [shape = 'u32[144,128]{1,0:T(1,128)}', space=vmem, size = 0x12000, scoped, tag = 'internal scratch']
  %s0 = inlined_call_operand.vmem [shape: f32[9,16,128], index: 0, kind: input, shape index: {}]
  %s1 = inlined_call_operand.vmem [shape: f32[9,16,128], index: 1, kind: input, shape index: {}]
  %s2 = inlined_call_operand.vmem [shape: f32[16,128], index: 2, kind: input, shape index: {}]
  %s3 = inlined_call_operand.vmem [shape: f32[16,128], index: 3, kind: output, shape index: {}]
  %s4 = sld [smem:[#allocation0]]
  $region22: #{_lambda_.72} parent=0
    _
  %s6 = ssub.s32 1, %s4
  %s7 = scalar_select 0, %s6, %s4
  // Predicated region
  $region2: #{_lambda_.72} parent=0 // pred_check
    _
  $region3: #{_lambda_.72} parent=0 // pred_check_branch
    %9 = sbr.rel (0) target = $region5
  $region4: #{_lambda_.72} parent=0 // pred_region
    _
  $region5: #{_lambda_.72} parent=0 // pred_fallthru
    _
  // Predicated region
  $region6: #{_lambda_.72} parent=0 // pred_check
    _
  $region7: #{_lambda_.72} parent=0 // pred_check_branch
    %11 = sbr.rel (0) target = $region9
  $region8: #{_lambda_.72} parent=0 // pred_region
    _
  $region9: #{_lambda_.72} parent=0 // pred_fallthru
    _
  // Predicated region
  $region10: #{_lambda_.72} parent=0 // pred_check
    _
  $region11: #{_lambda_.72} parent=0 // pred_check_branch
    %13 = sbr.rel (0) target = $region13
  $region12: #{_lambda_.72} parent=0 // pred_region
    _
  $region13: #{_lambda_.72} parent=0 // pred_fallthru
    _
  %v14 = vld [vmem:[%s0] sm:$0xff]
  %v15 = vld [vmem:[%s0 + $0x8] sm:$0xff]
  %v16 = vld [vmem:[%s0 + $0x10] sm:$0xff]
  %v17 = vld [vmem:[%s0 + $0x18] sm:$0xff]
  %v18 = vld [vmem:[%s0 + $0x20] sm:$0xff]
  %v19 = vld [vmem:[%s0 + $0x28] sm:$0xff]
  %v20 = vld [vmem:[%s0 + $0x30] sm:$0xff]
  %v21 = vld [vmem:[%s0 + $0x38] sm:$0xff]
  %v22 = vld [vmem:[%s0 + $0x40] sm:$0xff]
  %v23 = vld [vmem:[%s0 + $0x48] sm:$0xff]
  %v24 = vld [vmem:[%s0 + $0x50] sm:$0xff]
  %v25 = vld [vmem:[%s0 + $0x58] sm:$0xff]
  %v26 = vld [vmem:[%s0 + $0x60] sm:$0xff]
  %v27 = vld [vmem:[%s0 + $0x68] sm:$0xff]
  %v28 = vld [vmem:[%s0 + $0x70] sm:$0xff]
  %v29 = vld [vmem:[%s0 + $0x78] sm:$0xff]
  %v30 = vld [vmem:[%s0 + $0x80] sm:$0xff]
  %v31 = vld [vmem:[%s0 + $0x88] sm:$0xff]
  %v32 = vmax.f32 %v14, %v18
  %v33 = vmax.f32 %v16, %v20
  %v34 = vmax.f32 %v32, %v22
  %v35 = vmax.f32 %v33, %v24
  %v36 = vmax.f32 %v34, %v26
  %v37 = vmax.f32 %v35, %v28
  %v38 = vmax.f32 %v36, %v30
  %v39 = vmax.f32 %v38, %v37
  %v40 = vmax.f32 %v15, %v19
  %v41 = vmax.f32 %v17, %v21
  %v42 = vmax.f32 %v40, %v23
  %v43 = vmax.f32 %v41, %v25
  %v44 = vmax.f32 %v42, %v27
  %v45 = vmax.f32 %v43, %v29
  %v46 = vmax.f32 %v44, %v31
  %v47 = vmax.f32 %v46, %v45
  %v48 = vld [vmem:[%s1] sm:$0xff]
  %v49 = vld [vmem:[%s1 + $0x8] sm:$0xff]
  %v50 = vld [vmem:[%s1 + $0x10] sm:$0xff]
  %v51 = vld [vmem:[%s1 + $0x18] sm:$0xff]
  %v52 = vld [vmem:[%s1 + $0x20] sm:$0xff]
  %v53 = vld [vmem:[%s1 + $0x28] sm:$0xff]
  %v54 = vld [vmem:[%s1 + $0x30] sm:$0xff]
  %v55 = vld [vmem:[%s1 + $0x38] sm:$0xff]
  %v56 = vld [vmem:[%s1 + $0x40] sm:$0xff]
  %v57 = vld [vmem:[%s1 + $0x48] sm:$0xff]
  %v58 = vld [vmem:[%s1 + $0x50] sm:$0xff]
  %v59 = vld [vmem:[%s1 + $0x58] sm:$0xff]
  %v60 = vld [vmem:[%s1 + $0x60] sm:$0xff]
  %v61 = vld [vmem:[%s1 + $0x68] sm:$0xff]
  %v62 = vld [vmem:[%s1 + $0x70] sm:$0xff]
  %v63 = vld [vmem:[%s1 + $0x78] sm:$0xff]
  %v64 = vld [vmem:[%s1 + $0x80] sm:$0xff]
  %v65 = vld [vmem:[%s1 + $0x88] sm:$0xff]
  %v66 = vadd.f32 %v48, %v50
  %v67 = vadd.f32 %v66, %v52
  %v68 = vadd.f32 %v67, %v54
  %v69 = vadd.f32 %v68, %v56
  %v70 = vadd.f32 %v69, %v58
  %v71 = vadd.f32 %v70, %v60
  %v72 = vadd.f32 %v71, %v62
  %v73 = vadd.f32 %v72, %v64
  %v74 = vadd.f32 %v49, %v51
  %v75 = vadd.f32 %v74, %v53
  %v76 = vadd.f32 %v75, %v55
  %v77 = vadd.f32 %v76, %v57
  %v78 = vadd.f32 %v77, %v59
  %v79 = vadd.f32 %v78, %v61
  %v80 = vadd.f32 %v79, %v63
  %v81 = vadd.f32 %v80, %v65
  %v82 = vld [vmem:[%s2] sm:$0xff]
  %v83 = vld [vmem:[%s2 + $0x8] sm:$0xff]
  %v84 = vmul.f32 %v73, %v82
  %v85 = vmul.f32 %v81, %v83
  %v86 = vadd.f32 %v39, %v84
  %v87 = vadd.f32 %v47, %v85
  %88 = vst [vmem:[%s3] sm:$0xff] %v86
  %89 = vst [vmem:[%s3 + $0x8] sm:$0xff] %v87
  // Predicated region
  $region14: #{_lambda_.72} parent=0 // pred_check
    _
  $region15: #{_lambda_.72} parent=0 // pred_check_branch
    %91 = sbr.rel (0) target = $region17
  $region16: #{_lambda_.72} parent=0 // pred_region
    _
  $region17: #{_lambda_.72} parent=0 // pred_fallthru
    _
  // Predicated region
  $region18: #{_lambda_.72} parent=0 // pred_check
    _
  $region19: #{_lambda_.72} parent=0 // pred_check_branch
    %93 = sbr.rel (0) target = $region21
  $region20: #{_lambda_.72} parent=0 // pred_region
    _
  $region21: #{_lambda_.72} parent=0 // pred_fallthru
    _

// kernel: _lambda_.82
$region0: #{_lambda_.82}
  #allocation0 [shape = 'u32[]', space=smem, size = 0x4, offset = 0x4, fixed_abs, tag = 'smem constant byte address 0x4 - core index']
  #allocation1 [shape = 'u32[144,128]{1,0:T(1,128)}', space=vmem, size = 0x12000, scoped, tag = 'internal scratch']
  %s0 = inlined_call_operand.vmem [shape: bf16[32,128], index: 0, kind: input, shape index: {}]
  %s1 = inlined_call_operand.vmem [shape: bf16[128,128], index: 1, kind: input, shape index: {}]
  %s2 = inlined_call_operand.vmem [shape: f32[2,1,128], index: 2, kind: input, shape index: {}]
  %s3 = inlined_call_operand.vmem [shape: f32[32,128], index: 3, kind: output, shape index: {}]
  %s4 = sld [smem:[#allocation0]]
  $region22: #{_lambda_.82} parent=0
    _
  %s6 = ssub.s32 1, %s4
  %s7 = scalar_select 0, %s6, %s4
  // Predicated region
  $region2: #{_lambda_.82} parent=0 // pred_check
    _
  $region3: #{_lambda_.82} parent=0 // pred_check_branch
    %9 = sbr.rel (0) target = $region5
  $region4: #{_lambda_.82} parent=0 // pred_region
    _
  $region5: #{_lambda_.82} parent=0 // pred_fallthru
    _
  // Predicated region
  $region6: #{_lambda_.82} parent=0 // pred_check
    _
  $region7: #{_lambda_.82} parent=0 // pred_check_branch
    %11 = sbr.rel (0) target = $region9
  $region8: #{_lambda_.82} parent=0 // pred_region
    _
  $region9: #{_lambda_.82} parent=0 // pred_fallthru
    _
  // Predicated region
  $region10: #{_lambda_.82} parent=0 // pred_check
    _
  $region11: #{_lambda_.82} parent=0 // pred_check_branch
    %13 = sbr.rel (0) target = $region13
  $region12: #{_lambda_.82} parent=0 // pred_region
    _
  $region13: #{_lambda_.82} parent=0 // pred_fallthru
    _
  %v15 = vld [vmem:[%s0] sm:$0xf]
  %v16 = vld [vmem:[%s0 + $0x4] sm:$0xf]
  %v17 = vld [vmem:[%s0 + $0x8] sm:$0xf]
  %v18 = vld [vmem:[%s0 + $0xc] sm:$0xf]
  %v19 = vmax.bf16 %v15, 0
  %v20 = vmax.bf16 %v16, 0
  %v21 = vmax.bf16 %v17, 0
  %v22 = vmax.bf16 %v18, 0
  %v23 = vld [vmem:[%s1] sm:$0xf]
  %v24 = vld [vmem:[%s1 + $0x4] sm:$0xf]
  %v25 = vld [vmem:[%s1 + $0x8] sm:$0xf]
  %v26 = vld [vmem:[%s1 + $0xc] sm:$0xf]
  %v27 = vld [vmem:[%s1 + $0x10] sm:$0xf]
  %v28 = vld [vmem:[%s1 + $0x14] sm:$0xf]
  %v29 = vld [vmem:[%s1 + $0x18] sm:$0xf]
  %v30 = vld [vmem:[%s1 + $0x1c] sm:$0xf]
  %v31 = vld [vmem:[%s1 + $0x20] sm:$0xf]
  %v32 = vld [vmem:[%s1 + $0x24] sm:$0xf]
  %v33 = vld [vmem:[%s1 + $0x28] sm:$0xf]
  %v34 = vld [vmem:[%s1 + $0x2c] sm:$0xf]
  %v35 = vld [vmem:[%s1 + $0x30] sm:$0xf]
  %v36 = vld [vmem:[%s1 + $0x34] sm:$0xf]
  %v37 = vld [vmem:[%s1 + $0x38] sm:$0xf]
  %v38 = vld [vmem:[%s1 + $0x3c] sm:$0xf]
  %v43 = vunpack.c.l.b16 %v19
  %v44 = vunpack.c.l.b16 %v20
  %v45 = vunpack.c.l.b16 %v21
  %v46 = vunpack.c.l.b16 %v22
  %v47 = vpack.c.b16 %v44, %v43
  %v48 = vpack.c.b16 %v46, %v45
  %v67 = vunpack.c.l.b16 %v23
  %v68 = vunpack.c.l.b16 %v24
  %v69 = vunpack.c.l.b16 %v25
  %v70 = vunpack.c.l.b16 %v26
  %v71 = vunpack.c.l.b16 %v27
  %v72 = vunpack.c.l.b16 %v28
  %v73 = vunpack.c.l.b16 %v29
  %v74 = vunpack.c.l.b16 %v30
  %v75 = vunpack.c.l.b16 %v31
  %v76 = vunpack.c.l.b16 %v32
  %v77 = vunpack.c.l.b16 %v33
  %v78 = vunpack.c.l.b16 %v34
  %v79 = vunpack.c.l.b16 %v35
  %v80 = vunpack.c.l.b16 %v36
  %v81 = vunpack.c.l.b16 %v37
  %v82 = vunpack.c.l.b16 %v38
  %v83 = vpack.c.b16 %v68, %v67
  %v84 = vpack.c.b16 %v70, %v69
  %v85 = vpack.c.b16 %v72, %v71
  %v86 = vpack.c.b16 %v74, %v73
  %v87 = vpack.c.b16 %v76, %v75
  %v88 = vpack.c.b16 %v78, %v77
  %v89 = vpack.c.b16 %v80, %v79
  %v90 = vpack.c.b16 %v82, %v81
  %99 = vmatprep.subr.bf16.mxu0 0
  %100 = vmatpush1.bf16.msra.mxu0 %v83
  %101 = vmatprep.subr.bf16.mxu0 0
  %102 = vmatpush1.bf16.msra.mxu0 %v84
  %103 = vmatprep.subr.bf16.mxu0 0
  %104 = vmatpush1.bf16.msra.mxu0 %v85
  %105 = vmatprep.subr.bf16.mxu0 0
  %106 = vmatpush1.bf16.msra.mxu0 %v86
  %107 = vmatprep.subr.bf16.mxu0 0
  %108 = vmatpush1.bf16.msra.mxu0 %v87
  %109 = vmatprep.subr.bf16.mxu0 0
  %110 = vmatpush1.bf16.msra.mxu0 %v88
  %111 = vmatprep.subr.bf16.mxu0 0
  %112 = vmatpush1.bf16.msra.mxu0 %v89
  %113 = vmatprep.subr.bf16.mxu0 0
  %114 = vmatpush1.bf16.msra.mxu0 %v90
  %115 = vmatprep.subr.bf16.mxu0 0
  %116 = vmatpush1.bf16.msra.mxu0 0
  %117 = vmatprep.subr.bf16.mxu0 0
  %118 = vmatpush1.bf16.msra.mxu0 0
  %119 = vmatprep.subr.bf16.mxu0 0
  %120 = vmatpush1.bf16.msra.mxu0 0
  %121 = vmatprep.subr.bf16.mxu0 0
  %122 = vmatpush1.bf16.msra.mxu0 0
  %123 = vmatprep.subr.bf16.mxu0 0
  %124 = vmatpush1.bf16.msra.mxu0 0
  %125 = vmatprep.subr.bf16.mxu0 0
  %126 = vmatpush1.bf16.msra.mxu0 0
  %127 = vmatprep.subr.bf16.mxu0 0
  %128 = vmatpush1.bf16.msra.mxu0 0
  %129 = vmatprep.subr.bf16.mxu0 0
  %130 = vmatpush1.bf16.msra.mxu0 0
  %131 = vmatprep.mubr.bf16.mxu0 0
  %132 = vmatmul.mubr.bf16.gmra.mrb[0].mxu0 %v47
  %v133 = vpop.f32.mrb[0].mxu0
  %v134 = vadd.f32 0.0, %v133
  %v135 = vpop.f32.mrb[0].mxu0
  %v136 = vpop.f32.mrb[0].mxu0
  %v137 = vadd.f32 0.0, %v136
  %v138 = vpop.f32.mrb[0].mxu0
  %139 = vmatprep.mubr.bf16.mxu0 0
  %140 = vmatmul.mubr.bf16.gmra.mrb[0].mxu0 %v48
  %v141 = vpop.f32.mrb[0].mxu0
  %v142 = vadd.f32 0.0, %v141
  %v143 = vpop.f32.mrb[0].mxu0
  %v144 = vpop.f32.mrb[0].mxu0
  %v145 = vadd.f32 0.0, %v144
  %v146 = vpop.f32.mrb[0].mxu0
  %147 = vdwg.mxu0
  %v148 = vld [vmem:[%s2] sm:$0x1]
  %v150 = vlaneseq
  %v151 = vshrl.u32 %v150, 7
  %v152 = vsub.s32 0, %v151
  %v153 = vrot.slane %v148, %v152
  %v155 = vmul.f32 %v134, %v153
  %v156 = vmul.f32 %v137, %v153
  %v157 = vmul.f32 %v142, %v153
  %v158 = vmul.f32 %v145, %v153
  %s159 = scalar_lea.vmem %s2, 1
  %v160 = vld [vmem:[%s159] sm:$0x1]
  %v162 = vlaneseq
  %v163 = vshrl.u32 %v162, 7
  %v164 = vsub.s32 0, %v163
  %v165 = vrot.slane %v160, %v164
  %v167 = vadd.f32 %v155, %v165
  %v168 = vadd.f32 %v156, %v165
  %v169 = vadd.f32 %v157, %v165
  %v170 = vadd.f32 %v158, %v165
  %171 = vst [vmem:[%s3] sm:$0xff] %v167
  %172 = vst [vmem:[%s3 + $0x8] sm:$0xff] %v168
  %173 = vst [vmem:[%s3 + $0x10] sm:$0xff] %v169
  %174 = vst [vmem:[%s3 + $0x18] sm:$0xff] %v170
  // Predicated region
  $region14: #{_lambda_.82} parent=0 // pred_check
    _
  $region15: #{_lambda_.82} parent=0 // pred_check_branch
    %176 = sbr.rel (0) target = $region17
  $region16: #{_lambda_.82} parent=0 // pred_region
    _
  $region17: #{_lambda_.82} parent=0 // pred_fallthru
    _
  // Predicated region
  $region18: #{_lambda_.82} parent=0 // pred_check
    _
  $region19: #{_lambda_.82} parent=0 // pred_check_branch
    %178 = sbr.rel (0) target = $region21
  $region20: #{_lambda_.82} parent=0 // pred_region
    _
  $region21: #{_lambda_.82} parent=0 // pred_fallthru
    _

// kernel: _lambda_.77
$region0: #{_lambda_.77}
  #allocation0 [shape = 'u32[]', space=smem, size = 0x4, offset = 0x4, fixed_abs, tag = 'smem constant byte address 0x4 - core index']
  #allocation1 [shape = 'u32[144,128]{1,0:T(1,128)}', space=vmem, size = 0x12000, scoped, tag = 'internal scratch']
  %s0 = inlined_call_operand.vmem [shape: f32[9,8,128], index: 0, kind: input, shape index: {}]
  %s1 = inlined_call_operand.vmem [shape: f32[9,8,128], index: 1, kind: input, shape index: {}]
  %s2 = inlined_call_operand.vmem [shape: f32[8,128], index: 2, kind: output, shape index: {}]
  %s3 = sld [smem:[#allocation0]]
  $region18: #{_lambda_.77} parent=0
    _
  %s5 = ssub.s32 1, %s3
  %s6 = scalar_select 0, %s5, %s3
  // Predicated region
  $region2: #{_lambda_.77} parent=0 // pred_check
    _
  $region3: #{_lambda_.77} parent=0 // pred_check_branch
    %8 = sbr.rel (0) target = $region5
  $region4: #{_lambda_.77} parent=0 // pred_region
    _
  $region5: #{_lambda_.77} parent=0 // pred_fallthru
    _
  // Predicated region
  $region6: #{_lambda_.77} parent=0 // pred_check
    _
  $region7: #{_lambda_.77} parent=0 // pred_check_branch
    %10 = sbr.rel (0) target = $region9
  $region8: #{_lambda_.77} parent=0 // pred_region
    _
  $region9: #{_lambda_.77} parent=0 // pred_fallthru
    _
  %v11 = vld [vmem:[%s0] sm:$0xff]
  %v12 = vld [vmem:[%s0 + $0x8] sm:$0xff]
  %v13 = vld [vmem:[%s0 + $0x10] sm:$0xff]
  %v14 = vld [vmem:[%s0 + $0x18] sm:$0xff]
  %v15 = vld [vmem:[%s0 + $0x20] sm:$0xff]
  %v16 = vld [vmem:[%s0 + $0x28] sm:$0xff]
  %v17 = vld [vmem:[%s0 + $0x30] sm:$0xff]
  %v18 = vld [vmem:[%s0 + $0x38] sm:$0xff]
  %v19 = vld [vmem:[%s0 + $0x40] sm:$0xff]
  %v20 = vmax.f32 %v11, %v15
  %v21 = vmax.f32 %v12, %v16
  %v22 = vmax.f32 %v13, %v17
  %v23 = vmax.f32 %v14, %v18
  %v24 = vmax.f32 %v20, %v19
  %v25 = vmax.f32 %v24, %v21
  %v26 = vmax.f32 %v22, %v23
  %v27 = vmax.f32 %v25, %v26
  %v28 = vld [vmem:[%s1] sm:$0xff]
  %v29 = vld [vmem:[%s1 + $0x8] sm:$0xff]
  %v30 = vld [vmem:[%s1 + $0x10] sm:$0xff]
  %v31 = vld [vmem:[%s1 + $0x18] sm:$0xff]
  %v32 = vld [vmem:[%s1 + $0x20] sm:$0xff]
  %v33 = vld [vmem:[%s1 + $0x28] sm:$0xff]
  %v34 = vld [vmem:[%s1 + $0x30] sm:$0xff]
  %v35 = vld [vmem:[%s1 + $0x38] sm:$0xff]
  %v36 = vld [vmem:[%s1 + $0x40] sm:$0xff]
  %v37 = vmax.f32 %v28, %v32
  %v38 = vmax.f32 %v29, %v33
  %v39 = vmax.f32 %v30, %v34
  %v40 = vmax.f32 %v31, %v35
  %v41 = vmax.f32 %v37, %v36
  %v42 = vmax.f32 %v41, %v38
  %v43 = vmax.f32 %v39, %v40
  %v44 = vmax.f32 %v42, %v43
  %v45 = vadd.f32 %v27, %v44
  %46 = vst [vmem:[%s2] sm:$0xff] %v45
  // Predicated region
  $region10: #{_lambda_.77} parent=0 // pred_check
    _
  $region11: #{_lambda_.77} parent=0 // pred_check_branch
    %48 = sbr.rel (0) target = $region13
  $region12: #{_lambda_.77} parent=0 // pred_region
    _
  $region13: #{_lambda_.77} parent=0 // pred_fallthru
    _
  // Predicated region
  $region14: #{_lambda_.77} parent=0 // pred_check
    _
  $region15: #{_lambda_.77} parent=0 // pred_check_branch
    %50 = sbr.rel (0) target = $region17
  $region16: #{_lambda_.77} parent=0 // pred_region
    _
  $region17: #{_lambda_.77} parent=0 // pred_fallthru
    _

// kernel: _lambda_.80
$region0: #{_lambda_.80}
  #allocation0 [shape = 'u32[]', space=smem, size = 0x4, offset = 0x4, fixed_abs, tag = 'smem constant byte address 0x4 - core index']
  #allocation1 [shape = 'u32[144,128]{1,0:T(1,128)}', space=vmem, size = 0x12000, scoped, tag = 'internal scratch']
  %s0 = inlined_call_operand.vmem [shape: f32[8,128], index: 0, kind: input, shape index: {}]
  %s1 = inlined_call_operand.vmem [shape: f32[9,8,128], index: 1, kind: input, shape index: {}]
  %s2 = inlined_call_operand.vmem [shape: f32[8,128], index: 2, kind: input, shape index: {}]
  %s3 = inlined_call_operand.vmem [shape: f32[8,128], index: 3, kind: output, shape index: {}]
  %s4 = sld [smem:[#allocation0]]
  $region22: #{_lambda_.80} parent=0
    _
  %s6 = ssub.s32 1, %s4
  %s7 = scalar_select 0, %s6, %s4
  // Predicated region
  $region2: #{_lambda_.80} parent=0 // pred_check
    _
  $region3: #{_lambda_.80} parent=0 // pred_check_branch
    %9 = sbr.rel (0) target = $region5
  $region4: #{_lambda_.80} parent=0 // pred_region
    _
  $region5: #{_lambda_.80} parent=0 // pred_fallthru
    _
  // Predicated region
  $region6: #{_lambda_.80} parent=0 // pred_check
    _
  $region7: #{_lambda_.80} parent=0 // pred_check_branch
    %11 = sbr.rel (0) target = $region9
  $region8: #{_lambda_.80} parent=0 // pred_region
    _
  $region9: #{_lambda_.80} parent=0 // pred_fallthru
    _
  // Predicated region
  $region10: #{_lambda_.80} parent=0 // pred_check
    _
  $region11: #{_lambda_.80} parent=0 // pred_check_branch
    %13 = sbr.rel (0) target = $region13
  $region12: #{_lambda_.80} parent=0 // pred_region
    _
  $region13: #{_lambda_.80} parent=0 // pred_fallthru
    _
  %v14 = vld [vmem:[%s0] sm:$0xff]
  %v15 = vld [vmem:[%s1] sm:$0xff]
  %v16 = vld [vmem:[%s1 + $0x8] sm:$0xff]
  %v17 = vld [vmem:[%s1 + $0x10] sm:$0xff]
  %v18 = vld [vmem:[%s1 + $0x18] sm:$0xff]
  %v19 = vld [vmem:[%s1 + $0x20] sm:$0xff]
  %v20 = vld [vmem:[%s1 + $0x28] sm:$0xff]
  %v21 = vld [vmem:[%s1 + $0x30] sm:$0xff]
  %v22 = vld [vmem:[%s1 + $0x38] sm:$0xff]
  %v23 = vld [vmem:[%s1 + $0x40] sm:$0xff]
  %v24 = vadd.f32 %v15, %v16
  %v25 = vadd.f32 %v24, %v17
  %v26 = vadd.f32 %v25, %v18
  %v27 = vadd.f32 %v26, %v19
  %v28 = vadd.f32 %v27, %v20
  %v29 = vadd.f32 %v28, %v21
  %v30 = vadd.f32 %v29, %v22
  %v31 = vadd.f32 %v30, %v23
  %v32 = vld [vmem:[%s2] sm:$0xff]
  %v33 = vmul.f32 %v31, %v32
  %v34 = vadd.f32 %v14, %v33
  %35 = vst [vmem:[%s3] sm:$0xff] %v34
  // Predicated region
  $region14: #{_lambda_.80} parent=0 // pred_check
    _
  $region15: #{_lambda_.80} parent=0 // pred_check_branch
    %37 = sbr.rel (0) target = $region17
  $region16: #{_lambda_.80} parent=0 // pred_region
    _
  $region17: #{_lambda_.80} parent=0 // pred_fallthru
    _
  // Predicated region
  $region18: #{_lambda_.80} parent=0 // pred_check
    _
  $region19: #{_lambda_.80} parent=0 // pred_check_branch
    %39 = sbr.rel (0) target = $region21
  $region20: #{_lambda_.80} parent=0 // pred_region
    _
  $region21: #{_lambda_.80} parent=0 // pred_fallthru
    _

// kernel: _lambda_.78
$region0: #{_lambda_.78}
  #allocation0 [shape = 'u32[]', space=smem, size = 0x4, offset = 0x4, fixed_abs, tag = 'smem constant byte address 0x4 - core index']
  #allocation1 [shape = 'u32[144,128]{1,0:T(1,128)}', space=vmem, size = 0x12000, scoped, tag = 'internal scratch']
  %s0 = inlined_call_operand.vmem [shape: f32[8,128], index: 0, kind: input, shape index: {}]
  %s1 = inlined_call_operand.vmem [shape: f32[9,8,128], index: 1, kind: input, shape index: {}]
  %s2 = inlined_call_operand.vmem [shape: f32[8,128], index: 2, kind: output, shape index: {}]
  %s3 = sld [smem:[#allocation0]]
  $region18: #{_lambda_.78} parent=0
    _
  %s5 = ssub.s32 1, %s3
  %s6 = scalar_select 0, %s5, %s3
  // Predicated region
  $region2: #{_lambda_.78} parent=0 // pred_check
    _
  $region3: #{_lambda_.78} parent=0 // pred_check_branch
    %8 = sbr.rel (0) target = $region5
  $region4: #{_lambda_.78} parent=0 // pred_region
    _
  $region5: #{_lambda_.78} parent=0 // pred_fallthru
    _
  // Predicated region
  $region6: #{_lambda_.78} parent=0 // pred_check
    _
  $region7: #{_lambda_.78} parent=0 // pred_check_branch
    %10 = sbr.rel (0) target = $region9
  $region8: #{_lambda_.78} parent=0 // pred_region
    _
  $region9: #{_lambda_.78} parent=0 // pred_fallthru
    _
  %v11 = vld [vmem:[%s0] sm:$0xff]
  %v12 = vld [vmem:[%s1] sm:$0xff]
  %v13 = vld [vmem:[%s1 + $0x8] sm:$0xff]
  %v14 = vld [vmem:[%s1 + $0x10] sm:$0xff]
  %v15 = vld [vmem:[%s1 + $0x18] sm:$0xff]
  %v16 = vld [vmem:[%s1 + $0x20] sm:$0xff]
  %v17 = vld [vmem:[%s1 + $0x28] sm:$0xff]
  %v18 = vld [vmem:[%s1 + $0x30] sm:$0xff]
  %v19 = vld [vmem:[%s1 + $0x38] sm:$0xff]
  %v20 = vld [vmem:[%s1 + $0x40] sm:$0xff]
  %v21 = vmax.f32 %v12, %v16
  %v22 = vmax.f32 %v13, %v17
  %v23 = vmax.f32 %v14, %v18
  %v24 = vmax.f32 %v15, %v19
  %v25 = vmax.f32 %v21, %v20
  %v26 = vmax.f32 %v25, %v22
  %v27 = vmax.f32 %v23, %v24
  %v28 = vmax.f32 %v26, %v27
  %v29 = vadd.f32 %v11, %v28
  %30 = vst [vmem:[%s2] sm:$0xff] %v29
  // Predicated region
  $region10: #{_lambda_.78} parent=0 // pred_check
    _
  $region11: #{_lambda_.78} parent=0 // pred_check_branch
    %32 = sbr.rel (0) target = $region13
  $region12: #{_lambda_.78} parent=0 // pred_region
    _
  $region13: #{_lambda_.78} parent=0 // pred_fallthru
    _
  // Predicated region
  $region14: #{_lambda_.78} parent=0 // pred_check
    _
  $region15: #{_lambda_.78} parent=0 // pred_check_branch
    %34 = sbr.rel (0) target = $region17
  $region16: #{_lambda_.78} parent=0 // pred_region
    _
  $region17: #{_lambda_.78} parent=0 // pred_fallthru
    _

// kernel: _lambda_.79
$region0: #{_lambda_.79}
  #allocation0 [shape = 'u32[]', space=smem, size = 0x4, offset = 0x4, fixed_abs, tag = 'smem constant byte address 0x4 - core index']
  #allocation1 [shape = 'u32[144,128]{1,0:T(1,128)}', space=vmem, size = 0x12000, scoped, tag = 'internal scratch']
  %s0 = inlined_call_operand.vmem [shape: f32[9,8,128], index: 0, kind: input, shape index: {}]
  %s1 = inlined_call_operand.vmem [shape: f32[8,128], index: 1, kind: input, shape index: {}]
  %s2 = inlined_call_operand.vmem [shape: f32[8,128], index: 2, kind: output, shape index: {}]
  %s3 = sld [smem:[#allocation0]]
  $region18: #{_lambda_.79} parent=0
    _
  %s5 = ssub.s32 1, %s3
  %s6 = scalar_select 0, %s5, %s3
  // Predicated region
  $region2: #{_lambda_.79} parent=0 // pred_check
    _
  $region3: #{_lambda_.79} parent=0 // pred_check_branch
    %8 = sbr.rel (0) target = $region5
  $region4: #{_lambda_.79} parent=0 // pred_region
    _
  $region5: #{_lambda_.79} parent=0 // pred_fallthru
    _
  // Predicated region
  $region6: #{_lambda_.79} parent=0 // pred_check
    _
  $region7: #{_lambda_.79} parent=0 // pred_check_branch
    %10 = sbr.rel (0) target = $region9
  $region8: #{_lambda_.79} parent=0 // pred_region
    _
  $region9: #{_lambda_.79} parent=0 // pred_fallthru
    _
  %v11 = vld [vmem:[%s0] sm:$0xff]
  %v12 = vld [vmem:[%s0 + $0x8] sm:$0xff]
  %v13 = vld [vmem:[%s0 + $0x10] sm:$0xff]
  %v14 = vld [vmem:[%s0 + $0x18] sm:$0xff]
  %v15 = vld [vmem:[%s0 + $0x20] sm:$0xff]
  %v16 = vld [vmem:[%s0 + $0x28] sm:$0xff]
  %v17 = vld [vmem:[%s0 + $0x30] sm:$0xff]
  %v18 = vld [vmem:[%s0 + $0x38] sm:$0xff]
  %v19 = vld [vmem:[%s0 + $0x40] sm:$0xff]
  %v20 = vmax.f32 %v11, %v15
  %v21 = vmax.f32 %v12, %v16
  %v22 = vmax.f32 %v13, %v17
  %v23 = vmax.f32 %v14, %v18
  %v24 = vmax.f32 %v20, %v19
  %v25 = vmax.f32 %v24, %v21
  %v26 = vmax.f32 %v22, %v23
  %v27 = vmax.f32 %v25, %v26
  %v28 = vld [vmem:[%s1] sm:$0xff]
  %v29 = vadd.f32 %v27, %v28
  %30 = vst [vmem:[%s2] sm:$0xff] %v29
  // Predicated region
  $region10: #{_lambda_.79} parent=0 // pred_check
    _
  $region11: #{_lambda_.79} parent=0 // pred_check_branch
    %32 = sbr.rel (0) target = $region13
  $region12: #{_lambda_.79} parent=0 // pred_region
    _
  $region13: #{_lambda_.79} parent=0 // pred_fallthru
    _
  // Predicated region
  $region14: #{_lambda_.79} parent=0 // pred_check
    _
  $region15: #{_lambda_.79} parent=0 // pred_check_branch
    %34 = sbr.rel (0) target = $region17
  $region16: #{_lambda_.79} parent=0 // pred_region
    _
  $region17: #{_lambda_.79} parent=0 // pred_fallthru
    _

// kernel: _lambda_.88
$region0: #{_lambda_.88}
  #allocation0 [shape = 'u32[]', space=smem, size = 0x4, offset = 0x4, fixed_abs, tag = 'smem constant byte address 0x4 - core index']
  #allocation1 [shape = 'u32[144,128]{1,0:T(1,128)}', space=vmem, size = 0x12000, scoped, tag = 'internal scratch']
  %s0 = inlined_call_operand.vmem [shape: f32[4,512], index: 0, kind: input, shape index: {}]
  %s1 = inlined_call_operand.vmem [shape: f32[1,512], index: 1, kind: output, shape index: {}]
  %s2 = sld [smem:[#allocation0]]
  $region14: #{_lambda_.88} parent=0
    _
  %s4 = ssub.s32 1, %s2
  %s5 = scalar_select 0, %s4, %s2
  // Predicated region
  $region2: #{_lambda_.88} parent=0 // pred_check
    _
  $region3: #{_lambda_.88} parent=0 // pred_check_branch
    %7 = sbr.rel (0) target = $region5
  $region4: #{_lambda_.88} parent=0 // pred_region
    _
  $region5: #{_lambda_.88} parent=0 // pred_fallthru
    _
  %v8 = vld [vmem:[%s0] sm:$0xff]
  %v9 = vld [vmem:[%s0 + $0x8] sm:$0xff]
  %v12 = vcombine.high %v8, %v8
  %v13 = vcombine.high %v9, %v9
  %vm16 = vcmask 1043456
  %v17 = vsel %vm16, %v8, 0.0
  %v18 = vrot.slane %v17, 4
  %v19 = vadd.f32 %v17, %v18
  %v20 = vrot.slane %v19, 2
  %v21 = vadd.f32 %v19, %v20
  %v22 = vrot.slane %v21, 1
  %v23 = vadd.f32 %v21, %v22
  %v24 = vsel %vm16, %v12, 0.0
  %v25 = vrot.slane %v24, 4
  %v26 = vadd.f32 %v24, %v25
  %v27 = vrot.slane %v26, 2
  %v28 = vadd.f32 %v26, %v27
  %v29 = vrot.slane %v28, 1
  %v30 = vadd.f32 %v28, %v29
  %v31 = vsel %vm16, %v9, 0.0
  %v32 = vrot.slane %v31, 4
  %v33 = vadd.f32 %v31, %v32
  %v34 = vrot.slane %v33, 2
  %v35 = vadd.f32 %v33, %v34
  %v36 = vrot.slane %v35, 1
  %v37 = vadd.f32 %v35, %v36
  %v38 = vsel %vm16, %v13, 0.0
  %v39 = vrot.slane %v38, 4
  %v40 = vadd.f32 %v38, %v39
  %v41 = vrot.slane %v40, 2
  %v42 = vadd.f32 %v40, %v41
  %v43 = vrot.slane %v42, 1
  %v44 = vadd.f32 %v42, %v43
  %v45 = vrcp.pop 4.0
  %v46 = vmul.f32 %v23, %v45
  %v47 = vmul.f32 %v30, %v45
  %v48 = vmul.f32 %v37, %v45
  %v49 = vmul.f32 %v44, %v45
  %v54 = vcombine.low %v46, %v47
  %v55 = vcombine.low %v48, %v49
  %v57 = vunpack.c.l.s4 1966171168
  %v58 = vunpack.c.0.s8 %v57
  %v59 = vlaneseq
  %v60 = vshrl.u32 %v59, 7
  %v61 = vsub.s32 %v58, %v60
  %v62 = vrot.slane %v54, %v61
  %v64 = vunpack.c.l.s4 1966171168
  %v65 = vunpack.c.0.s8 %v64
  %v66 = vlaneseq
  %v67 = vshrl.u32 %v66, 7
  %v68 = vsub.s32 %v65, %v67
  %v69 = vrot.slane %v55, %v68
  %v70 = vcombine.low %v62, %v69
  %v72 = vunpack.c.l.s4 1966171168
  %v73 = vunpack.c.0.s8 %v72
  %v74 = vlaneseq
  %v75 = vshrl.u32 %v74, 7
  %v76 = vsub.s32 %v73, %v75
  %v77 = vrot.slane %v70, %v76
  %v79 = vlaneseq
  %vm80 = vcmp.ge.s32.totalorder %v79, 0
  %vm81 = vcmp.lt.s32.totalorder %v79, 512
  %vm82 = vmand %vm80, %vm81
  %83 = vst.msk [vmem:[%s1] sm:$0xf] %vm82, %v77
  // Predicated region
  $region6: #{_lambda_.88} parent=0 // pred_check
    _
  $region7: #{_lambda_.88} parent=0 // pred_check_branch
    %85 = sbr.rel (0) target = $region9
  $region8: #{_lambda_.88} parent=0 // pred_region
    _
  $region9: #{_lambda_.88} parent=0 // pred_fallthru
    _
  // Predicated region
  $region10: #{_lambda_.88} parent=0 // pred_check
    _
  $region11: #{_lambda_.88} parent=0 // pred_check_branch
    %87 = sbr.rel (0) target = $region13
  $region12: #{_lambda_.88} parent=0 // pred_region
    _
  $region13: #{_lambda_.88} parent=0 // pred_fallthru
    _

// kernel: _lambda_.45
$region0: #{_lambda_.45}
  #allocation0 [shape = 'u32[]', space=smem, size = 0x4, offset = 0x4, fixed_abs, tag = 'smem constant byte address 0x4 - core index']
  #allocation1 [shape = 'u32[144,128]{1,0:T(1,128)}', space=vmem, size = 0x12000, scoped, tag = 'internal scratch']
  %s0 = inlined_call_operand.vmem [shape: bf16[512,128], index: 0, kind: input, shape index: {}]
  %s1 = inlined_call_operand.vmem [shape: bf16[128,128], index: 1, kind: input, shape index: {}]
  %s2 = inlined_call_operand.vmem [shape: f32[2,1,128], index: 2, kind: input, shape index: {}]
  %s3 = inlined_call_operand.vmem [shape: f32[512,128], index: 3, kind: output, shape index: {}]
  %s4 = sld [smem:[#allocation0]]
  $region22: #{_lambda_.45} parent=0
    _
  %s6 = ssub.s32 1, %s4
  %s7 = scalar_select 0, %s6, %s4
  // Predicated region
  $region2: #{_lambda_.45} parent=0 // pred_check
    _
  $region3: #{_lambda_.45} parent=0 // pred_check_branch
    %9 = sbr.rel (0) target = $region5
  $region4: #{_lambda_.45} parent=0 // pred_region
    _
  $region5: #{_lambda_.45} parent=0 // pred_fallthru
    _
  // Predicated region
  $region6: #{_lambda_.45} parent=0 // pred_check
    _
  $region7: #{_lambda_.45} parent=0 // pred_check_branch
    %11 = sbr.rel (0) target = $region9
  $region8: #{_lambda_.45} parent=0 // pred_region
    _
  $region9: #{_lambda_.45} parent=0 // pred_fallthru
    _
  // Predicated region
  $region10: #{_lambda_.45} parent=0 // pred_check
    _
  $region11: #{_lambda_.45} parent=0 // pred_check_branch
    %13 = sbr.rel (0) target = $region13
  $region12: #{_lambda_.45} parent=0 // pred_region
    _
  $region13: #{_lambda_.45} parent=0 // pred_fallthru
    _
  %v15 = vld [vmem:[%s0] sm:$0xf]
  %v16 = vld [vmem:[%s0 + $0x4] sm:$0xf]
  %v17 = vld [vmem:[%s0 + $0x8] sm:$0xf]
  %v18 = vld [vmem:[%s0 + $0xc] sm:$0xf]
  %v19 = vld [vmem:[%s0 + $0x10] sm:$0xf]
  %v20 = vld [vmem:[%s0 + $0x14] sm:$0xf]
  %v21 = vld [vmem:[%s0 + $0x18] sm:$0xf]
  %v22 = vld [vmem:[%s0 + $0x1c] sm:$0xf]
  %v23 = vld [vmem:[%s0 + $0x20] sm:$0xf]
  %v24 = vld [vmem:[%s0 + $0x24] sm:$0xf]
  %v25 = vld [vmem:[%s0 + $0x28] sm:$0xf]
  %v26 = vld [vmem:[%s0 + $0x2c] sm:$0xf]
  %v27 = vld [vmem:[%s0 + $0x30] sm:$0xf]
  %v28 = vld [vmem:[%s0 + $0x34] sm:$0xf]
  %v29 = vld [vmem:[%s0 + $0x38] sm:$0xf]
  %v30 = vld [vmem:[%s0 + $0x3c] sm:$0xf]
  %v31 = vld [vmem:[%s0 + $0x40] sm:$0xf]
  %v32 = vld [vmem:[%s0 + $0x44] sm:$0xf]
  %v33 = vld [vmem:[%s0 + $0x48] sm:$0xf]
  %v34 = vld [vmem:[%s0 + $0x4c] sm:$0xf]
  %v35 = vld [vmem:[%s0 + $0x50] sm:$0xf]
  %v36 = vld [vmem:[%s0 + $0x54] sm:$0xf]
  %v37 = vld [vmem:[%s0 + $0x58] sm:$0xf]
  %v38 = vld [vmem:[%s0 + $0x5c] sm:$0xf]
  %v39 = vld [vmem:[%s0 + $0x60] sm:$0xf]
  %v40 = vld [vmem:[%s0 + $0x64] sm:$0xf]
  %v41 = vld [vmem:[%s0 + $0x68] sm:$0xf]
  %v42 = vld [vmem:[%s0 + $0x6c] sm:$0xf]
  %v43 = vld [vmem:[%s0 + $0x70] sm:$0xf]
  %v44 = vld [vmem:[%s0 + $0x74] sm:$0xf]
  %v45 = vld [vmem:[%s0 + $0x78] sm:$0xf]
  %v46 = vld [vmem:[%s0 + $0x7c] sm:$0xf]
  %v47 = vld [vmem:[%s0 + $0x80] sm:$0xf]
  %v48 = vld [vmem:[%s0 + $0x84] sm:$0xf]
  %v49 = vld [vmem:[%s0 + $0x88] sm:$0xf]
  %v50 = vld [vmem:[%s0 + $0x8c] sm:$0xf]
  %v51 = vld [vmem:[%s0 + $0x90] sm:$0xf]
  %v52 = vld [vmem:[%s0 + $0x94] sm:$0xf]
  %v53 = vld [vmem:[%s0 + $0x98] sm:$0xf]
  %v54 = vld [vmem:[%s0 + $0x9c] sm:$0xf]
  %v55 = vld [vmem:[%s0 + $0xa0] sm:$0xf]
  %v56 = vld [vmem:[%s0 + $0xa4] sm:$0xf]
  %v57 = vld [vmem:[%s0 + $0xa8] sm:$0xf]
  %v58 = vld [vmem:[%s0 + $0xac] sm:$0xf]
  %v59 = vld [vmem:[%s0 + $0xb0] sm:$0xf]
  %v60 = vld [vmem:[%s0 + $0xb4] sm:$0xf]
  %v61 = vld [vmem:[%s0 + $0xb8] sm:$0xf]
  %v62 = vld [vmem:[%s0 + $0xbc] sm:$0xf]
  %v63 = vld [vmem:[%s0 + $0xc0] sm:$0xf]
  %v64 = vld [vmem:[%s0 + $0xc4] sm:$0xf]
  %v65 = vld [vmem:[%s0 + $0xc8] sm:$0xf]
  %v66 = vld [vmem:[%s0 + $0xcc] sm:$0xf]
  %v67 = vld [vmem:[%s0 + $0xd0] sm:$0xf]
  %v68 = vld [vmem:[%s0 + $0xd4] sm:$0xf]
  %v69 = vld [vmem:[%s0 + $0xd8] sm:$0xf]
  %v70 = vld [vmem:[%s0 + $0xdc] sm:$0xf]
  %v71 = vld [vmem:[%s0 + $0xe0] sm:$0xf]
  %v72 = vld [vmem:[%s0 + $0xe4] sm:$0xf]
  %v73 = vld [vmem:[%s0 + $0xe8] sm:$0xf]
  %v74 = vld [vmem:[%s0 + $0xec] sm:$0xf]
  %v75 = vld [vmem:[%s0 + $0xf0] sm:$0xf]
  %v76 = vld [vmem:[%s0 + $0xf4] sm:$0xf]
  %v77 = vld [vmem:[%s0 + $0xf8] sm:$0xf]
  %v78 = vld [vmem:[%s0 + $0xfc] sm:$0xf]
  %v79 = vld [vmem:[%s1] sm:$0xf]
  %v80 = vld [vmem:[%s1 + $0x4] sm:$0xf]
  %v81 = vld [vmem:[%s1 + $0x8] sm:$0xf]
  %v82 = vld [vmem:[%s1 + $0xc] sm:$0xf]
  %v83 = vld [vmem:[%s1 + $0x10] sm:$0xf]
  %v84 = vld [vmem:[%s1 + $0x14] sm:$0xf]
  %v85 = vld [vmem:[%s1 + $0x18] sm:$0xf]
  %v86 = vld [vmem:[%s1 + $0x1c] sm:$0xf]
  %v87 = vld [vmem:[%s1 + $0x20] sm:$0xf]
  %v88 = vld [vmem:[%s1 + $0x24] sm:$0xf]
  %v89 = vld [vmem:[%s1 + $0x28] sm:$0xf]
  %v90 = vld [vmem:[%s1 + $0x2c] sm:$0xf]
  %v91 = vld [vmem:[%s1 + $0x30] sm:$0xf]
  %v92 = vld [vmem:[%s1 + $0x34] sm:$0xf]
  %v93 = vld [vmem:[%s1 + $0x38] sm:$0xf]
  %v94 = vld [vmem:[%s1 + $0x3c] sm:$0xf]
  %v159 = vunpack.c.l.b16 %v15
  %v160 = vunpack.c.l.b16 %v16
  %v161 = vunpack.c.l.b16 %v17
  %v162 = vunpack.c.l.b16 %v18
  %v163 = vunpack.c.l.b16 %v19
  %v164 = vunpack.c.l.b16 %v20
  %v165 = vunpack.c.l.b16 %v21
  %v166 = vunpack.c.l.b16 %v22
  %v167 = vunpack.c.l.b16 %v23
  %v168 = vunpack.c.l.b16 %v24
  %v169 = vunpack.c.l.b16 %v25
  %v170 = vunpack.c.l.b16 %v26
  %v171 = vunpack.c.l.b16 %v27
  %v172 = vunpack.c.l.b16 %v28
  %v173 = vunpack.c.l.b16 %v29
  %v174 = vunpack.c.l.b16 %v30
  %v175 = vunpack.c.l.b16 %v31
  %v176 = vunpack.c.l.b16 %v32
  %v177 = vunpack.c.l.b16 %v33
  %v178 = vunpack.c.l.b16 %v34
  %v179 = vunpack.c.l.b16 %v35
  %v180 = vunpack.c.l.b16 %v36
  %v181 = vunpack.c.l.b16 %v37
  %v182 = vunpack.c.l.b16 %v38
  %v183 = vunpack.c.l.b16 %v39
  %v184 = vunpack.c.l.b16 %v40
  %v185 = vunpack.c.l.b16 %v41
  %v186 = vunpack.c.l.b16 %v42
  %v187 = vunpack.c.l.b16 %v43
  %v188 = vunpack.c.l.b16 %v44
  %v189 = vunpack.c.l.b16 %v45
  %v190 = vunpack.c.l.b16 %v46
  %v191 = vunpack.c.l.b16 %v47
  %v192 = vunpack.c.l.b16 %v48
  %v193 = vunpack.c.l.b16 %v49
  %v194 = vunpack.c.l.b16 %v50
  %v195 = vunpack.c.l.b16 %v51
  %v196 = vunpack.c.l.b16 %v52
  %v197 = vunpack.c.l.b16 %v53
  %v198 = vunpack.c.l.b16 %v54
  %v199 = vunpack.c.l.b16 %v55
  %v200 = vunpack.c.l.b16 %v56
  %v201 = vunpack.c.l.b16 %v57
  %v202 = vunpack.c.l.b16 %v58
  %v203 = vunpack.c.l.b16 %v59
  %v204 = vunpack.c.l.b16 %v60
  %v205 = vunpack.c.l.b16 %v61
  %v206 = vunpack.c.l.b16 %v62
  %v207 = vunpack.c.l.b16 %v63
  %v208 = vunpack.c.l.b16 %v64
  %v209 = vunpack.c.l.b16 %v65
  %v210 = vunpack.c.l.b16 %v66
  %v211 = vunpack.c.l.b16 %v67
  %v212 = vunpack.c.l.b16 %v68
  %v213 = vunpack.c.l.b16 %v69
  %v214 = vunpack.c.l.b16 %v70
  %v215 = vunpack.c.l.b16 %v71
  %v216 = vunpack.c.l.b16 %v72
  %v217 = vunpack.c.l.b16 %v73
  %v218 = vunpack.c.l.b16 %v74
  %v219 = vunpack.c.l.b16 %v75
  %v220 = vunpack.c.l.b16 %v76
  %v221 = vunpack.c.l.b16 %v77
  %v222 = vunpack.c.l.b16 %v78
  %v223 = vpack.c.b16 %v160, %v159
  %v224 = vpack.c.b16 %v162, %v161
  %v225 = vpack.c.b16 %v164, %v163
  %v226 = vpack.c.b16 %v166, %v165
  %v227 = vpack.c.b16 %v168, %v167
  %v228 = vpack.c.b16 %v170, %v169
  %v229 = vpack.c.b16 %v172, %v171
  %v230 = vpack.c.b16 %v174, %v173
  %v231 = vpack.c.b16 %v176, %v175
  %v232 = vpack.c.b16 %v178, %v177
  %v233 = vpack.c.b16 %v180, %v179
  %v234 = vpack.c.b16 %v182, %v181
  %v235 = vpack.c.b16 %v184, %v183
  %v236 = vpack.c.b16 %v186, %v185
  %v237 = vpack.c.b16 %v188, %v187
  %v238 = vpack.c.b16 %v190, %v189
  %v239 = vpack.c.b16 %v192, %v191
  %v240 = vpack.c.b16 %v194, %v193
  %v241 = vpack.c.b16 %v196, %v195
  %v242 = vpack.c.b16 %v198, %v197
  %v243 = vpack.c.b16 %v200, %v199
  %v244 = vpack.c.b16 %v202, %v201
  %v245 = vpack.c.b16 %v204, %v203
  %v246 = vpack.c.b16 %v206, %v205
  %v247 = vpack.c.b16 %v208, %v207
  %v248 = vpack.c.b16 %v210, %v209
  %v249 = vpack.c.b16 %v212, %v211
  %v250 = vpack.c.b16 %v214, %v213
  %v251 = vpack.c.b16 %v216, %v215
  %v252 = vpack.c.b16 %v218, %v217
  %v253 = vpack.c.b16 %v220, %v219
  %v254 = vpack.c.b16 %v222, %v221
  %v303 = vunpack.c.l.b16 %v79
  %v304 = vunpack.c.l.b16 %v80
  %v305 = vunpack.c.l.b16 %v81
  %v306 = vunpack.c.l.b16 %v82
  %v307 = vunpack.c.l.b16 %v83
  %v308 = vunpack.c.l.b16 %v84
  %v309 = vunpack.c.l.b16 %v85
  %v310 = vunpack.c.l.b16 %v86
  %v311 = vunpack.c.l.b16 %v87
  %v312 = vunpack.c.l.b16 %v88
  %v313 = vunpack.c.l.b16 %v89
  %v314 = vunpack.c.l.b16 %v90
  %v315 = vunpack.c.l.b16 %v91
  %v316 = vunpack.c.l.b16 %v92
  %v317 = vunpack.c.l.b16 %v93
  %v318 = vunpack.c.l.b16 %v94
  %v319 = vpack.c.b16 %v304, %v303
  %v320 = vpack.c.b16 %v306, %v305
  %v321 = vpack.c.b16 %v308, %v307
  %v322 = vpack.c.b16 %v310, %v309
  %v323 = vpack.c.b16 %v312, %v311
  %v324 = vpack.c.b16 %v314, %v313
  %v325 = vpack.c.b16 %v316, %v315
  %v326 = vpack.c.b16 %v318, %v317
  %335 = vmatprep.subr.bf16.mxu0 0
  %336 = vmatpush1.bf16.msra.mxu0 %v319
  %337 = vmatprep.subr.bf16.mxu0 0
  %338 = vmatpush1.bf16.msra.mxu0 %v320
  %339 = vmatprep.subr.bf16.mxu0 0
  %340 = vmatpush1.bf16.msra.mxu0 %v321
  %341 = vmatprep.subr.bf16.mxu0 0
  %342 = vmatpush1.bf16.msra.mxu0 %v322
  %343 = vmatprep.subr.bf16.mxu0 0
  %344 = vmatpush1.bf16.msra.mxu0 %v323
  %345 = vmatprep.subr.bf16.mxu0 0
  %346 = vmatpush1.bf16.msra.mxu0 %v324
  %347 = vmatprep.subr.bf16.mxu0 0
  %348 = vmatpush1.bf16.msra.mxu0 %v325
  %349 = vmatprep.subr.bf16.mxu0 0
  %350 = vmatpush1.bf16.msra.mxu0 %v326
  %351 = vmatprep.subr.bf16.mxu0 0
  %352 = vmatpush1.bf16.msra.mxu0 0
  %353 = vmatprep.subr.bf16.mxu0 0
  %354 = vmatpush1.bf16.msra.mxu0 0
  %355 = vmatprep.subr.bf16.mxu0 0
  %356 = vmatpush1.bf16.msra.mxu0 0
  %357 = vmatprep.subr.bf16.mxu0 0
  %358 = vmatpush1.bf16.msra.mxu0 0
  %359 = vmatprep.subr.bf16.mxu0 0
  %360 = vmatpush1.bf16.msra.mxu0 0
  %361 = vmatprep.subr.bf16.mxu0 0
  %362 = vmatpush1.bf16.msra.mxu0 0
  %363 = vmatprep.subr.bf16.mxu0 0
  %364 = vmatpush1.bf16.msra.mxu0 0
  %365 = vmatprep.subr.bf16.mxu0 0
  %366 = vmatpush1.bf16.msra.mxu0 0
  %367 = vmatprep.mubr.bf16.mxu0 0
  %368 = vmatmul.mubr.bf16.gmra.mrb[0].mxu0 %v223
  %v369 = vpop.f32.mrb[0].mxu0
  %v370 = vadd.f32 0.0, %v369
  %v371 = vpop.f32.mrb[0].mxu0
  %v372 = vpop.f32.mrb[0].mxu0
  %v373 = vadd.f32 0.0, %v372
  %v374 = vpop.f32.mrb[0].mxu0
  %375 = vmatprep.mubr.bf16.mxu0 0
  %376 = vmatmul.mubr.bf16.gmra.mrb[0].mxu0 %v224
  %v377 = vpop.f32.mrb[0].mxu0
  %v378 = vadd.f32 0.0, %v377
  %v379 = vpop.f32.mrb[0].mxu0
  %v380 = vpop.f32.mrb[0].mxu0
  %v381 = vadd.f32 0.0, %v380
  %v382 = vpop.f32.mrb[0].mxu0
  %383 = vmatprep.mubr.bf16.mxu0 0
  %384 = vmatmul.mubr.bf16.gmra.mrb[0].mxu0 %v225
  %v385 = vpop.f32.mrb[0].mxu0
  %v386 = vadd.f32 0.0, %v385
  %v387 = vpop.f32.mrb[0].mxu0
  %v388 = vpop.f32.mrb[0].mxu0
  %v389 = vadd.f32 0.0, %v388
  %v390 = vpop.f32.mrb[0].mxu0
  %391 = vmatprep.mubr.bf16.mxu0 0
  %392 = vmatmul.mubr.bf16.gmra.mrb[0].mxu0 %v226
  %v393 = vpop.f32.mrb[0].mxu0
  %v394 = vadd.f32 0.0, %v393
  %v395 = vpop.f32.mrb[0].mxu0
  %v396 = vpop.f32.mrb[0].mxu0
  %v397 = vadd.f32 0.0, %v396
  %v398 = vpop.f32.mrb[0].mxu0
  %399 = vmatprep.mubr.bf16.mxu0 0
  %400 = vmatmul.mubr.bf16.gmra.mrb[0].mxu0 %v227
  %v401 = vpop.f32.mrb[0].mxu0
  %v402 = vadd.f32 0.0, %v401
  %v403 = vpop.f32.mrb[0].mxu0
  %v404 = vpop.f32.mrb[0].mxu0
  %v405 = vadd.f32 0.0, %v404
  %v406 = vpop.f32.mrb[0].mxu0
  %407 = vmatprep.mubr.bf16.mxu0 0
  %408 = vmatmul.mubr.bf16.gmra.mrb[0].mxu0 %v228
  %v409 = vpop.f32.mrb[0].mxu0
  %v410 = vadd.f32 0.0, %v409
  %v411 = vpop.f32.mrb[0].mxu0
  %v412 = vpop.f32.mrb[0].mxu0
  %v413 = vadd.f32 0.0, %v412
  %v414 = vpop.f32.mrb[0].mxu0
  %415 = vmatprep.mubr.bf16.mxu0 0
  %416 = vmatmul.mubr.bf16.gmra.mrb[0].mxu0 %v229
  %v417 = vpop.f32.mrb[0].mxu0
  %v418 = vadd.f32 0.0, %v417
  %v419 = vpop.f32.mrb[0].mxu0
  %v420 = vpop.f32.mrb[0].mxu0
  %v421 = vadd.f32 0.0, %v420
  %v422 = vpop.f32.mrb[0].mxu0
  %423 = vmatprep.mubr.bf16.mxu0 0
  %424 = vmatmul.mubr.bf16.gmra.mrb[0].mxu0 %v230
  %v425 = vpop.f32.mrb[0].mxu0
  %v426 = vadd.f32 0.0, %v425
  %v427 = vpop.f32.mrb[0].mxu0
  %v428 = vpop.f32.mrb[0].mxu0
  %v429 = vadd.f32 0.0, %v428
  %v430 = vpop.f32.mrb[0].mxu0
  %431 = vmatprep.mubr.bf16.mxu0 0
  %432 = vmatmul.mubr.bf16.gmra.mrb[0].mxu0 %v231
  %v433 = vpop.f32.mrb[0].mxu0
  %v434 = vadd.f32 0.0, %v433
  %v435 = vpop.f32.mrb[0].mxu0
  %v436 = vpop.f32.mrb[0].mxu0
  %v437 = vadd.f32 0.0, %v436
  %v438 = vpop.f32.mrb[0].mxu0
  %439 = vmatprep.mubr.bf16.mxu0 0
  %440 = vmatmul.mubr.bf16.gmra.mrb[0].mxu0 %v232
  %v441 = vpop.f32.mrb[0].mxu0
  %v442 = vadd.f32 0.0, %v441
  %v443 = vpop.f32.mrb[0].mxu0
  %v444 = vpop.f32.mrb[0].mxu0
  %v445 = vadd.f32 0.0, %v444
  %v446 = vpop.f32.mrb[0].mxu0
  %447 = vmatprep.mubr.bf16.mxu0 0
  %448 = vmatmul.mubr.bf16.gmra.mrb[0].mxu0 %v233
  %v449 = vpop.f32.mrb[0].mxu0
  %v450 = vadd.f32 0.0, %v449
  %v451 = vpop.f32.mrb[0].mxu0
  %v452 = vpop.f32.mrb[0].mxu0
  %v453 = vadd.f32 0.0, %v452
  %v454 = vpop.f32.mrb[0].mxu0
  %455 = vmatprep.mubr.bf16.mxu0 0
  %456 = vmatmul.mubr.bf16.gmra.mrb[0].mxu0 %v234
  %v457 = vpop.f32.mrb[0].mxu0
  %v458 = vadd.f32 0.0, %v457
  %v459 = vpop.f32.mrb[0].mxu0
  %v460 = vpop.f32.mrb[0].mxu0
  %v461 = vadd.f32 0.0, %v460
  %v462 = vpop.f32.mrb[0].mxu0
  %463 = vmatprep.mubr.bf16.mxu0 0
  %464 = vmatmul.mubr.bf16.gmra.mrb[0].mxu0 %v235
  %v465 = vpop.f32.mrb[0].mxu0
  %v466 = vadd.f32 0.0, %v465
  %v467 = vpop.f32.mrb[0].mxu0
  %v468 = vpop.f32.mrb[0].mxu0
  %v469 = vadd.f32 0.0, %v468
  %v470 = vpop.f32.mrb[0].mxu0
  %471 = vmatprep.mubr.bf16.mxu0 0
  %472 = vmatmul.mubr.bf16.gmra.mrb[0].mxu0 %v236
  %v473 = vpop.f32.mrb[0].mxu0
  %v474 = vadd.f32 0.0, %v473
  %v475 = vpop.f32.mrb[0].mxu0
  %v476 = vpop.f32.mrb[0].mxu0
  %v477 = vadd.f32 0.0, %v476
  %v478 = vpop.f32.mrb[0].mxu0
  %479 = vmatprep.mubr.bf16.mxu0 0
  %480 = vmatmul.mubr.bf16.gmra.mrb[0].mxu0 %v237
  %v481 = vpop.f32.mrb[0].mxu0
  %v482 = vadd.f32 0.0, %v481
  %v483 = vpop.f32.mrb[0].mxu0
  %v484 = vpop.f32.mrb[0].mxu0
  %v485 = vadd.f32 0.0, %v484
  %v486 = vpop.f32.mrb[0].mxu0
  %487 = vmatprep.mubr.bf16.mxu0 0
  %488 = vmatmul.mubr.bf16.gmra.mrb[0].mxu0 %v238
  %v489 = vpop.f32.mrb[0].mxu0
  %v490 = vadd.f32 0.0, %v489
  %v491 = vpop.f32.mrb[0].mxu0
  %v492 = vpop.f32.mrb[0].mxu0
  %v493 = vadd.f32 0.0, %v492
  %v494 = vpop.f32.mrb[0].mxu0
  %495 = vmatprep.mubr.bf16.mxu0 0
  %496 = vmatmul.mubr.bf16.gmra.mrb[0].mxu0 %v239
  %v497 = vpop.f32.mrb[0].mxu0
  %v498 = vadd.f32 0.0, %v497
  %v499 = vpop.f32.mrb[0].mxu0
  %v500 = vpop.f32.mrb[0].mxu0
  %v501 = vadd.f32 0.0, %v500
  %v502 = vpop.f32.mrb[0].mxu0
  %503 = vmatprep.mubr.bf16.mxu0 0
  %504 = vmatmul.mubr.bf16.gmra.mrb[0].mxu0 %v240
  %v505 = vpop.f32.mrb[0].mxu0
  %v506 = vadd.f32 0.0, %v505
  %v507 = vpop.f32.mrb[0].mxu0
  %v508 = vpop.f32.mrb[0].mxu0
  %v509 = vadd.f32 0.0, %v508
  %v510 = vpop.f32.mrb[0].mxu0
  %511 = vmatprep.mubr.bf16.mxu0 0
  %512 = vmatmul.mubr.bf16.gmra.mrb[0].mxu0 %v241
  %v513 = vpop.f32.mrb[0].mxu0
  %v514 = vadd.f32 0.0, %v513
  %v515 = vpop.f32.mrb[0].mxu0
  %v516 = vpop.f32.mrb[0].mxu0
  %v517 = vadd.f32 0.0, %v516
  %v518 = vpop.f32.mrb[0].mxu0
  %519 = vmatprep.mubr.bf16.mxu0 0
  %520 = vmatmul.mubr.bf16.gmra.mrb[0].mxu0 %v242
  %v521 = vpop.f32.mrb[0].mxu0
  %v522 = vadd.f32 0.0, %v521
  %v523 = vpop.f32.mrb[0].mxu0
  %v524 = vpop.f32.mrb[0].mxu0
  %v525 = vadd.f32 0.0, %v524
  %v526 = vpop.f32.mrb[0].mxu0
  %527 = vmatprep.mubr.bf16.mxu0 0
  %528 = vmatmul.mubr.bf16.gmra.mrb[0].mxu0 %v243
  %v529 = vpop.f32.mrb[0].mxu0
  %v530 = vadd.f32 0.0, %v529
  %v531 = vpop.f32.mrb[0].mxu0
  %v532 = vpop.f32.mrb[0].mxu0
  %v533 = vadd.f32 0.0, %v532
  %v534 = vpop.f32.mrb[0].mxu0
  %535 = vmatprep.mubr.bf16.mxu0 0
  %536 = vmatmul.mubr.bf16.gmra.mrb[0].mxu0 %v244
  %v537 = vpop.f32.mrb[0].mxu0
  %v538 = vadd.f32 0.0, %v537
  %v539 = vpop.f32.mrb[0].mxu0
  %v540 = vpop.f32.mrb[0].mxu0
  %v541 = vadd.f32 0.0, %v540
  %v542 = vpop.f32.mrb[0].mxu0
  %543 = vmatprep.mubr.bf16.mxu0 0
  %544 = vmatmul.mubr.bf16.gmra.mrb[0].mxu0 %v245
  %v545 = vpop.f32.mrb[0].mxu0
  %v546 = vadd.f32 0.0, %v545
  %v547 = vpop.f32.mrb[0].mxu0
  %v548 = vpop.f32.mrb[0].mxu0
  %v549 = vadd.f32 0.0, %v548
  %v550 = vpop.f32.mrb[0].mxu0
  %551 = vmatprep.mubr.bf16.mxu0 0
  %552 = vmatmul.mubr.bf16.gmra.mrb[0].mxu0 %v246
  %v553 = vpop.f32.mrb[0].mxu0
  %v554 = vadd.f32 0.0, %v553
  %v555 = vpop.f32.mrb[0].mxu0
  %v556 = vpop.f32.mrb[0].mxu0
  %v557 = vadd.f32 0.0, %v556
  %v558 = vpop.f32.mrb[0].mxu0
  %559 = vmatprep.mubr.bf16.mxu0 0
  %560 = vmatmul.mubr.bf16.gmra.mrb[0].mxu0 %v247
  %v561 = vpop.f32.mrb[0].mxu0
  %v562 = vadd.f32 0.0, %v561
  %v563 = vpop.f32.mrb[0].mxu0
  %v564 = vpop.f32.mrb[0].mxu0
  %v565 = vadd.f32 0.0, %v564
  %v566 = vpop.f32.mrb[0].mxu0
  %567 = vmatprep.mubr.bf16.mxu0 0
  %568 = vmatmul.mubr.bf16.gmra.mrb[0].mxu0 %v248
  %v569 = vpop.f32.mrb[0].mxu0
  %v570 = vadd.f32 0.0, %v569
  %v571 = vpop.f32.mrb[0].mxu0
  %v572 = vpop.f32.mrb[0].mxu0
  %v573 = vadd.f32 0.0, %v572
  %v574 = vpop.f32.mrb[0].mxu0
  %575 = vmatprep.mubr.bf16.mxu0 0
  %576 = vmatmul.mubr.bf16.gmra.mrb[0].mxu0 %v249
  %v577 = vpop.f32.mrb[0].mxu0
  %v578 = vadd.f32 0.0, %v577
  %v579 = vpop.f32.mrb[0].mxu0
  %v580 = vpop.f32.mrb[0].mxu0
  %v581 = vadd.f32 0.0, %v580
  %v582 = vpop.f32.mrb[0].mxu0
  %583 = vmatprep.mubr.bf16.mxu0 0
  %584 = vmatmul.mubr.bf16.gmra.mrb[0].mxu0 %v250
  %v585 = vpop.f32.mrb[0].mxu0
  %v586 = vadd.f32 0.0, %v585
  %v587 = vpop.f32.mrb[0].mxu0
  %v588 = vpop.f32.mrb[0].mxu0
  %v589 = vadd.f32 0.0, %v588
  %v590 = vpop.f32.mrb[0].mxu0
  %591 = vmatprep.mubr.bf16.mxu0 0
  %592 = vmatmul.mubr.bf16.gmra.mrb[0].mxu0 %v251
  %v593 = vpop.f32.mrb[0].mxu0
  %v594 = vadd.f32 0.0, %v593
  %v595 = vpop.f32.mrb[0].mxu0
  %v596 = vpop.f32.mrb[0].mxu0
  %v597 = vadd.f32 0.0, %v596
  %v598 = vpop.f32.mrb[0].mxu0
  %599 = vmatprep.mubr.bf16.mxu0 0
  %600 = vmatmul.mubr.bf16.gmra.mrb[0].mxu0 %v252
  %v601 = vpop.f32.mrb[0].mxu0
  %v602 = vadd.f32 0.0, %v601
  %v603 = vpop.f32.mrb[0].mxu0
  %v604 = vpop.f32.mrb[0].mxu0
  %v605 = vadd.f32 0.0, %v604
  %v606 = vpop.f32.mrb[0].mxu0
  %607 = vmatprep.mubr.bf16.mxu0 0
  %608 = vmatmul.mubr.bf16.gmra.mrb[0].mxu0 %v253
  %v609 = vpop.f32.mrb[0].mxu0
  %v610 = vadd.f32 0.0, %v609
  %v611 = vpop.f32.mrb[0].mxu0
  %v612 = vpop.f32.mrb[0].mxu0
  %v613 = vadd.f32 0.0, %v612
  %v614 = vpop.f32.mrb[0].mxu0
  %615 = vmatprep.mubr.bf16.mxu0 0
  %616 = vmatmul.mubr.bf16.gmra.mrb[0].mxu0 %v254
  %v617 = vpop.f32.mrb[0].mxu0
  %v618 = vadd.f32 0.0, %v617
  %v619 = vpop.f32.mrb[0].mxu0
  %v620 = vpop.f32.mrb[0].mxu0
  %v621 = vadd.f32 0.0, %v620
  %v622 = vpop.f32.mrb[0].mxu0
  %623 = vdwg.mxu0
  %v624 = vld [vmem:[%s2] sm:$0x1]
  %v626 = vlaneseq
  %v627 = vshrl.u32 %v626, 7
  %v628 = vsub.s32 0, %v627
  %v629 = vrot.slane %v624, %v628
  %v631 = vmul.f32 %v370, %v629
  %v632 = vmul.f32 %v373, %v629
  %v633 = vmul.f32 %v378, %v629
  %v634 = vmul.f32 %v381, %v629
  %v635 = vmul.f32 %v386, %v629
  %v636 = vmul.f32 %v389, %v629
  %v637 = vmul.f32 %v394, %v629
  %v638 = vmul.f32 %v397, %v629
  %v639 = vmul.f32 %v402, %v629
  %v640 = vmul.f32 %v405, %v629
  %v641 = vmul.f32 %v410, %v629
  %v642 = vmul.f32 %v413, %v629
  %v643 = vmul.f32 %v418, %v629
  %v644 = vmul.f32 %v421, %v629
  %v645 = vmul.f32 %v426, %v629
  %v646 = vmul.f32 %v429, %v629
  %v647 = vmul.f32 %v434, %v629
  %v648 = vmul.f32 %v437, %v629
  %v649 = vmul.f32 %v442, %v629
  %v650 = vmul.f32 %v445, %v629
  %v651 = vmul.f32 %v450, %v629
  %v652 = vmul.f32 %v453, %v629
  %v653 = vmul.f32 %v458, %v629
  %v654 = vmul.f32 %v461, %v629
  %v655 = vmul.f32 %v466, %v629
  %v656 = vmul.f32 %v469, %v629
  %v657 = vmul.f32 %v474, %v629
  %v658 = vmul.f32 %v477, %v629
  %v659 = vmul.f32 %v482, %v629
  %v660 = vmul.f32 %v485, %v629
  %v661 = vmul.f32 %v490, %v629
  %v662 = vmul.f32 %v493, %v629
  %v663 = vmul.f32 %v498, %v629
  %v664 = vmul.f32 %v501, %v629
  %v665 = vmul.f32 %v506, %v629
  %v666 = vmul.f32 %v509, %v629
  %v667 = vmul.f32 %v514, %v629
  %v668 = vmul.f32 %v517, %v629
  %v669 = vmul.f32 %v522, %v629
  %v670 = vmul.f32 %v525, %v629
  %v671 = vmul.f32 %v530, %v629
  %v672 = vmul.f32 %v533, %v629
  %v673 = vmul.f32 %v538, %v629
  %v674 = vmul.f32 %v541, %v629
  %v675 = vmul.f32 %v546, %v629
  %v676 = vmul.f32 %v549, %v629
  %v677 = vmul.f32 %v554, %v629
  %v678 = vmul.f32 %v557, %v629
  %v679 = vmul.f32 %v562, %v629
  %v680 = vmul.f32 %v565, %v629
  %v681 = vmul.f32 %v570, %v629
  %v682 = vmul.f32 %v573, %v629
  %v683 = vmul.f32 %v578, %v629
  %v684 = vmul.f32 %v581, %v629
  %v685 = vmul.f32 %v586, %v629
  %v686 = vmul.f32 %v589, %v629
  %v687 = vmul.f32 %v594, %v629
  %v688 = vmul.f32 %v597, %v629
  %v689 = vmul.f32 %v602, %v629
  %v690 = vmul.f32 %v605, %v629
  %v691 = vmul.f32 %v610, %v629
  %v692 = vmul.f32 %v613, %v629
  %v693 = vmul.f32 %v618, %v629
  %v694 = vmul.f32 %v621, %v629
  %s695 = scalar_lea.vmem %s2, 1
  %v696 = vld [vmem:[%s695] sm:$0x1]
  %v698 = vlaneseq
  %v699 = vshrl.u32 %v698, 7
  %v700 = vsub.s32 0, %v699
  %v701 = vrot.slane %v696, %v700
  %v703 = vadd.f32 %v631, %v701
  %v704 = vadd.f32 %v632, %v701
  %v705 = vadd.f32 %v633, %v701
  %v706 = vadd.f32 %v634, %v701
  %v707 = vadd.f32 %v635, %v701
  %v708 = vadd.f32 %v636, %v701
  %v709 = vadd.f32 %v637, %v701
  %v710 = vadd.f32 %v638, %v701
  %v711 = vadd.f32 %v639, %v701
  %v712 = vadd.f32 %v640, %v701
  %v713 = vadd.f32 %v641, %v701
  %v714 = vadd.f32 %v642, %v701
  %v715 = vadd.f32 %v643, %v701
  %v716 = vadd.f32 %v644, %v701
  %v717 = vadd.f32 %v645, %v701
  %v718 = vadd.f32 %v646, %v701
  %v719 = vadd.f32 %v647, %v701
  %v720 = vadd.f32 %v648, %v701
  %v721 = vadd.f32 %v649, %v701
  %v722 = vadd.f32 %v650, %v701
  %v723 = vadd.f32 %v651, %v701
  %v724 = vadd.f32 %v652, %v701
  %v725 = vadd.f32 %v653, %v701
  %v726 = vadd.f32 %v654, %v701
  %v727 = vadd.f32 %v655, %v701
  %v728 = vadd.f32 %v656, %v701
  %v729 = vadd.f32 %v657, %v701
  %v730 = vadd.f32 %v658, %v701
  %v731 = vadd.f32 %v659, %v701
  %v732 = vadd.f32 %v660, %v701
  %v733 = vadd.f32 %v661, %v701
  %v734 = vadd.f32 %v662, %v701
  %v735 = vadd.f32 %v663, %v701
  %v736 = vadd.f32 %v664, %v701
  %v737 = vadd.f32 %v665, %v701
  %v738 = vadd.f32 %v666, %v701
  %v739 = vadd.f32 %v667, %v701
  %v740 = vadd.f32 %v668, %v701
  %v741 = vadd.f32 %v669, %v701
  %v742 = vadd.f32 %v670, %v701
  %v743 = vadd.f32 %v671, %v701
  %v744 = vadd.f32 %v672, %v701
  %v745 = vadd.f32 %v673, %v701
  %v746 = vadd.f32 %v674, %v701
  %v747 = vadd.f32 %v675, %v701
  %v748 = vadd.f32 %v676, %v701
  %v749 = vadd.f32 %v677, %v701
  %v750 = vadd.f32 %v678, %v701
  %v751 = vadd.f32 %v679, %v701
  %v752 = vadd.f32 %v680, %v701
  %v753 = vadd.f32 %v681, %v701
  %v754 = vadd.f32 %v682, %v701
  %v755 = vadd.f32 %v683, %v701
  %v756 = vadd.f32 %v684, %v701
  %v757 = vadd.f32 %v685, %v701
  %v758 = vadd.f32 %v686, %v701
  %v759 = vadd.f32 %v687, %v701
  %v760 = vadd.f32 %v688, %v701
  %v761 = vadd.f32 %v689, %v701
  %v762 = vadd.f32 %v690, %v701
  %v763 = vadd.f32 %v691, %v701
  %v764 = vadd.f32 %v692, %v701
  %v765 = vadd.f32 %v693, %v701
  %v766 = vadd.f32 %v694, %v701
  %v767 = vmax.f32 %v703, 0.0
  %v768 = vmax.f32 %v704, 0.0
  %v769 = vmax.f32 %v705, 0.0
  %v770 = vmax.f32 %v706, 0.0
  %v771 = vmax.f32 %v707, 0.0
  %v772 = vmax.f32 %v708, 0.0
  %v773 = vmax.f32 %v709, 0.0
  %v774 = vmax.f32 %v710, 0.0
  %v775 = vmax.f32 %v711, 0.0
  %v776 = vmax.f32 %v712, 0.0
  %v777 = vmax.f32 %v713, 0.0
  %v778 = vmax.f32 %v714, 0.0
  %v779 = vmax.f32 %v715, 0.0
  %v780 = vmax.f32 %v716, 0.0
  %v781 = vmax.f32 %v717, 0.0
  %v782 = vmax.f32 %v718, 0.0
  %v783 = vmax.f32 %v719, 0.0
  %v784 = vmax.f32 %v720, 0.0
  %v785 = vmax.f32 %v721, 0.0
  %v786 = vmax.f32 %v722, 0.0
  %v787 = vmax.f32 %v723, 0.0
  %v788 = vmax.f32 %v724, 0.0
  %v789 = vmax.f32 %v725, 0.0
  %v790 = vmax.f32 %v726, 0.0
  %v791 = vmax.f32 %v727, 0.0
  %v792 = vmax.f32 %v728, 0.0
  %v793 = vmax.f32 %v729, 0.0
  %v794 = vmax.f32 %v730, 0.0
  %v795 = vmax.f32 %v731, 0.0
  %v796 = vmax.f32 %v732, 0.0
  %v797 = vmax.f32 %v733, 0.0
  %v798 = vmax.f32 %v734, 0.0
  %v799 = vmax.f32 %v735, 0.0
  %v800 = vmax.f32 %v736, 0.0
  %v801 = vmax.f32 %v737, 0.0
  %v802 = vmax.f32 %v738, 0.0
  %v803 = vmax.f32 %v739, 0.0
  %v804 = vmax.f32 %v740, 0.0
  %v805 = vmax.f32 %v741, 0.0
  %v806 = vmax.f32 %v742, 0.0
  %v807 = vmax.f32 %v743, 0.0
  %v808 = vmax.f32 %v744, 0.0
  %v809 = vmax.f32 %v745, 0.0
  %v810 = vmax.f32 %v746, 0.0
  %v811 = vmax.f32 %v747, 0.0
  %v812 = vmax.f32 %v748, 0.0
  %v813 = vmax.f32 %v749, 0.0
  %v814 = vmax.f32 %v750, 0.0
  %v815 = vmax.f32 %v751, 0.0
  %v816 = vmax.f32 %v752, 0.0
  %v817 = vmax.f32 %v753, 0.0
  %v818 = vmax.f32 %v754, 0.0
  %v819 = vmax.f32 %v755, 0.0
  %v820 = vmax.f32 %v756, 0.0
  %v821 = vmax.f32 %v757, 0.0
  %v822 = vmax.f32 %v758, 0.0
  %v823 = vmax.f32 %v759, 0.0
  %v824 = vmax.f32 %v760, 0.0
  %v825 = vmax.f32 %v761, 0.0
  %v826 = vmax.f32 %v762, 0.0
  %v827 = vmax.f32 %v763, 0.0
  %v828 = vmax.f32 %v764, 0.0
  %v829 = vmax.f32 %v765, 0.0
  %v830 = vmax.f32 %v766, 0.0
  %831 = vst [vmem:[%s3] sm:$0xff] %v767
  %832 = vst [vmem:[%s3 + $0x8] sm:$0xff] %v768
  %833 = vst [vmem:[%s3 + $0x10] sm:$0xff] %v769
  %834 = vst [vmem:[%s3 + $0x18] sm:$0xff] %v770
  %835 = vst [vmem:[%s3 + $0x20] sm:$0xff] %v771
  %836 = vst [vmem:[%s3 + $0x28] sm:$0xff] %v772
  %837 = vst [vmem:[%s3 + $0x30] sm:$0xff] %v773
  %838 = vst [vmem:[%s3 + $0x38] sm:$0xff] %v774
  %839 = vst [vmem:[%s3 + $0x40] sm:$0xff] %v775
  %840 = vst [vmem:[%s3 + $0x48] sm:$0xff] %v776
  %841 = vst [vmem:[%s3 + $0x50] sm:$0xff] %v777
  %842 = vst [vmem:[%s3 + $0x58] sm:$0xff] %v778
  %843 = vst [vmem:[%s3 + $0x60] sm:$0xff] %v779
  %844 = vst [vmem:[%s3 + $0x68] sm:$0xff] %v780
  %845 = vst [vmem:[%s3 + $0x70] sm:$0xff] %v781
  %846 = vst [vmem:[%s3 + $0x78] sm:$0xff] %v782
  %847 = vst [vmem:[%s3 + $0x80] sm:$0xff] %v783
  %848 = vst [vmem:[%s3 + $0x88] sm:$0xff] %v784
  %849 = vst [vmem:[%s3 + $0x90] sm:$0xff] %v785
  %850 = vst [vmem:[%s3 + $0x98] sm:$0xff] %v786
  %851 = vst [vmem:[%s3 + $0xa0] sm:$0xff] %v787
  %852 = vst [vmem:[%s3 + $0xa8] sm:$0xff] %v788
  %853 = vst [vmem:[%s3 + $0xb0] sm:$0xff] %v789
  %854 = vst [vmem:[%s3 + $0xb8] sm:$0xff] %v790
  %855 = vst [vmem:[%s3 + $0xc0] sm:$0xff] %v791
  %856 = vst [vmem:[%s3 + $0xc8] sm:$0xff] %v792
  %857 = vst [vmem:[%s3 + $0xd0] sm:$0xff] %v793
  %858 = vst [vmem:[%s3 + $0xd8] sm:$0xff] %v794
  %859 = vst [vmem:[%s3 + $0xe0] sm:$0xff] %v795
  %860 = vst [vmem:[%s3 + $0xe8] sm:$0xff] %v796
  %861 = vst [vmem:[%s3 + $0xf0] sm:$0xff] %v797
  %862 = vst [vmem:[%s3 + $0xf8] sm:$0xff] %v798
  %863 = vst [vmem:[%s3 + $0x100] sm:$0xff] %v799
  %864 = vst [vmem:[%s3 + $0x108] sm:$0xff] %v800
  %865 = vst [vmem:[%s3 + $0x110] sm:$0xff] %v801
  %866 = vst [vmem:[%s3 + $0x118] sm:$0xff] %v802
  %867 = vst [vmem:[%s3 + $0x120] sm:$0xff] %v803
  %868 = vst [vmem:[%s3 + $0x128] sm:$0xff] %v804
  %869 = vst [vmem:[%s3 + $0x130] sm:$0xff] %v805
  %870 = vst [vmem:[%s3 + $0x138] sm:$0xff] %v806
  %871 = vst [vmem:[%s3 + $0x140] sm:$0xff] %v807
  %872 = vst [vmem:[%s3 + $0x148] sm:$0xff] %v808
  %873 = vst [vmem:[%s3 + $0x150] sm:$0xff] %v809
  %874 = vst [vmem:[%s3 + $0x158] sm:$0xff] %v810
  %875 = vst [vmem:[%s3 + $0x160] sm:$0xff] %v811
  %876 = vst [vmem:[%s3 + $0x168] sm:$0xff] %v812
  %877 = vst [vmem:[%s3 + $0x170] sm:$0xff] %v813
  %878 = vst [vmem:[%s3 + $0x178] sm:$0xff] %v814
  %879 = vst [vmem:[%s3 + $0x180] sm:$0xff] %v815
  %880 = vst [vmem:[%s3 + $0x188] sm:$0xff] %v816
  %881 = vst [vmem:[%s3 + $0x190] sm:$0xff] %v817
  %882 = vst [vmem:[%s3 + $0x198] sm:$0xff] %v818
  %883 = vst [vmem:[%s3 + $0x1a0] sm:$0xff] %v819
  %884 = vst [vmem:[%s3 + $0x1a8] sm:$0xff] %v820
  %885 = vst [vmem:[%s3 + $0x1b0] sm:$0xff] %v821
  %886 = vst [vmem:[%s3 + $0x1b8] sm:$0xff] %v822
  %887 = vst [vmem:[%s3 + $0x1c0] sm:$0xff] %v823
  %888 = vst [vmem:[%s3 + $0x1c8] sm:$0xff] %v824
  %889 = vst [vmem:[%s3 + $0x1d0] sm:$0xff] %v825
  %890 = vst [vmem:[%s3 + $0x1d8] sm:$0xff] %v826
  %891 = vst [vmem:[%s3 + $0x1e0] sm:$0xff] %v827
  %892 = vst [vmem:[%s3 + $0x1e8] sm:$0xff] %v828
  %893 = vst [vmem:[%s3 + $0x1f0] sm:$0xff] %v829
  %894 = vst [vmem:[%s3 + $0x1f8] sm:$0xff] %v830
  // Predicated region
  $region14: #{_lambda_.45} parent=0 // pred_check
    _
  $region15: #{_lambda_.45} parent=0 // pred_check_branch
    %896 = sbr.rel (0) target = $region17
  $region16: #{_lambda_.45} parent=0 // pred_region
    _
  $region17: #{_lambda_.45} parent=0 // pred_fallthru
    _
  // Predicated region
  $region18: #{_lambda_.45} parent=0 // pred_check
    _
  $region19: #{_lambda_.45} parent=0 // pred_check_branch
    %898 = sbr.rel (0) target = $region21
  $region20: #{_lambda_.45} parent=0 // pred_region
    _
  $region21: #{_lambda_.45} parent=0 // pred_fallthru
    _

// kernel: _lambda_.46
$region0: #{_lambda_.46}
  #allocation0 [shape = 'u32[]', space=smem, size = 0x4, offset = 0x4, fixed_abs, tag = 'smem constant byte address 0x4 - core index']
  #allocation1 [shape = 'u32[144,128]{1,0:T(1,128)}', space=vmem, size = 0x12000, scoped, tag = 'internal scratch']
  %s0 = inlined_call_operand.vmem [shape: f32[9,8,128], index: 0, kind: input, shape index: {}]
  %s1 = inlined_call_operand.vmem [shape: f32[8,128], index: 1, kind: output, shape index: {}]
  %s2 = sld [smem:[#allocation0]]
  $region14: #{_lambda_.46} parent=0
    _
  %s4 = ssub.s32 1, %s2
  %s5 = scalar_select 0, %s4, %s2
  // Predicated region
  $region2: #{_lambda_.46} parent=0 // pred_check
    _
  $region3: #{_lambda_.46} parent=0 // pred_check_branch
    %7 = sbr.rel (0) target = $region5
  $region4: #{_lambda_.46} parent=0 // pred_region
    _
  $region5: #{_lambda_.46} parent=0 // pred_fallthru
    _
  %v8 = vld [vmem:[%s0] sm:$0xff]
  %v9 = vld [vmem:[%s0 + $0x8] sm:$0xff]
  %v10 = vld [vmem:[%s0 + $0x10] sm:$0xff]
  %v11 = vld [vmem:[%s0 + $0x18] sm:$0xff]
  %v12 = vld [vmem:[%s0 + $0x20] sm:$0xff]
  %v13 = vld [vmem:[%s0 + $0x28] sm:$0xff]
  %v14 = vld [vmem:[%s0 + $0x30] sm:$0xff]
  %v15 = vld [vmem:[%s0 + $0x38] sm:$0xff]
  %v16 = vld [vmem:[%s0 + $0x40] sm:$0xff]
  %v17 = vmax.f32 %v8, %v12
  %v18 = vmax.f32 %v9, %v13
  %v19 = vmax.f32 %v10, %v14
  %v20 = vmax.f32 %v11, %v15
  %v21 = vmax.f32 %v17, %v16
  %v22 = vmax.f32 %v21, %v18
  %v23 = vmax.f32 %v19, %v20
  %v24 = vmax.f32 %v22, %v23
  %25 = vst [vmem:[%s1] sm:$0xff] %v24
  // Predicated region
  $region6: #{_lambda_.46} parent=0 // pred_check
    _
  $region7: #{_lambda_.46} parent=0 // pred_check_branch
    %27 = sbr.rel (0) target = $region9
  $region8: #{_lambda_.46} parent=0 // pred_region
    _
  $region9: #{_lambda_.46} parent=0 // pred_fallthru
    _
  // Predicated region
  $region10: #{_lambda_.46} parent=0 // pred_check
    _
  $region11: #{_lambda_.46} parent=0 // pred_check_branch
    %29 = sbr.rel (0) target = $region13
  $region12: #{_lambda_.46} parent=0 // pred_region
    _
  $region13: #{_lambda_.46} parent=0 // pred_fallthru
    _

// kernel: _lambda_.47
$region0: #{_lambda_.47}
  #allocation0 [shape = 'u32[]', space=smem, size = 0x4, offset = 0x4, fixed_abs, tag = 'smem constant byte address 0x4 - core index']
  #allocation1 [shape = 'u32[144,128]{1,0:T(1,128)}', space=vmem, size = 0x12000, scoped, tag = 'internal scratch']
  %s0 = inlined_call_operand.vmem [shape: bf16[128,128], index: 0, kind: input, shape index: {}]
  %s1 = inlined_call_operand.vmem [shape: bf16[128,128], index: 1, kind: input, shape index: {}]
  %s2 = inlined_call_operand.vmem [shape: f32[2,1,128], index: 2, kind: input, shape index: {}]
  %s3 = inlined_call_operand.vmem [shape: f32[128,128], index: 3, kind: output, shape index: {}]
  %s4 = sld [smem:[#allocation0]]
  $region22: #{_lambda_.47} parent=0
    _
  %s6 = ssub.s32 1, %s4
  %s7 = scalar_select 0, %s6, %s4
  // Predicated region
  $region2: #{_lambda_.47} parent=0 // pred_check
    _
  $region3: #{_lambda_.47} parent=0 // pred_check_branch
    %9 = sbr.rel (0) target = $region5
  $region4: #{_lambda_.47} parent=0 // pred_region
    _
  $region5: #{_lambda_.47} parent=0 // pred_fallthru
    _
  // Predicated region
  $region6: #{_lambda_.47} parent=0 // pred_check
    _
  $region7: #{_lambda_.47} parent=0 // pred_check_branch
    %11 = sbr.rel (0) target = $region9
  $region8: #{_lambda_.47} parent=0 // pred_region
    _
  $region9: #{_lambda_.47} parent=0 // pred_fallthru
    _
  // Predicated region
  $region10: #{_lambda_.47} parent=0 // pred_check
    _
  $region11: #{_lambda_.47} parent=0 // pred_check_branch
    %13 = sbr.rel (0) target = $region13
  $region12: #{_lambda_.47} parent=0 // pred_region
    _
  $region13: #{_lambda_.47} parent=0 // pred_fallthru
    _
  %v15 = vld [vmem:[%s0] sm:$0xf]
  %v16 = vld [vmem:[%s0 + $0x4] sm:$0xf]
  %v17 = vld [vmem:[%s0 + $0x8] sm:$0xf]
  %v18 = vld [vmem:[%s0 + $0xc] sm:$0xf]
  %v19 = vld [vmem:[%s0 + $0x10] sm:$0xf]
  %v20 = vld [vmem:[%s0 + $0x14] sm:$0xf]
  %v21 = vld [vmem:[%s0 + $0x18] sm:$0xf]
  %v22 = vld [vmem:[%s0 + $0x1c] sm:$0xf]
  %v23 = vld [vmem:[%s0 + $0x20] sm:$0xf]
  %v24 = vld [vmem:[%s0 + $0x24] sm:$0xf]
  %v25 = vld [vmem:[%s0 + $0x28] sm:$0xf]
  %v26 = vld [vmem:[%s0 + $0x2c] sm:$0xf]
  %v27 = vld [vmem:[%s0 + $0x30] sm:$0xf]
  %v28 = vld [vmem:[%s0 + $0x34] sm:$0xf]
  %v29 = vld [vmem:[%s0 + $0x38] sm:$0xf]
  %v30 = vld [vmem:[%s0 + $0x3c] sm:$0xf]
  %v31 = vld [vmem:[%s1] sm:$0xf]
  %v32 = vld [vmem:[%s1 + $0x4] sm:$0xf]
  %v33 = vld [vmem:[%s1 + $0x8] sm:$0xf]
  %v34 = vld [vmem:[%s1 + $0xc] sm:$0xf]
  %v35 = vld [vmem:[%s1 + $0x10] sm:$0xf]
  %v36 = vld [vmem:[%s1 + $0x14] sm:$0xf]
  %v37 = vld [vmem:[%s1 + $0x18] sm:$0xf]
  %v38 = vld [vmem:[%s1 + $0x1c] sm:$0xf]
  %v39 = vld [vmem:[%s1 + $0x20] sm:$0xf]
  %v40 = vld [vmem:[%s1 + $0x24] sm:$0xf]
  %v41 = vld [vmem:[%s1 + $0x28] sm:$0xf]
  %v42 = vld [vmem:[%s1 + $0x2c] sm:$0xf]
  %v43 = vld [vmem:[%s1 + $0x30] sm:$0xf]
  %v44 = vld [vmem:[%s1 + $0x34] sm:$0xf]
  %v45 = vld [vmem:[%s1 + $0x38] sm:$0xf]
  %v46 = vld [vmem:[%s1 + $0x3c] sm:$0xf]
  %v63 = vunpack.c.l.b16 %v15
  %v64 = vunpack.c.l.b16 %v16
  %v65 = vunpack.c.l.b16 %v17
  %v66 = vunpack.c.l.b16 %v18
  %v67 = vunpack.c.l.b16 %v19
  %v68 = vunpack.c.l.b16 %v20
  %v69 = vunpack.c.l.b16 %v21
  %v70 = vunpack.c.l.b16 %v22
  %v71 = vunpack.c.l.b16 %v23
  %v72 = vunpack.c.l.b16 %v24
  %v73 = vunpack.c.l.b16 %v25
  %v74 = vunpack.c.l.b16 %v26
  %v75 = vunpack.c.l.b16 %v27
  %v76 = vunpack.c.l.b16 %v28
  %v77 = vunpack.c.l.b16 %v29
  %v78 = vunpack.c.l.b16 %v30
  %v79 = vpack.c.b16 %v64, %v63
  %v80 = vpack.c.b16 %v66, %v65
  %v81 = vpack.c.b16 %v68, %v67
  %v82 = vpack.c.b16 %v70, %v69
  %v83 = vpack.c.b16 %v72, %v71
  %v84 = vpack.c.b16 %v74, %v73
  %v85 = vpack.c.b16 %v76, %v75
  %v86 = vpack.c.b16 %v78, %v77
  %v111 = vunpack.c.l.b16 %v31
  %v112 = vunpack.c.l.b16 %v32
  %v113 = vunpack.c.l.b16 %v33
  %v114 = vunpack.c.l.b16 %v34
  %v115 = vunpack.c.l.b16 %v35
  %v116 = vunpack.c.l.b16 %v36
  %v117 = vunpack.c.l.b16 %v37
  %v118 = vunpack.c.l.b16 %v38
  %v119 = vunpack.c.l.b16 %v39
  %v120 = vunpack.c.l.b16 %v40
  %v121 = vunpack.c.l.b16 %v41
  %v122 = vunpack.c.l.b16 %v42
  %v123 = vunpack.c.l.b16 %v43
  %v124 = vunpack.c.l.b16 %v44
  %v125 = vunpack.c.l.b16 %v45
  %v126 = vunpack.c.l.b16 %v46
  %v127 = vpack.c.b16 %v112, %v111
  %v128 = vpack.c.b16 %v114, %v113
  %v129 = vpack.c.b16 %v116, %v115
  %v130 = vpack.c.b16 %v118, %v117
  %v131 = vpack.c.b16 %v120, %v119
  %v132 = vpack.c.b16 %v122, %v121
  %v133 = vpack.c.b16 %v124, %v123
  %v134 = vpack.c.b16 %v126, %v125
  %143 = vmatprep.subr.bf16.mxu0 0
  %144 = vmatpush1.bf16.msra.mxu0 %v127
  %145 = vmatprep.subr.bf16.mxu0 0
  %146 = vmatpush1.bf16.msra.mxu0 %v128
  %147 = vmatprep.subr.bf16.mxu0 0
  %148 = vmatpush1.bf16.msra.mxu0 %v129
  %149 = vmatprep.subr.bf16.mxu0 0
  %150 = vmatpush1.bf16.msra.mxu0 %v130
  %151 = vmatprep.subr.bf16.mxu0 0
  %152 = vmatpush1.bf16.msra.mxu0 %v131
  %153 = vmatprep.subr.bf16.mxu0 0
  %154 = vmatpush1.bf16.msra.mxu0 %v132
  %155 = vmatprep.subr.bf16.mxu0 0
  %156 = vmatpush1.bf16.msra.mxu0 %v133
  %157 = vmatprep.subr.bf16.mxu0 0
  %158 = vmatpush1.bf16.msra.mxu0 %v134
  %159 = vmatprep.subr.bf16.mxu0 0
  %160 = vmatpush1.bf16.msra.mxu0 0
  %161 = vmatprep.subr.bf16.mxu0 0
  %162 = vmatpush1.bf16.msra.mxu0 0
  %163 = vmatprep.subr.bf16.mxu0 0
  %164 = vmatpush1.bf16.msra.mxu0 0
  %165 = vmatprep.subr.bf16.mxu0 0
  %166 = vmatpush1.bf16.msra.mxu0 0
  %167 = vmatprep.subr.bf16.mxu0 0
  %168 = vmatpush1.bf16.msra.mxu0 0
  %169 = vmatprep.subr.bf16.mxu0 0
  %170 = vmatpush1.bf16.msra.mxu0 0
  %171 = vmatprep.subr.bf16.mxu0 0
  %172 = vmatpush1.bf16.msra.mxu0 0
  %173 = vmatprep.subr.bf16.mxu0 0
  %174 = vmatpush1.bf16.msra.mxu0 0
  %175 = vmatprep.mubr.bf16.mxu0 0
  %176 = vmatmul.mubr.bf16.gmra.mrb[0].mxu0 %v79
  %v177 = vpop.f32.mrb[0].mxu0
  %v178 = vadd.f32 0.0, %v177
  %v179 = vpop.f32.mrb[0].mxu0
  %v180 = vpop.f32.mrb[0].mxu0
  %v181 = vadd.f32 0.0, %v180
  %v182 = vpop.f32.mrb[0].mxu0
  %183 = vmatprep.mubr.bf16.mxu0 0
  %184 = vmatmul.mubr.bf16.gmra.mrb[0].mxu0 %v80
  %v185 = vpop.f32.mrb[0].mxu0
  %v186 = vadd.f32 0.0, %v185
  %v187 = vpop.f32.mrb[0].mxu0
  %v188 = vpop.f32.mrb[0].mxu0
  %v189 = vadd.f32 0.0, %v188
  %v190 = vpop.f32.mrb[0].mxu0
  %191 = vmatprep.mubr.bf16.mxu0 0
  %192 = vmatmul.mubr.bf16.gmra.mrb[0].mxu0 %v81
  %v193 = vpop.f32.mrb[0].mxu0
  %v194 = vadd.f32 0.0, %v193
  %v195 = vpop.f32.mrb[0].mxu0
  %v196 = vpop.f32.mrb[0].mxu0
  %v197 = vadd.f32 0.0, %v196
  %v198 = vpop.f32.mrb[0].mxu0
  %199 = vmatprep.mubr.bf16.mxu0 0
  %200 = vmatmul.mubr.bf16.gmra.mrb[0].mxu0 %v82
  %v201 = vpop.f32.mrb[0].mxu0
  %v202 = vadd.f32 0.0, %v201
  %v203 = vpop.f32.mrb[0].mxu0
  %v204 = vpop.f32.mrb[0].mxu0
  %v205 = vadd.f32 0.0, %v204
  %v206 = vpop.f32.mrb[0].mxu0
  %207 = vmatprep.mubr.bf16.mxu0 0
  %208 = vmatmul.mubr.bf16.gmra.mrb[0].mxu0 %v83
  %v209 = vpop.f32.mrb[0].mxu0
  %v210 = vadd.f32 0.0, %v209
  %v211 = vpop.f32.mrb[0].mxu0
  %v212 = vpop.f32.mrb[0].mxu0
  %v213 = vadd.f32 0.0, %v212
  %v214 = vpop.f32.mrb[0].mxu0
  %215 = vmatprep.mubr.bf16.mxu0 0
  %216 = vmatmul.mubr.bf16.gmra.mrb[0].mxu0 %v84
  %v217 = vpop.f32.mrb[0].mxu0
  %v218 = vadd.f32 0.0, %v217
  %v219 = vpop.f32.mrb[0].mxu0
  %v220 = vpop.f32.mrb[0].mxu0
  %v221 = vadd.f32 0.0, %v220
  %v222 = vpop.f32.mrb[0].mxu0
  %223 = vmatprep.mubr.bf16.mxu0 0
  %224 = vmatmul.mubr.bf16.gmra.mrb[0].mxu0 %v85
  %v225 = vpop.f32.mrb[0].mxu0
  %v226 = vadd.f32 0.0, %v225
  %v227 = vpop.f32.mrb[0].mxu0
  %v228 = vpop.f32.mrb[0].mxu0
  %v229 = vadd.f32 0.0, %v228
  %v230 = vpop.f32.mrb[0].mxu0
  %231 = vmatprep.mubr.bf16.mxu0 0
  %232 = vmatmul.mubr.bf16.gmra.mrb[0].mxu0 %v86
  %v233 = vpop.f32.mrb[0].mxu0
  %v234 = vadd.f32 0.0, %v233
  %v235 = vpop.f32.mrb[0].mxu0
  %v236 = vpop.f32.mrb[0].mxu0
  %v237 = vadd.f32 0.0, %v236
  %v238 = vpop.f32.mrb[0].mxu0
  %239 = vdwg.mxu0
  %v240 = vld [vmem:[%s2] sm:$0x1]
  %v242 = vlaneseq
  %v243 = vshrl.u32 %v242, 7
  %v244 = vsub.s32 0, %v243
  %v245 = vrot.slane %v240, %v244
  %v247 = vmul.f32 %v178, %v245
  %v248 = vmul.f32 %v181, %v245
  %v249 = vmul.f32 %v186, %v245
  %v250 = vmul.f32 %v189, %v245
  %v251 = vmul.f32 %v194, %v245
  %v252 = vmul.f32 %v197, %v245
  %v253 = vmul.f32 %v202, %v245
  %v254 = vmul.f32 %v205, %v245
  %v255 = vmul.f32 %v210, %v245
  %v256 = vmul.f32 %v213, %v245
  %v257 = vmul.f32 %v218, %v245
  %v258 = vmul.f32 %v221, %v245
  %v259 = vmul.f32 %v226, %v245
  %v260 = vmul.f32 %v229, %v245
  %v261 = vmul.f32 %v234, %v245
  %v262 = vmul.f32 %v237, %v245
  %s263 = scalar_lea.vmem %s2, 1
  %v264 = vld [vmem:[%s263] sm:$0x1]
  %v266 = vlaneseq
  %v267 = vshrl.u32 %v266, 7
  %v268 = vsub.s32 0, %v267
  %v269 = vrot.slane %v264, %v268
  %v271 = vadd.f32 %v247, %v269
  %v272 = vadd.f32 %v248, %v269
  %v273 = vadd.f32 %v249, %v269
  %v274 = vadd.f32 %v250, %v269
  %v275 = vadd.f32 %v251, %v269
  %v276 = vadd.f32 %v252, %v269
  %v277 = vadd.f32 %v253, %v269
  %v278 = vadd.f32 %v254, %v269
  %v279 = vadd.f32 %v255, %v269
  %v280 = vadd.f32 %v256, %v269
  %v281 = vadd.f32 %v257, %v269
  %v282 = vadd.f32 %v258, %v269
  %v283 = vadd.f32 %v259, %v269
  %v284 = vadd.f32 %v260, %v269
  %v285 = vadd.f32 %v261, %v269
  %v286 = vadd.f32 %v262, %v269
  %v287 = vmax.f32 %v271, 0.0
  %v288 = vmax.f32 %v272, 0.0
  %v289 = vmax.f32 %v273, 0.0
  %v290 = vmax.f32 %v274, 0.0
  %v291 = vmax.f32 %v275, 0.0
  %v292 = vmax.f32 %v276, 0.0
  %v293 = vmax.f32 %v277, 0.0
  %v294 = vmax.f32 %v278, 0.0
  %v295 = vmax.f32 %v279, 0.0
  %v296 = vmax.f32 %v280, 0.0
  %v297 = vmax.f32 %v281, 0.0
  %v298 = vmax.f32 %v282, 0.0
  %v299 = vmax.f32 %v283, 0.0
  %v300 = vmax.f32 %v284, 0.0
  %v301 = vmax.f32 %v285, 0.0
  %v302 = vmax.f32 %v286, 0.0
  %303 = vst [vmem:[%s3] sm:$0xff] %v287
  %304 = vst [vmem:[%s3 + $0x8] sm:$0xff] %v288
  %305 = vst [vmem:[%s3 + $0x10] sm:$0xff] %v289
  %306 = vst [vmem:[%s3 + $0x18] sm:$0xff] %v290
  %307 = vst [vmem:[%s3 + $0x20] sm:$0xff] %v291
  %308 = vst [vmem:[%s3 + $0x28] sm:$0xff] %v292
  %309 = vst [vmem:[%s3 + $0x30] sm:$0xff] %v293
  %310 = vst [vmem:[%s3 + $0x38] sm:$0xff] %v294
  %311 = vst [vmem:[%s3 + $0x40] sm:$0xff] %v295
  %312 = vst [vmem:[%s3 + $0x48] sm:$0xff] %v296
  %313 = vst [vmem:[%s3 + $0x50] sm:$0xff] %v297
  %314 = vst [vmem:[%s3 + $0x58] sm:$0xff] %v298
  %315 = vst [vmem:[%s3 + $0x60] sm:$0xff] %v299
  %316 = vst [vmem:[%s3 + $0x68] sm:$0xff] %v300
  %317 = vst [vmem:[%s3 + $0x70] sm:$0xff] %v301
  %318 = vst [vmem:[%s3 + $0x78] sm:$0xff] %v302
  // Predicated region
  $region14: #{_lambda_.47} parent=0 // pred_check
    _
  $region15: #{_lambda_.47} parent=0 // pred_check_branch
    %320 = sbr.rel (0) target = $region17
  $region16: #{_lambda_.47} parent=0 // pred_region
    _
  $region17: #{_lambda_.47} parent=0 // pred_fallthru
    _
  // Predicated region
  $region18: #{_lambda_.47} parent=0 // pred_check
    _
  $region19: #{_lambda_.47} parent=0 // pred_check_branch
    %322 = sbr.rel (0) target = $region21
  $region20: #{_lambda_.47} parent=0 // pred_region
    _
  $region21: #{_lambda_.47} parent=0 // pred_fallthru
    _

// kernel: _lambda_.48
$region0: #{_lambda_.48}
  #allocation0 [shape = 'u32[]', space=smem, size = 0x4, offset = 0x4, fixed_abs, tag = 'smem constant byte address 0x4 - core index']
  #allocation1 [shape = 'u32[144,128]{1,0:T(1,128)}', space=vmem, size = 0x12000, scoped, tag = 'internal scratch']
  %s0 = inlined_call_operand.vmem [shape: bf16[128,128], index: 0, kind: input, shape index: {}]
  %s1 = inlined_call_operand.vmem [shape: bf16[128,128], index: 1, kind: input, shape index: {}]
  %s2 = inlined_call_operand.vmem [shape: f32[2,1,128], index: 2, kind: input, shape index: {}]
  %s3 = inlined_call_operand.vmem [shape: f32[128,128], index: 3, kind: input, shape index: {}]
  %s4 = inlined_call_operand.vmem [shape: f32[128,128], index: 4, kind: output, shape index: {}]
  %s5 = sld [smem:[#allocation0]]
  $region26: #{_lambda_.48} parent=0
    _
  %s7 = ssub.s32 1, %s5
  %s8 = scalar_select 0, %s7, %s5
  // Predicated region
  $region2: #{_lambda_.48} parent=0 // pred_check
    _
  $region3: #{_lambda_.48} parent=0 // pred_check_branch
    %10 = sbr.rel (0) target = $region5
  $region4: #{_lambda_.48} parent=0 // pred_region
    _
  $region5: #{_lambda_.48} parent=0 // pred_fallthru
    _
  // Predicated region
  $region6: #{_lambda_.48} parent=0 // pred_check
    _
  $region7: #{_lambda_.48} parent=0 // pred_check_branch
    %12 = sbr.rel (0) target = $region9
  $region8: #{_lambda_.48} parent=0 // pred_region
    _
  $region9: #{_lambda_.48} parent=0 // pred_fallthru
    _
  // Predicated region
  $region10: #{_lambda_.48} parent=0 // pred_check
    _
  $region11: #{_lambda_.48} parent=0 // pred_check_branch
    %14 = sbr.rel (0) target = $region13
  $region12: #{_lambda_.48} parent=0 // pred_region
    _
  $region13: #{_lambda_.48} parent=0 // pred_fallthru
    _
  // Predicated region
  $region14: #{_lambda_.48} parent=0 // pred_check
    _
  $region15: #{_lambda_.48} parent=0 // pred_check_branch
    %16 = sbr.rel (0) target = $region17
  $region16: #{_lambda_.48} parent=0 // pred_region
    _
  $region17: #{_lambda_.48} parent=0 // pred_fallthru
    _
  %v18 = vld [vmem:[%s0] sm:$0xf]
  %v19 = vld [vmem:[%s0 + $0x4] sm:$0xf]
  %v20 = vld [vmem:[%s0 + $0x8] sm:$0xf]
  %v21 = vld [vmem:[%s0 + $0xc] sm:$0xf]
  %v22 = vld [vmem:[%s0 + $0x10] sm:$0xf]
  %v23 = vld [vmem:[%s0 + $0x14] sm:$0xf]
  %v24 = vld [vmem:[%s0 + $0x18] sm:$0xf]
  %v25 = vld [vmem:[%s0 + $0x1c] sm:$0xf]
  %v26 = vld [vmem:[%s0 + $0x20] sm:$0xf]
  %v27 = vld [vmem:[%s0 + $0x24] sm:$0xf]
  %v28 = vld [vmem:[%s0 + $0x28] sm:$0xf]
  %v29 = vld [vmem:[%s0 + $0x2c] sm:$0xf]
  %v30 = vld [vmem:[%s0 + $0x30] sm:$0xf]
  %v31 = vld [vmem:[%s0 + $0x34] sm:$0xf]
  %v32 = vld [vmem:[%s0 + $0x38] sm:$0xf]
  %v33 = vld [vmem:[%s0 + $0x3c] sm:$0xf]
  %v34 = vld [vmem:[%s1] sm:$0xf]
  %v35 = vld [vmem:[%s1 + $0x4] sm:$0xf]
  %v36 = vld [vmem:[%s1 + $0x8] sm:$0xf]
  %v37 = vld [vmem:[%s1 + $0xc] sm:$0xf]
  %v38 = vld [vmem:[%s1 + $0x10] sm:$0xf]
  %v39 = vld [vmem:[%s1 + $0x14] sm:$0xf]
  %v40 = vld [vmem:[%s1 + $0x18] sm:$0xf]
  %v41 = vld [vmem:[%s1 + $0x1c] sm:$0xf]
  %v42 = vld [vmem:[%s1 + $0x20] sm:$0xf]
  %v43 = vld [vmem:[%s1 + $0x24] sm:$0xf]
  %v44 = vld [vmem:[%s1 + $0x28] sm:$0xf]
  %v45 = vld [vmem:[%s1 + $0x2c] sm:$0xf]
  %v46 = vld [vmem:[%s1 + $0x30] sm:$0xf]
  %v47 = vld [vmem:[%s1 + $0x34] sm:$0xf]
  %v48 = vld [vmem:[%s1 + $0x38] sm:$0xf]
  %v49 = vld [vmem:[%s1 + $0x3c] sm:$0xf]
  %v66 = vunpack.c.l.b16 %v18
  %v67 = vunpack.c.l.b16 %v19
  %v68 = vunpack.c.l.b16 %v20
  %v69 = vunpack.c.l.b16 %v21
  %v70 = vunpack.c.l.b16 %v22
  %v71 = vunpack.c.l.b16 %v23
  %v72 = vunpack.c.l.b16 %v24
  %v73 = vunpack.c.l.b16 %v25
  %v74 = vunpack.c.l.b16 %v26
  %v75 = vunpack.c.l.b16 %v27
  %v76 = vunpack.c.l.b16 %v28
  %v77 = vunpack.c.l.b16 %v29
  %v78 = vunpack.c.l.b16 %v30
  %v79 = vunpack.c.l.b16 %v31
  %v80 = vunpack.c.l.b16 %v32
  %v81 = vunpack.c.l.b16 %v33
  %v82 = vpack.c.b16 %v67, %v66
  %v83 = vpack.c.b16 %v69, %v68
  %v84 = vpack.c.b16 %v71, %v70
  %v85 = vpack.c.b16 %v73, %v72
  %v86 = vpack.c.b16 %v75, %v74
  %v87 = vpack.c.b16 %v77, %v76
  %v88 = vpack.c.b16 %v79, %v78
  %v89 = vpack.c.b16 %v81, %v80
  %v114 = vunpack.c.l.b16 %v34
  %v115 = vunpack.c.l.b16 %v35
  %v116 = vunpack.c.l.b16 %v36
  %v117 = vunpack.c.l.b16 %v37
  %v118 = vunpack.c.l.b16 %v38
  %v119 = vunpack.c.l.b16 %v39
  %v120 = vunpack.c.l.b16 %v40
  %v121 = vunpack.c.l.b16 %v41
  %v122 = vunpack.c.l.b16 %v42
  %v123 = vunpack.c.l.b16 %v43
  %v124 = vunpack.c.l.b16 %v44
  %v125 = vunpack.c.l.b16 %v45
  %v126 = vunpack.c.l.b16 %v46
  %v127 = vunpack.c.l.b16 %v47
  %v128 = vunpack.c.l.b16 %v48
  %v129 = vunpack.c.l.b16 %v49
  %v130 = vpack.c.b16 %v115, %v114
  %v131 = vpack.c.b16 %v117, %v116
  %v132 = vpack.c.b16 %v119, %v118
  %v133 = vpack.c.b16 %v121, %v120
  %v134 = vpack.c.b16 %v123, %v122
  %v135 = vpack.c.b16 %v125, %v124
  %v136 = vpack.c.b16 %v127, %v126
  %v137 = vpack.c.b16 %v129, %v128
  %146 = vmatprep.subr.bf16.mxu0 0
  %147 = vmatpush1.bf16.msra.mxu0 %v130
  %148 = vmatprep.subr.bf16.mxu0 0
  %149 = vmatpush1.bf16.msra.mxu0 %v131
  %150 = vmatprep.subr.bf16.mxu0 0
  %151 = vmatpush1.bf16.msra.mxu0 %v132
  %152 = vmatprep.subr.bf16.mxu0 0
  %153 = vmatpush1.bf16.msra.mxu0 %v133
  %154 = vmatprep.subr.bf16.mxu0 0
  %155 = vmatpush1.bf16.msra.mxu0 %v134
  %156 = vmatprep.subr.bf16.mxu0 0
  %157 = vmatpush1.bf16.msra.mxu0 %v135
  %158 = vmatprep.subr.bf16.mxu0 0
  %159 = vmatpush1.bf16.msra.mxu0 %v136
  %160 = vmatprep.subr.bf16.mxu0 0
  %161 = vmatpush1.bf16.msra.mxu0 %v137
  %162 = vmatprep.subr.bf16.mxu0 0
  %163 = vmatpush1.bf16.msra.mxu0 0
  %164 = vmatprep.subr.bf16.mxu0 0
  %165 = vmatpush1.bf16.msra.mxu0 0
  %166 = vmatprep.subr.bf16.mxu0 0
  %167 = vmatpush1.bf16.msra.mxu0 0
  %168 = vmatprep.subr.bf16.mxu0 0
  %169 = vmatpush1.bf16.msra.mxu0 0
  %170 = vmatprep.subr.bf16.mxu0 0
  %171 = vmatpush1.bf16.msra.mxu0 0
  %172 = vmatprep.subr.bf16.mxu0 0
  %173 = vmatpush1.bf16.msra.mxu0 0
  %174 = vmatprep.subr.bf16.mxu0 0
  %175 = vmatpush1.bf16.msra.mxu0 0
  %176 = vmatprep.subr.bf16.mxu0 0
  %177 = vmatpush1.bf16.msra.mxu0 0
  %178 = vmatprep.mubr.bf16.mxu0 0
  %179 = vmatmul.mubr.bf16.gmra.mrb[0].mxu0 %v82
  %v180 = vpop.f32.mrb[0].mxu0
  %v181 = vadd.f32 0.0, %v180
  %v182 = vpop.f32.mrb[0].mxu0
  %v183 = vpop.f32.mrb[0].mxu0
  %v184 = vadd.f32 0.0, %v183
  %v185 = vpop.f32.mrb[0].mxu0
  %186 = vmatprep.mubr.bf16.mxu0 0
  %187 = vmatmul.mubr.bf16.gmra.mrb[0].mxu0 %v83
  %v188 = vpop.f32.mrb[0].mxu0
  %v189 = vadd.f32 0.0, %v188
  %v190 = vpop.f32.mrb[0].mxu0
  %v191 = vpop.f32.mrb[0].mxu0
  %v192 = vadd.f32 0.0, %v191
  %v193 = vpop.f32.mrb[0].mxu0
  %194 = vmatprep.mubr.bf16.mxu0 0
  %195 = vmatmul.mubr.bf16.gmra.mrb[0].mxu0 %v84
  %v196 = vpop.f32.mrb[0].mxu0
  %v197 = vadd.f32 0.0, %v196
  %v198 = vpop.f32.mrb[0].mxu0
  %v199 = vpop.f32.mrb[0].mxu0
  %v200 = vadd.f32 0.0, %v199
  %v201 = vpop.f32.mrb[0].mxu0
  %202 = vmatprep.mubr.bf16.mxu0 0
  %203 = vmatmul.mubr.bf16.gmra.mrb[0].mxu0 %v85
  %v204 = vpop.f32.mrb[0].mxu0
  %v205 = vadd.f32 0.0, %v204
  %v206 = vpop.f32.mrb[0].mxu0
  %v207 = vpop.f32.mrb[0].mxu0
  %v208 = vadd.f32 0.0, %v207
  %v209 = vpop.f32.mrb[0].mxu0
  %210 = vmatprep.mubr.bf16.mxu0 0
  %211 = vmatmul.mubr.bf16.gmra.mrb[0].mxu0 %v86
  %v212 = vpop.f32.mrb[0].mxu0
  %v213 = vadd.f32 0.0, %v212
  %v214 = vpop.f32.mrb[0].mxu0
  %v215 = vpop.f32.mrb[0].mxu0
  %v216 = vadd.f32 0.0, %v215
  %v217 = vpop.f32.mrb[0].mxu0
  %218 = vmatprep.mubr.bf16.mxu0 0
  %219 = vmatmul.mubr.bf16.gmra.mrb[0].mxu0 %v87
  %v220 = vpop.f32.mrb[0].mxu0
  %v221 = vadd.f32 0.0, %v220
  %v222 = vpop.f32.mrb[0].mxu0
  %v223 = vpop.f32.mrb[0].mxu0
  %v224 = vadd.f32 0.0, %v223
  %v225 = vpop.f32.mrb[0].mxu0
  %226 = vmatprep.mubr.bf16.mxu0 0
  %227 = vmatmul.mubr.bf16.gmra.mrb[0].mxu0 %v88
  %v228 = vpop.f32.mrb[0].mxu0
  %v229 = vadd.f32 0.0, %v228
  %v230 = vpop.f32.mrb[0].mxu0
  %v231 = vpop.f32.mrb[0].mxu0
  %v232 = vadd.f32 0.0, %v231
  %v233 = vpop.f32.mrb[0].mxu0
  %234 = vmatprep.mubr.bf16.mxu0 0
  %235 = vmatmul.mubr.bf16.gmra.mrb[0].mxu0 %v89
  %v236 = vpop.f32.mrb[0].mxu0
  %v237 = vadd.f32 0.0, %v236
  %v238 = vpop.f32.mrb[0].mxu0
  %v239 = vpop.f32.mrb[0].mxu0
  %v240 = vadd.f32 0.0, %v239
  %v241 = vpop.f32.mrb[0].mxu0
  %242 = vdwg.mxu0
  %v243 = vld [vmem:[%s2] sm:$0x1]
  %v245 = vlaneseq
  %v246 = vshrl.u32 %v245, 7
  %v247 = vsub.s32 0, %v246
  %v248 = vrot.slane %v243, %v247
  %v250 = vmul.f32 %v181, %v248
  %v251 = vmul.f32 %v184, %v248
  %v252 = vmul.f32 %v189, %v248
  %v253 = vmul.f32 %v192, %v248
  %v254 = vmul.f32 %v197, %v248
  %v255 = vmul.f32 %v200, %v248
  %v256 = vmul.f32 %v205, %v248
  %v257 = vmul.f32 %v208, %v248
  %v258 = vmul.f32 %v213, %v248
  %v259 = vmul.f32 %v216, %v248
  %v260 = vmul.f32 %v221, %v248
  %v261 = vmul.f32 %v224, %v248
  %v262 = vmul.f32 %v229, %v248
  %v263 = vmul.f32 %v232, %v248
  %v264 = vmul.f32 %v237, %v248
  %v265 = vmul.f32 %v240, %v248
  %s266 = scalar_lea.vmem %s2, 1
  %v267 = vld [vmem:[%s266] sm:$0x1]
  %v269 = vlaneseq
  %v270 = vshrl.u32 %v269, 7
  %v271 = vsub.s32 0, %v270
  %v272 = vrot.slane %v267, %v271
  %v274 = vadd.f32 %v250, %v272
  %v275 = vadd.f32 %v251, %v272
  %v276 = vadd.f32 %v252, %v272
  %v277 = vadd.f32 %v253, %v272
  %v278 = vadd.f32 %v254, %v272
  %v279 = vadd.f32 %v255, %v272
  %v280 = vadd.f32 %v256, %v272
  %v281 = vadd.f32 %v257, %v272
  %v282 = vadd.f32 %v258, %v272
  %v283 = vadd.f32 %v259, %v272
  %v284 = vadd.f32 %v260, %v272
  %v285 = vadd.f32 %v261, %v272
  %v286 = vadd.f32 %v262, %v272
  %v287 = vadd.f32 %v263, %v272
  %v288 = vadd.f32 %v264, %v272
  %v289 = vadd.f32 %v265, %v272
  %v290 = vld [vmem:[%s3] sm:$0xff]
  %v291 = vld [vmem:[%s3 + $0x8] sm:$0xff]
  %v292 = vld [vmem:[%s3 + $0x10] sm:$0xff]
  %v293 = vld [vmem:[%s3 + $0x18] sm:$0xff]
  %v294 = vld [vmem:[%s3 + $0x20] sm:$0xff]
  %v295 = vld [vmem:[%s3 + $0x28] sm:$0xff]
  %v296 = vld [vmem:[%s3 + $0x30] sm:$0xff]
  %v297 = vld [vmem:[%s3 + $0x38] sm:$0xff]
  %v298 = vld [vmem:[%s3 + $0x40] sm:$0xff]
  %v299 = vld [vmem:[%s3 + $0x48] sm:$0xff]
  %v300 = vld [vmem:[%s3 + $0x50] sm:$0xff]
  %v301 = vld [vmem:[%s3 + $0x58] sm:$0xff]
  %v302 = vld [vmem:[%s3 + $0x60] sm:$0xff]
  %v303 = vld [vmem:[%s3 + $0x68] sm:$0xff]
  %v304 = vld [vmem:[%s3 + $0x70] sm:$0xff]
  %v305 = vld [vmem:[%s3 + $0x78] sm:$0xff]
  %v306 = vadd.f32 %v274, %v290
  %v307 = vadd.f32 %v275, %v291
  %v308 = vadd.f32 %v276, %v292
  %v309 = vadd.f32 %v277, %v293
  %v310 = vadd.f32 %v278, %v294
  %v311 = vadd.f32 %v279, %v295
  %v312 = vadd.f32 %v280, %v296
  %v313 = vadd.f32 %v281, %v297
  %v314 = vadd.f32 %v282, %v298
  %v315 = vadd.f32 %v283, %v299
  %v316 = vadd.f32 %v284, %v300
  %v317 = vadd.f32 %v285, %v301
  %v318 = vadd.f32 %v286, %v302
  %v319 = vadd.f32 %v287, %v303
  %v320 = vadd.f32 %v288, %v304
  %v321 = vadd.f32 %v289, %v305
  %v322 = vmax.f32 %v306, 0.0
  %v323 = vmax.f32 %v307, 0.0
  %v324 = vmax.f32 %v308, 0.0
  %v325 = vmax.f32 %v309, 0.0
  %v326 = vmax.f32 %v310, 0.0
  %v327 = vmax.f32 %v311, 0.0
  %v328 = vmax.f32 %v312, 0.0
  %v329 = vmax.f32 %v313, 0.0
  %v330 = vmax.f32 %v314, 0.0
  %v331 = vmax.f32 %v315, 0.0
  %v332 = vmax.f32 %v316, 0.0
  %v333 = vmax.f32 %v317, 0.0
  %v334 = vmax.f32 %v318, 0.0
  %v335 = vmax.f32 %v319, 0.0
  %v336 = vmax.f32 %v320, 0.0
  %v337 = vmax.f32 %v321, 0.0
  %338 = vst [vmem:[%s4] sm:$0xff] %v322
  %339 = vst [vmem:[%s4 + $0x8] sm:$0xff] %v323
  %340 = vst [vmem:[%s4 + $0x10] sm:$0xff] %v324
  %341 = vst [vmem:[%s4 + $0x18] sm:$0xff] %v325
  %342 = vst [vmem:[%s4 + $0x20] sm:$0xff] %v326
  %343 = vst [vmem:[%s4 + $0x28] sm:$0xff] %v327
  %344 = vst [vmem:[%s4 + $0x30] sm:$0xff] %v328
  %345 = vst [vmem:[%s4 + $0x38] sm:$0xff] %v329
  %346 = vst [vmem:[%s4 + $0x40] sm:$0xff] %v330
  %347 = vst [vmem:[%s4 + $0x48] sm:$0xff] %v331
  %348 = vst [vmem:[%s4 + $0x50] sm:$0xff] %v332
  %349 = vst [vmem:[%s4 + $0x58] sm:$0xff] %v333
  %350 = vst [vmem:[%s4 + $0x60] sm:$0xff] %v334
  %351 = vst [vmem:[%s4 + $0x68] sm:$0xff] %v335
  %352 = vst [vmem:[%s4 + $0x70] sm:$0xff] %v336
  %353 = vst [vmem:[%s4 + $0x78] sm:$0xff] %v337
  // Predicated region
  $region18: #{_lambda_.48} parent=0 // pred_check
    _
  $region19: #{_lambda_.48} parent=0 // pred_check_branch
    %355 = sbr.rel (0) target = $region21
  $region20: #{_lambda_.48} parent=0 // pred_region
    _
  $region21: #{_lambda_.48} parent=0 // pred_fallthru
    _
  // Predicated region
  $region22: #{_lambda_.48} parent=0 // pred_check
    _
  $region23: #{_lambda_.48} parent=0 // pred_check_branch
    %357 = sbr.rel (0) target = $region25
  $region24: #{_lambda_.48} parent=0 // pred_region
    _
  $region25: #{_lambda_.48} parent=0 // pred_fallthru
    _

// kernel: _lambda_.51
$region0: #{_lambda_.51}
  #allocation0 [shape = 'u32[]', space=smem, size = 0x4, offset = 0x4, fixed_abs, tag = 'smem constant byte address 0x4 - core index']
  #allocation1 [shape = 'u32[144,128]{1,0:T(1,128)}', space=vmem, size = 0x12000, scoped, tag = 'internal scratch']
  %s0 = inlined_call_operand.vmem [shape: bf16[32,128], index: 0, kind: input, shape index: {}]
  %s1 = inlined_call_operand.vmem [shape: bf16[128,128], index: 1, kind: input, shape index: {}]
  %s2 = inlined_call_operand.vmem [shape: f32[2,1,128], index: 2, kind: input, shape index: {}]
  %s3 = inlined_call_operand.vmem [shape: f32[32,128], index: 3, kind: output, shape index: {}]
  %s4 = sld [smem:[#allocation0]]
  $region22: #{_lambda_.51} parent=0
    _
  %s6 = ssub.s32 1, %s4
  %s7 = scalar_select 0, %s6, %s4
  // Predicated region
  $region2: #{_lambda_.51} parent=0 // pred_check
    _
  $region3: #{_lambda_.51} parent=0 // pred_check_branch
    %9 = sbr.rel (0) target = $region5
  $region4: #{_lambda_.51} parent=0 // pred_region
    _
  $region5: #{_lambda_.51} parent=0 // pred_fallthru
    _
  // Predicated region
  $region6: #{_lambda_.51} parent=0 // pred_check
    _
  $region7: #{_lambda_.51} parent=0 // pred_check_branch
    %11 = sbr.rel (0) target = $region9
  $region8: #{_lambda_.51} parent=0 // pred_region
    _
  $region9: #{_lambda_.51} parent=0 // pred_fallthru
    _
  // Predicated region
  $region10: #{_lambda_.51} parent=0 // pred_check
    _
  $region11: #{_lambda_.51} parent=0 // pred_check_branch
    %13 = sbr.rel (0) target = $region13
  $region12: #{_lambda_.51} parent=0 // pred_region
    _
  $region13: #{_lambda_.51} parent=0 // pred_fallthru
    _
  %v15 = vld [vmem:[%s0] sm:$0xf]
  %v16 = vld [vmem:[%s0 + $0x4] sm:$0xf]
  %v17 = vld [vmem:[%s0 + $0x8] sm:$0xf]
  %v18 = vld [vmem:[%s0 + $0xc] sm:$0xf]
  %v19 = vld [vmem:[%s1] sm:$0xf]
  %v20 = vld [vmem:[%s1 + $0x4] sm:$0xf]
  %v21 = vld [vmem:[%s1 + $0x8] sm:$0xf]
  %v22 = vld [vmem:[%s1 + $0xc] sm:$0xf]
  %v23 = vld [vmem:[%s1 + $0x10] sm:$0xf]
  %v24 = vld [vmem:[%s1 + $0x14] sm:$0xf]
  %v25 = vld [vmem:[%s1 + $0x18] sm:$0xf]
  %v26 = vld [vmem:[%s1 + $0x1c] sm:$0xf]
  %v27 = vld [vmem:[%s1 + $0x20] sm:$0xf]
  %v28 = vld [vmem:[%s1 + $0x24] sm:$0xf]
  %v29 = vld [vmem:[%s1 + $0x28] sm:$0xf]
  %v30 = vld [vmem:[%s1 + $0x2c] sm:$0xf]
  %v31 = vld [vmem:[%s1 + $0x30] sm:$0xf]
  %v32 = vld [vmem:[%s1 + $0x34] sm:$0xf]
  %v33 = vld [vmem:[%s1 + $0x38] sm:$0xf]
  %v34 = vld [vmem:[%s1 + $0x3c] sm:$0xf]
  %v39 = vunpack.c.l.b16 %v15
  %v40 = vunpack.c.l.b16 %v16
  %v41 = vunpack.c.l.b16 %v17
  %v42 = vunpack.c.l.b16 %v18
  %v43 = vpack.c.b16 %v40, %v39
  %v44 = vpack.c.b16 %v42, %v41
  %v63 = vunpack.c.l.b16 %v19
  %v64 = vunpack.c.l.b16 %v20
  %v65 = vunpack.c.l.b16 %v21
  %v66 = vunpack.c.l.b16 %v22
  %v67 = vunpack.c.l.b16 %v23
  %v68 = vunpack.c.l.b16 %v24
  %v69 = vunpack.c.l.b16 %v25
  %v70 = vunpack.c.l.b16 %v26
  %v71 = vunpack.c.l.b16 %v27
  %v72 = vunpack.c.l.b16 %v28
  %v73 = vunpack.c.l.b16 %v29
  %v74 = vunpack.c.l.b16 %v30
  %v75 = vunpack.c.l.b16 %v31
  %v76 = vunpack.c.l.b16 %v32
  %v77 = vunpack.c.l.b16 %v33
  %v78 = vunpack.c.l.b16 %v34
  %v79 = vpack.c.b16 %v64, %v63
  %v80 = vpack.c.b16 %v66, %v65
  %v81 = vpack.c.b16 %v68, %v67
  %v82 = vpack.c.b16 %v70, %v69
  %v83 = vpack.c.b16 %v72, %v71
  %v84 = vpack.c.b16 %v74, %v73
  %v85 = vpack.c.b16 %v76, %v75
  %v86 = vpack.c.b16 %v78, %v77
  %95 = vmatprep.subr.bf16.mxu0 0
  %96 = vmatpush1.bf16.msra.mxu0 %v79
  %97 = vmatprep.subr.bf16.mxu0 0
  %98 = vmatpush1.bf16.msra.mxu0 %v80
  %99 = vmatprep.subr.bf16.mxu0 0
  %100 = vmatpush1.bf16.msra.mxu0 %v81
  %101 = vmatprep.subr.bf16.mxu0 0
  %102 = vmatpush1.bf16.msra.mxu0 %v82
  %103 = vmatprep.subr.bf16.mxu0 0
  %104 = vmatpush1.bf16.msra.mxu0 %v83
  %105 = vmatprep.subr.bf16.mxu0 0
  %106 = vmatpush1.bf16.msra.mxu0 %v84
  %107 = vmatprep.subr.bf16.mxu0 0
  %108 = vmatpush1.bf16.msra.mxu0 %v85
  %109 = vmatprep.subr.bf16.mxu0 0
  %110 = vmatpush1.bf16.msra.mxu0 %v86
  %111 = vmatprep.subr.bf16.mxu0 0
  %112 = vmatpush1.bf16.msra.mxu0 0
  %113 = vmatprep.subr.bf16.mxu0 0
  %114 = vmatpush1.bf16.msra.mxu0 0
  %115 = vmatprep.subr.bf16.mxu0 0
  %116 = vmatpush1.bf16.msra.mxu0 0
  %117 = vmatprep.subr.bf16.mxu0 0
  %118 = vmatpush1.bf16.msra.mxu0 0
  %119 = vmatprep.subr.bf16.mxu0 0
  %120 = vmatpush1.bf16.msra.mxu0 0
  %121 = vmatprep.subr.bf16.mxu0 0
  %122 = vmatpush1.bf16.msra.mxu0 0
  %123 = vmatprep.subr.bf16.mxu0 0
  %124 = vmatpush1.bf16.msra.mxu0 0
  %125 = vmatprep.subr.bf16.mxu0 0
  %126 = vmatpush1.bf16.msra.mxu0 0
  %127 = vmatprep.mubr.bf16.mxu0 0
  %128 = vmatmul.mubr.bf16.gmra.mrb[0].mxu0 %v43
  %v129 = vpop.f32.mrb[0].mxu0
  %v130 = vadd.f32 0.0, %v129
  %v131 = vpop.f32.mrb[0].mxu0
  %v132 = vpop.f32.mrb[0].mxu0
  %v133 = vadd.f32 0.0, %v132
  %v134 = vpop.f32.mrb[0].mxu0
  %135 = vmatprep.mubr.bf16.mxu0 0
  %136 = vmatmul.mubr.bf16.gmra.mrb[0].mxu0 %v44
  %v137 = vpop.f32.mrb[0].mxu0
  %v138 = vadd.f32 0.0, %v137
  %v139 = vpop.f32.mrb[0].mxu0
  %v140 = vpop.f32.mrb[0].mxu0
  %v141 = vadd.f32 0.0, %v140
  %v142 = vpop.f32.mrb[0].mxu0
  %143 = vdwg.mxu0
  %v144 = vld [vmem:[%s2] sm:$0x1]
  %v146 = vlaneseq
  %v147 = vshrl.u32 %v146, 7
  %v148 = vsub.s32 0, %v147
  %v149 = vrot.slane %v144, %v148
  %v151 = vmul.f32 %v130, %v149
  %v152 = vmul.f32 %v133, %v149
  %v153 = vmul.f32 %v138, %v149
  %v154 = vmul.f32 %v141, %v149
  %s155 = scalar_lea.vmem %s2, 1
  %v156 = vld [vmem:[%s155] sm:$0x1]
  %v158 = vlaneseq
  %v159 = vshrl.u32 %v158, 7
  %v160 = vsub.s32 0, %v159
  %v161 = vrot.slane %v156, %v160
  %v163 = vadd.f32 %v151, %v161
  %v164 = vadd.f32 %v152, %v161
  %v165 = vadd.f32 %v153, %v161
  %v166 = vadd.f32 %v154, %v161
  %v167 = vmax.f32 %v163, 0.0
  %v168 = vmax.f32 %v164, 0.0
  %v169 = vmax.f32 %v165, 0.0
  %v170 = vmax.f32 %v166, 0.0
  %171 = vst [vmem:[%s3] sm:$0xff] %v167
  %172 = vst [vmem:[%s3 + $0x8] sm:$0xff] %v168
  %173 = vst [vmem:[%s3 + $0x10] sm:$0xff] %v169
  %174 = vst [vmem:[%s3 + $0x18] sm:$0xff] %v170
  // Predicated region
  $region14: #{_lambda_.51} parent=0 // pred_check
    _
  $region15: #{_lambda_.51} parent=0 // pred_check_branch
    %176 = sbr.rel (0) target = $region17
  $region16: #{_lambda_.51} parent=0 // pred_region
    _
  $region17: #{_lambda_.51} parent=0 // pred_fallthru
    _
  // Predicated region
  $region18: #{_lambda_.51} parent=0 // pred_check
    _
  $region19: #{_lambda_.51} parent=0 // pred_check_branch
    %178 = sbr.rel (0) target = $region21
  $region20: #{_lambda_.51} parent=0 // pred_region
    _
  $region21: #{_lambda_.51} parent=0 // pred_fallthru
    _

// kernel: _lambda_.53
$region0: #{_lambda_.53}
  #allocation0 [shape = 'u32[]', space=smem, size = 0x4, offset = 0x4, fixed_abs, tag = 'smem constant byte address 0x4 - core index']
  #allocation1 [shape = 'u32[144,128]{1,0:T(1,128)}', space=vmem, size = 0x12000, scoped, tag = 'internal scratch']
  %s0 = inlined_call_operand.vmem [shape: bf16[32,256], index: 0, kind: input, shape index: {}]
  %s1 = inlined_call_operand.vmem [shape: bf16[256,128], index: 1, kind: input, shape index: {}]
  %s2 = inlined_call_operand.vmem [shape: f32[2,1,128], index: 2, kind: input, shape index: {}]
  %s3 = inlined_call_operand.vmem [shape: f32[32,128], index: 3, kind: input, shape index: {}]
  %s4 = inlined_call_operand.vmem [shape: f32[32,128], index: 4, kind: output, shape index: {}]
  %s5 = sld [smem:[#allocation0]]
  $region26: #{_lambda_.53} parent=0
    _
  %s7 = ssub.s32 1, %s5
  %s8 = scalar_select 0, %s7, %s5
  // Predicated region
  $region2: #{_lambda_.53} parent=0 // pred_check
    _
  $region3: #{_lambda_.53} parent=0 // pred_check_branch
    %10 = sbr.rel (0) target = $region5
  $region4: #{_lambda_.53} parent=0 // pred_region
    _
  $region5: #{_lambda_.53} parent=0 // pred_fallthru
    _
  // Predicated region
  $region6: #{_lambda_.53} parent=0 // pred_check
    _
  $region7: #{_lambda_.53} parent=0 // pred_check_branch
    %12 = sbr.rel (0) target = $region9
  $region8: #{_lambda_.53} parent=0 // pred_region
    _
  $region9: #{_lambda_.53} parent=0 // pred_fallthru
    _
  // Predicated region
  $region10: #{_lambda_.53} parent=0 // pred_check
    _
  $region11: #{_lambda_.53} parent=0 // pred_check_branch
    %14 = sbr.rel (0) target = $region13
  $region12: #{_lambda_.53} parent=0 // pred_region
    _
  $region13: #{_lambda_.53} parent=0 // pred_fallthru
    _
  // Predicated region
  $region14: #{_lambda_.53} parent=0 // pred_check
    _
  $region15: #{_lambda_.53} parent=0 // pred_check_branch
    %16 = sbr.rel (0) target = $region17
  $region16: #{_lambda_.53} parent=0 // pred_region
    _
  $region17: #{_lambda_.53} parent=0 // pred_fallthru
    _
  %v18 = vld [vmem:[%s0] sm:$0xff]
  %v19 = vld [vmem:[%s0 + $0x8] sm:$0xff]
  %v20 = vld [vmem:[%s0 + $0x10] sm:$0xff]
  %v21 = vld [vmem:[%s0 + $0x18] sm:$0xff]
  %v22 = vld [vmem:[%s1] sm:$0xf]
  %v23 = vld [vmem:[%s1 + $0x4] sm:$0xf]
  %v24 = vld [vmem:[%s1 + $0x8] sm:$0xf]
  %v25 = vld [vmem:[%s1 + $0xc] sm:$0xf]
  %v26 = vld [vmem:[%s1 + $0x10] sm:$0xf]
  %v27 = vld [vmem:[%s1 + $0x14] sm:$0xf]
  %v28 = vld [vmem:[%s1 + $0x18] sm:$0xf]
  %v29 = vld [vmem:[%s1 + $0x1c] sm:$0xf]
  %v30 = vld [vmem:[%s1 + $0x20] sm:$0xf]
  %v31 = vld [vmem:[%s1 + $0x24] sm:$0xf]
  %v32 = vld [vmem:[%s1 + $0x28] sm:$0xf]
  %v33 = vld [vmem:[%s1 + $0x2c] sm:$0xf]
  %v34 = vld [vmem:[%s1 + $0x30] sm:$0xf]
  %v35 = vld [vmem:[%s1 + $0x34] sm:$0xf]
  %v36 = vld [vmem:[%s1 + $0x38] sm:$0xf]
  %v37 = vld [vmem:[%s1 + $0x3c] sm:$0xf]
  %v38 = vld [vmem:[%s1 + $0x40] sm:$0xf]
  %v39 = vld [vmem:[%s1 + $0x44] sm:$0xf]
  %v40 = vld [vmem:[%s1 + $0x48] sm:$0xf]
  %v41 = vld [vmem:[%s1 + $0x4c] sm:$0xf]
  %v42 = vld [vmem:[%s1 + $0x50] sm:$0xf]
  %v43 = vld [vmem:[%s1 + $0x54] sm:$0xf]
  %v44 = vld [vmem:[%s1 + $0x58] sm:$0xf]
  %v45 = vld [vmem:[%s1 + $0x5c] sm:$0xf]
  %v46 = vld [vmem:[%s1 + $0x60] sm:$0xf]
  %v47 = vld [vmem:[%s1 + $0x64] sm:$0xf]
  %v48 = vld [vmem:[%s1 + $0x68] sm:$0xf]
  %v49 = vld [vmem:[%s1 + $0x6c] sm:$0xf]
  %v50 = vld [vmem:[%s1 + $0x70] sm:$0xf]
  %v51 = vld [vmem:[%s1 + $0x74] sm:$0xf]
  %v52 = vld [vmem:[%s1 + $0x78] sm:$0xf]
  %v53 = vld [vmem:[%s1 + $0x7c] sm:$0xf]
  %v58 = vunpack.c.l.b16 %v18
  %v59 = vunpack.c.h.b16 %v18
  %v60 = vunpack.c.l.b16 %v19
  %v61 = vunpack.c.h.b16 %v19
  %v62 = vunpack.c.l.b16 %v20
  %v63 = vunpack.c.h.b16 %v20
  %v64 = vunpack.c.l.b16 %v21
  %v65 = vunpack.c.h.b16 %v21
  %v66 = vpack.c.b16 %v60, %v58
  %v67 = vpack.c.b16 %v61, %v59
  %v68 = vpack.c.b16 %v64, %v62
  %v69 = vpack.c.b16 %v65, %v63
  %v106 = vunpack.c.l.b16 %v22
  %v107 = vunpack.c.l.b16 %v23
  %v108 = vunpack.c.l.b16 %v24
  %v109 = vunpack.c.l.b16 %v25
  %v110 = vunpack.c.l.b16 %v26
  %v111 = vunpack.c.l.b16 %v27
  %v112 = vunpack.c.l.b16 %v28
  %v113 = vunpack.c.l.b16 %v29
  %v114 = vunpack.c.l.b16 %v30
  %v115 = vunpack.c.l.b16 %v31
  %v116 = vunpack.c.l.b16 %v32
  %v117 = vunpack.c.l.b16 %v33
  %v118 = vunpack.c.l.b16 %v34
  %v119 = vunpack.c.l.b16 %v35
  %v120 = vunpack.c.l.b16 %v36
  %v121 = vunpack.c.l.b16 %v37
  %v122 = vunpack.c.l.b16 %v38
  %v123 = vunpack.c.l.b16 %v39
  %v124 = vunpack.c.l.b16 %v40
  %v125 = vunpack.c.l.b16 %v41
  %v126 = vunpack.c.l.b16 %v42
  %v127 = vunpack.c.l.b16 %v43
  %v128 = vunpack.c.l.b16 %v44
  %v129 = vunpack.c.l.b16 %v45
  %v130 = vunpack.c.l.b16 %v46
  %v131 = vunpack.c.l.b16 %v47
  %v132 = vunpack.c.l.b16 %v48
  %v133 = vunpack.c.l.b16 %v49
  %v134 = vunpack.c.l.b16 %v50
  %v135 = vunpack.c.l.b16 %v51
  %v136 = vunpack.c.l.b16 %v52
  %v137 = vunpack.c.l.b16 %v53
  %v138 = vpack.c.b16 %v107, %v106
  %v139 = vpack.c.b16 %v109, %v108
  %v140 = vpack.c.b16 %v111, %v110
  %v141 = vpack.c.b16 %v113, %v112
  %v142 = vpack.c.b16 %v115, %v114
  %v143 = vpack.c.b16 %v117, %v116
  %v144 = vpack.c.b16 %v119, %v118
  %v145 = vpack.c.b16 %v121, %v120
  %v146 = vpack.c.b16 %v123, %v122
  %v147 = vpack.c.b16 %v125, %v124
  %v148 = vpack.c.b16 %v127, %v126
  %v149 = vpack.c.b16 %v129, %v128
  %v150 = vpack.c.b16 %v131, %v130
  %v151 = vpack.c.b16 %v133, %v132
  %v152 = vpack.c.b16 %v135, %v134
  %v153 = vpack.c.b16 %v137, %v136
  %170 = vmatprep.subr.bf16.mxu0 0
  %171 = vmatpush1.bf16.msra.mxu0 %v138
  %172 = vmatprep.subr.bf16.mxu0 0
  %173 = vmatpush1.bf16.msra.mxu0 %v139
  %174 = vmatprep.subr.bf16.mxu0 0
  %175 = vmatpush1.bf16.msra.mxu0 %v140
  %176 = vmatprep.subr.bf16.mxu0 0
  %177 = vmatpush1.bf16.msra.mxu0 %v141
  %178 = vmatprep.subr.bf16.mxu0 0
  %179 = vmatpush1.bf16.msra.mxu0 %v142
  %180 = vmatprep.subr.bf16.mxu0 0
  %181 = vmatpush1.bf16.msra.mxu0 %v143
  %182 = vmatprep.subr.bf16.mxu0 0
  %183 = vmatpush1.bf16.msra.mxu0 %v144
  %184 = vmatprep.subr.bf16.mxu0 0
  %185 = vmatpush1.bf16.msra.mxu0 %v145
  %186 = vmatprep.subr.bf16.mxu0 0
  %187 = vmatpush1.bf16.msra.mxu0 %v146
  %188 = vmatprep.subr.bf16.mxu0 0
  %189 = vmatpush1.bf16.msra.mxu0 %v147
  %190 = vmatprep.subr.bf16.mxu0 0
  %191 = vmatpush1.bf16.msra.mxu0 %v148
  %192 = vmatprep.subr.bf16.mxu0 0
  %193 = vmatpush1.bf16.msra.mxu0 %v149
  %194 = vmatprep.subr.bf16.mxu0 0
  %195 = vmatpush1.bf16.msra.mxu0 %v150
  %196 = vmatprep.subr.bf16.mxu0 0
  %197 = vmatpush1.bf16.msra.mxu0 %v151
  %198 = vmatprep.subr.bf16.mxu0 0
  %199 = vmatpush1.bf16.msra.mxu0 %v152
  %200 = vmatprep.subr.bf16.mxu0 0
  %201 = vmatpush1.bf16.msra.mxu0 %v153
  %202 = vmatprep.mubr.bf16.mxu0 %v67
  %203 = vmatmul.mubr.bf16.gmra.mrb[0].mxu0 %v66
  %v204 = vpop.f32.mrb[0].mxu0
  %v205 = vadd.f32 0.0, %v204
  %v206 = vpop.f32.mrb[0].mxu0
  %v207 = vpop.f32.mrb[0].mxu0
  %v208 = vadd.f32 0.0, %v207
  %v209 = vpop.f32.mrb[0].mxu0
  %210 = vmatprep.mubr.bf16.mxu0 %v69
  %211 = vmatmul.mubr.bf16.gmra.mrb[0].mxu0 %v68
  %v212 = vpop.f32.mrb[0].mxu0
  %v213 = vadd.f32 0.0, %v212
  %v214 = vpop.f32.mrb[0].mxu0
  %v215 = vpop.f32.mrb[0].mxu0
  %v216 = vadd.f32 0.0, %v215
  %v217 = vpop.f32.mrb[0].mxu0
  %218 = vdwg.mxu0
  %v219 = vld [vmem:[%s2] sm:$0x1]
  %v221 = vlaneseq
  %v222 = vshrl.u32 %v221, 7
  %v223 = vsub.s32 0, %v222
  %v224 = vrot.slane %v219, %v223
  %v226 = vmul.f32 %v205, %v224
  %v227 = vmul.f32 %v208, %v224
  %v228 = vmul.f32 %v213, %v224
  %v229 = vmul.f32 %v216, %v224
  %s230 = scalar_lea.vmem %s2, 1
  %v231 = vld [vmem:[%s230] sm:$0x1]
  %v233 = vlaneseq
  %v234 = vshrl.u32 %v233, 7
  %v235 = vsub.s32 0, %v234
  %v236 = vrot.slane %v231, %v235
  %v238 = vadd.f32 %v226, %v236
  %v239 = vadd.f32 %v227, %v236
  %v240 = vadd.f32 %v228, %v236
  %v241 = vadd.f32 %v229, %v236
  %v242 = vld [vmem:[%s3] sm:$0xff]
  %v243 = vld [vmem:[%s3 + $0x8] sm:$0xff]
  %v244 = vld [vmem:[%s3 + $0x10] sm:$0xff]
  %v245 = vld [vmem:[%s3 + $0x18] sm:$0xff]
  %v246 = vadd.f32 %v238, %v242
  %v247 = vadd.f32 %v239, %v243
  %v248 = vadd.f32 %v240, %v244
  %v249 = vadd.f32 %v241, %v245
  %v250 = vmax.f32 %v246, 0.0
  %v251 = vmax.f32 %v247, 0.0
  %v252 = vmax.f32 %v248, 0.0
  %v253 = vmax.f32 %v249, 0.0
  %254 = vst [vmem:[%s4] sm:$0xff] %v250
  %255 = vst [vmem:[%s4 + $0x8] sm:$0xff] %v251
  %256 = vst [vmem:[%s4 + $0x10] sm:$0xff] %v252
  %257 = vst [vmem:[%s4 + $0x18] sm:$0xff] %v253
  // Predicated region
  $region18: #{_lambda_.53} parent=0 // pred_check
    _
  $region19: #{_lambda_.53} parent=0 // pred_check_branch
    %259 = sbr.rel (0) target = $region21
  $region20: #{_lambda_.53} parent=0 // pred_region
    _
  $region21: #{_lambda_.53} parent=0 // pred_fallthru
    _
  // Predicated region
  $region22: #{_lambda_.53} parent=0 // pred_check
    _
  $region23: #{_lambda_.53} parent=0 // pred_check_branch
    %261 = sbr.rel (0) target = $region25
  $region24: #{_lambda_.53} parent=0 // pred_region
    _
  $region25: #{_lambda_.53} parent=0 // pred_fallthru
    _

// kernel: _lambda_.52
$region0: #{_lambda_.52}
  #allocation0 [shape = 'u32[]', space=smem, size = 0x4, offset = 0x4, fixed_abs, tag = 'smem constant byte address 0x4 - core index']
  #allocation1 [shape = 'u32[144,128]{1,0:T(1,128)}', space=vmem, size = 0x12000, scoped, tag = 'internal scratch']
  %s0 = inlined_call_operand.vmem [shape: bf16[32,128], index: 0, kind: input, shape index: {}]
  %s1 = inlined_call_operand.vmem [shape: bf16[128,128], index: 1, kind: input, shape index: {}]
  %s2 = inlined_call_operand.vmem [shape: f32[2,1,128], index: 2, kind: input, shape index: {}]
  %s3 = inlined_call_operand.vmem [shape: f32[32,128], index: 3, kind: output, shape index: {}]
  %s4 = sld [smem:[#allocation0]]
  $region22: #{_lambda_.52} parent=0
    _
  %s6 = ssub.s32 1, %s4
  %s7 = scalar_select 0, %s6, %s4
  // Predicated region
  $region2: #{_lambda_.52} parent=0 // pred_check
    _
  $region3: #{_lambda_.52} parent=0 // pred_check_branch
    %9 = sbr.rel (0) target = $region5
  $region4: #{_lambda_.52} parent=0 // pred_region
    _
  $region5: #{_lambda_.52} parent=0 // pred_fallthru
    _
  // Predicated region
  $region6: #{_lambda_.52} parent=0 // pred_check
    _
  $region7: #{_lambda_.52} parent=0 // pred_check_branch
    %11 = sbr.rel (0) target = $region9
  $region8: #{_lambda_.52} parent=0 // pred_region
    _
  $region9: #{_lambda_.52} parent=0 // pred_fallthru
    _
  // Predicated region
  $region10: #{_lambda_.52} parent=0 // pred_check
    _
  $region11: #{_lambda_.52} parent=0 // pred_check_branch
    %13 = sbr.rel (0) target = $region13
  $region12: #{_lambda_.52} parent=0 // pred_region
    _
  $region13: #{_lambda_.52} parent=0 // pred_fallthru
    _
  %v15 = vld [vmem:[%s0] sm:$0xf]
  %v16 = vld [vmem:[%s0 + $0x4] sm:$0xf]
  %v17 = vld [vmem:[%s0 + $0x8] sm:$0xf]
  %v18 = vld [vmem:[%s0 + $0xc] sm:$0xf]
  %v19 = vld [vmem:[%s1] sm:$0xf]
  %v20 = vld [vmem:[%s1 + $0x4] sm:$0xf]
  %v21 = vld [vmem:[%s1 + $0x8] sm:$0xf]
  %v22 = vld [vmem:[%s1 + $0xc] sm:$0xf]
  %v23 = vld [vmem:[%s1 + $0x10] sm:$0xf]
  %v24 = vld [vmem:[%s1 + $0x14] sm:$0xf]
  %v25 = vld [vmem:[%s1 + $0x18] sm:$0xf]
  %v26 = vld [vmem:[%s1 + $0x1c] sm:$0xf]
  %v27 = vld [vmem:[%s1 + $0x20] sm:$0xf]
  %v28 = vld [vmem:[%s1 + $0x24] sm:$0xf]
  %v29 = vld [vmem:[%s1 + $0x28] sm:$0xf]
  %v30 = vld [vmem:[%s1 + $0x2c] sm:$0xf]
  %v31 = vld [vmem:[%s1 + $0x30] sm:$0xf]
  %v32 = vld [vmem:[%s1 + $0x34] sm:$0xf]
  %v33 = vld [vmem:[%s1 + $0x38] sm:$0xf]
  %v34 = vld [vmem:[%s1 + $0x3c] sm:$0xf]
  %v39 = vunpack.c.l.b16 %v15
  %v40 = vunpack.c.l.b16 %v16
  %v41 = vunpack.c.l.b16 %v17
  %v42 = vunpack.c.l.b16 %v18
  %v43 = vpack.c.b16 %v40, %v39
  %v44 = vpack.c.b16 %v42, %v41
  %v63 = vunpack.c.l.b16 %v19
  %v64 = vunpack.c.l.b16 %v20
  %v65 = vunpack.c.l.b16 %v21
  %v66 = vunpack.c.l.b16 %v22
  %v67 = vunpack.c.l.b16 %v23
  %v68 = vunpack.c.l.b16 %v24
  %v69 = vunpack.c.l.b16 %v25
  %v70 = vunpack.c.l.b16 %v26
  %v71 = vunpack.c.l.b16 %v27
  %v72 = vunpack.c.l.b16 %v28
  %v73 = vunpack.c.l.b16 %v29
  %v74 = vunpack.c.l.b16 %v30
  %v75 = vunpack.c.l.b16 %v31
  %v76 = vunpack.c.l.b16 %v32
  %v77 = vunpack.c.l.b16 %v33
  %v78 = vunpack.c.l.b16 %v34
  %v79 = vpack.c.b16 %v64, %v63
  %v80 = vpack.c.b16 %v66, %v65
  %v81 = vpack.c.b16 %v68, %v67
  %v82 = vpack.c.b16 %v70, %v69
  %v83 = vpack.c.b16 %v72, %v71
  %v84 = vpack.c.b16 %v74, %v73
  %v85 = vpack.c.b16 %v76, %v75
  %v86 = vpack.c.b16 %v78, %v77
  %95 = vmatprep.subr.bf16.mxu0 0
  %96 = vmatpush1.bf16.msra.mxu0 %v79
  %97 = vmatprep.subr.bf16.mxu0 0
  %98 = vmatpush1.bf16.msra.mxu0 %v80
  %99 = vmatprep.subr.bf16.mxu0 0
  %100 = vmatpush1.bf16.msra.mxu0 %v81
  %101 = vmatprep.subr.bf16.mxu0 0
  %102 = vmatpush1.bf16.msra.mxu0 %v82
  %103 = vmatprep.subr.bf16.mxu0 0
  %104 = vmatpush1.bf16.msra.mxu0 %v83
  %105 = vmatprep.subr.bf16.mxu0 0
  %106 = vmatpush1.bf16.msra.mxu0 %v84
  %107 = vmatprep.subr.bf16.mxu0 0
  %108 = vmatpush1.bf16.msra.mxu0 %v85
  %109 = vmatprep.subr.bf16.mxu0 0
  %110 = vmatpush1.bf16.msra.mxu0 %v86
  %111 = vmatprep.subr.bf16.mxu0 0
  %112 = vmatpush1.bf16.msra.mxu0 0
  %113 = vmatprep.subr.bf16.mxu0 0
  %114 = vmatpush1.bf16.msra.mxu0 0
  %115 = vmatprep.subr.bf16.mxu0 0
  %116 = vmatpush1.bf16.msra.mxu0 0
  %117 = vmatprep.subr.bf16.mxu0 0
  %118 = vmatpush1.bf16.msra.mxu0 0
  %119 = vmatprep.subr.bf16.mxu0 0
  %120 = vmatpush1.bf16.msra.mxu0 0
  %121 = vmatprep.subr.bf16.mxu0 0
  %122 = vmatpush1.bf16.msra.mxu0 0
  %123 = vmatprep.subr.bf16.mxu0 0
  %124 = vmatpush1.bf16.msra.mxu0 0
  %125 = vmatprep.subr.bf16.mxu0 0
  %126 = vmatpush1.bf16.msra.mxu0 0
  %127 = vmatprep.mubr.bf16.mxu0 0
  %128 = vmatmul.mubr.bf16.gmra.mrb[0].mxu0 %v43
  %v129 = vpop.f32.mrb[0].mxu0
  %v130 = vadd.f32 0.0, %v129
  %v131 = vpop.f32.mrb[0].mxu0
  %v132 = vpop.f32.mrb[0].mxu0
  %v133 = vadd.f32 0.0, %v132
  %v134 = vpop.f32.mrb[0].mxu0
  %135 = vmatprep.mubr.bf16.mxu0 0
  %136 = vmatmul.mubr.bf16.gmra.mrb[0].mxu0 %v44
  %v137 = vpop.f32.mrb[0].mxu0
  %v138 = vadd.f32 0.0, %v137
  %v139 = vpop.f32.mrb[0].mxu0
  %v140 = vpop.f32.mrb[0].mxu0
  %v141 = vadd.f32 0.0, %v140
  %v142 = vpop.f32.mrb[0].mxu0
  %143 = vdwg.mxu0
  %v144 = vld [vmem:[%s2] sm:$0x1]
  %v146 = vlaneseq
  %v147 = vshrl.u32 %v146, 7
  %v148 = vsub.s32 0, %v147
  %v149 = vrot.slane %v144, %v148
  %v151 = vmul.f32 %v130, %v149
  %v152 = vmul.f32 %v133, %v149
  %v153 = vmul.f32 %v138, %v149
  %v154 = vmul.f32 %v141, %v149
  %s155 = scalar_lea.vmem %s2, 1
  %v156 = vld [vmem:[%s155] sm:$0x1]
  %v158 = vlaneseq
  %v159 = vshrl.u32 %v158, 7
  %v160 = vsub.s32 0, %v159
  %v161 = vrot.slane %v156, %v160
  %v163 = vadd.f32 %v151, %v161
  %v164 = vadd.f32 %v152, %v161
  %v165 = vadd.f32 %v153, %v161
  %v166 = vadd.f32 %v154, %v161
  %167 = vst [vmem:[%s3] sm:$0xff] %v163
  %168 = vst [vmem:[%s3 + $0x8] sm:$0xff] %v164
  %169 = vst [vmem:[%s3 + $0x10] sm:$0xff] %v165
  %170 = vst [vmem:[%s3 + $0x18] sm:$0xff] %v166
  // Predicated region
  $region14: #{_lambda_.52} parent=0 // pred_check
    _
  $region15: #{_lambda_.52} parent=0 // pred_check_branch
    %172 = sbr.rel (0) target = $region17
  $region16: #{_lambda_.52} parent=0 // pred_region
    _
  $region17: #{_lambda_.52} parent=0 // pred_fallthru
    _
  // Predicated region
  $region18: #{_lambda_.52} parent=0 // pred_check
    _
  $region19: #{_lambda_.52} parent=0 // pred_check_branch
    %174 = sbr.rel (0) target = $region21
  $region20: #{_lambda_.52} parent=0 // pred_region
    _
  $region21: #{_lambda_.52} parent=0 // pred_fallthru
    _

// kernel: _lambda_.54
$region0: #{_lambda_.54}
  #allocation0 [shape = 'u32[]', space=smem, size = 0x4, offset = 0x4, fixed_abs, tag = 'smem constant byte address 0x4 - core index']
  #allocation1 [shape = 'u32[144,128]{1,0:T(1,128)}', space=vmem, size = 0x12000, scoped, tag = 'internal scratch']
  %s0 = inlined_call_operand.vmem [shape: bf16[32,256], index: 0, kind: input, shape index: {}]
  %s1 = inlined_call_operand.vmem [shape: bf16[256,128], index: 1, kind: input, shape index: {}]
  %s2 = inlined_call_operand.vmem [shape: f32[2,1,128], index: 2, kind: input, shape index: {}]
  %s3 = inlined_call_operand.vmem [shape: f32[32,128], index: 3, kind: output, shape index: {}]
  %s4 = sld [smem:[#allocation0]]
  $region22: #{_lambda_.54} parent=0
    _
  %s6 = ssub.s32 1, %s4
  %s7 = scalar_select 0, %s6, %s4
  // Predicated region
  $region2: #{_lambda_.54} parent=0 // pred_check
    _
  $region3: #{_lambda_.54} parent=0 // pred_check_branch
    %9 = sbr.rel (0) target = $region5
  $region4: #{_lambda_.54} parent=0 // pred_region
    _
  $region5: #{_lambda_.54} parent=0 // pred_fallthru
    _
  // Predicated region
  $region6: #{_lambda_.54} parent=0 // pred_check
    _
  $region7: #{_lambda_.54} parent=0 // pred_check_branch
    %11 = sbr.rel (0) target = $region9
  $region8: #{_lambda_.54} parent=0 // pred_region
    _
  $region9: #{_lambda_.54} parent=0 // pred_fallthru
    _
  // Predicated region
  $region10: #{_lambda_.54} parent=0 // pred_check
    _
  $region11: #{_lambda_.54} parent=0 // pred_check_branch
    %13 = sbr.rel (0) target = $region13
  $region12: #{_lambda_.54} parent=0 // pred_region
    _
  $region13: #{_lambda_.54} parent=0 // pred_fallthru
    _
  %v15 = vld [vmem:[%s0] sm:$0xff]
  %v16 = vld [vmem:[%s0 + $0x8] sm:$0xff]
  %v17 = vld [vmem:[%s0 + $0x10] sm:$0xff]
  %v18 = vld [vmem:[%s0 + $0x18] sm:$0xff]
  %v19 = vld [vmem:[%s1] sm:$0xf]
  %v20 = vld [vmem:[%s1 + $0x4] sm:$0xf]
  %v21 = vld [vmem:[%s1 + $0x8] sm:$0xf]
  %v22 = vld [vmem:[%s1 + $0xc] sm:$0xf]
  %v23 = vld [vmem:[%s1 + $0x10] sm:$0xf]
  %v24 = vld [vmem:[%s1 + $0x14] sm:$0xf]
  %v25 = vld [vmem:[%s1 + $0x18] sm:$0xf]
  %v26 = vld [vmem:[%s1 + $0x1c] sm:$0xf]
  %v27 = vld [vmem:[%s1 + $0x20] sm:$0xf]
  %v28 = vld [vmem:[%s1 + $0x24] sm:$0xf]
  %v29 = vld [vmem:[%s1 + $0x28] sm:$0xf]
  %v30 = vld [vmem:[%s1 + $0x2c] sm:$0xf]
  %v31 = vld [vmem:[%s1 + $0x30] sm:$0xf]
  %v32 = vld [vmem:[%s1 + $0x34] sm:$0xf]
  %v33 = vld [vmem:[%s1 + $0x38] sm:$0xf]
  %v34 = vld [vmem:[%s1 + $0x3c] sm:$0xf]
  %v35 = vld [vmem:[%s1 + $0x40] sm:$0xf]
  %v36 = vld [vmem:[%s1 + $0x44] sm:$0xf]
  %v37 = vld [vmem:[%s1 + $0x48] sm:$0xf]
  %v38 = vld [vmem:[%s1 + $0x4c] sm:$0xf]
  %v39 = vld [vmem:[%s1 + $0x50] sm:$0xf]
  %v40 = vld [vmem:[%s1 + $0x54] sm:$0xf]
  %v41 = vld [vmem:[%s1 + $0x58] sm:$0xf]
  %v42 = vld [vmem:[%s1 + $0x5c] sm:$0xf]
  %v43 = vld [vmem:[%s1 + $0x60] sm:$0xf]
  %v44 = vld [vmem:[%s1 + $0x64] sm:$0xf]
  %v45 = vld [vmem:[%s1 + $0x68] sm:$0xf]
  %v46 = vld [vmem:[%s1 + $0x6c] sm:$0xf]
  %v47 = vld [vmem:[%s1 + $0x70] sm:$0xf]
  %v48 = vld [vmem:[%s1 + $0x74] sm:$0xf]
  %v49 = vld [vmem:[%s1 + $0x78] sm:$0xf]
  %v50 = vld [vmem:[%s1 + $0x7c] sm:$0xf]
  %v55 = vunpack.c.l.b16 %v15
  %v56 = vunpack.c.h.b16 %v15
  %v57 = vunpack.c.l.b16 %v16
  %v58 = vunpack.c.h.b16 %v16
  %v59 = vunpack.c.l.b16 %v17
  %v60 = vunpack.c.h.b16 %v17
  %v61 = vunpack.c.l.b16 %v18
  %v62 = vunpack.c.h.b16 %v18
  %v63 = vpack.c.b16 %v57, %v55
  %v64 = vpack.c.b16 %v58, %v56
  %v65 = vpack.c.b16 %v61, %v59
  %v66 = vpack.c.b16 %v62, %v60
  %v103 = vunpack.c.l.b16 %v19
  %v104 = vunpack.c.l.b16 %v20
  %v105 = vunpack.c.l.b16 %v21
  %v106 = vunpack.c.l.b16 %v22
  %v107 = vunpack.c.l.b16 %v23
  %v108 = vunpack.c.l.b16 %v24
  %v109 = vunpack.c.l.b16 %v25
  %v110 = vunpack.c.l.b16 %v26
  %v111 = vunpack.c.l.b16 %v27
  %v112 = vunpack.c.l.b16 %v28
  %v113 = vunpack.c.l.b16 %v29
  %v114 = vunpack.c.l.b16 %v30
  %v115 = vunpack.c.l.b16 %v31
  %v116 = vunpack.c.l.b16 %v32
  %v117 = vunpack.c.l.b16 %v33
  %v118 = vunpack.c.l.b16 %v34
  %v119 = vunpack.c.l.b16 %v35
  %v120 = vunpack.c.l.b16 %v36
  %v121 = vunpack.c.l.b16 %v37
  %v122 = vunpack.c.l.b16 %v38
  %v123 = vunpack.c.l.b16 %v39
  %v124 = vunpack.c.l.b16 %v40
  %v125 = vunpack.c.l.b16 %v41
  %v126 = vunpack.c.l.b16 %v42
  %v127 = vunpack.c.l.b16 %v43
  %v128 = vunpack.c.l.b16 %v44
  %v129 = vunpack.c.l.b16 %v45
  %v130 = vunpack.c.l.b16 %v46
  %v131 = vunpack.c.l.b16 %v47
  %v132 = vunpack.c.l.b16 %v48
  %v133 = vunpack.c.l.b16 %v49
  %v134 = vunpack.c.l.b16 %v50
  %v135 = vpack.c.b16 %v104, %v103
  %v136 = vpack.c.b16 %v106, %v105
  %v137 = vpack.c.b16 %v108, %v107
  %v138 = vpack.c.b16 %v110, %v109
  %v139 = vpack.c.b16 %v112, %v111
  %v140 = vpack.c.b16 %v114, %v113
  %v141 = vpack.c.b16 %v116, %v115
  %v142 = vpack.c.b16 %v118, %v117
  %v143 = vpack.c.b16 %v120, %v119
  %v144 = vpack.c.b16 %v122, %v121
  %v145 = vpack.c.b16 %v124, %v123
  %v146 = vpack.c.b16 %v126, %v125
  %v147 = vpack.c.b16 %v128, %v127
  %v148 = vpack.c.b16 %v130, %v129
  %v149 = vpack.c.b16 %v132, %v131
  %v150 = vpack.c.b16 %v134, %v133
  %167 = vmatprep.subr.bf16.mxu0 0
  %168 = vmatpush1.bf16.msra.mxu0 %v135
  %169 = vmatprep.subr.bf16.mxu0 0
  %170 = vmatpush1.bf16.msra.mxu0 %v136
  %171 = vmatprep.subr.bf16.mxu0 0
  %172 = vmatpush1.bf16.msra.mxu0 %v137
  %173 = vmatprep.subr.bf16.mxu0 0
  %174 = vmatpush1.bf16.msra.mxu0 %v138
  %175 = vmatprep.subr.bf16.mxu0 0
  %176 = vmatpush1.bf16.msra.mxu0 %v139
  %177 = vmatprep.subr.bf16.mxu0 0
  %178 = vmatpush1.bf16.msra.mxu0 %v140
  %179 = vmatprep.subr.bf16.mxu0 0
  %180 = vmatpush1.bf16.msra.mxu0 %v141
  %181 = vmatprep.subr.bf16.mxu0 0
  %182 = vmatpush1.bf16.msra.mxu0 %v142
  %183 = vmatprep.subr.bf16.mxu0 0
  %184 = vmatpush1.bf16.msra.mxu0 %v143
  %185 = vmatprep.subr.bf16.mxu0 0
  %186 = vmatpush1.bf16.msra.mxu0 %v144
  %187 = vmatprep.subr.bf16.mxu0 0
  %188 = vmatpush1.bf16.msra.mxu0 %v145
  %189 = vmatprep.subr.bf16.mxu0 0
  %190 = vmatpush1.bf16.msra.mxu0 %v146
  %191 = vmatprep.subr.bf16.mxu0 0
  %192 = vmatpush1.bf16.msra.mxu0 %v147
  %193 = vmatprep.subr.bf16.mxu0 0
  %194 = vmatpush1.bf16.msra.mxu0 %v148
  %195 = vmatprep.subr.bf16.mxu0 0
  %196 = vmatpush1.bf16.msra.mxu0 %v149
  %197 = vmatprep.subr.bf16.mxu0 0
  %198 = vmatpush1.bf16.msra.mxu0 %v150
  %199 = vmatprep.mubr.bf16.mxu0 %v64
  %200 = vmatmul.mubr.bf16.gmra.mrb[0].mxu0 %v63
  %v201 = vpop.f32.mrb[0].mxu0
  %v202 = vadd.f32 0.0, %v201
  %v203 = vpop.f32.mrb[0].mxu0
  %v204 = vpop.f32.mrb[0].mxu0
  %v205 = vadd.f32 0.0, %v204
  %v206 = vpop.f32.mrb[0].mxu0
  %207 = vmatprep.mubr.bf16.mxu0 %v66
  %208 = vmatmul.mubr.bf16.gmra.mrb[0].mxu0 %v65
  %v209 = vpop.f32.mrb[0].mxu0
  %v210 = vadd.f32 0.0, %v209
  %v211 = vpop.f32.mrb[0].mxu0
  %v212 = vpop.f32.mrb[0].mxu0
  %v213 = vadd.f32 0.0, %v212
  %v214 = vpop.f32.mrb[0].mxu0
  %215 = vdwg.mxu0
  %v216 = vld [vmem:[%s2] sm:$0x1]
  %v218 = vlaneseq
  %v219 = vshrl.u32 %v218, 7
  %v220 = vsub.s32 0, %v219
  %v221 = vrot.slane %v216, %v220
  %v223 = vmul.f32 %v202, %v221
  %v224 = vmul.f32 %v205, %v221
  %v225 = vmul.f32 %v210, %v221
  %v226 = vmul.f32 %v213, %v221
  %s227 = scalar_lea.vmem %s2, 1
  %v228 = vld [vmem:[%s227] sm:$0x1]
  %v230 = vlaneseq
  %v231 = vshrl.u32 %v230, 7
  %v232 = vsub.s32 0, %v231
  %v233 = vrot.slane %v228, %v232
  %v235 = vadd.f32 %v223, %v233
  %v236 = vadd.f32 %v224, %v233
  %v237 = vadd.f32 %v225, %v233
  %v238 = vadd.f32 %v226, %v233
  %v239 = vmax.f32 %v235, 0.0
  %v240 = vmax.f32 %v236, 0.0
  %v241 = vmax.f32 %v237, 0.0
  %v242 = vmax.f32 %v238, 0.0
  %243 = vst [vmem:[%s3] sm:$0xff] %v239
  %244 = vst [vmem:[%s3 + $0x8] sm:$0xff] %v240
  %245 = vst [vmem:[%s3 + $0x10] sm:$0xff] %v241
  %246 = vst [vmem:[%s3 + $0x18] sm:$0xff] %v242
  // Predicated region
  $region14: #{_lambda_.54} parent=0 // pred_check
    _
  $region15: #{_lambda_.54} parent=0 // pred_check_branch
    %248 = sbr.rel (0) target = $region17
  $region16: #{_lambda_.54} parent=0 // pred_region
    _
  $region17: #{_lambda_.54} parent=0 // pred_fallthru
    _
  // Predicated region
  $region18: #{_lambda_.54} parent=0 // pred_check
    _
  $region19: #{_lambda_.54} parent=0 // pred_check_branch
    %250 = sbr.rel (0) target = $region21
  $region20: #{_lambda_.54} parent=0 // pred_region
    _
  $region21: #{_lambda_.54} parent=0 // pred_fallthru
    _

// kernel: _lambda_.56
$region0: #{_lambda_.56}
  #allocation0 [shape = 'u32[]', space=smem, size = 0x4, offset = 0x4, fixed_abs, tag = 'smem constant byte address 0x4 - core index']
  #allocation1 [shape = 'u32[144,128]{1,0:T(1,128)}', space=vmem, size = 0x12000, scoped, tag = 'internal scratch']
  %s0 = inlined_call_operand.vmem [shape: bf16[16,256], index: 0, kind: input, shape index: {}]
  %s1 = inlined_call_operand.vmem [shape: bf16[256,128], index: 1, kind: input, shape index: {}]
  %s2 = inlined_call_operand.vmem [shape: f32[2,1,128], index: 2, kind: input, shape index: {}]
  %s3 = inlined_call_operand.vmem [shape: f32[16,128], index: 3, kind: output, shape index: {}]
  %s4 = sld [smem:[#allocation0]]
  $region22: #{_lambda_.56} parent=0
    _
  %s6 = ssub.s32 1, %s4
  %s7 = scalar_select 0, %s6, %s4
  // Predicated region
  $region2: #{_lambda_.56} parent=0 // pred_check
    _
  $region3: #{_lambda_.56} parent=0 // pred_check_branch
    %9 = sbr.rel (0) target = $region5
  $region4: #{_lambda_.56} parent=0 // pred_region
    _
  $region5: #{_lambda_.56} parent=0 // pred_fallthru
    _
  // Predicated region
  $region6: #{_lambda_.56} parent=0 // pred_check
    _
  $region7: #{_lambda_.56} parent=0 // pred_check_branch
    %11 = sbr.rel (0) target = $region9
  $region8: #{_lambda_.56} parent=0 // pred_region
    _
  $region9: #{_lambda_.56} parent=0 // pred_fallthru
    _
  // Predicated region
  $region10: #{_lambda_.56} parent=0 // pred_check
    _
  $region11: #{_lambda_.56} parent=0 // pred_check_branch
    %13 = sbr.rel (0) target = $region13
  $region12: #{_lambda_.56} parent=0 // pred_region
    _
  $region13: #{_lambda_.56} parent=0 // pred_fallthru
    _
  %v15 = vld [vmem:[%s0] sm:$0xff]
  %v16 = vld [vmem:[%s0 + $0x8] sm:$0xff]
  %v17 = vld [vmem:[%s1] sm:$0xf]
  %v18 = vld [vmem:[%s1 + $0x4] sm:$0xf]
  %v19 = vld [vmem:[%s1 + $0x8] sm:$0xf]
  %v20 = vld [vmem:[%s1 + $0xc] sm:$0xf]
  %v21 = vld [vmem:[%s1 + $0x10] sm:$0xf]
  %v22 = vld [vmem:[%s1 + $0x14] sm:$0xf]
  %v23 = vld [vmem:[%s1 + $0x18] sm:$0xf]
  %v24 = vld [vmem:[%s1 + $0x1c] sm:$0xf]
  %v25 = vld [vmem:[%s1 + $0x20] sm:$0xf]
  %v26 = vld [vmem:[%s1 + $0x24] sm:$0xf]
  %v27 = vld [vmem:[%s1 + $0x28] sm:$0xf]
  %v28 = vld [vmem:[%s1 + $0x2c] sm:$0xf]
  %v29 = vld [vmem:[%s1 + $0x30] sm:$0xf]
  %v30 = vld [vmem:[%s1 + $0x34] sm:$0xf]
  %v31 = vld [vmem:[%s1 + $0x38] sm:$0xf]
  %v32 = vld [vmem:[%s1 + $0x3c] sm:$0xf]
  %v33 = vld [vmem:[%s1 + $0x40] sm:$0xf]
  %v34 = vld [vmem:[%s1 + $0x44] sm:$0xf]
  %v35 = vld [vmem:[%s1 + $0x48] sm:$0xf]
  %v36 = vld [vmem:[%s1 + $0x4c] sm:$0xf]
  %v37 = vld [vmem:[%s1 + $0x50] sm:$0xf]
  %v38 = vld [vmem:[%s1 + $0x54] sm:$0xf]
  %v39 = vld [vmem:[%s1 + $0x58] sm:$0xf]
  %v40 = vld [vmem:[%s1 + $0x5c] sm:$0xf]
  %v41 = vld [vmem:[%s1 + $0x60] sm:$0xf]
  %v42 = vld [vmem:[%s1 + $0x64] sm:$0xf]
  %v43 = vld [vmem:[%s1 + $0x68] sm:$0xf]
  %v44 = vld [vmem:[%s1 + $0x6c] sm:$0xf]
  %v45 = vld [vmem:[%s1 + $0x70] sm:$0xf]
  %v46 = vld [vmem:[%s1 + $0x74] sm:$0xf]
  %v47 = vld [vmem:[%s1 + $0x78] sm:$0xf]
  %v48 = vld [vmem:[%s1 + $0x7c] sm:$0xf]
  %v51 = vunpack.c.l.b16 %v15
  %v52 = vunpack.c.h.b16 %v15
  %v53 = vunpack.c.l.b16 %v16
  %v54 = vunpack.c.h.b16 %v16
  %v55 = vpack.c.b16 %v53, %v51
  %v56 = vpack.c.b16 %v54, %v52
  %v91 = vunpack.c.l.b16 %v17
  %v92 = vunpack.c.l.b16 %v18
  %v93 = vunpack.c.l.b16 %v19
  %v94 = vunpack.c.l.b16 %v20
  %v95 = vunpack.c.l.b16 %v21
  %v96 = vunpack.c.l.b16 %v22
  %v97 = vunpack.c.l.b16 %v23
  %v98 = vunpack.c.l.b16 %v24
  %v99 = vunpack.c.l.b16 %v25
  %v100 = vunpack.c.l.b16 %v26
  %v101 = vunpack.c.l.b16 %v27
  %v102 = vunpack.c.l.b16 %v28
  %v103 = vunpack.c.l.b16 %v29
  %v104 = vunpack.c.l.b16 %v30
  %v105 = vunpack.c.l.b16 %v31
  %v106 = vunpack.c.l.b16 %v32
  %v107 = vunpack.c.l.b16 %v33
  %v108 = vunpack.c.l.b16 %v34
  %v109 = vunpack.c.l.b16 %v35
  %v110 = vunpack.c.l.b16 %v36
  %v111 = vunpack.c.l.b16 %v37
  %v112 = vunpack.c.l.b16 %v38
  %v113 = vunpack.c.l.b16 %v39
  %v114 = vunpack.c.l.b16 %v40
  %v115 = vunpack.c.l.b16 %v41
  %v116 = vunpack.c.l.b16 %v42
  %v117 = vunpack.c.l.b16 %v43
  %v118 = vunpack.c.l.b16 %v44
  %v119 = vunpack.c.l.b16 %v45
  %v120 = vunpack.c.l.b16 %v46
  %v121 = vunpack.c.l.b16 %v47
  %v122 = vunpack.c.l.b16 %v48
  %v123 = vpack.c.b16 %v92, %v91
  %v124 = vpack.c.b16 %v94, %v93
  %v125 = vpack.c.b16 %v96, %v95
  %v126 = vpack.c.b16 %v98, %v97
  %v127 = vpack.c.b16 %v100, %v99
  %v128 = vpack.c.b16 %v102, %v101
  %v129 = vpack.c.b16 %v104, %v103
  %v130 = vpack.c.b16 %v106, %v105
  %v131 = vpack.c.b16 %v108, %v107
  %v132 = vpack.c.b16 %v110, %v109
  %v133 = vpack.c.b16 %v112, %v111
  %v134 = vpack.c.b16 %v114, %v113
  %v135 = vpack.c.b16 %v116, %v115
  %v136 = vpack.c.b16 %v118, %v117
  %v137 = vpack.c.b16 %v120, %v119
  %v138 = vpack.c.b16 %v122, %v121
  %155 = vmatprep.subr.bf16.mxu0 0
  %156 = vmatpush1.bf16.msra.mxu0 %v123
  %157 = vmatprep.subr.bf16.mxu0 0
  %158 = vmatpush1.bf16.msra.mxu0 %v124
  %159 = vmatprep.subr.bf16.mxu0 0
  %160 = vmatpush1.bf16.msra.mxu0 %v125
  %161 = vmatprep.subr.bf16.mxu0 0
  %162 = vmatpush1.bf16.msra.mxu0 %v126
  %163 = vmatprep.subr.bf16.mxu0 0
  %164 = vmatpush1.bf16.msra.mxu0 %v127
  %165 = vmatprep.subr.bf16.mxu0 0
  %166 = vmatpush1.bf16.msra.mxu0 %v128
  %167 = vmatprep.subr.bf16.mxu0 0
  %168 = vmatpush1.bf16.msra.mxu0 %v129
  %169 = vmatprep.subr.bf16.mxu0 0
  %170 = vmatpush1.bf16.msra.mxu0 %v130
  %171 = vmatprep.subr.bf16.mxu0 0
  %172 = vmatpush1.bf16.msra.mxu0 %v131
  %173 = vmatprep.subr.bf16.mxu0 0
  %174 = vmatpush1.bf16.msra.mxu0 %v132
  %175 = vmatprep.subr.bf16.mxu0 0
  %176 = vmatpush1.bf16.msra.mxu0 %v133
  %177 = vmatprep.subr.bf16.mxu0 0
  %178 = vmatpush1.bf16.msra.mxu0 %v134
  %179 = vmatprep.subr.bf16.mxu0 0
  %180 = vmatpush1.bf16.msra.mxu0 %v135
  %181 = vmatprep.subr.bf16.mxu0 0
  %182 = vmatpush1.bf16.msra.mxu0 %v136
  %183 = vmatprep.subr.bf16.mxu0 0
  %184 = vmatpush1.bf16.msra.mxu0 %v137
  %185 = vmatprep.subr.bf16.mxu0 0
  %186 = vmatpush1.bf16.msra.mxu0 %v138
  %187 = vmatprep.mubr.bf16.mxu0 %v56
  %188 = vmatmul.mubr.bf16.gmra.mrb[0].mxu0 %v55
  %v189 = vpop.f32.mrb[0].mxu0
  %v190 = vadd.f32 0.0, %v189
  %v191 = vpop.f32.mrb[0].mxu0
  %v192 = vpop.f32.mrb[0].mxu0
  %v193 = vadd.f32 0.0, %v192
  %v194 = vpop.f32.mrb[0].mxu0
  %195 = vdwg.mxu0
  %v196 = vld [vmem:[%s2] sm:$0x1]
  %v198 = vlaneseq
  %v199 = vshrl.u32 %v198, 7
  %v200 = vsub.s32 0, %v199
  %v201 = vrot.slane %v196, %v200
  %v203 = vmul.f32 %v190, %v201
  %v204 = vmul.f32 %v193, %v201
  %s205 = scalar_lea.vmem %s2, 1
  %v206 = vld [vmem:[%s205] sm:$0x1]
  %v208 = vlaneseq
  %v209 = vshrl.u32 %v208, 7
  %v210 = vsub.s32 0, %v209
  %v211 = vrot.slane %v206, %v210
  %v213 = vadd.f32 %v203, %v211
  %v214 = vadd.f32 %v204, %v211
  %v215 = vmax.f32 %v213, 0.0
  %v216 = vmax.f32 %v214, 0.0
  %217 = vst [vmem:[%s3] sm:$0xff] %v215
  %218 = vst [vmem:[%s3 + $0x8] sm:$0xff] %v216
  // Predicated region
  $region14: #{_lambda_.56} parent=0 // pred_check
    _
  $region15: #{_lambda_.56} parent=0 // pred_check_branch
    %220 = sbr.rel (0) target = $region17
  $region16: #{_lambda_.56} parent=0 // pred_region
    _
  $region17: #{_lambda_.56} parent=0 // pred_fallthru
    _
  // Predicated region
  $region18: #{_lambda_.56} parent=0 // pred_check
    _
  $region19: #{_lambda_.56} parent=0 // pred_check_branch
    %222 = sbr.rel (0) target = $region21
  $region20: #{_lambda_.56} parent=0 // pred_region
    _
  $region21: #{_lambda_.56} parent=0 // pred_fallthru
    _

// kernel: _lambda_.57
$region0: #{_lambda_.57}
  #allocation0 [shape = 'u32[]', space=smem, size = 0x4, offset = 0x4, fixed_abs, tag = 'smem constant byte address 0x4 - core index']
  #allocation1 [shape = 'u32[144,128]{1,0:T(1,128)}', space=vmem, size = 0x12000, scoped, tag = 'internal scratch']
  %s0 = inlined_call_operand.vmem [shape: bf16[16,128], index: 0, kind: input, shape index: {}]
  %s1 = inlined_call_operand.vmem [shape: bf16[128,128], index: 1, kind: input, shape index: {}]
  %s2 = inlined_call_operand.vmem [shape: f32[2,1,128], index: 2, kind: input, shape index: {}]
  %s3 = inlined_call_operand.vmem [shape: f32[16,128], index: 3, kind: output, shape index: {}]
  %s4 = sld [smem:[#allocation0]]
  $region22: #{_lambda_.57} parent=0
    _
  %s6 = ssub.s32 1, %s4
  %s7 = scalar_select 0, %s6, %s4
  // Predicated region
  $region2: #{_lambda_.57} parent=0 // pred_check
    _
  $region3: #{_lambda_.57} parent=0 // pred_check_branch
    %9 = sbr.rel (0) target = $region5
  $region4: #{_lambda_.57} parent=0 // pred_region
    _
  $region5: #{_lambda_.57} parent=0 // pred_fallthru
    _
  // Predicated region
  $region6: #{_lambda_.57} parent=0 // pred_check
    _
  $region7: #{_lambda_.57} parent=0 // pred_check_branch
    %11 = sbr.rel (0) target = $region9
  $region8: #{_lambda_.57} parent=0 // pred_region
    _
  $region9: #{_lambda_.57} parent=0 // pred_fallthru
    _
  // Predicated region
  $region10: #{_lambda_.57} parent=0 // pred_check
    _
  $region11: #{_lambda_.57} parent=0 // pred_check_branch
    %13 = sbr.rel (0) target = $region13
  $region12: #{_lambda_.57} parent=0 // pred_region
    _
  $region13: #{_lambda_.57} parent=0 // pred_fallthru
    _
  %v15 = vld [vmem:[%s0] sm:$0xf]
  %v16 = vld [vmem:[%s0 + $0x4] sm:$0xf]
  %v17 = vld [vmem:[%s1] sm:$0xf]
  %v18 = vld [vmem:[%s1 + $0x4] sm:$0xf]
  %v19 = vld [vmem:[%s1 + $0x8] sm:$0xf]
  %v20 = vld [vmem:[%s1 + $0xc] sm:$0xf]
  %v21 = vld [vmem:[%s1 + $0x10] sm:$0xf]
  %v22 = vld [vmem:[%s1 + $0x14] sm:$0xf]
  %v23 = vld [vmem:[%s1 + $0x18] sm:$0xf]
  %v24 = vld [vmem:[%s1 + $0x1c] sm:$0xf]
  %v25 = vld [vmem:[%s1 + $0x20] sm:$0xf]
  %v26 = vld [vmem:[%s1 + $0x24] sm:$0xf]
  %v27 = vld [vmem:[%s1 + $0x28] sm:$0xf]
  %v28 = vld [vmem:[%s1 + $0x2c] sm:$0xf]
  %v29 = vld [vmem:[%s1 + $0x30] sm:$0xf]
  %v30 = vld [vmem:[%s1 + $0x34] sm:$0xf]
  %v31 = vld [vmem:[%s1 + $0x38] sm:$0xf]
  %v32 = vld [vmem:[%s1 + $0x3c] sm:$0xf]
  %v35 = vunpack.c.l.b16 %v15
  %v36 = vunpack.c.l.b16 %v16
  %v37 = vpack.c.b16 %v36, %v35
  %v55 = vunpack.c.l.b16 %v17
  %v56 = vunpack.c.l.b16 %v18
  %v57 = vunpack.c.l.b16 %v19
  %v58 = vunpack.c.l.b16 %v20
  %v59 = vunpack.c.l.b16 %v21
  %v60 = vunpack.c.l.b16 %v22
  %v61 = vunpack.c.l.b16 %v23
  %v62 = vunpack.c.l.b16 %v24
  %v63 = vunpack.c.l.b16 %v25
  %v64 = vunpack.c.l.b16 %v26
  %v65 = vunpack.c.l.b16 %v27
  %v66 = vunpack.c.l.b16 %v28
  %v67 = vunpack.c.l.b16 %v29
  %v68 = vunpack.c.l.b16 %v30
  %v69 = vunpack.c.l.b16 %v31
  %v70 = vunpack.c.l.b16 %v32
  %v71 = vpack.c.b16 %v56, %v55
  %v72 = vpack.c.b16 %v58, %v57
  %v73 = vpack.c.b16 %v60, %v59
  %v74 = vpack.c.b16 %v62, %v61
  %v75 = vpack.c.b16 %v64, %v63
  %v76 = vpack.c.b16 %v66, %v65
  %v77 = vpack.c.b16 %v68, %v67
  %v78 = vpack.c.b16 %v70, %v69
  %87 = vmatprep.subr.bf16.mxu0 0
  %88 = vmatpush1.bf16.msra.mxu0 %v71
  %89 = vmatprep.subr.bf16.mxu0 0
  %90 = vmatpush1.bf16.msra.mxu0 %v72
  %91 = vmatprep.subr.bf16.mxu0 0
  %92 = vmatpush1.bf16.msra.mxu0 %v73
  %93 = vmatprep.subr.bf16.mxu0 0
  %94 = vmatpush1.bf16.msra.mxu0 %v74
  %95 = vmatprep.subr.bf16.mxu0 0
  %96 = vmatpush1.bf16.msra.mxu0 %v75
  %97 = vmatprep.subr.bf16.mxu0 0
  %98 = vmatpush1.bf16.msra.mxu0 %v76
  %99 = vmatprep.subr.bf16.mxu0 0
  %100 = vmatpush1.bf16.msra.mxu0 %v77
  %101 = vmatprep.subr.bf16.mxu0 0
  %102 = vmatpush1.bf16.msra.mxu0 %v78
  %103 = vmatprep.subr.bf16.mxu0 0
  %104 = vmatpush1.bf16.msra.mxu0 0
  %105 = vmatprep.subr.bf16.mxu0 0
  %106 = vmatpush1.bf16.msra.mxu0 0
  %107 = vmatprep.subr.bf16.mxu0 0
  %108 = vmatpush1.bf16.msra.mxu0 0
  %109 = vmatprep.subr.bf16.mxu0 0
  %110 = vmatpush1.bf16.msra.mxu0 0
  %111 = vmatprep.subr.bf16.mxu0 0
  %112 = vmatpush1.bf16.msra.mxu0 0
  %113 = vmatprep.subr.bf16.mxu0 0
  %114 = vmatpush1.bf16.msra.mxu0 0
  %115 = vmatprep.subr.bf16.mxu0 0
  %116 = vmatpush1.bf16.msra.mxu0 0
  %117 = vmatprep.subr.bf16.mxu0 0
  %118 = vmatpush1.bf16.msra.mxu0 0
  %119 = vmatprep.mubr.bf16.mxu0 0
  %120 = vmatmul.mubr.bf16.gmra.mrb[0].mxu0 %v37
  %v121 = vpop.f32.mrb[0].mxu0
  %v122 = vadd.f32 0.0, %v121
  %v123 = vpop.f32.mrb[0].mxu0
  %v124 = vpop.f32.mrb[0].mxu0
  %v125 = vadd.f32 0.0, %v124
  %v126 = vpop.f32.mrb[0].mxu0
  %127 = vdwg.mxu0
  %v128 = vld [vmem:[%s2] sm:$0x1]
  %v130 = vlaneseq
  %v131 = vshrl.u32 %v130, 7
  %v132 = vsub.s32 0, %v131
  %v133 = vrot.slane %v128, %v132
  %v135 = vmul.f32 %v122, %v133
  %v136 = vmul.f32 %v125, %v133
  %s137 = scalar_lea.vmem %s2, 1
  %v138 = vld [vmem:[%s137] sm:$0x1]
  %v140 = vlaneseq
  %v141 = vshrl.u32 %v140, 7
  %v142 = vsub.s32 0, %v141
  %v143 = vrot.slane %v138, %v142
  %v145 = vadd.f32 %v135, %v143
  %v146 = vadd.f32 %v136, %v143
  %147 = vst [vmem:[%s3] sm:$0xff] %v145
  %148 = vst [vmem:[%s3 + $0x8] sm:$0xff] %v146
  // Predicated region
  $region14: #{_lambda_.57} parent=0 // pred_check
    _
  $region15: #{_lambda_.57} parent=0 // pred_check_branch
    %150 = sbr.rel (0) target = $region17
  $region16: #{_lambda_.57} parent=0 // pred_region
    _
  $region17: #{_lambda_.57} parent=0 // pred_fallthru
    _
  // Predicated region
  $region18: #{_lambda_.57} parent=0 // pred_check
    _
  $region19: #{_lambda_.57} parent=0 // pred_check_branch
    %152 = sbr.rel (0) target = $region21
  $region20: #{_lambda_.57} parent=0 // pred_region
    _
  $region21: #{_lambda_.57} parent=0 // pred_fallthru
    _

// kernel: _lambda_.59
$region0: #{_lambda_.59}
  #allocation0 [shape = 'u32[]', space=smem, size = 0x4, offset = 0x4, fixed_abs, tag = 'smem constant byte address 0x4 - core index']
  #allocation1 [shape = 'u32[144,128]{1,0:T(1,128)}', space=vmem, size = 0x12000, scoped, tag = 'internal scratch']
  %s0 = inlined_call_operand.vmem [shape: bf16[16,384], index: 0, kind: input, shape index: {}]
  %s1 = inlined_call_operand.vmem [shape: bf16[384,128], index: 1, kind: input, shape index: {}]
  %s2 = inlined_call_operand.vmem [shape: f32[2,1,128], index: 2, kind: input, shape index: {}]
  %s3 = inlined_call_operand.vmem [shape: f32[16,128], index: 3, kind: output, shape index: {}]
  %s4 = sld [smem:[#allocation0]]
  $region22: #{_lambda_.59} parent=0
    _
  %s6 = ssub.s32 1, %s4
  %s7 = scalar_select 0, %s6, %s4
  // Predicated region
  $region2: #{_lambda_.59} parent=0 // pred_check
    _
  $region3: #{_lambda_.59} parent=0 // pred_check_branch
    %9 = sbr.rel (0) target = $region5
  $region4: #{_lambda_.59} parent=0 // pred_region
    _
  $region5: #{_lambda_.59} parent=0 // pred_fallthru
    _
  // Predicated region
  $region6: #{_lambda_.59} parent=0 // pred_check
    _
  $region7: #{_lambda_.59} parent=0 // pred_check_branch
    %11 = sbr.rel (0) target = $region9
  $region8: #{_lambda_.59} parent=0 // pred_region
    _
  $region9: #{_lambda_.59} parent=0 // pred_fallthru
    _
  // Predicated region
  $region10: #{_lambda_.59} parent=0 // pred_check
    _
  $region11: #{_lambda_.59} parent=0 // pred_check_branch
    %13 = sbr.rel (0) target = $region13
  $region12: #{_lambda_.59} parent=0 // pred_region
    _
  $region13: #{_lambda_.59} parent=0 // pred_fallthru
    _
  %v15 = vld [vmem:[%s0] sm:$0xff]
  %v16 = vld [vmem:[%s0 + $0x8] sm:$0xf]
  %v17 = vld [vmem:[%s0 + $0xc] sm:$0xff]
  %v18 = vld [vmem:[%s0 + $0x14] sm:$0xf]
  %v19 = vld [vmem:[%s1] sm:$0xf]
  %v20 = vld [vmem:[%s1 + $0x4] sm:$0xf]
  %v21 = vld [vmem:[%s1 + $0x8] sm:$0xf]
  %v22 = vld [vmem:[%s1 + $0xc] sm:$0xf]
  %v23 = vld [vmem:[%s1 + $0x10] sm:$0xf]
  %v24 = vld [vmem:[%s1 + $0x14] sm:$0xf]
  %v25 = vld [vmem:[%s1 + $0x18] sm:$0xf]
  %v26 = vld [vmem:[%s1 + $0x1c] sm:$0xf]
  %v27 = vld [vmem:[%s1 + $0x20] sm:$0xf]
  %v28 = vld [vmem:[%s1 + $0x24] sm:$0xf]
  %v29 = vld [vmem:[%s1 + $0x28] sm:$0xf]
  %v30 = vld [vmem:[%s1 + $0x2c] sm:$0xf]
  %v31 = vld [vmem:[%s1 + $0x30] sm:$0xf]
  %v32 = vld [vmem:[%s1 + $0x34] sm:$0xf]
  %v33 = vld [vmem:[%s1 + $0x38] sm:$0xf]
  %v34 = vld [vmem:[%s1 + $0x3c] sm:$0xf]
  %v35 = vld [vmem:[%s1 + $0x40] sm:$0xf]
  %v36 = vld [vmem:[%s1 + $0x44] sm:$0xf]
  %v37 = vld [vmem:[%s1 + $0x48] sm:$0xf]
  %v38 = vld [vmem:[%s1 + $0x4c] sm:$0xf]
  %v39 = vld [vmem:[%s1 + $0x50] sm:$0xf]
  %v40 = vld [vmem:[%s1 + $0x54] sm:$0xf]
  %v41 = vld [vmem:[%s1 + $0x58] sm:$0xf]
  %v42 = vld [vmem:[%s1 + $0x5c] sm:$0xf]
  %v43 = vld [vmem:[%s1 + $0x60] sm:$0xf]
  %v44 = vld [vmem:[%s1 + $0x64] sm:$0xf]
  %v45 = vld [vmem:[%s1 + $0x68] sm:$0xf]
  %v46 = vld [vmem:[%s1 + $0x6c] sm:$0xf]
  %v47 = vld [vmem:[%s1 + $0x70] sm:$0xf]
  %v48 = vld [vmem:[%s1 + $0x74] sm:$0xf]
  %v49 = vld [vmem:[%s1 + $0x78] sm:$0xf]
  %v50 = vld [vmem:[%s1 + $0x7c] sm:$0xf]
  %v51 = vld [vmem:[%s1 + $0x80] sm:$0xf]
  %v52 = vld [vmem:[%s1 + $0x84] sm:$0xf]
  %v53 = vld [vmem:[%s1 + $0x88] sm:$0xf]
  %v54 = vld [vmem:[%s1 + $0x8c] sm:$0xf]
  %v55 = vld [vmem:[%s1 + $0x90] sm:$0xf]
  %v56 = vld [vmem:[%s1 + $0x94] sm:$0xf]
  %v57 = vld [vmem:[%s1 + $0x98] sm:$0xf]
  %v58 = vld [vmem:[%s1 + $0x9c] sm:$0xf]
  %v59 = vld [vmem:[%s1 + $0xa0] sm:$0xf]
  %v60 = vld [vmem:[%s1 + $0xa4] sm:$0xf]
  %v61 = vld [vmem:[%s1 + $0xa8] sm:$0xf]
  %v62 = vld [vmem:[%s1 + $0xac] sm:$0xf]
  %v63 = vld [vmem:[%s1 + $0xb0] sm:$0xf]
  %v64 = vld [vmem:[%s1 + $0xb4] sm:$0xf]
  %v65 = vld [vmem:[%s1 + $0xb8] sm:$0xf]
  %v66 = vld [vmem:[%s1 + $0xbc] sm:$0xf]
  %v71 = vunpack.c.l.b16 %v15
  %v72 = vunpack.c.h.b16 %v15
  %v73 = vunpack.c.l.b16 %v16
  %v74 = vunpack.c.l.b16 %v17
  %v75 = vunpack.c.h.b16 %v17
  %v76 = vunpack.c.l.b16 %v18
  %v77 = vpack.c.b16 %v74, %v71
  %v78 = vpack.c.b16 %v75, %v72
  %v79 = vpack.c.b16 %v76, %v73
  %v131 = vunpack.c.l.b16 %v19
  %v132 = vunpack.c.l.b16 %v20
  %v133 = vunpack.c.l.b16 %v21
  %v134 = vunpack.c.l.b16 %v22
  %v135 = vunpack.c.l.b16 %v23
  %v136 = vunpack.c.l.b16 %v24
  %v137 = vunpack.c.l.b16 %v25
  %v138 = vunpack.c.l.b16 %v26
  %v139 = vunpack.c.l.b16 %v27
  %v140 = vunpack.c.l.b16 %v28
  %v141 = vunpack.c.l.b16 %v29
  %v142 = vunpack.c.l.b16 %v30
  %v143 = vunpack.c.l.b16 %v31
  %v144 = vunpack.c.l.b16 %v32
  %v145 = vunpack.c.l.b16 %v33
  %v146 = vunpack.c.l.b16 %v34
  %v147 = vunpack.c.l.b16 %v35
  %v148 = vunpack.c.l.b16 %v36
  %v149 = vunpack.c.l.b16 %v37
  %v150 = vunpack.c.l.b16 %v38
  %v151 = vunpack.c.l.b16 %v39
  %v152 = vunpack.c.l.b16 %v40
  %v153 = vunpack.c.l.b16 %v41
  %v154 = vunpack.c.l.b16 %v42
  %v155 = vunpack.c.l.b16 %v43
  %v156 = vunpack.c.l.b16 %v44
  %v157 = vunpack.c.l.b16 %v45
  %v158 = vunpack.c.l.b16 %v46
  %v159 = vunpack.c.l.b16 %v47
  %v160 = vunpack.c.l.b16 %v48
  %v161 = vunpack.c.l.b16 %v49
  %v162 = vunpack.c.l.b16 %v50
  %v163 = vunpack.c.l.b16 %v51
  %v164 = vunpack.c.l.b16 %v52
  %v165 = vunpack.c.l.b16 %v53
  %v166 = vunpack.c.l.b16 %v54
  %v167 = vunpack.c.l.b16 %v55
  %v168 = vunpack.c.l.b16 %v56
  %v169 = vunpack.c.l.b16 %v57
  %v170 = vunpack.c.l.b16 %v58
  %v171 = vunpack.c.l.b16 %v59
  %v172 = vunpack.c.l.b16 %v60
  %v173 = vunpack.c.l.b16 %v61
  %v174 = vunpack.c.l.b16 %v62
  %v175 = vunpack.c.l.b16 %v63
  %v176 = vunpack.c.l.b16 %v64
  %v177 = vunpack.c.l.b16 %v65
  %v178 = vunpack.c.l.b16 %v66
  %v179 = vpack.c.b16 %v132, %v131
  %v180 = vpack.c.b16 %v134, %v133
  %v181 = vpack.c.b16 %v136, %v135
  %v182 = vpack.c.b16 %v138, %v137
  %v183 = vpack.c.b16 %v140, %v139
  %v184 = vpack.c.b16 %v142, %v141
  %v185 = vpack.c.b16 %v144, %v143
  %v186 = vpack.c.b16 %v146, %v145
  %v187 = vpack.c.b16 %v148, %v147
  %v188 = vpack.c.b16 %v150, %v149
  %v189 = vpack.c.b16 %v152, %v151
  %v190 = vpack.c.b16 %v154, %v153
  %v191 = vpack.c.b16 %v156, %v155
  %v192 = vpack.c.b16 %v158, %v157
  %v193 = vpack.c.b16 %v160, %v159
  %v194 = vpack.c.b16 %v162, %v161
  %v195 = vpack.c.b16 %v164, %v163
  %v196 = vpack.c.b16 %v166, %v165
  %v197 = vpack.c.b16 %v168, %v167
  %v198 = vpack.c.b16 %v170, %v169
  %v199 = vpack.c.b16 %v172, %v171
  %v200 = vpack.c.b16 %v174, %v173
  %v201 = vpack.c.b16 %v176, %v175
  %v202 = vpack.c.b16 %v178, %v177
  %227 = vmatprep.subr.bf16.mxu0 0
  %228 = vmatpush1.bf16.msra.mxu0 %v179
  %229 = vmatprep.subr.bf16.mxu0 0
  %230 = vmatpush1.bf16.msra.mxu0 %v180
  %231 = vmatprep.subr.bf16.mxu0 0
  %232 = vmatpush1.bf16.msra.mxu0 %v181
  %233 = vmatprep.subr.bf16.mxu0 0
  %234 = vmatpush1.bf16.msra.mxu0 %v182
  %235 = vmatprep.subr.bf16.mxu0 0
  %236 = vmatpush1.bf16.msra.mxu0 %v183
  %237 = vmatprep.subr.bf16.mxu0 0
  %238 = vmatpush1.bf16.msra.mxu0 %v184
  %239 = vmatprep.subr.bf16.mxu0 0
  %240 = vmatpush1.bf16.msra.mxu0 %v185
  %241 = vmatprep.subr.bf16.mxu0 0
  %242 = vmatpush1.bf16.msra.mxu0 %v186
  %243 = vmatprep.subr.bf16.mxu0 0
  %244 = vmatpush1.bf16.msra.mxu0 %v187
  %245 = vmatprep.subr.bf16.mxu0 0
  %246 = vmatpush1.bf16.msra.mxu0 %v188
  %247 = vmatprep.subr.bf16.mxu0 0
  %248 = vmatpush1.bf16.msra.mxu0 %v189
  %249 = vmatprep.subr.bf16.mxu0 0
  %250 = vmatpush1.bf16.msra.mxu0 %v190
  %251 = vmatprep.subr.bf16.mxu0 0
  %252 = vmatpush1.bf16.msra.mxu0 %v191
  %253 = vmatprep.subr.bf16.mxu0 0
  %254 = vmatpush1.bf16.msra.mxu0 %v192
  %255 = vmatprep.subr.bf16.mxu0 0
  %256 = vmatpush1.bf16.msra.mxu0 %v193
  %257 = vmatprep.subr.bf16.mxu0 0
  %258 = vmatpush1.bf16.msra.mxu0 %v194
  %259 = vmatprep.mubr.bf16.mxu0 %v78
  %260 = vmatmul.mubr.bf16.gmra.mrb[0].mxu0 %v77
  %v261 = vpop.f32.mrb[0].mxu0
  %v262 = vadd.f32 0.0, %v261
  %v263 = vpop.f32.mrb[0].mxu0
  %v264 = vpop.f32.mrb[0].mxu0
  %v265 = vadd.f32 0.0, %v264
  %v266 = vpop.f32.mrb[0].mxu0
  %267 = vdwg.mxu0
  %268 = vmatprep.subr.bf16.mxu0 0
  %269 = vmatpush1.bf16.msra.mxu0 %v195
  %270 = vmatprep.subr.bf16.mxu0 0
  %271 = vmatpush1.bf16.msra.mxu0 %v196
  %272 = vmatprep.subr.bf16.mxu0 0
  %273 = vmatpush1.bf16.msra.mxu0 %v197
  %274 = vmatprep.subr.bf16.mxu0 0
  %275 = vmatpush1.bf16.msra.mxu0 %v198
  %276 = vmatprep.subr.bf16.mxu0 0
  %277 = vmatpush1.bf16.msra.mxu0 %v199
  %278 = vmatprep.subr.bf16.mxu0 0
  %279 = vmatpush1.bf16.msra.mxu0 %v200
  %280 = vmatprep.subr.bf16.mxu0 0
  %281 = vmatpush1.bf16.msra.mxu0 %v201
  %282 = vmatprep.subr.bf16.mxu0 0
  %283 = vmatpush1.bf16.msra.mxu0 %v202
  %284 = vmatprep.subr.bf16.mxu0 0
  %285 = vmatpush1.bf16.msra.mxu0 0
  %286 = vmatprep.subr.bf16.mxu0 0
  %287 = vmatpush1.bf16.msra.mxu0 0
  %288 = vmatprep.subr.bf16.mxu0 0
  %289 = vmatpush1.bf16.msra.mxu0 0
  %290 = vmatprep.subr.bf16.mxu0 0
  %291 = vmatpush1.bf16.msra.mxu0 0
  %292 = vmatprep.subr.bf16.mxu0 0
  %293 = vmatpush1.bf16.msra.mxu0 0
  %294 = vmatprep.subr.bf16.mxu0 0
  %295 = vmatpush1.bf16.msra.mxu0 0
  %296 = vmatprep.subr.bf16.mxu0 0
  %297 = vmatpush1.bf16.msra.mxu0 0
  %298 = vmatprep.subr.bf16.mxu0 0
  %299 = vmatpush1.bf16.msra.mxu0 0
  %300 = vmatprep.mubr.bf16.mxu0 0
  %301 = vmatmul.mubr.bf16.gmra.mrb[0].mxu0 %v79
  %v302 = vpop.f32.mrb[0].mxu0
  %v303 = vadd.f32 %v262, %v302
  %v304 = vpop.f32.mrb[0].mxu0
  %v305 = vpop.f32.mrb[0].mxu0
  %v306 = vadd.f32 %v265, %v305
  %v307 = vpop.f32.mrb[0].mxu0
  %308 = vdwg.mxu0
  %v309 = vld [vmem:[%s2] sm:$0x1]
  %v311 = vlaneseq
  %v312 = vshrl.u32 %v311, 7
  %v313 = vsub.s32 0, %v312
  %v314 = vrot.slane %v309, %v313
  %v316 = vmul.f32 %v303, %v314
  %v317 = vmul.f32 %v306, %v314
  %s318 = scalar_lea.vmem %s2, 1
  %v319 = vld [vmem:[%s318] sm:$0x1]
  %v321 = vlaneseq
  %v322 = vshrl.u32 %v321, 7
  %v323 = vsub.s32 0, %v322
  %v324 = vrot.slane %v319, %v323
  %v326 = vadd.f32 %v316, %v324
  %v327 = vadd.f32 %v317, %v324
  %v328 = vmax.f32 %v326, 0.0
  %v329 = vmax.f32 %v327, 0.0
  %330 = vst [vmem:[%s3] sm:$0xff] %v328
  %331 = vst [vmem:[%s3 + $0x8] sm:$0xff] %v329
  // Predicated region
  $region14: #{_lambda_.59} parent=0 // pred_check
    _
  $region15: #{_lambda_.59} parent=0 // pred_check_branch
    %333 = sbr.rel (0) target = $region17
  $region16: #{_lambda_.59} parent=0 // pred_region
    _
  $region17: #{_lambda_.59} parent=0 // pred_fallthru
    _
  // Predicated region
  $region18: #{_lambda_.59} parent=0 // pred_check
    _
  $region19: #{_lambda_.59} parent=0 // pred_check_branch
    %335 = sbr.rel (0) target = $region21
  $region20: #{_lambda_.59} parent=0 // pred_region
    _
  $region21: #{_lambda_.59} parent=0 // pred_fallthru
    _

// kernel: _lambda_.58
$region0: #{_lambda_.58}
  #allocation0 [shape = 'u32[]', space=smem, size = 0x4, offset = 0x4, fixed_abs, tag = 'smem constant byte address 0x4 - core index']
  #allocation1 [shape = 'u32[144,128]{1,0:T(1,128)}', space=vmem, size = 0x12000, scoped, tag = 'internal scratch']
  %s0 = inlined_call_operand.vmem [shape: bf16[16,384], index: 0, kind: input, shape index: {}]
  %s1 = inlined_call_operand.vmem [shape: bf16[384,128], index: 1, kind: input, shape index: {}]
  %s2 = inlined_call_operand.vmem [shape: f32[2,1,128], index: 2, kind: input, shape index: {}]
  %s3 = inlined_call_operand.vmem [shape: f32[16,128], index: 3, kind: input, shape index: {}]
  %s4 = inlined_call_operand.vmem [shape: f32[16,128], index: 4, kind: output, shape index: {}]
  %s5 = sld [smem:[#allocation0]]
  $region26: #{_lambda_.58} parent=0
    _
  %s7 = ssub.s32 1, %s5
  %s8 = scalar_select 0, %s7, %s5
  // Predicated region
  $region2: #{_lambda_.58} parent=0 // pred_check
    _
  $region3: #{_lambda_.58} parent=0 // pred_check_branch
    %10 = sbr.rel (0) target = $region5
  $region4: #{_lambda_.58} parent=0 // pred_region
    _
  $region5: #{_lambda_.58} parent=0 // pred_fallthru
    _
  // Predicated region
  $region6: #{_lambda_.58} parent=0 // pred_check
    _
  $region7: #{_lambda_.58} parent=0 // pred_check_branch
    %12 = sbr.rel (0) target = $region9
  $region8: #{_lambda_.58} parent=0 // pred_region
    _
  $region9: #{_lambda_.58} parent=0 // pred_fallthru
    _
  // Predicated region
  $region10: #{_lambda_.58} parent=0 // pred_check
    _
  $region11: #{_lambda_.58} parent=0 // pred_check_branch
    %14 = sbr.rel (0) target = $region13
  $region12: #{_lambda_.58} parent=0 // pred_region
    _
  $region13: #{_lambda_.58} parent=0 // pred_fallthru
    _
  // Predicated region
  $region14: #{_lambda_.58} parent=0 // pred_check
    _
  $region15: #{_lambda_.58} parent=0 // pred_check_branch
    %16 = sbr.rel (0) target = $region17
  $region16: #{_lambda_.58} parent=0 // pred_region
    _
  $region17: #{_lambda_.58} parent=0 // pred_fallthru
    _
  %v18 = vld [vmem:[%s0] sm:$0xff]
  %v19 = vld [vmem:[%s0 + $0x8] sm:$0xf]
  %v20 = vld [vmem:[%s0 + $0xc] sm:$0xff]
  %v21 = vld [vmem:[%s0 + $0x14] sm:$0xf]
  %v22 = vld [vmem:[%s1] sm:$0xf]
  %v23 = vld [vmem:[%s1 + $0x4] sm:$0xf]
  %v24 = vld [vmem:[%s1 + $0x8] sm:$0xf]
  %v25 = vld [vmem:[%s1 + $0xc] sm:$0xf]
  %v26 = vld [vmem:[%s1 + $0x10] sm:$0xf]
  %v27 = vld [vmem:[%s1 + $0x14] sm:$0xf]
  %v28 = vld [vmem:[%s1 + $0x18] sm:$0xf]
  %v29 = vld [vmem:[%s1 + $0x1c] sm:$0xf]
  %v30 = vld [vmem:[%s1 + $0x20] sm:$0xf]
  %v31 = vld [vmem:[%s1 + $0x24] sm:$0xf]
  %v32 = vld [vmem:[%s1 + $0x28] sm:$0xf]
  %v33 = vld [vmem:[%s1 + $0x2c] sm:$0xf]
  %v34 = vld [vmem:[%s1 + $0x30] sm:$0xf]
  %v35 = vld [vmem:[%s1 + $0x34] sm:$0xf]
  %v36 = vld [vmem:[%s1 + $0x38] sm:$0xf]
  %v37 = vld [vmem:[%s1 + $0x3c] sm:$0xf]
  %v38 = vld [vmem:[%s1 + $0x40] sm:$0xf]
  %v39 = vld [vmem:[%s1 + $0x44] sm:$0xf]
  %v40 = vld [vmem:[%s1 + $0x48] sm:$0xf]
  %v41 = vld [vmem:[%s1 + $0x4c] sm:$0xf]
  %v42 = vld [vmem:[%s1 + $0x50] sm:$0xf]
  %v43 = vld [vmem:[%s1 + $0x54] sm:$0xf]
  %v44 = vld [vmem:[%s1 + $0x58] sm:$0xf]
  %v45 = vld [vmem:[%s1 + $0x5c] sm:$0xf]
  %v46 = vld [vmem:[%s1 + $0x60] sm:$0xf]
  %v47 = vld [vmem:[%s1 + $0x64] sm:$0xf]
  %v48 = vld [vmem:[%s1 + $0x68] sm:$0xf]
  %v49 = vld [vmem:[%s1 + $0x6c] sm:$0xf]
  %v50 = vld [vmem:[%s1 + $0x70] sm:$0xf]
  %v51 = vld [vmem:[%s1 + $0x74] sm:$0xf]
  %v52 = vld [vmem:[%s1 + $0x78] sm:$0xf]
  %v53 = vld [vmem:[%s1 + $0x7c] sm:$0xf]
  %v54 = vld [vmem:[%s1 + $0x80] sm:$0xf]
  %v55 = vld [vmem:[%s1 + $0x84] sm:$0xf]
  %v56 = vld [vmem:[%s1 + $0x88] sm:$0xf]
  %v57 = vld [vmem:[%s1 + $0x8c] sm:$0xf]
  %v58 = vld [vmem:[%s1 + $0x90] sm:$0xf]
  %v59 = vld [vmem:[%s1 + $0x94] sm:$0xf]
  %v60 = vld [vmem:[%s1 + $0x98] sm:$0xf]
  %v61 = vld [vmem:[%s1 + $0x9c] sm:$0xf]
  %v62 = vld [vmem:[%s1 + $0xa0] sm:$0xf]
  %v63 = vld [vmem:[%s1 + $0xa4] sm:$0xf]
  %v64 = vld [vmem:[%s1 + $0xa8] sm:$0xf]
  %v65 = vld [vmem:[%s1 + $0xac] sm:$0xf]
  %v66 = vld [vmem:[%s1 + $0xb0] sm:$0xf]
  %v67 = vld [vmem:[%s1 + $0xb4] sm:$0xf]
  %v68 = vld [vmem:[%s1 + $0xb8] sm:$0xf]
  %v69 = vld [vmem:[%s1 + $0xbc] sm:$0xf]
  %v74 = vunpack.c.l.b16 %v18
  %v75 = vunpack.c.h.b16 %v18
  %v76 = vunpack.c.l.b16 %v19
  %v77 = vunpack.c.l.b16 %v20
  %v78 = vunpack.c.h.b16 %v20
  %v79 = vunpack.c.l.b16 %v21
  %v80 = vpack.c.b16 %v77, %v74
  %v81 = vpack.c.b16 %v78, %v75
  %v82 = vpack.c.b16 %v79, %v76
  %v134 = vunpack.c.l.b16 %v22
  %v135 = vunpack.c.l.b16 %v23
  %v136 = vunpack.c.l.b16 %v24
  %v137 = vunpack.c.l.b16 %v25
  %v138 = vunpack.c.l.b16 %v26
  %v139 = vunpack.c.l.b16 %v27
  %v140 = vunpack.c.l.b16 %v28
  %v141 = vunpack.c.l.b16 %v29
  %v142 = vunpack.c.l.b16 %v30
  %v143 = vunpack.c.l.b16 %v31
  %v144 = vunpack.c.l.b16 %v32
  %v145 = vunpack.c.l.b16 %v33
  %v146 = vunpack.c.l.b16 %v34
  %v147 = vunpack.c.l.b16 %v35
  %v148 = vunpack.c.l.b16 %v36
  %v149 = vunpack.c.l.b16 %v37
  %v150 = vunpack.c.l.b16 %v38
  %v151 = vunpack.c.l.b16 %v39
  %v152 = vunpack.c.l.b16 %v40
  %v153 = vunpack.c.l.b16 %v41
  %v154 = vunpack.c.l.b16 %v42
  %v155 = vunpack.c.l.b16 %v43
  %v156 = vunpack.c.l.b16 %v44
  %v157 = vunpack.c.l.b16 %v45
  %v158 = vunpack.c.l.b16 %v46
  %v159 = vunpack.c.l.b16 %v47
  %v160 = vunpack.c.l.b16 %v48
  %v161 = vunpack.c.l.b16 %v49
  %v162 = vunpack.c.l.b16 %v50
  %v163 = vunpack.c.l.b16 %v51
  %v164 = vunpack.c.l.b16 %v52
  %v165 = vunpack.c.l.b16 %v53
  %v166 = vunpack.c.l.b16 %v54
  %v167 = vunpack.c.l.b16 %v55
  %v168 = vunpack.c.l.b16 %v56
  %v169 = vunpack.c.l.b16 %v57
  %v170 = vunpack.c.l.b16 %v58
  %v171 = vunpack.c.l.b16 %v59
  %v172 = vunpack.c.l.b16 %v60
  %v173 = vunpack.c.l.b16 %v61
  %v174 = vunpack.c.l.b16 %v62
  %v175 = vunpack.c.l.b16 %v63
  %v176 = vunpack.c.l.b16 %v64
  %v177 = vunpack.c.l.b16 %v65
  %v178 = vunpack.c.l.b16 %v66
  %v179 = vunpack.c.l.b16 %v67
  %v180 = vunpack.c.l.b16 %v68
  %v181 = vunpack.c.l.b16 %v69
  %v182 = vpack.c.b16 %v135, %v134
  %v183 = vpack.c.b16 %v137, %v136
  %v184 = vpack.c.b16 %v139, %v138
  %v185 = vpack.c.b16 %v141, %v140
  %v186 = vpack.c.b16 %v143, %v142
  %v187 = vpack.c.b16 %v145, %v144
  %v188 = vpack.c.b16 %v147, %v146
  %v189 = vpack.c.b16 %v149, %v148
  %v190 = vpack.c.b16 %v151, %v150
  %v191 = vpack.c.b16 %v153, %v152
  %v192 = vpack.c.b16 %v155, %v154
  %v193 = vpack.c.b16 %v157, %v156
  %v194 = vpack.c.b16 %v159, %v158
  %v195 = vpack.c.b16 %v161, %v160
  %v196 = vpack.c.b16 %v163, %v162
  %v197 = vpack.c.b16 %v165, %v164
  %v198 = vpack.c.b16 %v167, %v166
  %v199 = vpack.c.b16 %v169, %v168
  %v200 = vpack.c.b16 %v171, %v170
  %v201 = vpack.c.b16 %v173, %v172
  %v202 = vpack.c.b16 %v175, %v174
  %v203 = vpack.c.b16 %v177, %v176
  %v204 = vpack.c.b16 %v179, %v178
  %v205 = vpack.c.b16 %v181, %v180
  %230 = vmatprep.subr.bf16.mxu0 0
  %231 = vmatpush1.bf16.msra.mxu0 %v182
  %232 = vmatprep.subr.bf16.mxu0 0
  %233 = vmatpush1.bf16.msra.mxu0 %v183
  %234 = vmatprep.subr.bf16.mxu0 0
  %235 = vmatpush1.bf16.msra.mxu0 %v184
  %236 = vmatprep.subr.bf16.mxu0 0
  %237 = vmatpush1.bf16.msra.mxu0 %v185
  %238 = vmatprep.subr.bf16.mxu0 0
  %239 = vmatpush1.bf16.msra.mxu0 %v186
  %240 = vmatprep.subr.bf16.mxu0 0
  %241 = vmatpush1.bf16.msra.mxu0 %v187
  %242 = vmatprep.subr.bf16.mxu0 0
  %243 = vmatpush1.bf16.msra.mxu0 %v188
  %244 = vmatprep.subr.bf16.mxu0 0
  %245 = vmatpush1.bf16.msra.mxu0 %v189
  %246 = vmatprep.subr.bf16.mxu0 0
  %247 = vmatpush1.bf16.msra.mxu0 %v190
  %248 = vmatprep.subr.bf16.mxu0 0
  %249 = vmatpush1.bf16.msra.mxu0 %v191
  %250 = vmatprep.subr.bf16.mxu0 0
  %251 = vmatpush1.bf16.msra.mxu0 %v192
  %252 = vmatprep.subr.bf16.mxu0 0
  %253 = vmatpush1.bf16.msra.mxu0 %v193
  %254 = vmatprep.subr.bf16.mxu0 0
  %255 = vmatpush1.bf16.msra.mxu0 %v194
  %256 = vmatprep.subr.bf16.mxu0 0
  %257 = vmatpush1.bf16.msra.mxu0 %v195
  %258 = vmatprep.subr.bf16.mxu0 0
  %259 = vmatpush1.bf16.msra.mxu0 %v196
  %260 = vmatprep.subr.bf16.mxu0 0
  %261 = vmatpush1.bf16.msra.mxu0 %v197
  %262 = vmatprep.mubr.bf16.mxu0 %v81
  %263 = vmatmul.mubr.bf16.gmra.mrb[0].mxu0 %v80
  %v264 = vpop.f32.mrb[0].mxu0
  %v265 = vadd.f32 0.0, %v264
  %v266 = vpop.f32.mrb[0].mxu0
  %v267 = vpop.f32.mrb[0].mxu0
  %v268 = vadd.f32 0.0, %v267
  %v269 = vpop.f32.mrb[0].mxu0
  %270 = vdwg.mxu0
  %271 = vmatprep.subr.bf16.mxu0 0
  %272 = vmatpush1.bf16.msra.mxu0 %v198
  %273 = vmatprep.subr.bf16.mxu0 0
  %274 = vmatpush1.bf16.msra.mxu0 %v199
  %275 = vmatprep.subr.bf16.mxu0 0
  %276 = vmatpush1.bf16.msra.mxu0 %v200
  %277 = vmatprep.subr.bf16.mxu0 0
  %278 = vmatpush1.bf16.msra.mxu0 %v201
  %279 = vmatprep.subr.bf16.mxu0 0
  %280 = vmatpush1.bf16.msra.mxu0 %v202
  %281 = vmatprep.subr.bf16.mxu0 0
  %282 = vmatpush1.bf16.msra.mxu0 %v203
  %283 = vmatprep.subr.bf16.mxu0 0
  %284 = vmatpush1.bf16.msra.mxu0 %v204
  %285 = vmatprep.subr.bf16.mxu0 0
  %286 = vmatpush1.bf16.msra.mxu0 %v205
  %287 = vmatprep.subr.bf16.mxu0 0
  %288 = vmatpush1.bf16.msra.mxu0 0
  %289 = vmatprep.subr.bf16.mxu0 0
  %290 = vmatpush1.bf16.msra.mxu0 0
  %291 = vmatprep.subr.bf16.mxu0 0
  %292 = vmatpush1.bf16.msra.mxu0 0
  %293 = vmatprep.subr.bf16.mxu0 0
  %294 = vmatpush1.bf16.msra.mxu0 0
  %295 = vmatprep.subr.bf16.mxu0 0
  %296 = vmatpush1.bf16.msra.mxu0 0
  %297 = vmatprep.subr.bf16.mxu0 0
  %298 = vmatpush1.bf16.msra.mxu0 0
  %299 = vmatprep.subr.bf16.mxu0 0
  %300 = vmatpush1.bf16.msra.mxu0 0
  %301 = vmatprep.subr.bf16.mxu0 0
  %302 = vmatpush1.bf16.msra.mxu0 0
  %303 = vmatprep.mubr.bf16.mxu0 0
  %304 = vmatmul.mubr.bf16.gmra.mrb[0].mxu0 %v82
  %v305 = vpop.f32.mrb[0].mxu0
  %v306 = vadd.f32 %v265, %v305
  %v307 = vpop.f32.mrb[0].mxu0
  %v308 = vpop.f32.mrb[0].mxu0
  %v309 = vadd.f32 %v268, %v308
  %v310 = vpop.f32.mrb[0].mxu0
  %311 = vdwg.mxu0
  %v312 = vld [vmem:[%s2] sm:$0x1]
  %v314 = vlaneseq
  %v315 = vshrl.u32 %v314, 7
  %v316 = vsub.s32 0, %v315
  %v317 = vrot.slane %v312, %v316
  %v319 = vmul.f32 %v306, %v317
  %v320 = vmul.f32 %v309, %v317
  %s321 = scalar_lea.vmem %s2, 1
  %v322 = vld [vmem:[%s321] sm:$0x1]
  %v324 = vlaneseq
  %v325 = vshrl.u32 %v324, 7
  %v326 = vsub.s32 0, %v325
  %v327 = vrot.slane %v322, %v326
  %v329 = vadd.f32 %v319, %v327
  %v330 = vadd.f32 %v320, %v327
  %v331 = vld [vmem:[%s3] sm:$0xff]
  %v332 = vld [vmem:[%s3 + $0x8] sm:$0xff]
  %v333 = vadd.f32 %v329, %v331
  %v334 = vadd.f32 %v330, %v332
  %v335 = vmax.f32 %v333, 0.0
  %v336 = vmax.f32 %v334, 0.0
  %337 = vst [vmem:[%s4] sm:$0xff] %v335
  %338 = vst [vmem:[%s4 + $0x8] sm:$0xff] %v336
  // Predicated region
  $region18: #{_lambda_.58} parent=0 // pred_check
    _
  $region19: #{_lambda_.58} parent=0 // pred_check_branch
    %340 = sbr.rel (0) target = $region21
  $region20: #{_lambda_.58} parent=0 // pred_region
    _
  $region21: #{_lambda_.58} parent=0 // pred_fallthru
    _
  // Predicated region
  $region22: #{_lambda_.58} parent=0 // pred_check
    _
  $region23: #{_lambda_.58} parent=0 // pred_check_branch
    %342 = sbr.rel (0) target = $region25
  $region24: #{_lambda_.58} parent=0 // pred_region
    _
  $region25: #{_lambda_.58} parent=0 // pred_fallthru
    _

// kernel: _lambda_.66
$region0: #{_lambda_.66}
  #allocation0 [shape = 'u32[]', space=smem, size = 0x4, offset = 0x4, fixed_abs, tag = 'smem constant byte address 0x4 - core index']
  #allocation1 [shape = 'u32[144,128]{1,0:T(1,128)}', space=vmem, size = 0x12000, scoped, tag = 'internal scratch']
  %s0 = inlined_call_operand.vmem [shape: f32[1,128], index: 0, kind: input, shape index: {}]
  %s1 = inlined_call_operand.vmem [shape: f32[1,128], index: 1, kind: output, shape index: {}]
  %s2 = sld [smem:[#allocation0]]
  $region14: #{_lambda_.66} parent=0
    _
  %s4 = ssub.s32 1, %s2
  %s5 = scalar_select 0, %s4, %s2
  // Predicated region
  $region2: #{_lambda_.66} parent=0 // pred_check
    _
  $region3: #{_lambda_.66} parent=0 // pred_check_branch
    %7 = sbr.rel (0) target = $region5
  $region4: #{_lambda_.66} parent=0 // pred_region
    _
  $region5: #{_lambda_.66} parent=0 // pred_fallthru
    _
  %v8 = vld [vmem:[%s0] sm:$0x1]
  %v9 = vadd.f32 %v8, 0.0
  %10 = vst [vmem:[%s1] sm:$0x1] %v9
  // Predicated region
  $region6: #{_lambda_.66} parent=0 // pred_check
    _
  $region7: #{_lambda_.66} parent=0 // pred_check_branch
    %12 = sbr.rel (0) target = $region9
  $region8: #{_lambda_.66} parent=0 // pred_region
    _
  $region9: #{_lambda_.66} parent=0 // pred_fallthru
    _
  // Predicated region
  $region10: #{_lambda_.66} parent=0 // pred_check
    _
  $region11: #{_lambda_.66} parent=0 // pred_check_branch
    %14 = sbr.rel (0) target = $region13
  $region12: #{_lambda_.66} parent=0 // pred_region
    _
  $region13: #{_lambda_.66} parent=0 // pred_fallthru
    _

// kernel: _lambda_.63
$region0: #{_lambda_.63}
  #allocation0 [shape = 'u32[]', space=smem, size = 0x4, offset = 0x4, fixed_abs, tag = 'smem constant byte address 0x4 - core index']
  #allocation1 [shape = 'u32[144,128]{1,0:T(1,128)}', space=vmem, size = 0x12000, scoped, tag = 'internal scratch']
  %s0 = inlined_call_operand.vmem [shape: bf16[16,640], index: 0, kind: input, shape index: {}]
  %s1 = inlined_call_operand.vmem [shape: bf16[640,128], index: 1, kind: input, shape index: {}]
  %s2 = inlined_call_operand.vmem [shape: f32[2,1,128], index: 2, kind: input, shape index: {}]
  %s3 = inlined_call_operand.vmem [shape: f32[16,128], index: 3, kind: input, shape index: {}]
  %s4 = inlined_call_operand.vmem [shape: f32[16,128], index: 4, kind: output, shape index: {}]
  %s5 = sld [smem:[#allocation0]]
  $region26: #{_lambda_.63} parent=0
    _
  %s7 = ssub.s32 1, %s5
  %s8 = scalar_select 0, %s7, %s5
  // Predicated region
  $region2: #{_lambda_.63} parent=0 // pred_check
    _
  $region3: #{_lambda_.63} parent=0 // pred_check_branch
    %10 = sbr.rel (0) target = $region5
  $region4: #{_lambda_.63} parent=0 // pred_region
    _
  $region5: #{_lambda_.63} parent=0 // pred_fallthru
    _
  // Predicated region
  $region6: #{_lambda_.63} parent=0 // pred_check
    _
  $region7: #{_lambda_.63} parent=0 // pred_check_branch
    %12 = sbr.rel (0) target = $region9
  $region8: #{_lambda_.63} parent=0 // pred_region
    _
  $region9: #{_lambda_.63} parent=0 // pred_fallthru
    _
  // Predicated region
  $region10: #{_lambda_.63} parent=0 // pred_check
    _
  $region11: #{_lambda_.63} parent=0 // pred_check_branch
    %14 = sbr.rel (0) target = $region13
  $region12: #{_lambda_.63} parent=0 // pred_region
    _
  $region13: #{_lambda_.63} parent=0 // pred_fallthru
    _
  // Predicated region
  $region14: #{_lambda_.63} parent=0 // pred_check
    _
  $region15: #{_lambda_.63} parent=0 // pred_check_branch
    %16 = sbr.rel (0) target = $region17
  $region16: #{_lambda_.63} parent=0 // pred_region
    _
  $region17: #{_lambda_.63} parent=0 // pred_fallthru
    _
  %v18 = vld [vmem:[%s0] sm:$0xff]
  %v19 = vld [vmem:[%s0 + $0x8] sm:$0xff]
  %v20 = vld [vmem:[%s0 + $0x10] sm:$0xf]
  %v21 = vld [vmem:[%s0 + $0x14] sm:$0xff]
  %v22 = vld [vmem:[%s0 + $0x1c] sm:$0xff]
  %v23 = vld [vmem:[%s0 + $0x24] sm:$0xf]
  %v24 = vld [vmem:[%s1] sm:$0xf]
  %v25 = vld [vmem:[%s1 + $0x4] sm:$0xf]
  %v26 = vld [vmem:[%s1 + $0x8] sm:$0xf]
  %v27 = vld [vmem:[%s1 + $0xc] sm:$0xf]
  %v28 = vld [vmem:[%s1 + $0x10] sm:$0xf]
  %v29 = vld [vmem:[%s1 + $0x14] sm:$0xf]
  %v30 = vld [vmem:[%s1 + $0x18] sm:$0xf]
  %v31 = vld [vmem:[%s1 + $0x1c] sm:$0xf]
  %v32 = vld [vmem:[%s1 + $0x20] sm:$0xf]
  %v33 = vld [vmem:[%s1 + $0x24] sm:$0xf]
  %v34 = vld [vmem:[%s1 + $0x28] sm:$0xf]
  %v35 = vld [vmem:[%s1 + $0x2c] sm:$0xf]
  %v36 = vld [vmem:[%s1 + $0x30] sm:$0xf]
  %v37 = vld [vmem:[%s1 + $0x34] sm:$0xf]
  %v38 = vld [vmem:[%s1 + $0x38] sm:$0xf]
  %v39 = vld [vmem:[%s1 + $0x3c] sm:$0xf]
  %v40 = vld [vmem:[%s1 + $0x40] sm:$0xf]
  %v41 = vld [vmem:[%s1 + $0x44] sm:$0xf]
  %v42 = vld [vmem:[%s1 + $0x48] sm:$0xf]
  %v43 = vld [vmem:[%s1 + $0x4c] sm:$0xf]
  %v44 = vld [vmem:[%s1 + $0x50] sm:$0xf]
  %v45 = vld [vmem:[%s1 + $0x54] sm:$0xf]
  %v46 = vld [vmem:[%s1 + $0x58] sm:$0xf]
  %v47 = vld [vmem:[%s1 + $0x5c] sm:$0xf]
  %v48 = vld [vmem:[%s1 + $0x60] sm:$0xf]
  %v49 = vld [vmem:[%s1 + $0x64] sm:$0xf]
  %v50 = vld [vmem:[%s1 + $0x68] sm:$0xf]
  %v51 = vld [vmem:[%s1 + $0x6c] sm:$0xf]
  %v52 = vld [vmem:[%s1 + $0x70] sm:$0xf]
  %v53 = vld [vmem:[%s1 + $0x74] sm:$0xf]
  %v54 = vld [vmem:[%s1 + $0x78] sm:$0xf]
  %v55 = vld [vmem:[%s1 + $0x7c] sm:$0xf]
  %v56 = vld [vmem:[%s1 + $0x80] sm:$0xf]
  %v57 = vld [vmem:[%s1 + $0x84] sm:$0xf]
  %v58 = vld [vmem:[%s1 + $0x88] sm:$0xf]
  %v59 = vld [vmem:[%s1 + $0x8c] sm:$0xf]
  %v60 = vld [vmem:[%s1 + $0x90] sm:$0xf]
  %v61 = vld [vmem:[%s1 + $0x94] sm:$0xf]
  %v62 = vld [vmem:[%s1 + $0x98] sm:$0xf]
  %v63 = vld [vmem:[%s1 + $0x9c] sm:$0xf]
  %v64 = vld [vmem:[%s1 + $0xa0] sm:$0xf]
  %v65 = vld [vmem:[%s1 + $0xa4] sm:$0xf]
  %v66 = vld [vmem:[%s1 + $0xa8] sm:$0xf]
  %v67 = vld [vmem:[%s1 + $0xac] sm:$0xf]
  %v68 = vld [vmem:[%s1 + $0xb0] sm:$0xf]
  %v69 = vld [vmem:[%s1 + $0xb4] sm:$0xf]
  %v70 = vld [vmem:[%s1 + $0xb8] sm:$0xf]
  %v71 = vld [vmem:[%s1 + $0xbc] sm:$0xf]
  %v72 = vld [vmem:[%s1 + $0xc0] sm:$0xf]
  %v73 = vld [vmem:[%s1 + $0xc4] sm:$0xf]
  %v74 = vld [vmem:[%s1 + $0xc8] sm:$0xf]
  %v75 = vld [vmem:[%s1 + $0xcc] sm:$0xf]
  %v76 = vld [vmem:[%s1 + $0xd0] sm:$0xf]
  %v77 = vld [vmem:[%s1 + $0xd4] sm:$0xf]
  %v78 = vld [vmem:[%s1 + $0xd8] sm:$0xf]
  %v79 = vld [vmem:[%s1 + $0xdc] sm:$0xf]
  %v80 = vld [vmem:[%s1 + $0xe0] sm:$0xf]
  %v81 = vld [vmem:[%s1 + $0xe4] sm:$0xf]
  %v82 = vld [vmem:[%s1 + $0xe8] sm:$0xf]
  %v83 = vld [vmem:[%s1 + $0xec] sm:$0xf]
  %v84 = vld [vmem:[%s1 + $0xf0] sm:$0xf]
  %v85 = vld [vmem:[%s1 + $0xf4] sm:$0xf]
  %v86 = vld [vmem:[%s1 + $0xf8] sm:$0xf]
  %v87 = vld [vmem:[%s1 + $0xfc] sm:$0xf]
  %v88 = vld [vmem:[%s1 + $0x100] sm:$0xf]
  %v89 = vld [vmem:[%s1 + $0x104] sm:$0xf]
  %v90 = vld [vmem:[%s1 + $0x108] sm:$0xf]
  %v91 = vld [vmem:[%s1 + $0x10c] sm:$0xf]
  %v92 = vld [vmem:[%s1 + $0x110] sm:$0xf]
  %v93 = vld [vmem:[%s1 + $0x114] sm:$0xf]
  %v94 = vld [vmem:[%s1 + $0x118] sm:$0xf]
  %v95 = vld [vmem:[%s1 + $0x11c] sm:$0xf]
  %v96 = vld [vmem:[%s1 + $0x120] sm:$0xf]
  %v97 = vld [vmem:[%s1 + $0x124] sm:$0xf]
  %v98 = vld [vmem:[%s1 + $0x128] sm:$0xf]
  %v99 = vld [vmem:[%s1 + $0x12c] sm:$0xf]
  %v100 = vld [vmem:[%s1 + $0x130] sm:$0xf]
  %v101 = vld [vmem:[%s1 + $0x134] sm:$0xf]
  %v102 = vld [vmem:[%s1 + $0x138] sm:$0xf]
  %v103 = vld [vmem:[%s1 + $0x13c] sm:$0xf]
  %v110 = vunpack.c.l.b16 %v18
  %v111 = vunpack.c.h.b16 %v18
  %v112 = vunpack.c.l.b16 %v19
  %v113 = vunpack.c.h.b16 %v19
  %v114 = vunpack.c.l.b16 %v20
  %v115 = vunpack.c.l.b16 %v21
  %v116 = vunpack.c.h.b16 %v21
  %v117 = vunpack.c.l.b16 %v22
  %v118 = vunpack.c.h.b16 %v22
  %v119 = vunpack.c.l.b16 %v23
  %v120 = vpack.c.b16 %v115, %v110
  %v121 = vpack.c.b16 %v116, %v111
  %v122 = vpack.c.b16 %v117, %v112
  %v123 = vpack.c.b16 %v118, %v113
  %v124 = vpack.c.b16 %v119, %v114
  %v210 = vunpack.c.l.b16 %v24
  %v211 = vunpack.c.l.b16 %v25
  %v212 = vunpack.c.l.b16 %v26
  %v213 = vunpack.c.l.b16 %v27
  %v214 = vunpack.c.l.b16 %v28
  %v215 = vunpack.c.l.b16 %v29
  %v216 = vunpack.c.l.b16 %v30
  %v217 = vunpack.c.l.b16 %v31
  %v218 = vunpack.c.l.b16 %v32
  %v219 = vunpack.c.l.b16 %v33
  %v220 = vunpack.c.l.b16 %v34
  %v221 = vunpack.c.l.b16 %v35
  %v222 = vunpack.c.l.b16 %v36
  %v223 = vunpack.c.l.b16 %v37
  %v224 = vunpack.c.l.b16 %v38
  %v225 = vunpack.c.l.b16 %v39
  %v226 = vunpack.c.l.b16 %v40
  %v227 = vunpack.c.l.b16 %v41
  %v228 = vunpack.c.l.b16 %v42
  %v229 = vunpack.c.l.b16 %v43
  %v230 = vunpack.c.l.b16 %v44
  %v231 = vunpack.c.l.b16 %v45
  %v232 = vunpack.c.l.b16 %v46
  %v233 = vunpack.c.l.b16 %v47
  %v234 = vunpack.c.l.b16 %v48
  %v235 = vunpack.c.l.b16 %v49
  %v236 = vunpack.c.l.b16 %v50
  %v237 = vunpack.c.l.b16 %v51
  %v238 = vunpack.c.l.b16 %v52
  %v239 = vunpack.c.l.b16 %v53
  %v240 = vunpack.c.l.b16 %v54
  %v241 = vunpack.c.l.b16 %v55
  %v242 = vunpack.c.l.b16 %v56
  %v243 = vunpack.c.l.b16 %v57
  %v244 = vunpack.c.l.b16 %v58
  %v245 = vunpack.c.l.b16 %v59
  %v246 = vunpack.c.l.b16 %v60
  %v247 = vunpack.c.l.b16 %v61
  %v248 = vunpack.c.l.b16 %v62
  %v249 = vunpack.c.l.b16 %v63
  %v250 = vunpack.c.l.b16 %v64
  %v251 = vunpack.c.l.b16 %v65
  %v252 = vunpack.c.l.b16 %v66
  %v253 = vunpack.c.l.b16 %v67
  %v254 = vunpack.c.l.b16 %v68
  %v255 = vunpack.c.l.b16 %v69
  %v256 = vunpack.c.l.b16 %v70
  %v257 = vunpack.c.l.b16 %v71
  %v258 = vunpack.c.l.b16 %v72
  %v259 = vunpack.c.l.b16 %v73
  %v260 = vunpack.c.l.b16 %v74
  %v261 = vunpack.c.l.b16 %v75
  %v262 = vunpack.c.l.b16 %v76
  %v263 = vunpack.c.l.b16 %v77
  %v264 = vunpack.c.l.b16 %v78
  %v265 = vunpack.c.l.b16 %v79
  %v266 = vunpack.c.l.b16 %v80
  %v267 = vunpack.c.l.b16 %v81
  %v268 = vunpack.c.l.b16 %v82
  %v269 = vunpack.c.l.b16 %v83
  %v270 = vunpack.c.l.b16 %v84
  %v271 = vunpack.c.l.b16 %v85
  %v272 = vunpack.c.l.b16 %v86
  %v273 = vunpack.c.l.b16 %v87
  %v274 = vunpack.c.l.b16 %v88
  %v275 = vunpack.c.l.b16 %v89
  %v276 = vunpack.c.l.b16 %v90
  %v277 = vunpack.c.l.b16 %v91
  %v278 = vunpack.c.l.b16 %v92
  %v279 = vunpack.c.l.b16 %v93
  %v280 = vunpack.c.l.b16 %v94
  %v281 = vunpack.c.l.b16 %v95
  %v282 = vunpack.c.l.b16 %v96
  %v283 = vunpack.c.l.b16 %v97
  %v284 = vunpack.c.l.b16 %v98
  %v285 = vunpack.c.l.b16 %v99
  %v286 = vunpack.c.l.b16 %v100
  %v287 = vunpack.c.l.b16 %v101
  %v288 = vunpack.c.l.b16 %v102
  %v289 = vunpack.c.l.b16 %v103
  %v290 = vpack.c.b16 %v211, %v210
  %v291 = vpack.c.b16 %v213, %v212
  %v292 = vpack.c.b16 %v215, %v214
  %v293 = vpack.c.b16 %v217, %v216
  %v294 = vpack.c.b16 %v219, %v218
  %v295 = vpack.c.b16 %v221, %v220
  %v296 = vpack.c.b16 %v223, %v222
  %v297 = vpack.c.b16 %v225, %v224
  %v298 = vpack.c.b16 %v227, %v226
  %v299 = vpack.c.b16 %v229, %v228
  %v300 = vpack.c.b16 %v231, %v230
  %v301 = vpack.c.b16 %v233, %v232
  %v302 = vpack.c.b16 %v235, %v234
  %v303 = vpack.c.b16 %v237, %v236
  %v304 = vpack.c.b16 %v239, %v238
  %v305 = vpack.c.b16 %v241, %v240
  %v306 = vpack.c.b16 %v243, %v242
  %v307 = vpack.c.b16 %v245, %v244
  %v308 = vpack.c.b16 %v247, %v246
  %v309 = vpack.c.b16 %v249, %v248
  %v310 = vpack.c.b16 %v251, %v250
  %v311 = vpack.c.b16 %v253, %v252
  %v312 = vpack.c.b16 %v255, %v254
  %v313 = vpack.c.b16 %v257, %v256
  %v314 = vpack.c.b16 %v259, %v258
  %v315 = vpack.c.b16 %v261, %v260
  %v316 = vpack.c.b16 %v263, %v262
  %v317 = vpack.c.b16 %v265, %v264
  %v318 = vpack.c.b16 %v267, %v266
  %v319 = vpack.c.b16 %v269, %v268
  %v320 = vpack.c.b16 %v271, %v270
  %v321 = vpack.c.b16 %v273, %v272
  %v322 = vpack.c.b16 %v275, %v274
  %v323 = vpack.c.b16 %v277, %v276
  %v324 = vpack.c.b16 %v279, %v278
  %v325 = vpack.c.b16 %v281, %v280
  %v326 = vpack.c.b16 %v283, %v282
  %v327 = vpack.c.b16 %v285, %v284
  %v328 = vpack.c.b16 %v287, %v286
  %v329 = vpack.c.b16 %v289, %v288
  %370 = vmatprep.subr.bf16.mxu0 0
  %371 = vmatpush1.bf16.msra.mxu0 %v290
  %372 = vmatprep.subr.bf16.mxu0 0
  %373 = vmatpush1.bf16.msra.mxu0 %v291
  %374 = vmatprep.subr.bf16.mxu0 0
  %375 = vmatpush1.bf16.msra.mxu0 %v292
  %376 = vmatprep.subr.bf16.mxu0 0
  %377 = vmatpush1.bf16.msra.mxu0 %v293
  %378 = vmatprep.subr.bf16.mxu0 0
  %379 = vmatpush1.bf16.msra.mxu0 %v294
  %380 = vmatprep.subr.bf16.mxu0 0
  %381 = vmatpush1.bf16.msra.mxu0 %v295
  %382 = vmatprep.subr.bf16.mxu0 0
  %383 = vmatpush1.bf16.msra.mxu0 %v296
  %384 = vmatprep.subr.bf16.mxu0 0
  %385 = vmatpush1.bf16.msra.mxu0 %v297
  %386 = vmatprep.subr.bf16.mxu0 0
  %387 = vmatpush1.bf16.msra.mxu0 %v298
  %388 = vmatprep.subr.bf16.mxu0 0
  %389 = vmatpush1.bf16.msra.mxu0 %v299
  %390 = vmatprep.subr.bf16.mxu0 0
  %391 = vmatpush1.bf16.msra.mxu0 %v300
  %392 = vmatprep.subr.bf16.mxu0 0
  %393 = vmatpush1.bf16.msra.mxu0 %v301
  %394 = vmatprep.subr.bf16.mxu0 0
  %395 = vmatpush1.bf16.msra.mxu0 %v302
  %396 = vmatprep.subr.bf16.mxu0 0
  %397 = vmatpush1.bf16.msra.mxu0 %v303
  %398 = vmatprep.subr.bf16.mxu0 0
  %399 = vmatpush1.bf16.msra.mxu0 %v304
  %400 = vmatprep.subr.bf16.mxu0 0
  %401 = vmatpush1.bf16.msra.mxu0 %v305
  %402 = vmatprep.mubr.bf16.mxu0 %v121
  %403 = vmatmul.mubr.bf16.gmra.mrb[0].mxu0 %v120
  %v404 = vpop.f32.mrb[0].mxu0
  %v405 = vadd.f32 0.0, %v404
  %v406 = vpop.f32.mrb[0].mxu0
  %v407 = vpop.f32.mrb[0].mxu0
  %v408 = vadd.f32 0.0, %v407
  %v409 = vpop.f32.mrb[0].mxu0
  %410 = vdwg.mxu0
  %411 = vmatprep.subr.bf16.mxu0 0
  %412 = vmatpush1.bf16.msra.mxu0 %v306
  %413 = vmatprep.subr.bf16.mxu0 0
  %414 = vmatpush1.bf16.msra.mxu0 %v307
  %415 = vmatprep.subr.bf16.mxu0 0
  %416 = vmatpush1.bf16.msra.mxu0 %v308
  %417 = vmatprep.subr.bf16.mxu0 0
  %418 = vmatpush1.bf16.msra.mxu0 %v309
  %419 = vmatprep.subr.bf16.mxu0 0
  %420 = vmatpush1.bf16.msra.mxu0 %v310
  %421 = vmatprep.subr.bf16.mxu0 0
  %422 = vmatpush1.bf16.msra.mxu0 %v311
  %423 = vmatprep.subr.bf16.mxu0 0
  %424 = vmatpush1.bf16.msra.mxu0 %v312
  %425 = vmatprep.subr.bf16.mxu0 0
  %426 = vmatpush1.bf16.msra.mxu0 %v313
  %427 = vmatprep.subr.bf16.mxu0 0
  %428 = vmatpush1.bf16.msra.mxu0 %v314
  %429 = vmatprep.subr.bf16.mxu0 0
  %430 = vmatpush1.bf16.msra.mxu0 %v315
  %431 = vmatprep.subr.bf16.mxu0 0
  %432 = vmatpush1.bf16.msra.mxu0 %v316
  %433 = vmatprep.subr.bf16.mxu0 0
  %434 = vmatpush1.bf16.msra.mxu0 %v317
  %435 = vmatprep.subr.bf16.mxu0 0
  %436 = vmatpush1.bf16.msra.mxu0 %v318
  %437 = vmatprep.subr.bf16.mxu0 0
  %438 = vmatpush1.bf16.msra.mxu0 %v319
  %439 = vmatprep.subr.bf16.mxu0 0
  %440 = vmatpush1.bf16.msra.mxu0 %v320
  %441 = vmatprep.subr.bf16.mxu0 0
  %442 = vmatpush1.bf16.msra.mxu0 %v321
  %443 = vmatprep.mubr.bf16.mxu0 %v123
  %444 = vmatmul.mubr.bf16.gmra.mrb[0].mxu0 %v122
  %v445 = vpop.f32.mrb[0].mxu0
  %v446 = vadd.f32 %v405, %v445
  %v447 = vpop.f32.mrb[0].mxu0
  %v448 = vpop.f32.mrb[0].mxu0
  %v449 = vadd.f32 %v408, %v448
  %v450 = vpop.f32.mrb[0].mxu0
  %451 = vdwg.mxu0
  %452 = vmatprep.subr.bf16.mxu0 0
  %453 = vmatpush1.bf16.msra.mxu0 %v322
  %454 = vmatprep.subr.bf16.mxu0 0
  %455 = vmatpush1.bf16.msra.mxu0 %v323
  %456 = vmatprep.subr.bf16.mxu0 0
  %457 = vmatpush1.bf16.msra.mxu0 %v324
  %458 = vmatprep.subr.bf16.mxu0 0
  %459 = vmatpush1.bf16.msra.mxu0 %v325
  %460 = vmatprep.subr.bf16.mxu0 0
  %461 = vmatpush1.bf16.msra.mxu0 %v326
  %462 = vmatprep.subr.bf16.mxu0 0
  %463 = vmatpush1.bf16.msra.mxu0 %v327
  %464 = vmatprep.subr.bf16.mxu0 0
  %465 = vmatpush1.bf16.msra.mxu0 %v328
  %466 = vmatprep.subr.bf16.mxu0 0
  %467 = vmatpush1.bf16.msra.mxu0 %v329
  %468 = vmatprep.subr.bf16.mxu0 0
  %469 = vmatpush1.bf16.msra.mxu0 0
  %470 = vmatprep.subr.bf16.mxu0 0
  %471 = vmatpush1.bf16.msra.mxu0 0
  %472 = vmatprep.subr.bf16.mxu0 0
  %473 = vmatpush1.bf16.msra.mxu0 0
  %474 = vmatprep.subr.bf16.mxu0 0
  %475 = vmatpush1.bf16.msra.mxu0 0
  %476 = vmatprep.subr.bf16.mxu0 0
  %477 = vmatpush1.bf16.msra.mxu0 0
  %478 = vmatprep.subr.bf16.mxu0 0
  %479 = vmatpush1.bf16.msra.mxu0 0
  %480 = vmatprep.subr.bf16.mxu0 0
  %481 = vmatpush1.bf16.msra.mxu0 0
  %482 = vmatprep.subr.bf16.mxu0 0
  %483 = vmatpush1.bf16.msra.mxu0 0
  %484 = vmatprep.mubr.bf16.mxu0 0
  %485 = vmatmul.mubr.bf16.gmra.mrb[0].mxu0 %v124
  %v486 = vpop.f32.mrb[0].mxu0
  %v487 = vadd.f32 %v446, %v486
  %v488 = vpop.f32.mrb[0].mxu0
  %v489 = vpop.f32.mrb[0].mxu0
  %v490 = vadd.f32 %v449, %v489
  %v491 = vpop.f32.mrb[0].mxu0
  %492 = vdwg.mxu0
  %v493 = vld [vmem:[%s2] sm:$0x1]
  %v495 = vlaneseq
  %v496 = vshrl.u32 %v495, 7
  %v497 = vsub.s32 0, %v496
  %v498 = vrot.slane %v493, %v497
  %v500 = vmul.f32 %v487, %v498
  %v501 = vmul.f32 %v490, %v498
  %s502 = scalar_lea.vmem %s2, 1
  %v503 = vld [vmem:[%s502] sm:$0x1]
  %v505 = vlaneseq
  %v506 = vshrl.u32 %v505, 7
  %v507 = vsub.s32 0, %v506
  %v508 = vrot.slane %v503, %v507
  %v510 = vadd.f32 %v500, %v508
  %v511 = vadd.f32 %v501, %v508
  %v512 = vld [vmem:[%s3] sm:$0xff]
  %v513 = vld [vmem:[%s3 + $0x8] sm:$0xff]
  %v514 = vadd.f32 %v510, %v512
  %v515 = vadd.f32 %v511, %v513
  %v516 = vmax.f32 %v514, 0.0
  %v517 = vmax.f32 %v515, 0.0
  %518 = vst [vmem:[%s4] sm:$0xff] %v516
  %519 = vst [vmem:[%s4 + $0x8] sm:$0xff] %v517
  // Predicated region
  $region18: #{_lambda_.63} parent=0 // pred_check
    _
  $region19: #{_lambda_.63} parent=0 // pred_check_branch
    %521 = sbr.rel (0) target = $region21
  $region20: #{_lambda_.63} parent=0 // pred_region
    _
  $region21: #{_lambda_.63} parent=0 // pred_fallthru
    _
  // Predicated region
  $region22: #{_lambda_.63} parent=0 // pred_check
    _
  $region23: #{_lambda_.63} parent=0 // pred_check_branch
    %523 = sbr.rel (0) target = $region25
  $region24: #{_lambda_.63} parent=0 // pred_region
    _
  $region25: #{_lambda_.63} parent=0 // pred_fallthru
    _

// kernel: _lambda_.64
$region0: #{_lambda_.64}
  #allocation0 [shape = 'u32[]', space=smem, size = 0x4, offset = 0x4, fixed_abs, tag = 'smem constant byte address 0x4 - core index']
  #allocation1 [shape = 'u32[144,128]{1,0:T(1,128)}', space=vmem, size = 0x12000, scoped, tag = 'internal scratch']
  %s0 = inlined_call_operand.vmem [shape: bf16[16,640], index: 0, kind: input, shape index: {}]
  %s1 = inlined_call_operand.vmem [shape: bf16[640,128], index: 1, kind: input, shape index: {}]
  %s2 = inlined_call_operand.vmem [shape: f32[2,1,128], index: 2, kind: input, shape index: {}]
  %s3 = inlined_call_operand.vmem [shape: f32[16,128], index: 3, kind: output, shape index: {}]
  %s4 = sld [smem:[#allocation0]]
  $region22: #{_lambda_.64} parent=0
    _
  %s6 = ssub.s32 1, %s4
  %s7 = scalar_select 0, %s6, %s4
  // Predicated region
  $region2: #{_lambda_.64} parent=0 // pred_check
    _
  $region3: #{_lambda_.64} parent=0 // pred_check_branch
    %9 = sbr.rel (0) target = $region5
  $region4: #{_lambda_.64} parent=0 // pred_region
    _
  $region5: #{_lambda_.64} parent=0 // pred_fallthru
    _
  // Predicated region
  $region6: #{_lambda_.64} parent=0 // pred_check
    _
  $region7: #{_lambda_.64} parent=0 // pred_check_branch
    %11 = sbr.rel (0) target = $region9
  $region8: #{_lambda_.64} parent=0 // pred_region
    _
  $region9: #{_lambda_.64} parent=0 // pred_fallthru
    _
  // Predicated region
  $region10: #{_lambda_.64} parent=0 // pred_check
    _
  $region11: #{_lambda_.64} parent=0 // pred_check_branch
    %13 = sbr.rel (0) target = $region13
  $region12: #{_lambda_.64} parent=0 // pred_region
    _
  $region13: #{_lambda_.64} parent=0 // pred_fallthru
    _
  %v15 = vld [vmem:[%s0] sm:$0xff]
  %v16 = vld [vmem:[%s0 + $0x8] sm:$0xff]
  %v17 = vld [vmem:[%s0 + $0x10] sm:$0xf]
  %v18 = vld [vmem:[%s0 + $0x14] sm:$0xff]
  %v19 = vld [vmem:[%s0 + $0x1c] sm:$0xff]
  %v20 = vld [vmem:[%s0 + $0x24] sm:$0xf]
  %v21 = vld [vmem:[%s1] sm:$0xf]
  %v22 = vld [vmem:[%s1 + $0x4] sm:$0xf]
  %v23 = vld [vmem:[%s1 + $0x8] sm:$0xf]
  %v24 = vld [vmem:[%s1 + $0xc] sm:$0xf]
  %v25 = vld [vmem:[%s1 + $0x10] sm:$0xf]
  %v26 = vld [vmem:[%s1 + $0x14] sm:$0xf]
  %v27 = vld [vmem:[%s1 + $0x18] sm:$0xf]
  %v28 = vld [vmem:[%s1 + $0x1c] sm:$0xf]
  %v29 = vld [vmem:[%s1 + $0x20] sm:$0xf]
  %v30 = vld [vmem:[%s1 + $0x24] sm:$0xf]
  %v31 = vld [vmem:[%s1 + $0x28] sm:$0xf]
  %v32 = vld [vmem:[%s1 + $0x2c] sm:$0xf]
  %v33 = vld [vmem:[%s1 + $0x30] sm:$0xf]
  %v34 = vld [vmem:[%s1 + $0x34] sm:$0xf]
  %v35 = vld [vmem:[%s1 + $0x38] sm:$0xf]
  %v36 = vld [vmem:[%s1 + $0x3c] sm:$0xf]
  %v37 = vld [vmem:[%s1 + $0x40] sm:$0xf]
  %v38 = vld [vmem:[%s1 + $0x44] sm:$0xf]
  %v39 = vld [vmem:[%s1 + $0x48] sm:$0xf]
  %v40 = vld [vmem:[%s1 + $0x4c] sm:$0xf]
  %v41 = vld [vmem:[%s1 + $0x50] sm:$0xf]
  %v42 = vld [vmem:[%s1 + $0x54] sm:$0xf]
  %v43 = vld [vmem:[%s1 + $0x58] sm:$0xf]
  %v44 = vld [vmem:[%s1 + $0x5c] sm:$0xf]
  %v45 = vld [vmem:[%s1 + $0x60] sm:$0xf]
  %v46 = vld [vmem:[%s1 + $0x64] sm:$0xf]
  %v47 = vld [vmem:[%s1 + $0x68] sm:$0xf]
  %v48 = vld [vmem:[%s1 + $0x6c] sm:$0xf]
  %v49 = vld [vmem:[%s1 + $0x70] sm:$0xf]
  %v50 = vld [vmem:[%s1 + $0x74] sm:$0xf]
  %v51 = vld [vmem:[%s1 + $0x78] sm:$0xf]
  %v52 = vld [vmem:[%s1 + $0x7c] sm:$0xf]
  %v53 = vld [vmem:[%s1 + $0x80] sm:$0xf]
  %v54 = vld [vmem:[%s1 + $0x84] sm:$0xf]
  %v55 = vld [vmem:[%s1 + $0x88] sm:$0xf]
  %v56 = vld [vmem:[%s1 + $0x8c] sm:$0xf]
  %v57 = vld [vmem:[%s1 + $0x90] sm:$0xf]
  %v58 = vld [vmem:[%s1 + $0x94] sm:$0xf]
  %v59 = vld [vmem:[%s1 + $0x98] sm:$0xf]
  %v60 = vld [vmem:[%s1 + $0x9c] sm:$0xf]
  %v61 = vld [vmem:[%s1 + $0xa0] sm:$0xf]
  %v62 = vld [vmem:[%s1 + $0xa4] sm:$0xf]
  %v63 = vld [vmem:[%s1 + $0xa8] sm:$0xf]
  %v64 = vld [vmem:[%s1 + $0xac] sm:$0xf]
  %v65 = vld [vmem:[%s1 + $0xb0] sm:$0xf]
  %v66 = vld [vmem:[%s1 + $0xb4] sm:$0xf]
  %v67 = vld [vmem:[%s1 + $0xb8] sm:$0xf]
  %v68 = vld [vmem:[%s1 + $0xbc] sm:$0xf]
  %v69 = vld [vmem:[%s1 + $0xc0] sm:$0xf]
  %v70 = vld [vmem:[%s1 + $0xc4] sm:$0xf]
  %v71 = vld [vmem:[%s1 + $0xc8] sm:$0xf]
  %v72 = vld [vmem:[%s1 + $0xcc] sm:$0xf]
  %v73 = vld [vmem:[%s1 + $0xd0] sm:$0xf]
  %v74 = vld [vmem:[%s1 + $0xd4] sm:$0xf]
  %v75 = vld [vmem:[%s1 + $0xd8] sm:$0xf]
  %v76 = vld [vmem:[%s1 + $0xdc] sm:$0xf]
  %v77 = vld [vmem:[%s1 + $0xe0] sm:$0xf]
  %v78 = vld [vmem:[%s1 + $0xe4] sm:$0xf]
  %v79 = vld [vmem:[%s1 + $0xe8] sm:$0xf]
  %v80 = vld [vmem:[%s1 + $0xec] sm:$0xf]
  %v81 = vld [vmem:[%s1 + $0xf0] sm:$0xf]
  %v82 = vld [vmem:[%s1 + $0xf4] sm:$0xf]
  %v83 = vld [vmem:[%s1 + $0xf8] sm:$0xf]
  %v84 = vld [vmem:[%s1 + $0xfc] sm:$0xf]
  %v85 = vld [vmem:[%s1 + $0x100] sm:$0xf]
  %v86 = vld [vmem:[%s1 + $0x104] sm:$0xf]
  %v87 = vld [vmem:[%s1 + $0x108] sm:$0xf]
  %v88 = vld [vmem:[%s1 + $0x10c] sm:$0xf]
  %v89 = vld [vmem:[%s1 + $0x110] sm:$0xf]
  %v90 = vld [vmem:[%s1 + $0x114] sm:$0xf]
  %v91 = vld [vmem:[%s1 + $0x118] sm:$0xf]
  %v92 = vld [vmem:[%s1 + $0x11c] sm:$0xf]
  %v93 = vld [vmem:[%s1 + $0x120] sm:$0xf]
  %v94 = vld [vmem:[%s1 + $0x124] sm:$0xf]
  %v95 = vld [vmem:[%s1 + $0x128] sm:$0xf]
  %v96 = vld [vmem:[%s1 + $0x12c] sm:$0xf]
  %v97 = vld [vmem:[%s1 + $0x130] sm:$0xf]
  %v98 = vld [vmem:[%s1 + $0x134] sm:$0xf]
  %v99 = vld [vmem:[%s1 + $0x138] sm:$0xf]
  %v100 = vld [vmem:[%s1 + $0x13c] sm:$0xf]
  %v107 = vunpack.c.l.b16 %v15
  %v108 = vunpack.c.h.b16 %v15
  %v109 = vunpack.c.l.b16 %v16
  %v110 = vunpack.c.h.b16 %v16
  %v111 = vunpack.c.l.b16 %v17
  %v112 = vunpack.c.l.b16 %v18
  %v113 = vunpack.c.h.b16 %v18
  %v114 = vunpack.c.l.b16 %v19
  %v115 = vunpack.c.h.b16 %v19
  %v116 = vunpack.c.l.b16 %v20
  %v117 = vpack.c.b16 %v112, %v107
  %v118 = vpack.c.b16 %v113, %v108
  %v119 = vpack.c.b16 %v114, %v109
  %v120 = vpack.c.b16 %v115, %v110
  %v121 = vpack.c.b16 %v116, %v111
  %v207 = vunpack.c.l.b16 %v21
  %v208 = vunpack.c.l.b16 %v22
  %v209 = vunpack.c.l.b16 %v23
  %v210 = vunpack.c.l.b16 %v24
  %v211 = vunpack.c.l.b16 %v25
  %v212 = vunpack.c.l.b16 %v26
  %v213 = vunpack.c.l.b16 %v27
  %v214 = vunpack.c.l.b16 %v28
  %v215 = vunpack.c.l.b16 %v29
  %v216 = vunpack.c.l.b16 %v30
  %v217 = vunpack.c.l.b16 %v31
  %v218 = vunpack.c.l.b16 %v32
  %v219 = vunpack.c.l.b16 %v33
  %v220 = vunpack.c.l.b16 %v34
  %v221 = vunpack.c.l.b16 %v35
  %v222 = vunpack.c.l.b16 %v36
  %v223 = vunpack.c.l.b16 %v37
  %v224 = vunpack.c.l.b16 %v38
  %v225 = vunpack.c.l.b16 %v39
  %v226 = vunpack.c.l.b16 %v40
  %v227 = vunpack.c.l.b16 %v41
  %v228 = vunpack.c.l.b16 %v42
  %v229 = vunpack.c.l.b16 %v43
  %v230 = vunpack.c.l.b16 %v44
  %v231 = vunpack.c.l.b16 %v45
  %v232 = vunpack.c.l.b16 %v46
  %v233 = vunpack.c.l.b16 %v47
  %v234 = vunpack.c.l.b16 %v48
  %v235 = vunpack.c.l.b16 %v49
  %v236 = vunpack.c.l.b16 %v50
  %v237 = vunpack.c.l.b16 %v51
  %v238 = vunpack.c.l.b16 %v52
  %v239 = vunpack.c.l.b16 %v53
  %v240 = vunpack.c.l.b16 %v54
  %v241 = vunpack.c.l.b16 %v55
  %v242 = vunpack.c.l.b16 %v56
  %v243 = vunpack.c.l.b16 %v57
  %v244 = vunpack.c.l.b16 %v58
  %v245 = vunpack.c.l.b16 %v59
  %v246 = vunpack.c.l.b16 %v60
  %v247 = vunpack.c.l.b16 %v61
  %v248 = vunpack.c.l.b16 %v62
  %v249 = vunpack.c.l.b16 %v63
  %v250 = vunpack.c.l.b16 %v64
  %v251 = vunpack.c.l.b16 %v65
  %v252 = vunpack.c.l.b16 %v66
  %v253 = vunpack.c.l.b16 %v67
  %v254 = vunpack.c.l.b16 %v68
  %v255 = vunpack.c.l.b16 %v69
  %v256 = vunpack.c.l.b16 %v70
  %v257 = vunpack.c.l.b16 %v71
  %v258 = vunpack.c.l.b16 %v72
  %v259 = vunpack.c.l.b16 %v73
  %v260 = vunpack.c.l.b16 %v74
  %v261 = vunpack.c.l.b16 %v75
  %v262 = vunpack.c.l.b16 %v76
  %v263 = vunpack.c.l.b16 %v77
  %v264 = vunpack.c.l.b16 %v78
  %v265 = vunpack.c.l.b16 %v79
  %v266 = vunpack.c.l.b16 %v80
  %v267 = vunpack.c.l.b16 %v81
  %v268 = vunpack.c.l.b16 %v82
  %v269 = vunpack.c.l.b16 %v83
  %v270 = vunpack.c.l.b16 %v84
  %v271 = vunpack.c.l.b16 %v85
  %v272 = vunpack.c.l.b16 %v86
  %v273 = vunpack.c.l.b16 %v87
  %v274 = vunpack.c.l.b16 %v88
  %v275 = vunpack.c.l.b16 %v89
  %v276 = vunpack.c.l.b16 %v90
  %v277 = vunpack.c.l.b16 %v91
  %v278 = vunpack.c.l.b16 %v92
  %v279 = vunpack.c.l.b16 %v93
  %v280 = vunpack.c.l.b16 %v94
  %v281 = vunpack.c.l.b16 %v95
  %v282 = vunpack.c.l.b16 %v96
  %v283 = vunpack.c.l.b16 %v97
  %v284 = vunpack.c.l.b16 %v98
  %v285 = vunpack.c.l.b16 %v99
  %v286 = vunpack.c.l.b16 %v100
  %v287 = vpack.c.b16 %v208, %v207
  %v288 = vpack.c.b16 %v210, %v209
  %v289 = vpack.c.b16 %v212, %v211
  %v290 = vpack.c.b16 %v214, %v213
  %v291 = vpack.c.b16 %v216, %v215
  %v292 = vpack.c.b16 %v218, %v217
  %v293 = vpack.c.b16 %v220, %v219
  %v294 = vpack.c.b16 %v222, %v221
  %v295 = vpack.c.b16 %v224, %v223
  %v296 = vpack.c.b16 %v226, %v225
  %v297 = vpack.c.b16 %v228, %v227
  %v298 = vpack.c.b16 %v230, %v229
  %v299 = vpack.c.b16 %v232, %v231
  %v300 = vpack.c.b16 %v234, %v233
  %v301 = vpack.c.b16 %v236, %v235
  %v302 = vpack.c.b16 %v238, %v237
  %v303 = vpack.c.b16 %v240, %v239
  %v304 = vpack.c.b16 %v242, %v241
  %v305 = vpack.c.b16 %v244, %v243
  %v306 = vpack.c.b16 %v246, %v245
  %v307 = vpack.c.b16 %v248, %v247
  %v308 = vpack.c.b16 %v250, %v249
  %v309 = vpack.c.b16 %v252, %v251
  %v310 = vpack.c.b16 %v254, %v253
  %v311 = vpack.c.b16 %v256, %v255
  %v312 = vpack.c.b16 %v258, %v257
  %v313 = vpack.c.b16 %v260, %v259
  %v314 = vpack.c.b16 %v262, %v261
  %v315 = vpack.c.b16 %v264, %v263
  %v316 = vpack.c.b16 %v266, %v265
  %v317 = vpack.c.b16 %v268, %v267
  %v318 = vpack.c.b16 %v270, %v269
  %v319 = vpack.c.b16 %v272, %v271
  %v320 = vpack.c.b16 %v274, %v273
  %v321 = vpack.c.b16 %v276, %v275
  %v322 = vpack.c.b16 %v278, %v277
  %v323 = vpack.c.b16 %v280, %v279
  %v324 = vpack.c.b16 %v282, %v281
  %v325 = vpack.c.b16 %v284, %v283
  %v326 = vpack.c.b16 %v286, %v285
  %367 = vmatprep.subr.bf16.mxu0 0
  %368 = vmatpush1.bf16.msra.mxu0 %v287
  %369 = vmatprep.subr.bf16.mxu0 0
  %370 = vmatpush1.bf16.msra.mxu0 %v288
  %371 = vmatprep.subr.bf16.mxu0 0
  %372 = vmatpush1.bf16.msra.mxu0 %v289
  %373 = vmatprep.subr.bf16.mxu0 0
  %374 = vmatpush1.bf16.msra.mxu0 %v290
  %375 = vmatprep.subr.bf16.mxu0 0
  %376 = vmatpush1.bf16.msra.mxu0 %v291
  %377 = vmatprep.subr.bf16.mxu0 0
  %378 = vmatpush1.bf16.msra.mxu0 %v292
  %379 = vmatprep.subr.bf16.mxu0 0
  %380 = vmatpush1.bf16.msra.mxu0 %v293
  %381 = vmatprep.subr.bf16.mxu0 0
  %382 = vmatpush1.bf16.msra.mxu0 %v294
  %383 = vmatprep.subr.bf16.mxu0 0
  %384 = vmatpush1.bf16.msra.mxu0 %v295
  %385 = vmatprep.subr.bf16.mxu0 0
  %386 = vmatpush1.bf16.msra.mxu0 %v296
  %387 = vmatprep.subr.bf16.mxu0 0
  %388 = vmatpush1.bf16.msra.mxu0 %v297
  %389 = vmatprep.subr.bf16.mxu0 0
  %390 = vmatpush1.bf16.msra.mxu0 %v298
  %391 = vmatprep.subr.bf16.mxu0 0
  %392 = vmatpush1.bf16.msra.mxu0 %v299
  %393 = vmatprep.subr.bf16.mxu0 0
  %394 = vmatpush1.bf16.msra.mxu0 %v300
  %395 = vmatprep.subr.bf16.mxu0 0
  %396 = vmatpush1.bf16.msra.mxu0 %v301
  %397 = vmatprep.subr.bf16.mxu0 0
  %398 = vmatpush1.bf16.msra.mxu0 %v302
  %399 = vmatprep.mubr.bf16.mxu0 %v118
  %400 = vmatmul.mubr.bf16.gmra.mrb[0].mxu0 %v117
  %v401 = vpop.f32.mrb[0].mxu0
  %v402 = vadd.f32 0.0, %v401
  %v403 = vpop.f32.mrb[0].mxu0
  %v404 = vpop.f32.mrb[0].mxu0
  %v405 = vadd.f32 0.0, %v404
  %v406 = vpop.f32.mrb[0].mxu0
  %407 = vdwg.mxu0
  %408 = vmatprep.subr.bf16.mxu0 0
  %409 = vmatpush1.bf16.msra.mxu0 %v303
  %410 = vmatprep.subr.bf16.mxu0 0
  %411 = vmatpush1.bf16.msra.mxu0 %v304
  %412 = vmatprep.subr.bf16.mxu0 0
  %413 = vmatpush1.bf16.msra.mxu0 %v305
  %414 = vmatprep.subr.bf16.mxu0 0
  %415 = vmatpush1.bf16.msra.mxu0 %v306
  %416 = vmatprep.subr.bf16.mxu0 0
  %417 = vmatpush1.bf16.msra.mxu0 %v307
  %418 = vmatprep.subr.bf16.mxu0 0
  %419 = vmatpush1.bf16.msra.mxu0 %v308
  %420 = vmatprep.subr.bf16.mxu0 0
  %421 = vmatpush1.bf16.msra.mxu0 %v309
  %422 = vmatprep.subr.bf16.mxu0 0
  %423 = vmatpush1.bf16.msra.mxu0 %v310
  %424 = vmatprep.subr.bf16.mxu0 0
  %425 = vmatpush1.bf16.msra.mxu0 %v311
  %426 = vmatprep.subr.bf16.mxu0 0
  %427 = vmatpush1.bf16.msra.mxu0 %v312
  %428 = vmatprep.subr.bf16.mxu0 0
  %429 = vmatpush1.bf16.msra.mxu0 %v313
  %430 = vmatprep.subr.bf16.mxu0 0
  %431 = vmatpush1.bf16.msra.mxu0 %v314
  %432 = vmatprep.subr.bf16.mxu0 0
  %433 = vmatpush1.bf16.msra.mxu0 %v315
  %434 = vmatprep.subr.bf16.mxu0 0
  %435 = vmatpush1.bf16.msra.mxu0 %v316
  %436 = vmatprep.subr.bf16.mxu0 0
  %437 = vmatpush1.bf16.msra.mxu0 %v317
  %438 = vmatprep.subr.bf16.mxu0 0
  %439 = vmatpush1.bf16.msra.mxu0 %v318
  %440 = vmatprep.mubr.bf16.mxu0 %v120
  %441 = vmatmul.mubr.bf16.gmra.mrb[0].mxu0 %v119
  %v442 = vpop.f32.mrb[0].mxu0
  %v443 = vadd.f32 %v402, %v442
  %v444 = vpop.f32.mrb[0].mxu0
  %v445 = vpop.f32.mrb[0].mxu0
  %v446 = vadd.f32 %v405, %v445
  %v447 = vpop.f32.mrb[0].mxu0
  %448 = vdwg.mxu0
  %449 = vmatprep.subr.bf16.mxu0 0
  %450 = vmatpush1.bf16.msra.mxu0 %v319
  %451 = vmatprep.subr.bf16.mxu0 0
  %452 = vmatpush1.bf16.msra.mxu0 %v320
  %453 = vmatprep.subr.bf16.mxu0 0
  %454 = vmatpush1.bf16.msra.mxu0 %v321
  %455 = vmatprep.subr.bf16.mxu0 0
  %456 = vmatpush1.bf16.msra.mxu0 %v322
  %457 = vmatprep.subr.bf16.mxu0 0
  %458 = vmatpush1.bf16.msra.mxu0 %v323
  %459 = vmatprep.subr.bf16.mxu0 0
  %460 = vmatpush1.bf16.msra.mxu0 %v324
  %461 = vmatprep.subr.bf16.mxu0 0
  %462 = vmatpush1.bf16.msra.mxu0 %v325
  %463 = vmatprep.subr.bf16.mxu0 0
  %464 = vmatpush1.bf16.msra.mxu0 %v326
  %465 = vmatprep.subr.bf16.mxu0 0
  %466 = vmatpush1.bf16.msra.mxu0 0
  %467 = vmatprep.subr.bf16.mxu0 0
  %468 = vmatpush1.bf16.msra.mxu0 0
  %469 = vmatprep.subr.bf16.mxu0 0
  %470 = vmatpush1.bf16.msra.mxu0 0
  %471 = vmatprep.subr.bf16.mxu0 0
  %472 = vmatpush1.bf16.msra.mxu0 0
  %473 = vmatprep.subr.bf16.mxu0 0
  %474 = vmatpush1.bf16.msra.mxu0 0
  %475 = vmatprep.subr.bf16.mxu0 0
  %476 = vmatpush1.bf16.msra.mxu0 0
  %477 = vmatprep.subr.bf16.mxu0 0
  %478 = vmatpush1.bf16.msra.mxu0 0
  %479 = vmatprep.subr.bf16.mxu0 0
  %480 = vmatpush1.bf16.msra.mxu0 0
  %481 = vmatprep.mubr.bf16.mxu0 0
  %482 = vmatmul.mubr.bf16.gmra.mrb[0].mxu0 %v121
  %v483 = vpop.f32.mrb[0].mxu0
  %v484 = vadd.f32 %v443, %v483
  %v485 = vpop.f32.mrb[0].mxu0
  %v486 = vpop.f32.mrb[0].mxu0
  %v487 = vadd.f32 %v446, %v486
  %v488 = vpop.f32.mrb[0].mxu0
  %489 = vdwg.mxu0
  %v490 = vld [vmem:[%s2] sm:$0x1]
  %v492 = vlaneseq
  %v493 = vshrl.u32 %v492, 7
  %v494 = vsub.s32 0, %v493
  %v495 = vrot.slane %v490, %v494
  %v497 = vmul.f32 %v484, %v495
  %v498 = vmul.f32 %v487, %v495
  %s499 = scalar_lea.vmem %s2, 1
  %v500 = vld [vmem:[%s499] sm:$0x1]
  %v502 = vlaneseq
  %v503 = vshrl.u32 %v502, 7
  %v504 = vsub.s32 0, %v503
  %v505 = vrot.slane %v500, %v504
  %v507 = vadd.f32 %v497, %v505
  %v508 = vadd.f32 %v498, %v505
  %v509 = vmax.f32 %v507, 0.0
  %v510 = vmax.f32 %v508, 0.0
  %511 = vst [vmem:[%s3] sm:$0xff] %v509
  %512 = vst [vmem:[%s3 + $0x8] sm:$0xff] %v510
  // Predicated region
  $region14: #{_lambda_.64} parent=0 // pred_check
    _
  $region15: #{_lambda_.64} parent=0 // pred_check_branch
    %514 = sbr.rel (0) target = $region17
  $region16: #{_lambda_.64} parent=0 // pred_region
    _
  $region17: #{_lambda_.64} parent=0 // pred_fallthru
    _
  // Predicated region
  $region18: #{_lambda_.64} parent=0 // pred_check
    _
  $region19: #{_lambda_.64} parent=0 // pred_check_branch
    %516 = sbr.rel (0) target = $region21
  $region20: #{_lambda_.64} parent=0 // pred_region
    _
  $region21: #{_lambda_.64} parent=0 // pred_fallthru
    _

// kernel: _lambda_.89
$region0: #{_lambda_.89}
  #allocation0 [shape = 'u32[]', space=smem, size = 0x4, offset = 0x4, fixed_abs, tag = 'smem constant byte address 0x4 - core index']
  #allocation1 [shape = 'u32[144,128]{1,0:T(1,128)}', space=vmem, size = 0x12000, scoped, tag = 'internal scratch']
  %s0 = inlined_call_operand.vmem [shape: bf16[16,256], index: 0, kind: input, shape index: {}]
  %s1 = inlined_call_operand.vmem [shape: bf16[256,128], index: 1, kind: input, shape index: {}]
  %s2 = inlined_call_operand.vmem [shape: f32[2,1,128], index: 2, kind: input, shape index: {}]
  %s3 = inlined_call_operand.vmem [shape: f32[16,128], index: 3, kind: input, shape index: {}]
  %s4 = inlined_call_operand.vmem [shape: f32[16,128], index: 4, kind: output, shape index: {}]
  %s5 = sld [smem:[#allocation0]]
  $region26: #{_lambda_.89} parent=0
    _
  %s7 = ssub.s32 1, %s5
  %s8 = scalar_select 0, %s7, %s5
  // Predicated region
  $region2: #{_lambda_.89} parent=0 // pred_check
    _
  $region3: #{_lambda_.89} parent=0 // pred_check_branch
    %10 = sbr.rel (0) target = $region5
  $region4: #{_lambda_.89} parent=0 // pred_region
    _
  $region5: #{_lambda_.89} parent=0 // pred_fallthru
    _
  // Predicated region
  $region6: #{_lambda_.89} parent=0 // pred_check
    _
  $region7: #{_lambda_.89} parent=0 // pred_check_branch
    %12 = sbr.rel (0) target = $region9
  $region8: #{_lambda_.89} parent=0 // pred_region
    _
  $region9: #{_lambda_.89} parent=0 // pred_fallthru
    _
  // Predicated region
  $region10: #{_lambda_.89} parent=0 // pred_check
    _
  $region11: #{_lambda_.89} parent=0 // pred_check_branch
    %14 = sbr.rel (0) target = $region13
  $region12: #{_lambda_.89} parent=0 // pred_region
    _
  $region13: #{_lambda_.89} parent=0 // pred_fallthru
    _
  // Predicated region
  $region14: #{_lambda_.89} parent=0 // pred_check
    _
  $region15: #{_lambda_.89} parent=0 // pred_check_branch
    %16 = sbr.rel (0) target = $region17
  $region16: #{_lambda_.89} parent=0 // pred_region
    _
  $region17: #{_lambda_.89} parent=0 // pred_fallthru
    _
  %v18 = vld [vmem:[%s0] sm:$0xff]
  %v19 = vld [vmem:[%s0 + $0x8] sm:$0xff]
  %v20 = vld [vmem:[%s1] sm:$0xf]
  %v21 = vld [vmem:[%s1 + $0x4] sm:$0xf]
  %v22 = vld [vmem:[%s1 + $0x8] sm:$0xf]
  %v23 = vld [vmem:[%s1 + $0xc] sm:$0xf]
  %v24 = vld [vmem:[%s1 + $0x10] sm:$0xf]
  %v25 = vld [vmem:[%s1 + $0x14] sm:$0xf]
  %v26 = vld [vmem:[%s1 + $0x18] sm:$0xf]
  %v27 = vld [vmem:[%s1 + $0x1c] sm:$0xf]
  %v28 = vld [vmem:[%s1 + $0x20] sm:$0xf]
  %v29 = vld [vmem:[%s1 + $0x24] sm:$0xf]
  %v30 = vld [vmem:[%s1 + $0x28] sm:$0xf]
  %v31 = vld [vmem:[%s1 + $0x2c] sm:$0xf]
  %v32 = vld [vmem:[%s1 + $0x30] sm:$0xf]
  %v33 = vld [vmem:[%s1 + $0x34] sm:$0xf]
  %v34 = vld [vmem:[%s1 + $0x38] sm:$0xf]
  %v35 = vld [vmem:[%s1 + $0x3c] sm:$0xf]
  %v36 = vld [vmem:[%s1 + $0x40] sm:$0xf]
  %v37 = vld [vmem:[%s1 + $0x44] sm:$0xf]
  %v38 = vld [vmem:[%s1 + $0x48] sm:$0xf]
  %v39 = vld [vmem:[%s1 + $0x4c] sm:$0xf]
  %v40 = vld [vmem:[%s1 + $0x50] sm:$0xf]
  %v41 = vld [vmem:[%s1 + $0x54] sm:$0xf]
  %v42 = vld [vmem:[%s1 + $0x58] sm:$0xf]
  %v43 = vld [vmem:[%s1 + $0x5c] sm:$0xf]
  %v44 = vld [vmem:[%s1 + $0x60] sm:$0xf]
  %v45 = vld [vmem:[%s1 + $0x64] sm:$0xf]
  %v46 = vld [vmem:[%s1 + $0x68] sm:$0xf]
  %v47 = vld [vmem:[%s1 + $0x6c] sm:$0xf]
  %v48 = vld [vmem:[%s1 + $0x70] sm:$0xf]
  %v49 = vld [vmem:[%s1 + $0x74] sm:$0xf]
  %v50 = vld [vmem:[%s1 + $0x78] sm:$0xf]
  %v51 = vld [vmem:[%s1 + $0x7c] sm:$0xf]
  %v54 = vunpack.c.l.b16 %v18
  %v55 = vunpack.c.h.b16 %v18
  %v56 = vunpack.c.l.b16 %v19
  %v57 = vunpack.c.h.b16 %v19
  %v58 = vpack.c.b16 %v56, %v54
  %v59 = vpack.c.b16 %v57, %v55
  %v94 = vunpack.c.l.b16 %v20
  %v95 = vunpack.c.l.b16 %v21
  %v96 = vunpack.c.l.b16 %v22
  %v97 = vunpack.c.l.b16 %v23
  %v98 = vunpack.c.l.b16 %v24
  %v99 = vunpack.c.l.b16 %v25
  %v100 = vunpack.c.l.b16 %v26
  %v101 = vunpack.c.l.b16 %v27
  %v102 = vunpack.c.l.b16 %v28
  %v103 = vunpack.c.l.b16 %v29
  %v104 = vunpack.c.l.b16 %v30
  %v105 = vunpack.c.l.b16 %v31
  %v106 = vunpack.c.l.b16 %v32
  %v107 = vunpack.c.l.b16 %v33
  %v108 = vunpack.c.l.b16 %v34
  %v109 = vunpack.c.l.b16 %v35
  %v110 = vunpack.c.l.b16 %v36
  %v111 = vunpack.c.l.b16 %v37
  %v112 = vunpack.c.l.b16 %v38
  %v113 = vunpack.c.l.b16 %v39
  %v114 = vunpack.c.l.b16 %v40
  %v115 = vunpack.c.l.b16 %v41
  %v116 = vunpack.c.l.b16 %v42
  %v117 = vunpack.c.l.b16 %v43
  %v118 = vunpack.c.l.b16 %v44
  %v119 = vunpack.c.l.b16 %v45
  %v120 = vunpack.c.l.b16 %v46
  %v121 = vunpack.c.l.b16 %v47
  %v122 = vunpack.c.l.b16 %v48
  %v123 = vunpack.c.l.b16 %v49
  %v124 = vunpack.c.l.b16 %v50
  %v125 = vunpack.c.l.b16 %v51
  %v126 = vpack.c.b16 %v95, %v94
  %v127 = vpack.c.b16 %v97, %v96
  %v128 = vpack.c.b16 %v99, %v98
  %v129 = vpack.c.b16 %v101, %v100
  %v130 = vpack.c.b16 %v103, %v102
  %v131 = vpack.c.b16 %v105, %v104
  %v132 = vpack.c.b16 %v107, %v106
  %v133 = vpack.c.b16 %v109, %v108
  %v134 = vpack.c.b16 %v111, %v110
  %v135 = vpack.c.b16 %v113, %v112
  %v136 = vpack.c.b16 %v115, %v114
  %v137 = vpack.c.b16 %v117, %v116
  %v138 = vpack.c.b16 %v119, %v118
  %v139 = vpack.c.b16 %v121, %v120
  %v140 = vpack.c.b16 %v123, %v122
  %v141 = vpack.c.b16 %v125, %v124
  %158 = vmatprep.subr.bf16.mxu0 0
  %159 = vmatpush1.bf16.msra.mxu0 %v126
  %160 = vmatprep.subr.bf16.mxu0 0
  %161 = vmatpush1.bf16.msra.mxu0 %v127
  %162 = vmatprep.subr.bf16.mxu0 0
  %163 = vmatpush1.bf16.msra.mxu0 %v128
  %164 = vmatprep.subr.bf16.mxu0 0
  %165 = vmatpush1.bf16.msra.mxu0 %v129
  %166 = vmatprep.subr.bf16.mxu0 0
  %167 = vmatpush1.bf16.msra.mxu0 %v130
  %168 = vmatprep.subr.bf16.mxu0 0
  %169 = vmatpush1.bf16.msra.mxu0 %v131
  %170 = vmatprep.subr.bf16.mxu0 0
  %171 = vmatpush1.bf16.msra.mxu0 %v132
  %172 = vmatprep.subr.bf16.mxu0 0
  %173 = vmatpush1.bf16.msra.mxu0 %v133
  %174 = vmatprep.subr.bf16.mxu0 0
  %175 = vmatpush1.bf16.msra.mxu0 %v134
  %176 = vmatprep.subr.bf16.mxu0 0
  %177 = vmatpush1.bf16.msra.mxu0 %v135
  %178 = vmatprep.subr.bf16.mxu0 0
  %179 = vmatpush1.bf16.msra.mxu0 %v136
  %180 = vmatprep.subr.bf16.mxu0 0
  %181 = vmatpush1.bf16.msra.mxu0 %v137
  %182 = vmatprep.subr.bf16.mxu0 0
  %183 = vmatpush1.bf16.msra.mxu0 %v138
  %184 = vmatprep.subr.bf16.mxu0 0
  %185 = vmatpush1.bf16.msra.mxu0 %v139
  %186 = vmatprep.subr.bf16.mxu0 0
  %187 = vmatpush1.bf16.msra.mxu0 %v140
  %188 = vmatprep.subr.bf16.mxu0 0
  %189 = vmatpush1.bf16.msra.mxu0 %v141
  %190 = vmatprep.mubr.bf16.mxu0 %v59
  %191 = vmatmul.mubr.bf16.gmra.mrb[0].mxu0 %v58
  %v192 = vpop.f32.mrb[0].mxu0
  %v193 = vadd.f32 0.0, %v192
  %v194 = vpop.f32.mrb[0].mxu0
  %v195 = vpop.f32.mrb[0].mxu0
  %v196 = vadd.f32 0.0, %v195
  %v197 = vpop.f32.mrb[0].mxu0
  %198 = vdwg.mxu0
  %v199 = vld [vmem:[%s2] sm:$0x1]
  %v201 = vlaneseq
  %v202 = vshrl.u32 %v201, 7
  %v203 = vsub.s32 0, %v202
  %v204 = vrot.slane %v199, %v203
  %v206 = vmul.f32 %v193, %v204
  %v207 = vmul.f32 %v196, %v204
  %s208 = scalar_lea.vmem %s2, 1
  %v209 = vld [vmem:[%s208] sm:$0x1]
  %v211 = vlaneseq
  %v212 = vshrl.u32 %v211, 7
  %v213 = vsub.s32 0, %v212
  %v214 = vrot.slane %v209, %v213
  %v216 = vadd.f32 %v206, %v214
  %v217 = vadd.f32 %v207, %v214
  %v218 = vld [vmem:[%s3] sm:$0xff]
  %v219 = vld [vmem:[%s3 + $0x8] sm:$0xff]
  %v220 = vadd.f32 %v216, %v218
  %v221 = vadd.f32 %v217, %v219
  %222 = vst [vmem:[%s4] sm:$0xff] %v220
  %223 = vst [vmem:[%s4 + $0x8] sm:$0xff] %v221
  // Predicated region
  $region18: #{_lambda_.89} parent=0 // pred_check
    _
  $region19: #{_lambda_.89} parent=0 // pred_check_branch
    %225 = sbr.rel (0) target = $region21
  $region20: #{_lambda_.89} parent=0 // pred_region
    _
  $region21: #{_lambda_.89} parent=0 // pred_fallthru
    _
  // Predicated region
  $region22: #{_lambda_.89} parent=0 // pred_check
    _
  $region23: #{_lambda_.89} parent=0 // pred_check_branch
    %227 = sbr.rel (0) target = $region25
  $region24: #{_lambda_.89} parent=0 // pred_region
    _
  $region25: #{_lambda_.89} parent=0 // pred_fallthru
    _

</llo_original>
